<compile_context>
chip_gen: v7x
topology: tpu7x:2x2x1
jax: 0.10.0
libtpu: 0.0.40
codegen_flags: <defaults>
</compile_context>

<pallas_src>
import functools

import jax
import jax.numpy as jnp
from jax import lax
from jax.experimental import pallas as pl
from jax.experimental.pallas import tpu as pltpu

NEG_SLOPE = 0.01          # nn.LeakyReLU default negative_slope
BN_EPS = 1e-5             # nn.BatchNorm2d default eps


def _leaky_relu(x):
    return jnp.where(x >= 0, x, NEG_SLOPE * x)


# ------------------------- hardware-aware sizing ---------------------------

def _vmem_limit_bytes():
    """~75% of physical VMEM: 96 MiB on v5e/v6e (128 MiB parts), 48 MiB on v7x."""
    try:
        info = pltpu.get_tpu_info()
        cap = (getattr(info, "vmem_capacity_bytes", None)
               or getattr(info, "vmem_size_bytes", None))
        if cap:
            return min(int(cap) * 3 // 4, 96 * 1024 * 1024)
    except Exception:
        pass
    return 48 * 1024 * 1024     # safe everywhere (v7x has 64 MiB per core)


_VMEM_LIMIT = _vmem_limit_bytes()


def _pick_b_tile(N, H, W, C, P, vmem_limit):
    """Batch-tile size: as big as the double-buffered blocks allow, but keep
    >= ~8 grid steps when possible so the software pipeline has work to hide
    DMA behind (and both v7x TensorCores get several steps each)."""
    in_b = C * H * W * 4            # f32 input / residual block
    raw_b = P * H * W * 2           # bf16 intermediate block
    out_b = C * H * W * 4           # f32 output block
    pad_b = (H + 2) * (W + 2) * max(C, P) * 2
    per_sample = 2 * (in_b + raw_b) + 2 * (raw_b + in_b + out_b) + pad_b
    budget = vmem_limit // 2        # headroom for weights / stats / temporaries
    bt = max(1, min(N, budget // max(per_sample, 1), pl.cdiv(N, 8)))
    while N % bt:                   # need an even split of the batch
        bt -= 1
    return bt


# ----------------------------- in-kernel helpers ---------------------------

def _zero_halo(pad_ref):
    """Zero only the 1-wide conv halo of the persistent VMEM scratch.

    The interior is fully rewritten every grid step, so re-zeroing it would be
    pure redundant stores (vst is a scarce slot).  The halo is re-zeroed every
    step (cheap) instead of only at program_id==0 so the kernel stays correct
    when the "parallel" batch grid is sharded across TensorCores, each of
    which owns its own scratch instance."""
    bt, H2, W2, C = pad_ref.shape
    zrow = jnp.zeros((bt, 1, W2, C), pad_ref.dtype)
    pad_ref[:, 0:1, :, :] = zrow
    pad_ref[:, H2 - 1:H2, :, :] = zrow
    zcol = jnp.zeros((bt, H2, 1, C), pad_ref.dtype)
    pad_ref[:, :, 0:1, :] = zcol
    pad_ref[:, :, W2 - 1:W2, :] = zcol


def _conv3x3_im2col(pad_ref, w_ref, H, W):
    """3x3 conv over the zero-padded (bt, H+2, W+2, Cin) bf16 scratch as ONE
    im2col MXU matmul with K = 9*Cin (bf16 operands, f32 accumulation)."""
    bt = pad_ref.shape[0]
    Cin = pad_ref.shape[3]
    taps = [pad_ref[:, kh:kh + H, kw:kw + W, :]
            for kh in range(3) for kw in range(3)]
    patch = jnp.concatenate(taps, axis=-1).reshape(bt * H * W, 9 * Cin)
    return jnp.dot(patch, w_ref[...], preferred_element_type=jnp.float32)


def _channel_stats(y):
    """Per-tile per-channel [sum, sum_sq] of y (rows, P) — exact f32 adds
    (no reduced-precision matmul on the variance path)."""
    s = jnp.sum(y, axis=0, keepdims=True)
    s2 = jnp.sum(y * y, axis=0, keepdims=True)
    return jnp.concatenate([s, s2], axis=0)              # (2, P)


def _store_chw(raw_ref, y, bt, HW):
    """Store the conv result channel-major, (bt, P, H*W) bf16: lane-dense in
    H*W (a multiple of 128 for realistic spatial sizes) -> unmasked stores /
    large contiguous DMA instead of Cout-wide masked partial stores."""
    P = raw_ref.shape[1]
    y3 = y.reshape(bt, HW, P)
    for b in range(bt):                     # static unroll; b_tile is small
        raw_ref[b] = y3[b].T.astype(raw_ref.dtype)


def _scale_shift(stats_ref, g_ref, b_ref, inv_count):
    """Fold the two-pass batch statistics + gamma/beta into one per-channel
    scale/shift.  Recomputed in-kernel (a few hundred FLOPs per step) so no
    tiny XLA reduction dispatch sits between the pallas_calls."""
    s = jnp.sum(stats_ref[...], axis=0)                  # (2, P)
    mean = s[0:1, :] * inv_count
    var = jnp.maximum(s[1:2, :] * inv_count - mean * mean, 0.0)
    scale = g_ref[...] * lax.rsqrt(var + BN_EPS)         # (1, P)
    shift = b_ref[...] - mean * scale
    return scale, shift


# ------------------------------ kernel bodies ------------------------------

def _conv1_kernel(x_ref, w_ref, raw_ref, stats_ref, pad_ref, *, H, W):
    # x_ref:     (bt, C, H*W)  f32   NCHW-flat input block
    # w_ref:     (9*C, P)      bf16  flattened (kh, kw, ci) conv1 weights
    # raw_ref:   (bt, P, H*W)  bf16  raw (pre-BN) conv1 output, lane-dense
    # stats_ref: (1, 2, P)     f32   per-tile [sum, sum_sq] for BN1
    bt, C, HW = x_ref.shape
    _zero_halo(pad_ref)
    for b in range(bt):
        pad_ref[b, 1:H + 1, 1:W + 1, :] = (
            x_ref[b].T.reshape(H, W, C).astype(pad_ref.dtype))
    y = _conv3x3_im2col(pad_ref, w_ref, H, W)            # (bt*HW, P) f32
    stats_ref[...] = _channel_stats(y).reshape(1, 2, y.shape[1])
    _store_chw(raw_ref, y, bt, HW)


def _bn1_act_conv2_kernel(raw1_ref, stats1_ref, g_ref, b_ref, w_ref,
                          raw2_ref, stats2_ref, pad_ref, *, H, W, inv_count):
    # Fuses BN1-apply + LeakyReLU with conv2: the normalized intermediate
    # never round-trips through HBM.
    bt, P, HW = raw1_ref.shape
    scale, shift = _scale_shift(stats1_ref, g_ref, b_ref, inv_count)  # (1, P)
    _zero_halo(pad_ref)
    for b in range(bt):
        v = _leaky_relu(raw1_ref[b].astype(jnp.float32).T * scale + shift)
        pad_ref[b, 1:H + 1, 1:W + 1, :] = v.reshape(H, W, P).astype(pad_ref.dtype)
    y = _conv3x3_im2col(pad_ref, w_ref, H, W)            # (bt*HW, P) f32
    stats2_ref[...] = _channel_stats(y).reshape(1, 2, P)
    _store_chw(raw2_ref, y, bt, HW)


def _bn2_residual_kernel(raw2_ref, stats2_ref, g_ref, b_ref, res_ref, out_ref,
                         *, inv_count):
    # BN2-apply + residual add + LeakyReLU in NCHW-flat (C, H*W) layout: the
    # per-channel scale/shift is a sublane broadcast (no jnp.tile through HBM)
    # and the output block is lane-dense along H*W.
    P = raw2_ref.shape[1]
    scale, shift = _scale_shift(stats2_ref, g_ref, b_ref, inv_count)  # (1, P)
    sc = scale.reshape(P, 1)
    sh = shift.reshape(P, 1)
    out_ref[...] = _leaky_relu(
        raw2_ref[...].astype(jnp.float32) * sc + sh + res_ref[...])


# --------------------------------- wrapper ---------------------------------

def basic_block_forward(x_nchw, params, *, b_tile=None):
    """BasicBlock forward (stride=1, downsample=None), NCHW in / NCHW out.

    All kernels work on NCHW-flat (C, H*W) views, so the wrapper only reshapes
    (free) — no layout transposes through HBM."""
    N, C, H, W = x_nchw.shape
    w1, w2 = params["w1"], params["w2"]
    P = w1.shape[-1]
    assert C == P, "downsample=None requires inplanes == planes"
    HW = H * W
    count = N * HW
    inv_count = 1.0 / count

    # bf16 MXU operands; accumulation stays f32 inside the kernels.
    w1_flat = w1.reshape(9 * C, P).astype(jnp.bfloat16)
    w2_flat = w2.reshape(9 * P, P).astype(jnp.bfloat16)

    if b_tile is None:
        b_tile = _pick_b_tile(N, H, W, C, P, _VMEM_LIMIT)
    assert N % b_tile == 0, (N, b_tile)
    G = N // b_tile

    x_flat = x_nchw.reshape(N, C, HW)        # row-major collapse: free

    cparams = pltpu.CompilerParams(
        dimension_semantics=("parallel",),   # shard batch grid across TCs
        vmem_limit_bytes=_VMEM_LIMIT)
    conv_flops = 2 * count * 9 * C * P
    act_f32 = count * C * 4
    raw_bf16 = count * P * 2

    # ---- stage 1: conv1 + per-tile BN1 partial sums ------------------------
    raw1, stats1 = pl.pallas_call(
        functools.partial(_conv1_kernel, H=H, W=W),
        grid=(G,),
        in_specs=[
            pl.BlockSpec((b_tile, C, HW), lambda n: (n, 0, 0)),
            pl.BlockSpec((9 * C, P), lambda n: (0, 0)),
        ],
        out_specs=[
            pl.BlockSpec((b_tile, P, HW), lambda n: (n, 0, 0)),
            pl.BlockSpec((1, 2, P), lambda n: (n, 0, 0)),
        ],
        out_shape=[
            jax.ShapeDtypeStruct((N, P, HW), jnp.bfloat16),
            jax.ShapeDtypeStruct((G, 2, P), jnp.float32),
        ],
        scratch_shapes=[pltpu.VMEM((b_tile, H + 2, W + 2, C), jnp.bfloat16)],
        compiler_params=cparams,
        cost_estimate=pl.CostEstimate(
            flops=conv_flops + 4 * count * P, transcendentals=0,
            bytes_accessed=act_f32 + raw_bf16 + w1_flat.size * 2),
    )(x_flat, w1_flat)

    # ---- stage 2: BN1-apply + LeakyReLU + conv2 + BN2 partial sums ---------
    raw2, stats2 = pl.pallas_call(
        functools.partial(_bn1_act_conv2_kernel, H=H, W=W, inv_count=inv_count),
        grid=(G,),
        in_specs=[
            pl.BlockSpec((b_tile, P, HW), lambda n: (n, 0, 0)),
            pl.BlockSpec((G, 2, P), lambda n: (0, 0, 0)),
            pl.BlockSpec((1, P), lambda n: (0, 0)),
            pl.BlockSpec((1, P), lambda n: (0, 0)),
            pl.BlockSpec((9 * P, P), lambda n: (0, 0)),
        ],
        out_specs=[
            pl.BlockSpec((b_tile, P, HW), lambda n: (n, 0, 0)),
            pl.BlockSpec((1, 2, P), lambda n: (n, 0, 0)),
        ],
        out_shape=[
            jax.ShapeDtypeStruct((N, P, HW), jnp.bfloat16),
            jax.ShapeDtypeStruct((G, 2, P), jnp.float32),
        ],
        scratch_shapes=[pltpu.VMEM((b_tile, H + 2, W + 2, P), jnp.bfloat16)],
        compiler_params=cparams,
        cost_estimate=pl.CostEstimate(
            flops=conv_flops + 10 * count * P, transcendentals=0,
            bytes_accessed=2 * raw_bf16 + w2_flat.size * 2),
    )(raw1, stats1, params["gamma1"], params["beta1"], w2_flat)

    # ---- stage 3: BN2-apply + residual + LeakyReLU (lane-dense output) -----
    out_flat = pl.pallas_call(
        functools.partial(_bn2_residual_kernel, inv_count=inv_count),
        grid=(G,),
        in_specs=[
            pl.BlockSpec((b_tile, P, HW), lambda n: (n, 0, 0)),
            pl.BlockSpec((G, 2, P), lambda n: (0, 0, 0)),
            pl.BlockSpec((1, P), lambda n: (0, 0)),
            pl.BlockSpec((1, P), lambda n: (0, 0)),
            pl.BlockSpec((b_tile, C, HW), lambda n: (n, 0, 0)),
        ],
        out_specs=pl.BlockSpec((b_tile, C, HW), lambda n: (n, 0, 0)),
        out_shape=jax.ShapeDtypeStruct((N, C, HW), jnp.float32),
        compiler_params=cparams,
        cost_estimate=pl.CostEstimate(
            flops=6 * count * P, transcendentals=0,
            bytes_accessed=raw_bf16 + 2 * act_f32),
    )(raw2, stats2, params["gamma2"], params["beta2"], x_flat)

    return out_flat.reshape(N, C, H, W)


# ----------------------- deterministic parameter init ----------------------

def init_params(key, inplanes, planes):
    ks = jax.random.split(key, 6)
    # PyTorch conv weights are (Cout, Cin, 3, 3); the kernels use HWIO.
    w1_t = jax.random.normal(ks[0], (planes, inplanes, 3, 3), jnp.float32) * 0.1
    w2_t = jax.random.normal(ks[1], (planes, planes, 3, 3), jnp.float32) * 0.1
    return {
        "w1": jnp.transpose(w1_t, (2, 3, 1, 0)),
        "w2": jnp.transpose(w2_t, (2, 3, 1, 0)),
        "gamma1": 1.0 + 0.1 * jax.random.normal(ks[2], (1, planes), jnp.float32),
        "beta1": 0.1 * jax.random.normal(ks[3], (1, planes), jnp.float32),
        "gamma2": 1.0 + 0.1 * jax.random.normal(ks[4], (1, planes), jnp.float32),
        "beta2": 0.1 * jax.random.normal(ks[5], (1, planes), jnp.float32),
    }


# ---------------------------- pure-JAX reference ---------------------------

def _ref_forward(x_nchw, params):
    def conv(x, w_hwio):
        return lax.conv_general_dilated(
            x, w_hwio, window_strides=(1, 1), padding=((1, 1), (1, 1)),
            dimension_numbers=("NHWC", "HWIO", "NHWC"))

    def bn(x, gamma, beta):
        mean = jnp.mean(x, axis=(0, 1, 2), keepdims=True)
        var = jnp.mean(jnp.square(x - mean), axis=(0, 1, 2), keepdims=True)
        return ((x - mean) * lax.rsqrt(var + BN_EPS)
                * gamma.reshape(1, 1, 1, -1) + beta.reshape(1, 1, 1, -1))

    x = jnp.transpose(x_nchw, (0, 2, 3, 1))
    y = _leaky_relu(bn(conv(x, params["w1"]), params["gamma1"], params["beta1"]))
    y = bn(conv(y, params["w2"]), params["gamma2"], params["beta2"]) + x
    return jnp.transpose(_leaky_relu(y), (0, 3, 1, 2))


# ----------------------------------- main -----------------------------------

if __name__ == "__main__":
    N, C, H, W = 2, 4, 16, 16   # inplanes == planes == 4 (required: downsample=None)
    key = jax.random.PRNGKey(0)
    kx, kp = jax.random.split(key)
    x = jax.random.normal(kx, (N, C, H, W), jnp.float32)
    params = init_params(kp, C, C)

    fwd = jax.jit(basic_block_forward)
    out = jax.block_until_ready(fwd(x, params))
    ref = jax.block_until_ready(_ref_forward(x, params))

    assert out.shape == (N, C, H, W), out.shape
    max_err = float(jnp.max(jnp.abs(out - ref)))
    # bf16 MXU operands + bf16 HBM intermediates (f32 accumulation / stats)
    # through two 3x3 convs plus BN give ~1e-2-scale absolute error vs the
    # all-f32 reference; tolerance is set accordingly.
    assert jnp.allclose(out, ref, atol=5e-2, rtol=2e-2), f"max_err={max_err}"
    print("KERNEL_OK")
</pallas_src>

<mosaic_0001>
module attributes {stable_mosaic.version = 11 : i64} {
  func.func @_conv1_kernel(%arg0: i32, %arg1: memref<1x4x256xf32, #tpu.memory_space<vmem>>, %arg2: memref<36x4xbf16, #tpu.memory_space<vmem>>, %arg3: memref<1x4x256xbf16, #tpu.memory_space<vmem>>, %arg4: memref<1x2x4xf32, #tpu.memory_space<vmem>>, %arg5: memref<1x18x18x4xbf16, #tpu.memory_space<vmem>>) attributes {dimension_semantics = [#tpu.dimension_semantics<parallel>], iteration_bounds = array<i64: 2>, scalar_prefetch = 0 : i64, scratch_operands = 1 : i64, tpu.core_type = #tpu.core_type<tc>, window_params = [{transform_indices = @transform_0, window_bounds = array<i64: 1, 4, 256>}, {pipeline_mode = #tpu.pipeline_mode<synchronous>, transform_indices = @transform_1, window_bounds = array<i64: 36, 4>}, {transform_indices = @transform_2, window_bounds = array<i64: 1, 4, 256>}, {transform_indices = @transform_3, window_bounds = array<i64: 1, 2, 4>}]} {
    %cst = arith.constant 0.000000e+00 : bf16
    %0 = vector.broadcast %cst : bf16 to vector<1x1x18x4xbf16>
    %c0 = arith.constant 0 : index
    %c0_0 = arith.constant 0 : index
    %c0_1 = arith.constant 0 : index
    %c0_2 = arith.constant 0 : index
    %1 = vector.load %arg5[%c0, %c0_0, %c0_1, %c0_2] : memref<1x18x18x4xbf16, #tpu.memory_space<vmem>>, vector<1x1x18x4xbf16>
    tpu.vector_store %arg5[%c0, %c0_0, %c0_1, %c0_2], %0 {strides = array<i32>} : memref<1x18x18x4xbf16, #tpu.memory_space<vmem>>, vector<1x1x18x4xbf16>,
    %c0_3 = arith.constant 0 : index
    %c17 = arith.constant 17 : index
    %c0_4 = arith.constant 0 : index
    %c0_5 = arith.constant 0 : index
    %2 = vector.load %arg5[%c0_3, %c17, %c0_4, %c0_5] : memref<1x18x18x4xbf16, #tpu.memory_space<vmem>>, vector<1x1x18x4xbf16>
    tpu.vector_store %arg5[%c0_3, %c17, %c0_4, %c0_5], %0 {strides = array<i32>} : memref<1x18x18x4xbf16, #tpu.memory_space<vmem>>, vector<1x1x18x4xbf16>,
    %cst_6 = arith.constant 0.000000e+00 : bf16
    %3 = vector.broadcast %cst_6 : bf16 to vector<1x18x1x4xbf16>
    %c0_7 = arith.constant 0 : index
    %c0_8 = arith.constant 0 : index
    %c0_9 = arith.constant 0 : index
    %c0_10 = arith.constant 0 : index
    %4 = vector.load %arg5[%c0_7, %c0_8, %c0_9, %c0_10] : memref<1x18x18x4xbf16, #tpu.memory_space<vmem>>, vector<1x18x1x4xbf16>
    tpu.vector_store %arg5[%c0_7, %c0_8, %c0_9, %c0_10], %3 {strides = array<i32>} : memref<1x18x18x4xbf16, #tpu.memory_space<vmem>>, vector<1x18x1x4xbf16>,
    %c0_11 = arith.constant 0 : index
    %c0_12 = arith.constant 0 : index
    %c17_13 = arith.constant 17 : index
    %c0_14 = arith.constant 0 : index
    %5 = vector.load %arg5[%c0_11, %c0_12, %c17_13, %c0_14] : memref<1x18x18x4xbf16, #tpu.memory_space<vmem>>, vector<1x18x1x4xbf16>
    tpu.vector_store %arg5[%c0_11, %c0_12, %c17_13, %c0_14], %3 {strides = array<i32>} : memref<1x18x18x4xbf16, #tpu.memory_space<vmem>>, vector<1x18x1x4xbf16>,
    %c0_15 = arith.constant 0 : index
    %c0_16 = arith.constant 0 : index
    %c0_17 = arith.constant 0 : index
    %6 = vector.load %arg1[%c0_15, %c0_16, %c0_17] : memref<1x4x256xf32, #tpu.memory_space<vmem>>, vector<1x4x256xf32>
    %7 = vector.shape_cast %6 : vector<1x4x256xf32> to vector<4x256xf32>
    %8 = tpu.transpose %7, [1, 0] : vector<4x256xf32> -> vector<256x4xf32>
    %9 = vector.shape_cast %8 : vector<256x4xf32> to vector<16x16x4xf32>
    %10 = arith.truncf %9 : vector<16x16x4xf32> to vector<16x16x4xbf16>
    %c0_18 = arith.constant 0 : index
    %c1 = arith.constant 1 : index
    %c1_19 = arith.constant 1 : index
    %c0_20 = arith.constant 0 : index
    %11 = vector.load %arg5[%c0_18, %c1, %c1_19, %c0_20] : memref<1x18x18x4xbf16, #tpu.memory_space<vmem>>, vector<1x16x16x4xbf16>
    %12 = vector.shape_cast %11 : vector<1x16x16x4xbf16> to vector<16x16x4xbf16>
    %13 = vector.shape_cast %10 : vector<16x16x4xbf16> to vector<1x16x16x4xbf16>
    tpu.vector_store %arg5[%c0_18, %c1, %c1_19, %c0_20], %13 {strides = array<i32>} : memref<1x18x18x4xbf16, #tpu.memory_space<vmem>>, vector<1x16x16x4xbf16>,
    %c0_21 = arith.constant 0 : index
    %c0_22 = arith.constant 0 : index
    %c0_23 = arith.constant 0 : index
    %c0_24 = arith.constant 0 : index
    %14 = vector.load %arg5[%c0_21, %c0_22, %c0_23, %c0_24] : memref<1x18x18x4xbf16, #tpu.memory_space<vmem>>, vector<1x16x16x4xbf16>
    %c0_25 = arith.constant 0 : index
    %c0_26 = arith.constant 0 : index
    %c1_27 = arith.constant 1 : index
    %c0_28 = arith.constant 0 : index
    %15 = vector.load %arg5[%c0_25, %c0_26, %c1_27, %c0_28] : memref<1x18x18x4xbf16, #tpu.memory_space<vmem>>, vector<1x16x16x4xbf16>
    %c0_29 = arith.constant 0 : index
    %c0_30 = arith.constant 0 : index
    %c2 = arith.constant 2 : index
    %c0_31 = arith.constant 0 : index
    %16 = vector.load %arg5[%c0_29, %c0_30, %c2, %c0_31] : memref<1x18x18x4xbf16, #tpu.memory_space<vmem>>, vector<1x16x16x4xbf16>
    %c0_32 = arith.constant 0 : index
    %c1_33 = arith.constant 1 : index
    %c0_34 = arith.constant 0 : index
    %c0_35 = arith.constant 0 : index
    %17 = vector.load %arg5[%c0_32, %c1_33, %c0_34, %c0_35] : memref<1x18x18x4xbf16, #tpu.memory_space<vmem>>, vector<1x16x16x4xbf16>
    %c0_36 = arith.constant 0 : index
    %c1_37 = arith.constant 1 : index
    %c1_38 = arith.constant 1 : index
    %c0_39 = arith.constant 0 : index
    %18 = vector.load %arg5[%c0_36, %c1_37, %c1_38, %c0_39] : memref<1x18x18x4xbf16, #tpu.memory_space<vmem>>, vector<1x16x16x4xbf16>
    %c0_40 = arith.constant 0 : index
    %c1_41 = arith.constant 1 : index
    %c2_42 = arith.constant 2 : index
    %c0_43 = arith.constant 0 : index
    %19 = vector.load %arg5[%c0_40, %c1_41, %c2_42, %c0_43] : memref<1x18x18x4xbf16, #tpu.memory_space<vmem>>, vector<1x16x16x4xbf16>
    %c0_44 = arith.constant 0 : index
    %c2_45 = arith.constant 2 : index
    %c0_46 = arith.constant 0 : index
    %c0_47 = arith.constant 0 : index
    %20 = vector.load %arg5[%c0_44, %c2_45, %c0_46, %c0_47] : memref<1x18x18x4xbf16, #tpu.memory_space<vmem>>, vector<1x16x16x4xbf16>
    %c0_48 = arith.constant 0 : index
    %c2_49 = arith.constant 2 : index
    %c1_50 = arith.constant 1 : index
    %c0_51 = arith.constant 0 : index
    %21 = vector.load %arg5[%c0_48, %c2_49, %c1_50, %c0_51] : memref<1x18x18x4xbf16, #tpu.memory_space<vmem>>, vector<1x16x16x4xbf16>
    %c0_52 = arith.constant 0 : index
    %c2_53 = arith.constant 2 : index
    %c2_54 = arith.constant 2 : index
    %c0_55 = arith.constant 0 : index
    %22 = vector.load %arg5[%c0_52, %c2_53, %c2_54, %c0_55] : memref<1x18x18x4xbf16, #tpu.memory_space<vmem>>, vector<1x16x16x4xbf16>
    %23 = tpu.concatenate %14, %15, %16, %17, %18, %19, %20, %21, %22 in 3 : vector<1x16x16x4xbf16>, vector<1x16x16x4xbf16>, vector<1x16x16x4xbf16>, vector<1x16x16x4xbf16>, vector<1x16x16x4xbf16>, vector<1x16x16x4xbf16>, vector<1x16x16x4xbf16>, vector<1x16x16x4xbf16>, vector<1x16x16x4xbf16> -> vector<1x16x16x36xbf16>
    %24 = vector.shape_cast %23 : vector<1x16x16x36xbf16> to vector<256x36xbf16>
    %c0_56 = arith.constant 0 : index
    %c0_57 = arith.constant 0 : index
    %25 = vector.load %arg2[%c0_56, %c0_57] : memref<36x4xbf16, #tpu.memory_space<vmem>>, vector<36x4xbf16>
    %cst_58 = arith.constant dense<0.000000e+00> : vector<256x4xf32>
    %26 = tpu.matmul %24, %25, %cst_58 {dimension_numbers = #tpu.dot_dimension_numbers<[1], [0], [0], [1], [0, 0, 1, 1], [], []>} : vector<256x36xbf16>, vector<36x4xbf16>, vector<256x4xf32> -> vector<256x4xf32>
    %cst_59 = arith.constant dense<0.000000e+00> : vector<4xf32>
    %27 = vector.multi_reduction <add>, %26, %cst_59 [0] : vector<256x4xf32> to vector<4xf32>
    %28 = vector.shape_cast %27 : vector<4xf32> to vector<1x4xf32>
    %29 = arith.mulf %26, %26 : vector<256x4xf32>
    %cst_60 = arith.constant dense<0.000000e+00> : vector<4xf32>
    %30 = vector.multi_reduction <add>, %29, %cst_60 [0] : vector<256x4xf32> to vector<4xf32>
    %31 = vector.shape_cast %30 : vector<4xf32> to vector<1x4xf32>
    %32 = tpu.concatenate %28, %31 in 0 : vector<1x4xf32>, vector<1x4xf32> -> vector<2x4xf32>
    %33 = vector.shape_cast %32 : vector<2x4xf32> to vector<1x2x4xf32>
    %c0_61 = arith.constant 0 : index
    %c0_62 = arith.constant 0 : index
    %c0_63 = arith.constant 0 : index
    %34 = vector.load %arg4[%c0_61, %c0_62, %c0_63] : memref<1x2x4xf32, #tpu.memory_space<vmem>>, vector<1x2x4xf32>
    tpu.vector_store %arg4[%c0_61, %c0_62, %c0_63], %33 {strides = array<i32>} : memref<1x2x4xf32, #tpu.memory_space<vmem>>, vector<1x2x4xf32>,
    %35 = vector.shape_cast %26 : vector<256x4xf32> to vector<1x256x4xf32>
    %36 = vector.shape_cast %35 : vector<1x256x4xf32> to vector<256x4xf32>
    %37 = tpu.transpose %36, [1, 0] : vector<256x4xf32> -> vector<4x256xf32>
    %38 = arith.truncf %37 : vector<4x256xf32> to vector<4x256xbf16>
    %c0_64 = arith.constant 0 : index
    %c0_65 = arith.constant 0 : index
    %c0_66 = arith.constant 0 : index
    %39 = vector.load %arg3[%c0_64, %c0_65, %c0_66] : memref<1x4x256xbf16, #tpu.memory_space<vmem>>, vector<1x4x256xbf16>
    %40 = vector.shape_cast %39 : vector<1x4x256xbf16> to vector<4x256xbf16>
    %41 = vector.shape_cast %38 : vector<4x256xbf16> to vector<1x4x256xbf16>
    tpu.vector_store %arg3[%c0_64, %c0_65, %c0_66], %41 {strides = array<i32>} : memref<1x4x256xbf16, #tpu.memory_space<vmem>>, vector<1x4x256xbf16>,
    return
  }
  func.func @transform_0(%arg0: i32) -> (i32, i32, i32) {
    %c0_i32 = arith.constant 0 : i32
    %c0_i32_0 = arith.constant 0 : i32
    %c0_i32_1 = arith.constant 0 : i32
    return %arg0, %c0_i32, %c0_i32_0 : i32, i32, i32
  }
  func.func @transform_1(%arg0: i32) -> (i32, i32) {
    %c0_i32 = arith.constant 0 : i32
    %c0_i32_0 = arith.constant 0 : i32
    %c0_i32_1 = arith.constant 0 : i32
    return %c0_i32, %c0_i32_0 : i32, i32
  }
  func.func @transform_2(%arg0: i32) -> (i32, i32, i32) {
    %c0_i32 = arith.constant 0 : i32
    %c0_i32_0 = arith.constant 0 : i32
    %c0_i32_1 = arith.constant 0 : i32
    return %arg0, %c0_i32, %c0_i32_0 : i32, i32, i32
  }
  func.func @transform_3(%arg0: i32) -> (i32, i32, i32) {
    %c0_i32 = arith.constant 0 : i32
    %c0_i32_0 = arith.constant 0 : i32
    %c0_i32_1 = arith.constant 0 : i32
    return %arg0, %c0_i32, %c0_i32_0 : i32, i32, i32
  }
}

module attributes {stable_mosaic.version = 11 : i64} {
  func.func @_bn2_residual_kernel(%arg0: i32, %arg1: memref<1x4x256xbf16, #tpu.memory_space<vmem>>, %arg2: memref<2x2x4xf32, #tpu.memory_space<vmem>>, %arg3: memref<1x4xf32, #tpu.memory_space<vmem>>, %arg4: memref<1x4xf32, #tpu.memory_space<vmem>>, %arg5: memref<1x4x256xf32, #tpu.memory_space<vmem>>, %arg6: memref<1x4x256xf32, #tpu.memory_space<vmem>>) attributes {dimension_semantics = [#tpu.dimension_semantics<parallel>], iteration_bounds = array<i64: 2>, scalar_prefetch = 0 : i64, scratch_operands = 0 : i64, tpu.core_type = #tpu.core_type<tc>, window_params = [{transform_indices = @transform_0, window_bounds = array<i64: 1, 4, 256>}, {pipeline_mode = #tpu.pipeline_mode<synchronous>, transform_indices = @transform_1, window_bounds = array<i64: 2, 2, 4>}, {pipeline_mode = #tpu.pipeline_mode<synchronous>, transform_indices = @transform_2, window_bounds = array<i64: 1, 4>}, {pipeline_mode = #tpu.pipeline_mode<synchronous>, transform_indices = @transform_3, window_bounds = array<i64: 1, 4>}, {transform_indices = @transform_4, window_bounds = array<i64: 1, 4, 256>}, {transform_indices = @transform_5, window_bounds = array<i64: 1, 4, 256>}]} {
    %c0 = arith.constant 0 : index
    %c0_0 = arith.constant 0 : index
    %c0_1 = arith.constant 0 : index
    %0 = vector.load %arg2[%c0, %c0_0, %c0_1] : memref<2x2x4xf32, #tpu.memory_space<vmem>>, vector<2x2x4xf32>
    %cst = arith.constant dense<0.000000e+00> : vector<2x4xf32>
    %1 = vector.multi_reduction <add>, %0, %cst [0] : vector<2x2x4xf32> to vector<2x4xf32>
    %2 = vector.extract_strided_slice %1 {offsets = [0, 0], sizes = [1, 4], strides = [1, 1]} : vector<2x4xf32> to vector<1x4xf32>
    %cst_2 = arith.constant 0.001953125 : f32
    %3 = vector.broadcast %cst_2 : f32 to vector<1x4xf32>
    %4 = arith.mulf %2, %3 : vector<1x4xf32>
    %5 = vector.extract_strided_slice %1 {offsets = [1, 0], sizes = [1, 4], strides = [1, 1]} : vector<2x4xf32> to vector<1x4xf32>
    %cst_3 = arith.constant 0.001953125 : f32
    %6 = vector.broadcast %cst_3 : f32 to vector<1x4xf32>
    %7 = arith.mulf %5, %6 : vector<1x4xf32>
    %8 = arith.mulf %4, %4 : vector<1x4xf32>
    %9 = arith.subf %7, %8 : vector<1x4xf32>
    %cst_4 = arith.constant 0.000000e+00 : f32
    %10 = vector.broadcast %cst_4 : f32 to vector<1x4xf32>
    %11 = arith.maximumf %9, %10 : vector<1x4xf32>
    %c0_5 = arith.constant 0 : index
    %c0_6 = arith.constant 0 : index
    %12 = vector.load %arg3[%c0_5, %c0_6] : memref<1x4xf32, #tpu.memory_space<vmem>>, vector<1x4xf32>
    %cst_7 = arith.constant 9.99999974E-6 : f32
    %13 = vector.broadcast %cst_7 : f32 to vector<1x4xf32>
    %14 = arith.addf %11, %13 : vector<1x4xf32>
    %15 = math.rsqrt %14 : vector<1x4xf32>
    %16 = arith.mulf %12, %15 : vector<1x4xf32>
    %c0_8 = arith.constant 0 : index
    %c0_9 = arith.constant 0 : index
    %17 = vector.load %arg4[%c0_8, %c0_9] : memref<1x4xf32, #tpu.memory_space<vmem>>, vector<1x4xf32>
    %18 = arith.mulf %4, %16 : vector<1x4xf32>
    %19 = arith.subf %17, %18 : vector<1x4xf32>
    %20 = vector.shape_cast %16 : vector<1x4xf32> to vector<4x1xf32>
    %21 = vector.shape_cast %19 : vector<1x4xf32> to vector<4x1xf32>
    %c0_10 = arith.constant 0 : index
    %c0_11 = arith.constant 0 : index
    %c0_12 = arith.constant 0 : index
    %22 = vector.load %arg1[%c0_10, %c0_11, %c0_12] : memref<1x4x256xbf16, #tpu.memory_space<vmem>>, vector<1x4x256xbf16>
    %23 = arith.extf %22 : vector<1x4x256xbf16> to vector<1x4x256xf32>
    %24 = vector.shape_cast %20 : vector<4x1xf32> to vector<1x4x1xf32>
    %25 = vector.broadcast %24 : vector<1x4x1xf32> to vector<1x4x256xf32>
    %26 = arith.mulf %23, %25 : vector<1x4x256xf32>
    %27 = vector.shape_cast %21 : vector<4x1xf32> to vector<1x4x1xf32>
    %28 = vector.broadcast %27 : vector<1x4x1xf32> to vector<1x4x256xf32>
    %29 = arith.addf %26, %28 : vector<1x4x256xf32>
    %c0_13 = arith.constant 0 : index
    %c0_14 = arith.constant 0 : index
    %c0_15 = arith.constant 0 : index
    %30 = vector.load %arg5[%c0_13, %c0_14, %c0_15] : memref<1x4x256xf32, #tpu.memory_space<vmem>>, vector<1x4x256xf32>
    %31 = arith.addf %29, %30 : vector<1x4x256xf32>
    %cst_16 = arith.constant 0.000000e+00 : f32
    %32 = vector.broadcast %cst_16 : f32 to vector<1x4x256xf32>
    %33 = arith.cmpf oge, %31, %32 : vector<1x4x256xf32>
    %cst_17 = arith.constant 0.00999999977 : f32
    %34 = vector.broadcast %cst_17 : f32 to vector<1x4x256xf32>
    %35 = arith.mulf %34, %31 : vector<1x4x256xf32>
    %36 = arith.select %33, %31, %35 : vector<1x4x256xi1>, vector<1x4x256xf32>
    %c0_18 = arith.constant 0 : index
    %c0_19 = arith.constant 0 : index
    %c0_20 = arith.constant 0 : index
    %37 = vector.load %arg6[%c0_18, %c0_19, %c0_20] : memref<1x4x256xf32, #tpu.memory_space<vmem>>, vector<1x4x256xf32>
    tpu.vector_store %arg6[%c0_18, %c0_19, %c0_20], %36 {strides = array<i32>} : memref<1x4x256xf32, #tpu.memory_space<vmem>>, vector<1x4x256xf32>,
    return
  }
  func.func @transform_0(%arg0: i32) -> (i32, i32, i32) {
    %c0_i32 = arith.constant 0 : i32
    %c0_i32_0 = arith.constant 0 : i32
    %c0_i32_1 = arith.constant 0 : i32
    return %arg0, %c0_i32, %c0_i32_0 : i32, i32, i32
  }
  func.func @transform_1(%arg0: i32) -> (i32, i32, i32) {
    %c0_i32 = arith.constant 0 : i32
    %c0_i32_0 = arith.constant 0 : i32
    %c0_i32_1 = arith.constant 0 : i32
    %c0_i32_2 = arith.constant 0 : i32
    return %c0_i32, %c0_i32_0, %c0_i32_1 : i32, i32, i32
  }
  func.func @transform_2(%arg0: i32) -> (i32, i32) {
    %c0_i32 = arith.constant 0 : i32
    %c0_i32_0 = arith.constant 0 : i32
    %c0_i32_1 = arith.constant 0 : i32
    return %c0_i32, %c0_i32_0 : i32, i32
  }
  func.func @transform_3(%arg0: i32) -> (i32, i32) {
    %c0_i32 = arith.constant 0 : i32
    %c0_i32_0 = arith.constant 0 : i32
    %c0_i32_1 = arith.constant 0 : i32
    return %c0_i32, %c0_i32_0 : i32, i32
  }
  func.func @transform_4(%arg0: i32) -> (i32, i32, i32) {
    %c0_i32 = arith.constant 0 : i32
    %c0_i32_0 = arith.constant 0 : i32
    %c0_i32_1 = arith.constant 0 : i32
    return %arg0, %c0_i32, %c0_i32_0 : i32, i32, i32
  }
  func.func @transform_5(%arg0: i32) -> (i32, i32, i32) {
    %c0_i32 = arith.constant 0 : i32
    %c0_i32_0 = arith.constant 0 : i32
    %c0_i32_1 = arith.constant 0 : i32
    return %arg0, %c0_i32, %c0_i32_0 : i32, i32, i32
  }
}

module attributes {stable_mosaic.version = 11 : i64} {
  func.func @_bn1_act_conv2_kernel(%arg0: i32, %arg1: memref<1x4x256xbf16, #tpu.memory_space<vmem>>, %arg2: memref<2x2x4xf32, #tpu.memory_space<vmem>>, %arg3: memref<1x4xf32, #tpu.memory_space<vmem>>, %arg4: memref<1x4xf32, #tpu.memory_space<vmem>>, %arg5: memref<36x4xbf16, #tpu.memory_space<vmem>>, %arg6: memref<1x4x256xbf16, #tpu.memory_space<vmem>>, %arg7: memref<1x2x4xf32, #tpu.memory_space<vmem>>, %arg8: memref<1x18x18x4xbf16, #tpu.memory_space<vmem>>) attributes {dimension_semantics = [#tpu.dimension_semantics<parallel>], iteration_bounds = array<i64: 2>, scalar_prefetch = 0 : i64, scratch_operands = 1 : i64, tpu.core_type = #tpu.core_type<tc>, window_params = [{transform_indices = @transform_0, window_bounds = array<i64: 1, 4, 256>}, {pipeline_mode = #tpu.pipeline_mode<synchronous>, transform_indices = @transform_1, window_bounds = array<i64: 2, 2, 4>}, {pipeline_mode = #tpu.pipeline_mode<synchronous>, transform_indices = @transform_2, window_bounds = array<i64: 1, 4>}, {pipeline_mode = #tpu.pipeline_mode<synchronous>, transform_indices = @transform_3, window_bounds = array<i64: 1, 4>}, {pipeline_mode = #tpu.pipeline_mode<synchronous>, transform_indices = @transform_4, window_bounds = array<i64: 36, 4>}, {transform_indices = @transform_5, window_bounds = array<i64: 1, 4, 256>}, {transform_indices = @transform_6, window_bounds = array<i64: 1, 2, 4>}]} {
    %c0 = arith.constant 0 : index
    %c0_0 = arith.constant 0 : index
    %c0_1 = arith.constant 0 : index
    %0 = vector.load %arg2[%c0, %c0_0, %c0_1] : memref<2x2x4xf32, #tpu.memory_space<vmem>>, vector<2x2x4xf32>
    %cst = arith.constant dense<0.000000e+00> : vector<2x4xf32>
    %1 = vector.multi_reduction <add>, %0, %cst [0] : vector<2x2x4xf32> to vector<2x4xf32>
    %2 = vector.extract_strided_slice %1 {offsets = [0, 0], sizes = [1, 4], strides = [1, 1]} : vector<2x4xf32> to vector<1x4xf32>
    %cst_2 = arith.constant 0.001953125 : f32
    %3 = vector.broadcast %cst_2 : f32 to vector<1x4xf32>
    %4 = arith.mulf %2, %3 : vector<1x4xf32>
    %5 = vector.extract_strided_slice %1 {offsets = [1, 0], sizes = [1, 4], strides = [1, 1]} : vector<2x4xf32> to vector<1x4xf32>
    %cst_3 = arith.constant 0.001953125 : f32
    %6 = vector.broadcast %cst_3 : f32 to vector<1x4xf32>
    %7 = arith.mulf %5, %6 : vector<1x4xf32>
    %8 = arith.mulf %4, %4 : vector<1x4xf32>
    %9 = arith.subf %7, %8 : vector<1x4xf32>
    %cst_4 = arith.constant 0.000000e+00 : f32
    %10 = vector.broadcast %cst_4 : f32 to vector<1x4xf32>
    %11 = arith.maximumf %9, %10 : vector<1x4xf32>
    %c0_5 = arith.constant 0 : index
    %c0_6 = arith.constant 0 : index
    %12 = vector.load %arg3[%c0_5, %c0_6] : memref<1x4xf32, #tpu.memory_space<vmem>>, vector<1x4xf32>
    %cst_7 = arith.constant 9.99999974E-6 : f32
    %13 = vector.broadcast %cst_7 : f32 to vector<1x4xf32>
    %14 = arith.addf %11, %13 : vector<1x4xf32>
    %15 = math.rsqrt %14 : vector<1x4xf32>
    %16 = arith.mulf %12, %15 : vector<1x4xf32>
    %c0_8 = arith.constant 0 : index
    %c0_9 = arith.constant 0 : index
    %17 = vector.load %arg4[%c0_8, %c0_9] : memref<1x4xf32, #tpu.memory_space<vmem>>, vector<1x4xf32>
    %18 = arith.mulf %4, %16 : vector<1x4xf32>
    %19 = arith.subf %17, %18 : vector<1x4xf32>
    %cst_10 = arith.constant 0.000000e+00 : bf16
    %20 = vector.broadcast %cst_10 : bf16 to vector<1x1x18x4xbf16>
    %c0_11 = arith.constant 0 : index
    %c0_12 = arith.constant 0 : index
    %c0_13 = arith.constant 0 : index
    %c0_14 = arith.constant 0 : index
    %21 = vector.load %arg8[%c0_11, %c0_12, %c0_13, %c0_14] : memref<1x18x18x4xbf16, #tpu.memory_space<vmem>>, vector<1x1x18x4xbf16>
    tpu.vector_store %arg8[%c0_11, %c0_12, %c0_13, %c0_14], %20 {strides = array<i32>} : memref<1x18x18x4xbf16, #tpu.memory_space<vmem>>, vector<1x1x18x4xbf16>,
    %c0_15 = arith.constant 0 : index
    %c17 = arith.constant 17 : index
    %c0_16 = arith.constant 0 : index
    %c0_17 = arith.constant 0 : index
    %22 = vector.load %arg8[%c0_15, %c17, %c0_16, %c0_17] : memref<1x18x18x4xbf16, #tpu.memory_space<vmem>>, vector<1x1x18x4xbf16>
    tpu.vector_store %arg8[%c0_15, %c17, %c0_16, %c0_17], %20 {strides = array<i32>} : memref<1x18x18x4xbf16, #tpu.memory_space<vmem>>, vector<1x1x18x4xbf16>,
    %cst_18 = arith.constant 0.000000e+00 : bf16
    %23 = vector.broadcast %cst_18 : bf16 to vector<1x18x1x4xbf16>
    %c0_19 = arith.constant 0 : index
    %c0_20 = arith.constant 0 : index
    %c0_21 = arith.constant 0 : index
    %c0_22 = arith.constant 0 : index
    %24 = vector.load %arg8[%c0_19, %c0_20, %c0_21, %c0_22] : memref<1x18x18x4xbf16, #tpu.memory_space<vmem>>, vector<1x18x1x4xbf16>
    tpu.vector_store %arg8[%c0_19, %c0_20, %c0_21, %c0_22], %23 {strides = array<i32>} : memref<1x18x18x4xbf16, #tpu.memory_space<vmem>>, vector<1x18x1x4xbf16>,
    %c0_23 = arith.constant 0 : index
    %c0_24 = arith.constant 0 : index
    %c17_25 = arith.constant 17 : index
    %c0_26 = arith.constant 0 : index
    %25 = vector.load %arg8[%c0_23, %c0_24, %c17_25, %c0_26] : memref<1x18x18x4xbf16, #tpu.memory_space<vmem>>, vector<1x18x1x4xbf16>
    tpu.vector_store %arg8[%c0_23, %c0_24, %c17_25, %c0_26], %23 {strides = array<i32>} : memref<1x18x18x4xbf16, #tpu.memory_space<vmem>>, vector<1x18x1x4xbf16>,
    %c0_27 = arith.constant 0 : index
    %c0_28 = arith.constant 0 : index
    %c0_29 = arith.constant 0 : index
    %26 = vector.load %arg1[%c0_27, %c0_28, %c0_29] : memref<1x4x256xbf16, #tpu.memory_space<vmem>>, vector<1x4x256xbf16>
    %27 = vector.shape_cast %26 : vector<1x4x256xbf16> to vector<4x256xbf16>
    %28 = arith.extf %27 : vector<4x256xbf16> to vector<4x256xf32>
    %29 = tpu.transpose %28, [1, 0] : vector<4x256xf32> -> vector<256x4xf32>
    %30 = vector.broadcast %16 : vector<1x4xf32> to vector<256x4xf32>
    %31 = arith.mulf %29, %30 : vector<256x4xf32>
    %32 = vector.broadcast %19 : vector<1x4xf32> to vector<256x4xf32>
    %33 = arith.addf %31, %32 : vector<256x4xf32>
    %cst_30 = arith.constant 0.000000e+00 : f32
    %34 = vector.broadcast %cst_30 : f32 to vector<256x4xf32>
    %35 = arith.cmpf oge, %33, %34 : vector<256x4xf32>
    %cst_31 = arith.constant 0.00999999977 : f32
    %36 = vector.broadcast %cst_31 : f32 to vector<256x4xf32>
    %37 = arith.mulf %36, %33 : vector<256x4xf32>
    %38 = arith.select %35, %33, %37 : vector<256x4xi1>, vector<256x4xf32>
    %39 = vector.shape_cast %38 : vector<256x4xf32> to vector<16x16x4xf32>
    %40 = arith.truncf %39 : vector<16x16x4xf32> to vector<16x16x4xbf16>
    %c0_32 = arith.constant 0 : index
    %c1 = arith.constant 1 : index
    %c1_33 = arith.constant 1 : index
    %c0_34 = arith.constant 0 : index
    %41 = vector.load %arg8[%c0_32, %c1, %c1_33, %c0_34] : memref<1x18x18x4xbf16, #tpu.memory_space<vmem>>, vector<1x16x16x4xbf16>
    %42 = vector.shape_cast %41 : vector<1x16x16x4xbf16> to vector<16x16x4xbf16>
    %43 = vector.shape_cast %40 : vector<16x16x4xbf16> to vector<1x16x16x4xbf16>
    tpu.vector_store %arg8[%c0_32, %c1, %c1_33, %c0_34], %43 {strides = array<i32>} : memref<1x18x18x4xbf16, #tpu.memory_space<vmem>>, vector<1x16x16x4xbf16>,
    %c0_35 = arith.constant 0 : index
    %c0_36 = arith.constant 0 : index
    %c0_37 = arith.constant 0 : index
    %c0_38 = arith.constant 0 : index
    %44 = vector.load %arg8[%c0_35, %c0_36, %c0_37, %c0_38] : memref<1x18x18x4xbf16, #tpu.memory_space<vmem>>, vector<1x16x16x4xbf16>
    %c0_39 = arith.constant 0 : index
    %c0_40 = arith.constant 0 : index
    %c1_41 = arith.constant 1 : index
    %c0_42 = arith.constant 0 : index
    %45 = vector.load %arg8[%c0_39, %c0_40, %c1_41, %c0_42] : memref<1x18x18x4xbf16, #tpu.memory_space<vmem>>, vector<1x16x16x4xbf16>
    %c0_43 = arith.constant 0 : index
    %c0_44 = arith.constant 0 : index
    %c2 = arith.constant 2 : index
    %c0_45 = arith.constant 0 : index
    %46 = vector.load %arg8[%c0_43, %c0_44, %c2, %c0_45] : memref<1x18x18x4xbf16, #tpu.memory_space<vmem>>, vector<1x16x16x4xbf16>
    %c0_46 = arith.constant 0 : index
    %c1_47 = arith.constant 1 : index
    %c0_48 = arith.constant 0 : index
    %c0_49 = arith.constant 0 : index
    %47 = vector.load %arg8[%c0_46, %c1_47, %c0_48, %c0_49] : memref<1x18x18x4xbf16, #tpu.memory_space<vmem>>, vector<1x16x16x4xbf16>
    %c0_50 = arith.constant 0 : index
    %c1_51 = arith.constant 1 : index
    %c1_52 = arith.constant 1 : index
    %c0_53 = arith.constant 0 : index
    %48 = vector.load %arg8[%c0_50, %c1_51, %c1_52, %c0_53] : memref<1x18x18x4xbf16, #tpu.memory_space<vmem>>, vector<1x16x16x4xbf16>
    %c0_54 = arith.constant 0 : index
    %c1_55 = arith.constant 1 : index
    %c2_56 = arith.constant 2 : index
    %c0_57 = arith.constant 0 : index
    %49 = vector.load %arg8[%c0_54, %c1_55, %c2_56, %c0_57] : memref<1x18x18x4xbf16, #tpu.memory_space<vmem>>, vector<1x16x16x4xbf16>
    %c0_58 = arith.constant 0 : index
    %c2_59 = arith.constant 2 : index
    %c0_60 = arith.constant 0 : index
    %c0_61 = arith.constant 0 : index
    %50 = vector.load %arg8[%c0_58, %c2_59, %c0_60, %c0_61] : memref<1x18x18x4xbf16, #tpu.memory_space<vmem>>, vector<1x16x16x4xbf16>
    %c0_62 = arith.constant 0 : index
    %c2_63 = arith.constant 2 : index
    %c1_64 = arith.constant 1 : index
    %c0_65 = arith.constant 0 : index
    %51 = vector.load %arg8[%c0_62, %c2_63, %c1_64, %c0_65] : memref<1x18x18x4xbf16, #tpu.memory_space<vmem>>, vector<1x16x16x4xbf16>
    %c0_66 = arith.constant 0 : index
    %c2_67 = arith.constant 2 : index
    %c2_68 = arith.constant 2 : index
    %c0_69 = arith.constant 0 : index
    %52 = vector.load %arg8[%c0_66, %c2_67, %c2_68, %c0_69] : memref<1x18x18x4xbf16, #tpu.memory_space<vmem>>, vector<1x16x16x4xbf16>
    %53 = tpu.concatenate %44, %45, %46, %47, %48, %49, %50, %51, %52 in 3 : vector<1x16x16x4xbf16>, vector<1x16x16x4xbf16>, vector<1x16x16x4xbf16>, vector<1x16x16x4xbf16>, vector<1x16x16x4xbf16>, vector<1x16x16x4xbf16>, vector<1x16x16x4xbf16>, vector<1x16x16x4xbf16>, vector<1x16x16x4xbf16> -> vector<1x16x16x36xbf16>
    %54 = vector.shape_cast %53 : vector<1x16x16x36xbf16> to vector<256x36xbf16>
    %c0_70 = arith.constant 0 : index
    %c0_71 = arith.constant 0 : index
    %55 = vector.load %arg5[%c0_70, %c0_71] : memref<36x4xbf16, #tpu.memory_space<vmem>>, vector<36x4xbf16>
    %cst_72 = arith.constant dense<0.000000e+00> : vector<256x4xf32>
    %56 = tpu.matmul %54, %55, %cst_72 {dimension_numbers = #tpu.dot_dimension_numbers<[1], [0], [0], [1], [0, 0, 1, 1], [], []>} : vector<256x36xbf16>, vector<36x4xbf16>, vector<256x4xf32> -> vector<256x4xf32>
    %cst_73 = arith.constant dense<0.000000e+00> : vector<4xf32>
    %57 = vector.multi_reduction <add>, %56, %cst_73 [0] : vector<256x4xf32> to vector<4xf32>
    %58 = vector.shape_cast %57 : vector<4xf32> to vector<1x4xf32>
    %59 = arith.mulf %56, %56 : vector<256x4xf32>
    %cst_74 = arith.constant dense<0.000000e+00> : vector<4xf32>
    %60 = vector.multi_reduction <add>, %59, %cst_74 [0] : vector<256x4xf32> to vector<4xf32>
    %61 = vector.shape_cast %60 : vector<4xf32> to vector<1x4xf32>
    %62 = tpu.concatenate %58, %61 in 0 : vector<1x4xf32>, vector<1x4xf32> -> vector<2x4xf32>
    %63 = vector.shape_cast %62 : vector<2x4xf32> to vector<1x2x4xf32>
    %c0_75 = arith.constant 0 : index
    %c0_76 = arith.constant 0 : index
    %c0_77 = arith.constant 0 : index
    %64 = vector.load %arg7[%c0_75, %c0_76, %c0_77] : memref<1x2x4xf32, #tpu.memory_space<vmem>>, vector<1x2x4xf32>
    tpu.vector_store %arg7[%c0_75, %c0_76, %c0_77], %63 {strides = array<i32>} : memref<1x2x4xf32, #tpu.memory_space<vmem>>, vector<1x2x4xf32>,
    %65 = vector.shape_cast %56 : vector<256x4xf32> to vector<1x256x4xf32>
    %66 = vector.shape_cast %65 : vector<1x256x4xf32> to vector<256x4xf32>
    %67 = tpu.transpose %66, [1, 0] : vector<256x4xf32> -> vector<4x256xf32>
    %68 = arith.truncf %67 : vector<4x256xf32> to vector<4x256xbf16>
    %c0_78 = arith.constant 0 : index
    %c0_79 = arith.constant 0 : index
    %c0_80 = arith.constant 0 : index
    %69 = vector.load %arg6[%c0_78, %c0_79, %c0_80] : memref<1x4x256xbf16, #tpu.memory_space<vmem>>, vector<1x4x256xbf16>
    %70 = vector.shape_cast %69 : vector<1x4x256xbf16> to vector<4x256xbf16>
    %71 = vector.shape_cast %68 : vector<4x256xbf16> to vector<1x4x256xbf16>
    tpu.vector_store %arg6[%c0_78, %c0_79, %c0_80], %71 {strides = array<i32>} : memref<1x4x256xbf16, #tpu.memory_space<vmem>>, vector<1x4x256xbf16>,
    return
  }
  func.func @transform_0(%arg0: i32) -> (i32, i32, i32) {
    %c0_i32 = arith.constant 0 : i32
    %c0_i32_0 = arith.constant 0 : i32
    %c0_i32_1 = arith.constant 0 : i32
    return %arg0, %c0_i32, %c0_i32_0 : i32, i32, i32
  }
  func.func @transform_1(%arg0: i32) -> (i32, i32, i32) {
    %c0_i32 = arith.constant 0 : i32
    %c0_i32_0 = arith.constant 0 : i32
    %c0_i32_1 = arith.constant 0 : i32
    %c0_i32_2 = arith.constant 0 : i32
    return %c0_i32, %c0_i32_0, %c0_i32_1 : i32, i32, i32
  }
  func.func @transform_2(%arg0: i32) -> (i32, i32) {
    %c0_i32 = arith.constant 0 : i32
    %c0_i32_0 = arith.constant 0 : i32
    %c0_i32_1 = arith.constant 0 : i32
    return %c0_i32, %c0_i32_0 : i32, i32
  }
  func.func @transform_3(%arg0: i32) -> (i32, i32) {
    %c0_i32 = arith.constant 0 : i32
    %c0_i32_0 = arith.constant 0 : i32
    %c0_i32_1 = arith.constant 0 : i32
    return %c0_i32, %c0_i32_0 : i32, i32
  }
  func.func @transform_4(%arg0: i32) -> (i32, i32) {
    %c0_i32 = arith.constant 0 : i32
    %c0_i32_0 = arith.constant 0 : i32
    %c0_i32_1 = arith.constant 0 : i32
    return %c0_i32, %c0_i32_0 : i32, i32
  }
  func.func @transform_5(%arg0: i32) -> (i32, i32, i32) {
    %c0_i32 = arith.constant 0 : i32
    %c0_i32_0 = arith.constant 0 : i32
    %c0_i32_1 = arith.constant 0 : i32
    return %arg0, %c0_i32, %c0_i32_0 : i32, i32, i32
  }
  func.func @transform_6(%arg0: i32) -> (i32, i32, i32) {
    %c0_i32 = arith.constant 0 : i32
    %c0_i32_0 = arith.constant 0 : i32
    %c0_i32_1 = arith.constant 0 : i32
    return %arg0, %c0_i32, %c0_i32_0 : i32, i32, i32
  }
}

</mosaic_0001>

<llo_original>
// kernel: basic_block_forward.5
$region0: #{basic_block_forward.5}
  #allocation0 [shape = 'u32[]', space=smem, size = 0x4, offset = 0x4, fixed_abs, tag = 'smem constant byte address 0x4 - core index']
  #allocation1 [shape = 'u32[144,128]{1,0:T(1,128)}', space=vmem, size = 0x12000, scoped, tag = 'internal scratch']
  %s0 = inlined_call_operand.vmem [shape: bf16[2,4,256], index: 0, kind: input, shape index: {}]
  %s1 = inlined_call_operand.vmem [shape: f32[2,2,4], index: 1, kind: input, shape index: {}]
  %s2 = inlined_call_operand.vmem [shape: f32[1,4], index: 2, kind: input, shape index: {}]
  %s3 = inlined_call_operand.vmem [shape: f32[1,4], index: 3, kind: input, shape index: {}]
  %s4 = inlined_call_operand.vmem [shape: f32[2,4,256], index: 4, kind: input, shape index: {}]
  %s5 = inlined_call_operand.vmem [shape: f32[2,4,256], index: 5, kind: output, shape index: {}]
  %s6 = sld [smem:[#allocation0]]
  $region53: #{basic_block_forward.5} parent=0
    _
  %s8 = ssub.s32 1, %s6
  %s9 = scalar_select 0, %s8, %s6
  loop: start=0, step=1, limit=4
  $region2: #{basic_block_forward.5} parent=0 // loop_pre_header
    _
  $region3: #{basic_block_forward.5} parent=0 // loop_header
    %s11 = sphi 0, %s15
    %p12 = scmp.ge.s32.totalorder %s11, 4
    %s21 = sphi 0, %s23
    %s24 = sphi 0, %s21
    %s25 = sphi 0, %s24
    %s41 = sphi 0, %s25
    %s45 = sphi 0, %s45
    %s47 = sphi 0, %s45
    %s48 = sphi 0, %s47
    %s62 = sphi 0, %s48
    %s66 = sphi 0, %s66
    %s68 = sphi 0, %s66
    %s69 = sphi 0, %s68
    %s83 = sphi 0, %s69
    %s87 = sphi 0, %s87
    %s89 = sphi 0, %s87
    %s90 = sphi 0, %s89
    %s104 = sphi 0, %s90
    %s110 = sphi 0, %s112
    %s113 = sphi 0, %s110
    %s114 = sphi 0, %s113
    %s130 = sphi 0, %s114
    %s136 = sphi 0, %s138
    %s139 = sphi 0, %s136
    %s140 = sphi 0, %s139
    %s156 = sphi 0, %s140
  $region4: #{basic_block_forward.5} parent=0 // loop_header_branch
    %14 = sbr.rel (%p12) target = $region8
  $region5: #{basic_block_forward.5} parent=0 // loop_body
    %s16 = ssub.s32 %s11, 1
    %s17 = ssub.s32 %s11, 2
    %s18 = sadd.s32 %s11, 1
    %s19 = ssub.s32 %s11, %s18
    %p20 = scmp.eq.s32.totalorder %s19, 0
    %s22 = sadd.s32 %s21, 1
    %s23 = scalar_select %p20, %s21, %s22
    %p26 = pneg %p20
    %p27 = scmp.eq.s32.totalorder %s11, 1
    %p28 = por %p26, %p27
    %p29 = scmp.ne.s32.totalorder %s21, %s24
    %p30 = scmp.eq.s32.totalorder %s11, 0
    %p31 = por %p29, %p30
    %p32 = scmp.ne.s32.totalorder %s21, %s24
    %p33 = scmp.eq.s32.totalorder %s16, 1
    %p34 = por %p32, %p33
    %p35 = scmp.ne.s32.totalorder %s24, %s25
    %p36 = scmp.eq.s32.totalorder %s16, 0
    %p37 = por %p35, %p36
    %p38 = scmp.ne.s32.totalorder %s24, %s25
    %p39 = scmp.eq.s32.totalorder %s17, 1
    %p40 = por %p38, %p39
    %p42 = scmp.ne.s32.totalorder %s25, %s41
    %p43 = scmp.eq.s32.totalorder %s17, 0
    %p44 = por %p42, %p43
    %s46 = sadd.s32 %s45, 1
    %p49 = scmp.eq.s32.totalorder %s11, 1
    %p50 = scmp.ne.s32.totalorder %s45, %s47
    %p51 = scmp.eq.s32.totalorder %s11, 0
    %p52 = por %p50, %p51
    %p53 = scmp.ne.s32.totalorder %s45, %s47
    %p54 = scmp.eq.s32.totalorder %s16, 1
    %p55 = por %p53, %p54
    %p56 = scmp.ne.s32.totalorder %s47, %s48
    %p57 = scmp.eq.s32.totalorder %s16, 0
    %p58 = por %p56, %p57
    %p59 = scmp.ne.s32.totalorder %s47, %s48
    %p60 = scmp.eq.s32.totalorder %s17, 1
    %p61 = por %p59, %p60
    %p63 = scmp.ne.s32.totalorder %s48, %s62
    %p64 = scmp.eq.s32.totalorder %s17, 0
    %p65 = por %p63, %p64
    %s67 = sadd.s32 %s66, 1
    %p70 = scmp.eq.s32.totalorder %s11, 1
    %p71 = scmp.ne.s32.totalorder %s66, %s68
    %p72 = scmp.eq.s32.totalorder %s11, 0
    %p73 = por %p71, %p72
    %p74 = scmp.ne.s32.totalorder %s66, %s68
    %p75 = scmp.eq.s32.totalorder %s16, 1
    %p76 = por %p74, %p75
    %p77 = scmp.ne.s32.totalorder %s68, %s69
    %p78 = scmp.eq.s32.totalorder %s16, 0
    %p79 = por %p77, %p78
    %p80 = scmp.ne.s32.totalorder %s68, %s69
    %p81 = scmp.eq.s32.totalorder %s17, 1
    %p82 = por %p80, %p81
    %p84 = scmp.ne.s32.totalorder %s69, %s83
    %p85 = scmp.eq.s32.totalorder %s17, 0
    %p86 = por %p84, %p85
    %s88 = sadd.s32 %s87, 1
    %p91 = scmp.eq.s32.totalorder %s11, 1
    %p92 = scmp.ne.s32.totalorder %s87, %s89
    %p93 = scmp.eq.s32.totalorder %s11, 0
    %p94 = por %p92, %p93
    %p95 = scmp.ne.s32.totalorder %s87, %s89
    %p96 = scmp.eq.s32.totalorder %s16, 1
    %p97 = por %p95, %p96
    %p98 = scmp.ne.s32.totalorder %s89, %s90
    %p99 = scmp.eq.s32.totalorder %s16, 0
    %p100 = por %p98, %p99
    %p101 = scmp.ne.s32.totalorder %s89, %s90
    %p102 = scmp.eq.s32.totalorder %s17, 1
    %p103 = por %p101, %p102
    %p105 = scmp.ne.s32.totalorder %s90, %s104
    %p106 = scmp.eq.s32.totalorder %s17, 0
    %p107 = por %p105, %p106
    %s108 = ssub.s32 %s11, %s18
    %p109 = scmp.eq.s32.totalorder %s108, 0
    %s111 = sadd.s32 %s110, 1
    %s112 = scalar_select %p109, %s110, %s111
    %p115 = pneg %p109
    %p116 = scmp.eq.s32.totalorder %s11, 1
    %p117 = por %p115, %p116
    %p118 = scmp.ne.s32.totalorder %s110, %s113
    %p119 = scmp.eq.s32.totalorder %s11, 0
    %p120 = por %p118, %p119
    %p121 = scmp.ne.s32.totalorder %s110, %s113
    %p122 = scmp.eq.s32.totalorder %s16, 1
    %p123 = por %p121, %p122
    %p124 = scmp.ne.s32.totalorder %s113, %s114
    %p125 = scmp.eq.s32.totalorder %s16, 0
    %p126 = por %p124, %p125
    %p127 = scmp.ne.s32.totalorder %s113, %s114
    %p128 = scmp.eq.s32.totalorder %s17, 1
    %p129 = por %p127, %p128
    %p131 = scmp.ne.s32.totalorder %s114, %s130
    %p132 = scmp.eq.s32.totalorder %s17, 0
    %p133 = por %p131, %p132
    %s134 = ssub.s32 %s11, %s18
    %p135 = scmp.eq.s32.totalorder %s134, 0
    %s137 = sadd.s32 %s136, 1
    %s138 = scalar_select %p135, %s136, %s137
    %p141 = pneg %p135
    %p142 = scmp.eq.s32.totalorder %s11, 1
    %p143 = por %p141, %p142
    %p144 = scmp.ne.s32.totalorder %s136, %s139
    %p145 = scmp.eq.s32.totalorder %s11, 0
    %p146 = por %p144, %p145
    %p147 = scmp.ne.s32.totalorder %s136, %s139
    %p148 = scmp.eq.s32.totalorder %s16, 1
    %p149 = por %p147, %p148
    %p150 = scmp.ne.s32.totalorder %s139, %s140
    %p151 = scmp.eq.s32.totalorder %s16, 0
    %p152 = por %p150, %p151
    %p153 = scmp.ne.s32.totalorder %s139, %s140
    %p154 = scmp.eq.s32.totalorder %s17, 1
    %p155 = por %p153, %p154
    %p157 = scmp.ne.s32.totalorder %s140, %s156
    %p158 = scmp.eq.s32.totalorder %s17, 0
    %p159 = por %p157, %p158
    %p160 = scmp.le.s32.totalorder 1, %s11
    %p161 = scmp.lt.s32.totalorder %s11, 3
    %p162 = pnand %p160, %p161
    %p163 = pneg %p162
    // Predicated region
    $region9: #{basic_block_forward.5} parent=5 // pred_check
      _
    $region10: #{basic_block_forward.5} parent=5 // pred_check_branch
      %165 = sbr.rel (%p162) target = $region12
    $region11: #{basic_block_forward.5} parent=5 // pred_region
      %s166 = ssub.s32 %s11, 1
      // Predicated region
      $region13: #{basic_block_forward.5} parent=11 // pred_check
        %p167 = pneg %p58
      $region14: #{basic_block_forward.5} parent=11 // pred_check_branch
        %169 = sbr.rel (%p167) target = $region16
      $region15: #{basic_block_forward.5} parent=11 // pred_region
        _
      $region16: #{basic_block_forward.5} parent=11 // pred_fallthru
        _
      // Predicated region
      $region17: #{basic_block_forward.5} parent=11 // pred_check
        %p170 = pneg %p79
      $region18: #{basic_block_forward.5} parent=11 // pred_check_branch
        %172 = sbr.rel (%p170) target = $region20
      $region19: #{basic_block_forward.5} parent=11 // pred_region
        _
      $region20: #{basic_block_forward.5} parent=11 // pred_fallthru
        _
      // Predicated region
      $region21: #{basic_block_forward.5} parent=11 // pred_check
        %p173 = pneg %p100
      $region22: #{basic_block_forward.5} parent=11 // pred_check_branch
        %175 = sbr.rel (%p173) target = $region24
      $region23: #{basic_block_forward.5} parent=11 // pred_region
        _
      $region24: #{basic_block_forward.5} parent=11 // pred_fallthru
        _
    $region12: #{basic_block_forward.5} parent=5 // pred_fallthru
      _
    %p176 = scmp.lt.s32.totalorder %s11, 2
    // Predicated region
    $region25: #{basic_block_forward.5} parent=5 // pred_check
      %p177 = pneg %p176
    $region26: #{basic_block_forward.5} parent=5 // pred_check_branch
      %179 = sbr.rel (%p177) target = $region28
    $region27: #{basic_block_forward.5} parent=5 // pred_region
      // Predicated region
      $region29: #{basic_block_forward.5} parent=27 // pred_check
        %p180 = pneg %p31
      $region30: #{basic_block_forward.5} parent=27 // pred_check_branch
        %182 = sbr.rel (%p180) target = $region32
      $region31: #{basic_block_forward.5} parent=27 // pred_region
        %p183 = scmp.lt.s32.totalorder %s11, 1
        %s184 = scalar_select %p183, %s11, 1
        %s185 = smul.addr %s184, 2
        %s186 = smul.addr %s185, 2
        %s187 = scalar_lea.vmem %s0, %s186
      $region32: #{basic_block_forward.5} parent=27 // pred_fallthru
        _
      // Predicated region
      $region33: #{basic_block_forward.5} parent=27 // pred_check
        %p188 = pneg %p120
      $region34: #{basic_block_forward.5} parent=27 // pred_check_branch
        %190 = sbr.rel (%p188) target = $region36
      $region35: #{basic_block_forward.5} parent=27 // pred_region
        %p191 = scmp.lt.s32.totalorder %s11, 1
        %s192 = scalar_select %p191, %s11, 1
        %s193 = smul.addr %s192, 2
        %s194 = smul.addr %s193, 4
        %s195 = scalar_lea.vmem %s4, %s194
      $region36: #{basic_block_forward.5} parent=27 // pred_fallthru
        _
    $region28: #{basic_block_forward.5} parent=5 // pred_fallthru
      _
    %p196 = scmp.le.s32.totalorder 1, %s11
    %p197 = scmp.lt.s32.totalorder %s11, 3
    %p198 = pnand %p196, %p197
    %p199 = pneg %p198
    // Predicated region
    $region37: #{basic_block_forward.5} parent=5 // pred_check
      _
    $region38: #{basic_block_forward.5} parent=5 // pred_check_branch
      %201 = sbr.rel (%p198) target = $region40
    $region39: #{basic_block_forward.5} parent=5 // pred_region
      %s202 = ssub.s32 %s11, 1
      %p203 = scmp.lt.s32.totalorder %s16, 1
      %s204 = scalar_select %p203, %s16, 1
      %s205 = smul.addr %s204, 2
      %s206 = smul.addr %s205, 2
      %s207 = scalar_lea.vmem %s0, %s206
      %p208 = pneg %p37
      %p209 = pneg %p34
      %p210 = pneg %p58
      %p211 = pneg %p55
      %p212 = pneg %p79
      %p213 = pneg %p76
      %p214 = pneg %p100
      %p215 = pneg %p97
      %p216 = scmp.lt.s32.totalorder %s16, 1
      %s217 = scalar_select %p216, %s16, 1
      %s218 = smul.addr %s217, 2
      %s219 = smul.addr %s218, 4
      %s220 = scalar_lea.vmem %s4, %s219
      %p221 = pneg %p126
      %p222 = pneg %p123
      %p223 = pneg %p152
      %p224 = pneg %p149
      %p225 = scmp.lt.s32.totalorder %s16, 1
      %s226 = scalar_select %p225, %s16, 1
      %s227 = smul.addr %s226, 2
      %s228 = smul.addr %s227, 4
      %s229 = scalar_lea.vmem %s5, %s228
      %p230 = scmp.lt.s32.totalorder %s16, 1
      %s231 = scalar_select %p230, %s16, 1
      %s232 = smul.addr %s231, 2
      %s233 = smul.addr %s232, 2
      %s234 = scalar_lea.vmem %s0, %s233
      %p235 = scmp.lt.s32.totalorder %s16, 1
      %s236 = scalar_select %p235, %s16, 1
      %s237 = smul.addr %s236, 2
      %s238 = smul.addr %s237, 4
      %s239 = scalar_lea.vmem %s4, %s238
      %p240 = scmp.lt.s32.totalorder %s16, 1
      %s241 = scalar_select %p240, %s16, 1
      %s242 = smul.addr %s241, 2
      %s243 = smul.addr %s242, 4
      %s244 = scalar_lea.vmem %s5, %s243
      %v245 = vld [vmem:[%s1] sm:$0x3]
      %v246 = vld [vmem:[%s1 + $0x2] sm:$0x3]
      %vm247 = vcmask 25600
      %v248 = vsel %vm247, %v245, 0.0
      %v249 = vsel %vm247, %v246, 0.0
      %v250 = vadd.f32 %v248, %v249
      %v251 = vmul.f32 %v250, 0.001953125
      %v252 = vmul.f32 %v251, %v251
      %v254 = vrot.slane %v252, 7
      %v256 = vsub.f32 %v251, %v254
      %v257 = vmax.f32 %v256, 0.0
      %v258 = vld [vmem:[%s2] sm:$0x1]
      %v259 = vadd.f32 %v257, 1e-05
      %v260 = vrsqrt.pop %v259
      %v263 = vunpack.c.l.s4 1966171168
      %v264 = vunpack.c.0.s8 %v263
      %v265 = vlaneseq
      %v266 = vshrl.u32 %v265, 7
      %v267 = vsub.s32 %v264, %v266
      %v268 = vrot.slane %v260, %v267
      %v269 = vcombine.high %v268, %v268
      %v271 = vunpack.c.l.s4 1966171168
      %v272 = vunpack.c.0.s8 %v271
      %v273 = vlaneseq
      %v274 = vshrl.u32 %v273, 7
      %v275 = vsub.s32 %v272, %v274
      %v276 = vrot.slane %v269, %v275
      %v278 = vmul.f32 %v258, %v276
      %v279 = vld [vmem:[%s3] sm:$0x1]
      %v280 = vmul.f32 %v251, %v278
      %v281 = vsub.f32 %v279, %v280
      %v282 = vld [vmem:[%s234] sm:$0xf]
      %v283 = vunpack.c.l.bf16 %v282
      %v284 = vlaneseq
      %v285 = vshrl.u32 %v284, 7
      %v286 = vsub.s32 0, %v285
      %v287 = vrot.slane %v278, %v286
      %289 = vbcast.lane.b32.xlu0 %v287, 256
      %v290 = vpop.permute.xlu0 %289
      %v293 = vunpack.c.l.s4 839922192
      %v294 = vunpack.c.0.s8 %v293
      %v295 = vlaneseq
      %v296 = vshrl.u32 %v295, 7
      %v297 = vsub.s32 %v294, %v296
      %v298 = vrot.slane %v290, %v297
      %v300 = vmul.f32 %v283, %v298
      %v301 = vlaneseq
      %v302 = vshrl.u32 %v301, 7
      %v303 = vsub.s32 0, %v302
      %v304 = vrot.slane %v281, %v303
      %306 = vbcast.lane.b32.xlu0 %v304, 256
      %v307 = vpop.permute.xlu0 %306
      %v310 = vunpack.c.l.s4 839922192
      %v311 = vunpack.c.0.s8 %v310
      %v312 = vlaneseq
      %v313 = vshrl.u32 %v312, 7
      %v314 = vsub.s32 %v311, %v313
      %v315 = vrot.slane %v307, %v314
      %v317 = vadd.f32 %v300, %v315
      %v318 = vld [vmem:[%s239] sm:$0xff]
      %v319 = vadd.f32 %v317, %v318
      %vm320 = vcmp.ge.f32.partialorder %v319, 0.0
      %v321 = vmul.f32 %v319, 0.01
      %v322 = vsel %vm320, %v319, %v321
      %323 = vst [vmem:[%s244] sm:$0xff] %v322
      %p324 = scmp.lt.s32.totalorder %s16, 1
      %s325 = scalar_select %p324, %s16, 1
      %s326 = smul.addr %s325, 2
      %s327 = smul.addr %s326, 4
      %s328 = scalar_lea.vmem %s5, %s327
      // Predicated region
      $region41: #{basic_block_forward.5} parent=39 // pred_check
        %p329 = pneg %p149
      $region42: #{basic_block_forward.5} parent=39 // pred_check_branch
        %331 = sbr.rel (%p329) target = $region44
      $region43: #{basic_block_forward.5} parent=39 // pred_region
        _
      $region44: #{basic_block_forward.5} parent=39 // pred_fallthru
        _
    $region40: #{basic_block_forward.5} parent=5 // pred_fallthru
      _
    %p332 = scmp.le.s32.totalorder 2, %s11
    // Predicated region
    $region45: #{basic_block_forward.5} parent=5 // pred_check
      %p333 = pneg %p332
    $region46: #{basic_block_forward.5} parent=5 // pred_check_branch
      %335 = sbr.rel (%p333) target = $region48
    $region47: #{basic_block_forward.5} parent=5 // pred_region
      %s336 = ssub.s32 %s11, 2
      // Predicated region
      $region49: #{basic_block_forward.5} parent=47 // pred_check
        %p337 = pneg %p155
      $region50: #{basic_block_forward.5} parent=47 // pred_check_branch
        %339 = sbr.rel (%p337) target = $region52
      $region51: #{basic_block_forward.5} parent=47 // pred_region
        %p340 = scmp.lt.s32.totalorder %s17, 1
        %s341 = scalar_select %p340, %s17, 1
        %s342 = smul.addr %s341, 2
        %s343 = smul.addr %s342, 4
        %s344 = scalar_lea.vmem %s5, %s343
      $region52: #{basic_block_forward.5} parent=47 // pred_fallthru
        _
    $region48: #{basic_block_forward.5} parent=5 // pred_fallthru
      _
  $region6: #{basic_block_forward.5} parent=0 // loop_footer
    %s15 = sadd.s32 1, %s11
  $region7: #{basic_block_forward.5} parent=0 // loop_footer_branch
    %10 = sbr.rel target = $region3
  $region8: #{basic_block_forward.5} parent=0 // loop_exit
    _

// kernel: basic_block_forward.3
$region0: #{basic_block_forward.3}
  #allocation0 [shape = 'u32[]', space=smem, size = 0x4, offset = 0x4, fixed_abs, tag = 'smem constant byte address 0x4 - core index']
  #allocation1 [shape = 'u32[144,128]{1,0:T(1,128)}', space=vmem, size = 0x12000, scoped, tag = 'internal scratch']
  #allocation2 [shape = 'bf16[1,18,18,4]{3,2,1,0:T(8,128)(2,1)}', space=vmem, size = 0x1b000, scoped, tag = 'scratch operand']
  %s0 = inlined_call_operand.vmem [shape: f32[2,4,256], index: 0, kind: input, shape index: {}]
  %s1 = inlined_call_operand.vmem [shape: bf16[36,4], index: 1, kind: input, shape index: {}]
  %s2 = inlined_call_operand.vmem [shape: bf16[2,4,256], index: 2, kind: output, shape index: {0}]
  %s3 = inlined_call_operand.vmem [shape: f32[2,2,4], index: 3, kind: output, shape index: {1}]
  %4 = xla_tuple %s2, %s3
  %s5 = sld [smem:[#allocation0]]
  $region49: #{basic_block_forward.3} parent=0
    _
  %s7 = ssub.s32 1, %s5
  %s8 = scalar_select 0, %s7, %s5
  loop: start=0, step=1, limit=4
  $region2: #{basic_block_forward.3} parent=0 // loop_pre_header
    _
  $region3: #{basic_block_forward.3} parent=0 // loop_header
    %s10 = sphi 0, %s14
    %p11 = scmp.ge.s32.totalorder %s10, 4
    %s20 = sphi 0, %s22
    %s23 = sphi 0, %s20
    %s24 = sphi 0, %s23
    %s40 = sphi 0, %s24
    %s44 = sphi 0, %s44
    %s46 = sphi 0, %s44
    %s47 = sphi 0, %s46
    %s61 = sphi 0, %s47
    %s67 = sphi 0, %s69
    %s70 = sphi 0, %s67
    %s71 = sphi 0, %s70
    %s87 = sphi 0, %s71
    %s93 = sphi 0, %s95
    %s96 = sphi 0, %s93
    %s97 = sphi 0, %s96
    %s113 = sphi 0, %s97
  $region4: #{basic_block_forward.3} parent=0 // loop_header_branch
    %13 = sbr.rel (%p11) target = $region8
  $region5: #{basic_block_forward.3} parent=0 // loop_body
    %s15 = ssub.s32 %s10, 1
    %s16 = ssub.s32 %s10, 2
    %s17 = sadd.s32 %s10, 1
    %s18 = ssub.s32 %s10, %s17
    %p19 = scmp.eq.s32.totalorder %s18, 0
    %s21 = sadd.s32 %s20, 1
    %s22 = scalar_select %p19, %s20, %s21
    %p25 = pneg %p19
    %p26 = scmp.eq.s32.totalorder %s10, 1
    %p27 = por %p25, %p26
    %p28 = scmp.ne.s32.totalorder %s20, %s23
    %p29 = scmp.eq.s32.totalorder %s10, 0
    %p30 = por %p28, %p29
    %p31 = scmp.ne.s32.totalorder %s20, %s23
    %p32 = scmp.eq.s32.totalorder %s15, 1
    %p33 = por %p31, %p32
    %p34 = scmp.ne.s32.totalorder %s23, %s24
    %p35 = scmp.eq.s32.totalorder %s15, 0
    %p36 = por %p34, %p35
    %p37 = scmp.ne.s32.totalorder %s23, %s24
    %p38 = scmp.eq.s32.totalorder %s16, 1
    %p39 = por %p37, %p38
    %p41 = scmp.ne.s32.totalorder %s24, %s40
    %p42 = scmp.eq.s32.totalorder %s16, 0
    %p43 = por %p41, %p42
    %s45 = sadd.s32 %s44, 1
    %p48 = scmp.eq.s32.totalorder %s10, 1
    %p49 = scmp.ne.s32.totalorder %s44, %s46
    %p50 = scmp.eq.s32.totalorder %s10, 0
    %p51 = por %p49, %p50
    %p52 = scmp.ne.s32.totalorder %s44, %s46
    %p53 = scmp.eq.s32.totalorder %s15, 1
    %p54 = por %p52, %p53
    %p55 = scmp.ne.s32.totalorder %s46, %s47
    %p56 = scmp.eq.s32.totalorder %s15, 0
    %p57 = por %p55, %p56
    %p58 = scmp.ne.s32.totalorder %s46, %s47
    %p59 = scmp.eq.s32.totalorder %s16, 1
    %p60 = por %p58, %p59
    %p62 = scmp.ne.s32.totalorder %s47, %s61
    %p63 = scmp.eq.s32.totalorder %s16, 0
    %p64 = por %p62, %p63
    %s65 = ssub.s32 %s10, %s17
    %p66 = scmp.eq.s32.totalorder %s65, 0
    %s68 = sadd.s32 %s67, 1
    %s69 = scalar_select %p66, %s67, %s68
    %p72 = pneg %p66
    %p73 = scmp.eq.s32.totalorder %s10, 1
    %p74 = por %p72, %p73
    %p75 = scmp.ne.s32.totalorder %s67, %s70
    %p76 = scmp.eq.s32.totalorder %s10, 0
    %p77 = por %p75, %p76
    %p78 = scmp.ne.s32.totalorder %s67, %s70
    %p79 = scmp.eq.s32.totalorder %s15, 1
    %p80 = por %p78, %p79
    %p81 = scmp.ne.s32.totalorder %s70, %s71
    %p82 = scmp.eq.s32.totalorder %s15, 0
    %p83 = por %p81, %p82
    %p84 = scmp.ne.s32.totalorder %s70, %s71
    %p85 = scmp.eq.s32.totalorder %s16, 1
    %p86 = por %p84, %p85
    %p88 = scmp.ne.s32.totalorder %s71, %s87
    %p89 = scmp.eq.s32.totalorder %s16, 0
    %p90 = por %p88, %p89
    %s91 = ssub.s32 %s10, %s17
    %p92 = scmp.eq.s32.totalorder %s91, 0
    %s94 = sadd.s32 %s93, 1
    %s95 = scalar_select %p92, %s93, %s94
    %p98 = pneg %p92
    %p99 = scmp.eq.s32.totalorder %s10, 1
    %p100 = por %p98, %p99
    %p101 = scmp.ne.s32.totalorder %s93, %s96
    %p102 = scmp.eq.s32.totalorder %s10, 0
    %p103 = por %p101, %p102
    %p104 = scmp.ne.s32.totalorder %s93, %s96
    %p105 = scmp.eq.s32.totalorder %s15, 1
    %p106 = por %p104, %p105
    %p107 = scmp.ne.s32.totalorder %s96, %s97
    %p108 = scmp.eq.s32.totalorder %s15, 0
    %p109 = por %p107, %p108
    %p110 = scmp.ne.s32.totalorder %s96, %s97
    %p111 = scmp.eq.s32.totalorder %s16, 1
    %p112 = por %p110, %p111
    %p114 = scmp.ne.s32.totalorder %s97, %s113
    %p115 = scmp.eq.s32.totalorder %s16, 0
    %p116 = por %p114, %p115
    %p117 = scmp.le.s32.totalorder 1, %s10
    %p118 = scmp.lt.s32.totalorder %s10, 3
    %p119 = pnand %p117, %p118
    %p120 = pneg %p119
    // Predicated region
    $region9: #{basic_block_forward.3} parent=5 // pred_check
      _
    $region10: #{basic_block_forward.3} parent=5 // pred_check_branch
      %122 = sbr.rel (%p119) target = $region12
    $region11: #{basic_block_forward.3} parent=5 // pred_region
      %s123 = ssub.s32 %s10, 1
      // Predicated region
      $region13: #{basic_block_forward.3} parent=11 // pred_check
        %p124 = pneg %p57
      $region14: #{basic_block_forward.3} parent=11 // pred_check_branch
        %126 = sbr.rel (%p124) target = $region16
      $region15: #{basic_block_forward.3} parent=11 // pred_region
        _
      $region16: #{basic_block_forward.3} parent=11 // pred_fallthru
        _
    $region12: #{basic_block_forward.3} parent=5 // pred_fallthru
      _
    %p127 = scmp.lt.s32.totalorder %s10, 2
    // Predicated region
    $region17: #{basic_block_forward.3} parent=5 // pred_check
      %p128 = pneg %p127
    $region18: #{basic_block_forward.3} parent=5 // pred_check_branch
      %130 = sbr.rel (%p128) target = $region20
    $region19: #{basic_block_forward.3} parent=5 // pred_region
      // Predicated region
      $region21: #{basic_block_forward.3} parent=19 // pred_check
        %p131 = pneg %p30
      $region22: #{basic_block_forward.3} parent=19 // pred_check_branch
        %133 = sbr.rel (%p131) target = $region24
      $region23: #{basic_block_forward.3} parent=19 // pred_region
        %p134 = scmp.lt.s32.totalorder %s10, 1
        %s135 = scalar_select %p134, %s10, 1
        %s136 = smul.addr %s135, 2
        %s137 = smul.addr %s136, 4
        %s138 = scalar_lea.vmem %s0, %s137
      $region24: #{basic_block_forward.3} parent=19 // pred_fallthru
        _
    $region20: #{basic_block_forward.3} parent=5 // pred_fallthru
      _
    %p139 = scmp.le.s32.totalorder 1, %s10
    %p140 = scmp.lt.s32.totalorder %s10, 3
    %p141 = pnand %p139, %p140
    %p142 = pneg %p141
    // Predicated region
    $region25: #{basic_block_forward.3} parent=5 // pred_check
      _
    $region26: #{basic_block_forward.3} parent=5 // pred_check_branch
      %144 = sbr.rel (%p141) target = $region28
    $region27: #{basic_block_forward.3} parent=5 // pred_region
      %s145 = ssub.s32 %s10, 1
      %p146 = scmp.lt.s32.totalorder %s15, 1
      %s147 = scalar_select %p146, %s15, 1
      %s148 = smul.addr %s147, 2
      %s149 = smul.addr %s148, 4
      %s150 = scalar_lea.vmem %s0, %s149
      %p151 = pneg %p36
      %p152 = pneg %p33
      %p153 = pneg %p57
      %p154 = pneg %p54
      %p155 = pneg %p83
      %p156 = pneg %p80
      %p157 = scmp.lt.s32.totalorder %s15, 1
      %s158 = scalar_select %p157, %s15, 1
      %s159 = smul.addr %s158, 2
      %s160 = smul.addr %s159, 2
      %s161 = scalar_lea.vmem %s2, %s160
      %p162 = pneg %p109
      %p163 = pneg %p106
      %p164 = scmp.lt.s32.totalorder %s15, 1
      %s165 = scalar_select %p164, %s15, 1
      %s166 = smul.addr %s165, 2
      %s167 = scalar_lea.vmem %s3, %s166
      %p168 = scmp.lt.s32.totalorder %s15, 1
      %s169 = scalar_select %p168, %s15, 1
      %s170 = smul.addr %s169, 2
      %s171 = smul.addr %s170, 4
      %s172 = scalar_lea.vmem %s0, %s171
      %p173 = scmp.lt.s32.totalorder %s15, 1
      %s174 = scalar_select %p173, %s15, 1
      %s175 = smul.addr %s174, 2
      %s176 = smul.addr %s175, 2
      %s177 = scalar_lea.vmem %s2, %s176
      %p178 = scmp.lt.s32.totalorder %s15, 1
      %s179 = scalar_select %p178, %s15, 1
      %s180 = smul.addr %s179, 2
      %s181 = scalar_lea.vmem %s3, %s180
      %vm183 = vcmask 27648
      %184 = vst.msk [vmem:[#allocation2] sm:$0xf] %vm183, 0
      %185 = vst.msk [vmem:[#allocation2 + $0x4] sm:$0xf] %vm183, 0
      %vm186 = vcmask 24576
      %187 = vst.msk [vmem:[#allocation2 + $0x8] sm:$0x1] %vm186, 0
      %s188 = scalar_lea.vmem [#allocation2], 204
      %189 = vst.msk [vmem:[%s188] sm:$0xf] %vm183, 0
      %190 = vst.msk [vmem:[%s188 + $0x4] sm:$0xf] %vm183, 0
      %191 = vst.msk [vmem:[%s188 + $0x8] sm:$0x1] %vm186, 0
      %vm192 = vcmask 24576
      %vm193 = vsmask.f32 256
      %vm194 = vmand %vm192, %vm193
      %v195 = vld [vmem:[#allocation2] sm:$0x1]
      %v196 = vsel %vm194, 0, %v195
      %197 = vst [vmem:[#allocation2] sm:$0x1] %v196
      %v198 = vld [vmem:[#allocation2 + $0xc] sm:$0x1]
      %v199 = vsel %vm194, 0, %v198
      %200 = vst [vmem:[#allocation2 + $0xc] sm:$0x1] %v199
      %v201 = vld [vmem:[#allocation2 + $0x18] sm:$0x1]
      %v202 = vsel %vm194, 0, %v201
      %203 = vst [vmem:[#allocation2 + $0x18] sm:$0x1] %v202
      %v204 = vld [vmem:[#allocation2 + $0x24] sm:$0x1]
      %v205 = vsel %vm194, 0, %v204
      %206 = vst [vmem:[#allocation2 + $0x24] sm:$0x1] %v205
      %v207 = vld [vmem:[#allocation2 + $0x30] sm:$0x1]
      %v208 = vsel %vm194, 0, %v207
      %209 = vst [vmem:[#allocation2 + $0x30] sm:$0x1] %v208
      %v210 = vld [vmem:[#allocation2 + $0x3c] sm:$0x1]
      %v211 = vsel %vm194, 0, %v210
      %212 = vst [vmem:[#allocation2 + $0x3c] sm:$0x1] %v211
      %v213 = vld [vmem:[#allocation2 + $0x48] sm:$0x1]
      %v214 = vsel %vm194, 0, %v213
      %215 = vst [vmem:[#allocation2 + $0x48] sm:$0x1] %v214
      %v216 = vld [vmem:[#allocation2 + $0x54] sm:$0x1]
      %v217 = vsel %vm194, 0, %v216
      %218 = vst [vmem:[#allocation2 + $0x54] sm:$0x1] %v217
      %v219 = vld [vmem:[#allocation2 + $0x60] sm:$0x1]
      %v220 = vsel %vm194, 0, %v219
      %221 = vst [vmem:[#allocation2 + $0x60] sm:$0x1] %v220
      %v222 = vld [vmem:[#allocation2 + $0x6c] sm:$0x1]
      %v223 = vsel %vm194, 0, %v222
      %224 = vst [vmem:[#allocation2 + $0x6c] sm:$0x1] %v223
      %v225 = vld [vmem:[#allocation2 + $0x78] sm:$0x1]
      %v226 = vsel %vm194, 0, %v225
      %227 = vst [vmem:[#allocation2 + $0x78] sm:$0x1] %v226
      %v228 = vld [vmem:[#allocation2 + $0x84] sm:$0x1]
      %v229 = vsel %vm194, 0, %v228
      %230 = vst [vmem:[#allocation2 + $0x84] sm:$0x1] %v229
      %v231 = vld [vmem:[#allocation2 + $0x90] sm:$0x1]
      %v232 = vsel %vm194, 0, %v231
      %233 = vst [vmem:[#allocation2 + $0x90] sm:$0x1] %v232
      %v234 = vld [vmem:[#allocation2 + $0x9c] sm:$0x1]
      %v235 = vsel %vm194, 0, %v234
      %236 = vst [vmem:[#allocation2 + $0x9c] sm:$0x1] %v235
      %v237 = vld [vmem:[#allocation2 + $0xa8] sm:$0x1]
      %v238 = vsel %vm194, 0, %v237
      %239 = vst [vmem:[#allocation2 + $0xa8] sm:$0x1] %v238
      %v240 = vld [vmem:[#allocation2 + $0xb4] sm:$0x1]
      %v241 = vsel %vm194, 0, %v240
      %242 = vst [vmem:[#allocation2 + $0xb4] sm:$0x1] %v241
      %v243 = vld [vmem:[#allocation2 + $0xc0] sm:$0x1]
      %v244 = vsel %vm194, 0, %v243
      %245 = vst [vmem:[#allocation2 + $0xc0] sm:$0x1] %v244
      %v246 = vld [vmem:[#allocation2 + $0xcc] sm:$0x1]
      %v247 = vsel %vm194, 0, %v246
      %248 = vst [vmem:[#allocation2 + $0xcc] sm:$0x1] %v247
      %vm249 = vsmask.f32 7938
      %vm250 = vmand %vm192, %vm249
      %v251 = vld [vmem:[#allocation2 + $0x8] sm:$0x1]
      %v252 = vsel %vm250, 0, %v251
      %253 = vst [vmem:[#allocation2 + $0x8] sm:$0x1] %v252
      %v254 = vld [vmem:[#allocation2 + $0x14] sm:$0x1]
      %v255 = vsel %vm250, 0, %v254
      %256 = vst [vmem:[#allocation2 + $0x14] sm:$0x1] %v255
      %v257 = vld [vmem:[#allocation2 + $0x20] sm:$0x1]
      %v258 = vsel %vm250, 0, %v257
      %259 = vst [vmem:[#allocation2 + $0x20] sm:$0x1] %v258
      %v260 = vld [vmem:[#allocation2 + $0x2c] sm:$0x1]
      %v261 = vsel %vm250, 0, %v260
      %262 = vst [vmem:[#allocation2 + $0x2c] sm:$0x1] %v261
      %v263 = vld [vmem:[#allocation2 + $0x38] sm:$0x1]
      %v264 = vsel %vm250, 0, %v263
      %265 = vst [vmem:[#allocation2 + $0x38] sm:$0x1] %v264
      %v266 = vld [vmem:[#allocation2 + $0x44] sm:$0x1]
      %v267 = vsel %vm250, 0, %v266
      %268 = vst [vmem:[#allocation2 + $0x44] sm:$0x1] %v267
      %v269 = vld [vmem:[#allocation2 + $0x50] sm:$0x1]
      %v270 = vsel %vm250, 0, %v269
      %271 = vst [vmem:[#allocation2 + $0x50] sm:$0x1] %v270
      %v272 = vld [vmem:[#allocation2 + $0x5c] sm:$0x1]
      %v273 = vsel %vm250, 0, %v272
      %274 = vst [vmem:[#allocation2 + $0x5c] sm:$0x1] %v273
      %v275 = vld [vmem:[#allocation2 + $0x68] sm:$0x1]
      %v276 = vsel %vm250, 0, %v275
      %277 = vst [vmem:[#allocation2 + $0x68] sm:$0x1] %v276
      %v278 = vld [vmem:[#allocation2 + $0x74] sm:$0x1]
      %v279 = vsel %vm250, 0, %v278
      %280 = vst [vmem:[#allocation2 + $0x74] sm:$0x1] %v279
      %v281 = vld [vmem:[#allocation2 + $0x80] sm:$0x1]
      %v282 = vsel %vm250, 0, %v281
      %283 = vst [vmem:[#allocation2 + $0x80] sm:$0x1] %v282
      %v284 = vld [vmem:[#allocation2 + $0x8c] sm:$0x1]
      %v285 = vsel %vm250, 0, %v284
      %286 = vst [vmem:[#allocation2 + $0x8c] sm:$0x1] %v285
      %v287 = vld [vmem:[#allocation2 + $0x98] sm:$0x1]
      %v288 = vsel %vm250, 0, %v287
      %289 = vst [vmem:[#allocation2 + $0x98] sm:$0x1] %v288
      %v290 = vld [vmem:[#allocation2 + $0xa4] sm:$0x1]
      %v291 = vsel %vm250, 0, %v290
      %292 = vst [vmem:[#allocation2 + $0xa4] sm:$0x1] %v291
      %v293 = vld [vmem:[#allocation2 + $0xb0] sm:$0x1]
      %v294 = vsel %vm250, 0, %v293
      %295 = vst [vmem:[#allocation2 + $0xb0] sm:$0x1] %v294
      %v296 = vld [vmem:[#allocation2 + $0xbc] sm:$0x1]
      %v297 = vsel %vm250, 0, %v296
      %298 = vst [vmem:[#allocation2 + $0xbc] sm:$0x1] %v297
      %v299 = vld [vmem:[#allocation2 + $0xc8] sm:$0x1]
      %v300 = vsel %vm250, 0, %v299
      %301 = vst [vmem:[#allocation2 + $0xc8] sm:$0x1] %v300
      %v302 = vld [vmem:[#allocation2 + $0xd4] sm:$0x1]
      %v303 = vsel %vm250, 0, %v302
      %304 = vst [vmem:[#allocation2 + $0xd4] sm:$0x1] %v303
      %v305 = vld [vmem:[%s172] sm:$0xff]
      %v307 = vcombine.high %v305, %v305
      %309 = vxpose.xlu0.b32.start [1/16] %v305, 128
      %310 = vxpose.xlu0.b32.cont [2/16] 0.0, 128
      %311 = vxpose.xlu0.b32.cont [3/16] 0.0, 128
      %312 = vxpose.xlu0.b32.cont [4/16] 0.0, 128
      %313 = vxpose.xlu0.b32.cont [5/16] 0.0, 128
      %314 = vxpose.xlu0.b32.cont [6/16] 0.0, 128
      %315 = vxpose.xlu0.b32.cont [7/16] 0.0, 128
      %316 = vxpose.xlu0.b32.cont [8/16] 0.0, 128
      %317 = vxpose.xlu0.b32.cont [9/16] 0.0, 128
      %318 = vxpose.xlu0.b32.cont [10/16] 0.0, 128
      %319 = vxpose.xlu0.b32.cont [11/16] 0.0, 128
      %320 = vxpose.xlu0.b32.cont [12/16] 0.0, 128
      %321 = vxpose.xlu0.b32.cont [13/16] 0.0, 128
      %322 = vxpose.xlu0.b32.cont [14/16] 0.0, 128
      %323 = vxpose.xlu0.b32.cont [15/16] 0.0, 128
      %324 = vxpose.xlu0.b32.end [16/16] 0.0, 128
      %v325 = vpop.trf.xlu0
      %v326 = vpop.trf.xlu0
      %v327 = vpop.trf.xlu0
      %v328 = vpop.trf.xlu0
      %v329 = vpop.trf.xlu0
      %v330 = vpop.trf.xlu0
      %v331 = vpop.trf.xlu0
      %v332 = vpop.trf.xlu0
      %v333 = vpop.trf.xlu0
      %v334 = vpop.trf.xlu0
      %v335 = vpop.trf.xlu0
      %v336 = vpop.trf.xlu0
      %v337 = vpop.trf.xlu0
      %v338 = vpop.trf.xlu0
      %v339 = vpop.trf.xlu0
      %v340 = vpop.trf.xlu0
      %341 = vxpose.xlu0.b32.start [1/16] %v307, 128
      %342 = vxpose.xlu0.b32.cont [2/16] 0.0, 128
      %343 = vxpose.xlu0.b32.cont [3/16] 0.0, 128
      %344 = vxpose.xlu0.b32.cont [4/16] 0.0, 128
      %345 = vxpose.xlu0.b32.cont [5/16] 0.0, 128
      %346 = vxpose.xlu0.b32.cont [6/16] 0.0, 128
      %347 = vxpose.xlu0.b32.cont [7/16] 0.0, 128
      %348 = vxpose.xlu0.b32.cont [8/16] 0.0, 128
      %349 = vxpose.xlu0.b32.cont [9/16] 0.0, 128
      %350 = vxpose.xlu0.b32.cont [10/16] 0.0, 128
      %351 = vxpose.xlu0.b32.cont [11/16] 0.0, 128
      %352 = vxpose.xlu0.b32.cont [12/16] 0.0, 128
      %353 = vxpose.xlu0.b32.cont [13/16] 0.0, 128
      %354 = vxpose.xlu0.b32.cont [14/16] 0.0, 128
      %355 = vxpose.xlu0.b32.cont [15/16] 0.0, 128
      %356 = vxpose.xlu0.b32.end [16/16] 0.0, 128
      %v357 = vpop.trf.xlu0
      %v358 = vpop.trf.xlu0
      %v359 = vpop.trf.xlu0
      %v360 = vpop.trf.xlu0
      %v361 = vpop.trf.xlu0
      %v362 = vpop.trf.xlu0
      %v363 = vpop.trf.xlu0
      %v364 = vpop.trf.xlu0
      %v365 = vpop.trf.xlu0
      %v366 = vpop.trf.xlu0
      %v367 = vpop.trf.xlu0
      %v368 = vpop.trf.xlu0
      %v369 = vpop.trf.xlu0
      %v370 = vpop.trf.xlu0
      %v371 = vpop.trf.xlu0
      %v372 = vpop.trf.xlu0
      %v373 = vpack.c.bf16 %v326, %v325
      %v374 = vpack.c.bf16 %v328, %v327
      %v375 = vpack.c.bf16 %v330, %v329
      %v376 = vpack.c.bf16 %v332, %v331
      %v377 = vpack.c.bf16 %v334, %v333
      %v378 = vpack.c.bf16 %v336, %v335
      %v379 = vpack.c.bf16 %v338, %v337
      %v380 = vpack.c.bf16 %v340, %v339
      %v381 = vpack.c.bf16 %v358, %v357
      %v382 = vpack.c.bf16 %v360, %v359
      %v383 = vpack.c.bf16 %v362, %v361
      %v384 = vpack.c.bf16 %v364, %v363
      %v385 = vpack.c.bf16 %v366, %v365
      %v386 = vpack.c.bf16 %v368, %v367
      %v387 = vpack.c.bf16 %v370, %v369
      %v388 = vpack.c.bf16 %v372, %v371
      %v405 = vunpack.c.l.b16 %v373
      %v406 = vunpack.c.h.b16 %v373
      %v407 = vunpack.c.l.b16 %v374
      %v408 = vunpack.c.h.b16 %v374
      %v409 = vunpack.c.l.b16 %v375
      %v410 = vunpack.c.h.b16 %v375
      %v411 = vunpack.c.l.b16 %v376
      %v412 = vunpack.c.h.b16 %v376
      %v413 = vunpack.c.l.b16 %v377
      %v414 = vunpack.c.h.b16 %v377
      %v415 = vunpack.c.l.b16 %v378
      %v416 = vunpack.c.h.b16 %v378
      %v417 = vunpack.c.l.b16 %v379
      %v418 = vunpack.c.h.b16 %v379
      %v419 = vunpack.c.l.b16 %v380
      %v420 = vunpack.c.h.b16 %v380
      %v421 = vunpack.c.l.b16 %v381
      %v422 = vunpack.c.h.b16 %v381
      %v423 = vunpack.c.l.b16 %v382
      %v424 = vunpack.c.h.b16 %v382
      %v425 = vunpack.c.l.b16 %v383
      %v426 = vunpack.c.h.b16 %v383
      %v427 = vunpack.c.l.b16 %v384
      %v428 = vunpack.c.h.b16 %v384
      %v429 = vunpack.c.l.b16 %v385
      %v430 = vunpack.c.h.b16 %v385
      %v431 = vunpack.c.l.b16 %v386
      %v432 = vunpack.c.h.b16 %v386
      %v433 = vunpack.c.l.b16 %v387
      %v434 = vunpack.c.h.b16 %v387
      %v435 = vunpack.c.l.b16 %v388
      %v436 = vunpack.c.h.b16 %v388
      %v437 = vpack.c.b16 %v405, %v405
      %v438 = vpack.c.b16 %v406, %v406
      %v439 = vpack.c.b16 %v407, %v407
      %v440 = vpack.c.b16 %v408, %v408
      %v441 = vpack.c.b16 %v409, %v409
      %v442 = vpack.c.b16 %v410, %v410
      %v443 = vpack.c.b16 %v411, %v411
      %v444 = vpack.c.b16 %v412, %v412
      %v445 = vpack.c.b16 %v413, %v413
      %v446 = vpack.c.b16 %v414, %v414
      %v447 = vpack.c.b16 %v415, %v415
      %v448 = vpack.c.b16 %v416, %v416
      %v449 = vpack.c.b16 %v417, %v417
      %v450 = vpack.c.b16 %v418, %v418
      %v451 = vpack.c.b16 %v419, %v419
      %v452 = vpack.c.b16 %v420, %v420
      %v453 = vpack.c.b16 %v421, %v421
      %v454 = vpack.c.b16 %v422, %v422
      %v455 = vpack.c.b16 %v423, %v423
      %v456 = vpack.c.b16 %v424, %v424
      %v457 = vpack.c.b16 %v425, %v425
      %v458 = vpack.c.b16 %v426, %v426
      %v459 = vpack.c.b16 %v427, %v427
      %v460 = vpack.c.b16 %v428, %v428
      %v461 = vpack.c.b16 %v429, %v429
      %v462 = vpack.c.b16 %v430, %v430
      %v463 = vpack.c.b16 %v431, %v431
      %v464 = vpack.c.b16 %v432, %v432
      %v465 = vpack.c.b16 %v433, %v433
      %v466 = vpack.c.b16 %v434, %v434
      %v467 = vpack.c.b16 %v435, %v435
      %v468 = vpack.c.b16 %v436, %v436
      %vm469 = vsmask.f32 4368
      %vm470 = vmor %vm193, %vm469
      %v472 = vshrl.u32 %v437, 16
      %v474 = vrot.slane %v472, 7
      %v475 = vshll.u32 %v437, 16
      %v477 = vor.u32 %v474, %v475
      %v478 = vrot.slane %v474, 4
      %v480 = vshrl.u32 %v438, 16
      %v482 = vrot.slane %v480, 7
      %v483 = vshll.u32 %v438, 16
      %v485 = vor.u32 %v482, %v483
      %v486 = vsel %vm470, %v478, %v485
      %v487 = vrot.slane %v482, 4
      %v489 = vshrl.u32 %v439, 16
      %v491 = vrot.slane %v489, 7
      %v492 = vshll.u32 %v439, 16
      %v494 = vor.u32 %v491, %v492
      %v495 = vrot.slane %v491, 4
      %v497 = vshrl.u32 %v440, 16
      %v499 = vrot.slane %v497, 7
      %v500 = vshll.u32 %v440, 16
      %v502 = vor.u32 %v499, %v500
      %v503 = vsel %vm470, %v495, %v502
      %v504 = vrot.slane %v499, 4
      %v506 = vshrl.u32 %v441, 16
      %v508 = vrot.slane %v506, 7
      %v509 = vshll.u32 %v441, 16
      %v511 = vor.u32 %v508, %v509
      %v512 = vrot.slane %v508, 4
      %v514 = vshrl.u32 %v442, 16
      %v516 = vrot.slane %v514, 7
      %v517 = vshll.u32 %v442, 16
      %v519 = vor.u32 %v516, %v517
      %v520 = vsel %vm470, %v512, %v519
      %v521 = vrot.slane %v516, 4
      %v523 = vshrl.u32 %v443, 16
      %v525 = vrot.slane %v523, 7
      %v526 = vshll.u32 %v443, 16
      %v528 = vor.u32 %v525, %v526
      %v529 = vrot.slane %v525, 4
      %v531 = vshrl.u32 %v444, 16
      %v533 = vrot.slane %v531, 7
      %v534 = vshll.u32 %v444, 16
      %v536 = vor.u32 %v533, %v534
      %v537 = vsel %vm470, %v529, %v536
      %v538 = vrot.slane %v533, 4
      %v540 = vshrl.u32 %v445, 16
      %v542 = vrot.slane %v540, 7
      %v543 = vshll.u32 %v445, 16
      %v545 = vor.u32 %v542, %v543
      %v546 = vrot.slane %v542, 4
      %v548 = vshrl.u32 %v446, 16
      %v550 = vrot.slane %v548, 7
      %v551 = vshll.u32 %v446, 16
      %v553 = vor.u32 %v550, %v551
      %v554 = vsel %vm470, %v546, %v553
      %v555 = vrot.slane %v550, 4
      %v557 = vshrl.u32 %v447, 16
      %v559 = vrot.slane %v557, 7
      %v560 = vshll.u32 %v447, 16
      %v562 = vor.u32 %v559, %v560
      %v563 = vrot.slane %v559, 4
      %v565 = vshrl.u32 %v448, 16
      %v567 = vrot.slane %v565, 7
      %v568 = vshll.u32 %v448, 16
      %v570 = vor.u32 %v567, %v568
      %v571 = vsel %vm470, %v563, %v570
      %v572 = vrot.slane %v567, 4
      %v574 = vshrl.u32 %v449, 16
      %v576 = vrot.slane %v574, 7
      %v577 = vshll.u32 %v449, 16
      %v579 = vor.u32 %v576, %v577
      %v580 = vrot.slane %v576, 4
      %v582 = vshrl.u32 %v450, 16
      %v584 = vrot.slane %v582, 7
      %v585 = vshll.u32 %v450, 16
      %v587 = vor.u32 %v584, %v585
      %v588 = vsel %vm470, %v580, %v587
      %v589 = vrot.slane %v584, 4
      %v591 = vshrl.u32 %v451, 16
      %v593 = vrot.slane %v591, 7
      %v594 = vshll.u32 %v451, 16
      %v596 = vor.u32 %v593, %v594
      %v597 = vrot.slane %v593, 4
      %v599 = vshrl.u32 %v452, 16
      %v601 = vrot.slane %v599, 7
      %v602 = vshll.u32 %v452, 16
      %v604 = vor.u32 %v601, %v602
      %v605 = vsel %vm470, %v597, %v604
      %v606 = vrot.slane %v601, 4
      %v608 = vshrl.u32 %v453, 16
      %v610 = vrot.slane %v608, 7
      %v611 = vshll.u32 %v453, 16
      %v613 = vor.u32 %v610, %v611
      %v614 = vrot.slane %v610, 4
      %v616 = vshrl.u32 %v454, 16
      %v618 = vrot.slane %v616, 7
      %v619 = vshll.u32 %v454, 16
      %v621 = vor.u32 %v618, %v619
      %v622 = vsel %vm470, %v614, %v621
      %v623 = vrot.slane %v618, 4
      %v625 = vshrl.u32 %v455, 16
      %v627 = vrot.slane %v625, 7
      %v628 = vshll.u32 %v455, 16
      %v630 = vor.u32 %v627, %v628
      %v631 = vrot.slane %v627, 4
      %v633 = vshrl.u32 %v456, 16
      %v635 = vrot.slane %v633, 7
      %v636 = vshll.u32 %v456, 16
      %v638 = vor.u32 %v635, %v636
      %v639 = vsel %vm470, %v631, %v638
      %v640 = vrot.slane %v635, 4
      %v642 = vshrl.u32 %v457, 16
      %v644 = vrot.slane %v642, 7
      %v645 = vshll.u32 %v457, 16
      %v647 = vor.u32 %v644, %v645
      %v648 = vrot.slane %v644, 4
      %v650 = vshrl.u32 %v458, 16
      %v652 = vrot.slane %v650, 7
      %v653 = vshll.u32 %v458, 16
      %v655 = vor.u32 %v652, %v653
      %v656 = vsel %vm470, %v648, %v655
      %v657 = vrot.slane %v652, 4
      %v659 = vshrl.u32 %v459, 16
      %v661 = vrot.slane %v659, 7
      %v662 = vshll.u32 %v459, 16
      %v664 = vor.u32 %v661, %v662
      %v665 = vrot.slane %v661, 4
      %v667 = vshrl.u32 %v460, 16
      %v669 = vrot.slane %v667, 7
      %v670 = vshll.u32 %v460, 16
      %v672 = vor.u32 %v669, %v670
      %v673 = vsel %vm470, %v665, %v672
      %v674 = vrot.slane %v669, 4
      %v676 = vshrl.u32 %v461, 16
      %v678 = vrot.slane %v676, 7
      %v679 = vshll.u32 %v461, 16
      %v681 = vor.u32 %v678, %v679
      %v682 = vrot.slane %v678, 4
      %v684 = vshrl.u32 %v462, 16
      %v686 = vrot.slane %v684, 7
      %v687 = vshll.u32 %v462, 16
      %v689 = vor.u32 %v686, %v687
      %v690 = vsel %vm470, %v682, %v689
      %v691 = vrot.slane %v686, 4
      %v693 = vshrl.u32 %v463, 16
      %v695 = vrot.slane %v693, 7
      %v696 = vshll.u32 %v463, 16
      %v698 = vor.u32 %v695, %v696
      %v699 = vrot.slane %v695, 4
      %v701 = vshrl.u32 %v464, 16
      %v703 = vrot.slane %v701, 7
      %v704 = vshll.u32 %v464, 16
      %v706 = vor.u32 %v703, %v704
      %v707 = vsel %vm470, %v699, %v706
      %v708 = vrot.slane %v703, 4
      %v710 = vshrl.u32 %v465, 16
      %v712 = vrot.slane %v710, 7
      %v713 = vshll.u32 %v465, 16
      %v715 = vor.u32 %v712, %v713
      %v716 = vrot.slane %v712, 4
      %v718 = vshrl.u32 %v466, 16
      %v720 = vrot.slane %v718, 7
      %v721 = vshll.u32 %v466, 16
      %v723 = vor.u32 %v720, %v721
      %v724 = vsel %vm470, %v716, %v723
      %v725 = vrot.slane %v720, 4
      %v727 = vshrl.u32 %v467, 16
      %v729 = vrot.slane %v727, 7
      %v730 = vshll.u32 %v467, 16
      %v732 = vor.u32 %v729, %v730
      %v733 = vrot.slane %v729, 4
      %v735 = vshrl.u32 %v468, 16
      %v737 = vrot.slane %v735, 7
      %v738 = vshll.u32 %v468, 16
      %v740 = vor.u32 %v737, %v738
      %v741 = vsel %vm470, %v733, %v740
      %v742 = vrot.slane %v737, 4
      %s791 = scalar_lea.vmem [#allocation2], 12
      %vm792 = vcmask 27648
      %vm793 = vmand %vm792, %vm249
      %v794 = vld [vmem:[%s791] sm:$0xf]
      %v795 = vsel %vm793, %v477, %v794
      %796 = vst [vmem:[%s791] sm:$0xf] %v795
      %797 = vst.msk [vmem:[%s791 + $0x4] sm:$0xf] %vm183, %v486
      %v798 = vld [vmem:[%s791 + $0x8] sm:$0x1]
      %v799 = vsel %vm194, %v487, %v798
      %800 = vst [vmem:[%s791 + $0x8] sm:$0x1] %v799
      %v801 = vld [vmem:[%s791 + $0xc] sm:$0xf]
      %v802 = vsel %vm793, %v494, %v801
      %803 = vst [vmem:[%s791 + $0xc] sm:$0xf] %v802
      %804 = vst.msk [vmem:[%s791 + $0x10] sm:$0xf] %vm183, %v503
      %v805 = vld [vmem:[%s791 + $0x14] sm:$0x1]
      %v806 = vsel %vm194, %v504, %v805
      %807 = vst [vmem:[%s791 + $0x14] sm:$0x1] %v806
      %v808 = vld [vmem:[%s791 + $0x18] sm:$0xf]
      %v809 = vsel %vm793, %v511, %v808
      %810 = vst [vmem:[%s791 + $0x18] sm:$0xf] %v809
      %811 = vst.msk [vmem:[%s791 + $0x1c] sm:$0xf] %vm183, %v520
      %v812 = vld [vmem:[%s791 + $0x20] sm:$0x1]
      %v813 = vsel %vm194, %v521, %v812
      %814 = vst [vmem:[%s791 + $0x20] sm:$0x1] %v813
      %v815 = vld [vmem:[%s791 + $0x24] sm:$0xf]
      %v816 = vsel %vm793, %v528, %v815
      %817 = vst [vmem:[%s791 + $0x24] sm:$0xf] %v816
      %818 = vst.msk [vmem:[%s791 + $0x28] sm:$0xf] %vm183, %v537
      %v819 = vld [vmem:[%s791 + $0x2c] sm:$0x1]
      %v820 = vsel %vm194, %v538, %v819
      %821 = vst [vmem:[%s791 + $0x2c] sm:$0x1] %v820
      %v822 = vld [vmem:[%s791 + $0x30] sm:$0xf]
      %v823 = vsel %vm793, %v545, %v822
      %824 = vst [vmem:[%s791 + $0x30] sm:$0xf] %v823
      %825 = vst.msk [vmem:[%s791 + $0x34] sm:$0xf] %vm183, %v554
      %v826 = vld [vmem:[%s791 + $0x38] sm:$0x1]
      %v827 = vsel %vm194, %v555, %v826
      %828 = vst [vmem:[%s791 + $0x38] sm:$0x1] %v827
      %v829 = vld [vmem:[%s791 + $0x3c] sm:$0xf]
      %v830 = vsel %vm793, %v562, %v829
      %831 = vst [vmem:[%s791 + $0x3c] sm:$0xf] %v830
      %832 = vst.msk [vmem:[%s791 + $0x40] sm:$0xf] %vm183, %v571
      %v833 = vld [vmem:[%s791 + $0x44] sm:$0x1]
      %v834 = vsel %vm194, %v572, %v833
      %835 = vst [vmem:[%s791 + $0x44] sm:$0x1] %v834
      %v836 = vld [vmem:[%s791 + $0x48] sm:$0xf]
      %v837 = vsel %vm793, %v579, %v836
      %838 = vst [vmem:[%s791 + $0x48] sm:$0xf] %v837
      %839 = vst.msk [vmem:[%s791 + $0x4c] sm:$0xf] %vm183, %v588
      %v840 = vld [vmem:[%s791 + $0x50] sm:$0x1]
      %v841 = vsel %vm194, %v589, %v840
      %842 = vst [vmem:[%s791 + $0x50] sm:$0x1] %v841
      %v843 = vld [vmem:[%s791 + $0x54] sm:$0xf]
      %v844 = vsel %vm793, %v596, %v843
      %845 = vst [vmem:[%s791 + $0x54] sm:$0xf] %v844
      %846 = vst.msk [vmem:[%s791 + $0x58] sm:$0xf] %vm183, %v605
      %v847 = vld [vmem:[%s791 + $0x5c] sm:$0x1]
      %v848 = vsel %vm194, %v606, %v847
      %849 = vst [vmem:[%s791 + $0x5c] sm:$0x1] %v848
      %v850 = vld [vmem:[%s791 + $0x60] sm:$0xf]
      %v851 = vsel %vm793, %v613, %v850
      %852 = vst [vmem:[%s791 + $0x60] sm:$0xf] %v851
      %853 = vst.msk [vmem:[%s791 + $0x64] sm:$0xf] %vm183, %v622
      %v854 = vld [vmem:[%s791 + $0x68] sm:$0x1]
      %v855 = vsel %vm194, %v623, %v854
      %856 = vst [vmem:[%s791 + $0x68] sm:$0x1] %v855
      %v857 = vld [vmem:[%s791 + $0x6c] sm:$0xf]
      %v858 = vsel %vm793, %v630, %v857
      %859 = vst [vmem:[%s791 + $0x6c] sm:$0xf] %v858
      %860 = vst.msk [vmem:[%s791 + $0x70] sm:$0xf] %vm183, %v639
      %v861 = vld [vmem:[%s791 + $0x74] sm:$0x1]
      %v862 = vsel %vm194, %v640, %v861
      %863 = vst [vmem:[%s791 + $0x74] sm:$0x1] %v862
      %v864 = vld [vmem:[%s791 + $0x78] sm:$0xf]
      %v865 = vsel %vm793, %v647, %v864
      %866 = vst [vmem:[%s791 + $0x78] sm:$0xf] %v865
      %867 = vst.msk [vmem:[%s791 + $0x7c] sm:$0xf] %vm183, %v656
      %v868 = vld [vmem:[%s791 + $0x80] sm:$0x1]
      %v869 = vsel %vm194, %v657, %v868
      %870 = vst [vmem:[%s791 + $0x80] sm:$0x1] %v869
      %v871 = vld [vmem:[%s791 + $0x84] sm:$0xf]
      %v872 = vsel %vm793, %v664, %v871
      %873 = vst [vmem:[%s791 + $0x84] sm:$0xf] %v872
      %874 = vst.msk [vmem:[%s791 + $0x88] sm:$0xf] %vm183, %v673
      %v875 = vld [vmem:[%s791 + $0x8c] sm:$0x1]
      %v876 = vsel %vm194, %v674, %v875
      %877 = vst [vmem:[%s791 + $0x8c] sm:$0x1] %v876
      %v878 = vld [vmem:[%s791 + $0x90] sm:$0xf]
      %v879 = vsel %vm793, %v681, %v878
      %880 = vst [vmem:[%s791 + $0x90] sm:$0xf] %v879
      %881 = vst.msk [vmem:[%s791 + $0x94] sm:$0xf] %vm183, %v690
      %v882 = vld [vmem:[%s791 + $0x98] sm:$0x1]
      %v883 = vsel %vm194, %v691, %v882
      %884 = vst [vmem:[%s791 + $0x98] sm:$0x1] %v883
      %v885 = vld [vmem:[%s791 + $0x9c] sm:$0xf]
      %v886 = vsel %vm793, %v698, %v885
      %887 = vst [vmem:[%s791 + $0x9c] sm:$0xf] %v886
      %888 = vst.msk [vmem:[%s791 + $0xa0] sm:$0xf] %vm183, %v707
      %v889 = vld [vmem:[%s791 + $0xa4] sm:$0x1]
      %v890 = vsel %vm194, %v708, %v889
      %891 = vst [vmem:[%s791 + $0xa4] sm:$0x1] %v890
      %v892 = vld [vmem:[%s791 + $0xa8] sm:$0xf]
      %v893 = vsel %vm793, %v715, %v892
      %894 = vst [vmem:[%s791 + $0xa8] sm:$0xf] %v893
      %895 = vst.msk [vmem:[%s791 + $0xac] sm:$0xf] %vm183, %v724
      %v896 = vld [vmem:[%s791 + $0xb0] sm:$0x1]
      %v897 = vsel %vm194, %v725, %v896
      %898 = vst [vmem:[%s791 + $0xb0] sm:$0x1] %v897
      %v899 = vld [vmem:[%s791 + $0xb4] sm:$0xf]
      %v900 = vsel %vm793, %v732, %v899
      %901 = vst [vmem:[%s791 + $0xb4] sm:$0xf] %v900
      %902 = vst.msk [vmem:[%s791 + $0xb8] sm:$0xf] %vm183, %v741
      %v903 = vld [vmem:[%s791 + $0xbc] sm:$0x1]
      %v904 = vsel %vm194, %v742, %v903
      %905 = vst [vmem:[%s791 + $0xbc] sm:$0x1] %v904
      %v906 = vld [vmem:[#allocation2] sm:$0xf]
      %v907 = vld [vmem:[#allocation2 + $0x4] sm:$0xf]
      %v908 = vld [vmem:[#allocation2 + $0xc] sm:$0xf]
      %v909 = vld [vmem:[#allocation2 + $0x10] sm:$0xf]
      %v910 = vld [vmem:[#allocation2 + $0x18] sm:$0xf]
      %v911 = vld [vmem:[#allocation2 + $0x1c] sm:$0xf]
      %v912 = vld [vmem:[#allocation2 + $0x24] sm:$0xf]
      %v913 = vld [vmem:[#allocation2 + $0x28] sm:$0xf]
      %v914 = vld [vmem:[#allocation2 + $0x30] sm:$0xf]
      %v915 = vld [vmem:[#allocation2 + $0x34] sm:$0xf]
      %v916 = vld [vmem:[#allocation2 + $0x3c] sm:$0xf]
      %v917 = vld [vmem:[#allocation2 + $0x40] sm:$0xf]
      %v918 = vld [vmem:[#allocation2 + $0x48] sm:$0xf]
      %v919 = vld [vmem:[#allocation2 + $0x4c] sm:$0xf]
      %v920 = vld [vmem:[#allocation2 + $0x54] sm:$0xf]
      %v921 = vld [vmem:[#allocation2 + $0x58] sm:$0xf]
      %v922 = vld [vmem:[#allocation2 + $0x60] sm:$0xf]
      %v923 = vld [vmem:[#allocation2 + $0x64] sm:$0xf]
      %v924 = vld [vmem:[#allocation2 + $0x6c] sm:$0xf]
      %v925 = vld [vmem:[#allocation2 + $0x70] sm:$0xf]
      %v926 = vld [vmem:[#allocation2 + $0x78] sm:$0xf]
      %v927 = vld [vmem:[#allocation2 + $0x7c] sm:$0xf]
      %v928 = vld [vmem:[#allocation2 + $0x84] sm:$0xf]
      %v929 = vld [vmem:[#allocation2 + $0x88] sm:$0xf]
      %v930 = vld [vmem:[#allocation2 + $0x90] sm:$0xf]
      %v931 = vld [vmem:[#allocation2 + $0x94] sm:$0xf]
      %v932 = vld [vmem:[#allocation2 + $0x9c] sm:$0xf]
      %v933 = vld [vmem:[#allocation2 + $0xa0] sm:$0xf]
      %v934 = vld [vmem:[#allocation2 + $0xa8] sm:$0xf]
      %v935 = vld [vmem:[#allocation2 + $0xac] sm:$0xf]
      %v936 = vld [vmem:[#allocation2 + $0xb4] sm:$0xf]
      %v937 = vld [vmem:[#allocation2 + $0xb8] sm:$0xf]
      %v938 = vld [vmem:[#allocation2 + $0x8] sm:$0x1]
      %v939 = vld [vmem:[#allocation2 + $0x14] sm:$0x1]
      %v940 = vld [vmem:[#allocation2 + $0x20] sm:$0x1]
      %v941 = vld [vmem:[#allocation2 + $0x2c] sm:$0x1]
      %v942 = vld [vmem:[#allocation2 + $0x38] sm:$0x1]
      %v943 = vld [vmem:[#allocation2 + $0x44] sm:$0x1]
      %v944 = vld [vmem:[#allocation2 + $0x50] sm:$0x1]
      %v945 = vld [vmem:[#allocation2 + $0x5c] sm:$0x1]
      %v946 = vld [vmem:[#allocation2 + $0x68] sm:$0x1]
      %v947 = vld [vmem:[#allocation2 + $0x74] sm:$0x1]
      %v948 = vld [vmem:[#allocation2 + $0x80] sm:$0x1]
      %v949 = vld [vmem:[#allocation2 + $0x8c] sm:$0x1]
      %v950 = vld [vmem:[#allocation2 + $0x98] sm:$0x1]
      %v951 = vld [vmem:[#allocation2 + $0xa4] sm:$0x1]
      %v952 = vld [vmem:[#allocation2 + $0xb0] sm:$0x1]
      %v953 = vld [vmem:[#allocation2 + $0xbc] sm:$0x1]
      %v954 = vld [vmem:[#allocation2] sm:$0xe]
      %v955 = vld [vmem:[#allocation2 + $0xc] sm:$0xe]
      %v956 = vld [vmem:[#allocation2 + $0x18] sm:$0xe]
      %v957 = vld [vmem:[#allocation2 + $0x24] sm:$0xe]
      %v958 = vld [vmem:[#allocation2 + $0x30] sm:$0xe]
      %v959 = vld [vmem:[#allocation2 + $0x3c] sm:$0xe]
      %v960 = vld [vmem:[#allocation2 + $0x48] sm:$0xe]
      %v961 = vld [vmem:[#allocation2 + $0x54] sm:$0xe]
      %v962 = vld [vmem:[#allocation2 + $0x60] sm:$0xe]
      %v963 = vld [vmem:[#allocation2 + $0x6c] sm:$0xe]
      %v964 = vld [vmem:[#allocation2 + $0x78] sm:$0xe]
      %v965 = vld [vmem:[#allocation2 + $0x84] sm:$0xe]
      %v966 = vld [vmem:[#allocation2 + $0x90] sm:$0xe]
      %v967 = vld [vmem:[#allocation2 + $0x9c] sm:$0xe]
      %v968 = vld [vmem:[#allocation2 + $0xa8] sm:$0xe]
      %v969 = vld [vmem:[#allocation2 + $0xb4] sm:$0xe]
      %v970 = vld [vmem:[%s791] sm:$0xf]
      %v971 = vld [vmem:[%s791 + $0x4] sm:$0xf]
      %v972 = vld [vmem:[%s791 + $0xc] sm:$0xf]
      %v973 = vld [vmem:[%s791 + $0x10] sm:$0xf]
      %v974 = vld [vmem:[%s791 + $0x18] sm:$0xf]
      %v975 = vld [vmem:[%s791 + $0x1c] sm:$0xf]
      %v976 = vld [vmem:[%s791 + $0x24] sm:$0xf]
      %v977 = vld [vmem:[%s791 + $0x28] sm:$0xf]
      %v978 = vld [vmem:[%s791 + $0x30] sm:$0xf]
      %v979 = vld [vmem:[%s791 + $0x34] sm:$0xf]
      %v980 = vld [vmem:[%s791 + $0x3c] sm:$0xf]
      %v981 = vld [vmem:[%s791 + $0x40] sm:$0xf]
      %v982 = vld [vmem:[%s791 + $0x48] sm:$0xf]
      %v983 = vld [vmem:[%s791 + $0x4c] sm:$0xf]
      %v984 = vld [vmem:[%s791 + $0x54] sm:$0xf]
      %v985 = vld [vmem:[%s791 + $0x58] sm:$0xf]
      %v986 = vld [vmem:[%s791 + $0x60] sm:$0xf]
      %v987 = vld [vmem:[%s791 + $0x64] sm:$0xf]
      %v988 = vld [vmem:[%s791 + $0x6c] sm:$0xf]
      %v989 = vld [vmem:[%s791 + $0x70] sm:$0xf]
      %v990 = vld [vmem:[%s791 + $0x78] sm:$0xf]
      %v991 = vld [vmem:[%s791 + $0x7c] sm:$0xf]
      %v992 = vld [vmem:[%s791 + $0x84] sm:$0xf]
      %v993 = vld [vmem:[%s791 + $0x88] sm:$0xf]
      %v994 = vld [vmem:[%s791 + $0x90] sm:$0xf]
      %v995 = vld [vmem:[%s791 + $0x94] sm:$0xf]
      %v996 = vld [vmem:[%s791 + $0x9c] sm:$0xf]
      %v997 = vld [vmem:[%s791 + $0xa0] sm:$0xf]
      %v998 = vld [vmem:[%s791 + $0xa8] sm:$0xf]
      %v999 = vld [vmem:[%s791 + $0xac] sm:$0xf]
      %v1000 = vld [vmem:[%s791 + $0xb4] sm:$0xf]
      %v1001 = vld [vmem:[%s791 + $0xb8] sm:$0xf]
      %v1002 = vld [vmem:[%s791 + $0x8] sm:$0x1]
      %v1003 = vld [vmem:[%s791 + $0x14] sm:$0x1]
      %v1004 = vld [vmem:[%s791 + $0x20] sm:$0x1]
      %v1005 = vld [vmem:[%s791 + $0x2c] sm:$0x1]
      %v1006 = vld [vmem:[%s791 + $0x38] sm:$0x1]
      %v1007 = vld [vmem:[%s791 + $0x44] sm:$0x1]
      %v1008 = vld [vmem:[%s791 + $0x50] sm:$0x1]
      %v1009 = vld [vmem:[%s791 + $0x5c] sm:$0x1]
      %v1010 = vld [vmem:[%s791 + $0x68] sm:$0x1]
      %v1011 = vld [vmem:[%s791 + $0x74] sm:$0x1]
      %v1012 = vld [vmem:[%s791 + $0x80] sm:$0x1]
      %v1013 = vld [vmem:[%s791 + $0x8c] sm:$0x1]
      %v1014 = vld [vmem:[%s791 + $0x98] sm:$0x1]
      %v1015 = vld [vmem:[%s791 + $0xa4] sm:$0x1]
      %v1016 = vld [vmem:[%s791 + $0xb0] sm:$0x1]
      %v1017 = vld [vmem:[%s791 + $0xbc] sm:$0x1]
      %v1018 = vld [vmem:[%s791] sm:$0xe]
      %v1019 = vld [vmem:[%s791 + $0xc] sm:$0xe]
      %v1020 = vld [vmem:[%s791 + $0x18] sm:$0xe]
      %v1021 = vld [vmem:[%s791 + $0x24] sm:$0xe]
      %v1022 = vld [vmem:[%s791 + $0x30] sm:$0xe]
      %v1023 = vld [vmem:[%s791 + $0x3c] sm:$0xe]
      %v1024 = vld [vmem:[%s791 + $0x48] sm:$0xe]
      %v1025 = vld [vmem:[%s791 + $0x54] sm:$0xe]
      %v1026 = vld [vmem:[%s791 + $0x60] sm:$0xe]
      %v1027 = vld [vmem:[%s791 + $0x6c] sm:$0xe]
      %v1028 = vld [vmem:[%s791 + $0x78] sm:$0xe]
      %v1029 = vld [vmem:[%s791 + $0x84] sm:$0xe]
      %v1030 = vld [vmem:[%s791 + $0x90] sm:$0xe]
      %v1031 = vld [vmem:[%s791 + $0x9c] sm:$0xe]
      %v1032 = vld [vmem:[%s791 + $0xa8] sm:$0xe]
      %v1033 = vld [vmem:[%s791 + $0xb4] sm:$0xe]
      %s1034 = scalar_lea.vmem [#allocation2], 24
      %v1035 = vld [vmem:[%s1034] sm:$0xf]
      %v1036 = vld [vmem:[%s1034 + $0x4] sm:$0xf]
      %v1037 = vld [vmem:[%s1034 + $0xc] sm:$0xf]
      %v1038 = vld [vmem:[%s1034 + $0x10] sm:$0xf]
      %v1039 = vld [vmem:[%s1034 + $0x18] sm:$0xf]
      %v1040 = vld [vmem:[%s1034 + $0x1c] sm:$0xf]
      %v1041 = vld [vmem:[%s1034 + $0x24] sm:$0xf]
      %v1042 = vld [vmem:[%s1034 + $0x28] sm:$0xf]
      %v1043 = vld [vmem:[%s1034 + $0x30] sm:$0xf]
      %v1044 = vld [vmem:[%s1034 + $0x34] sm:$0xf]
      %v1045 = vld [vmem:[%s1034 + $0x3c] sm:$0xf]
      %v1046 = vld [vmem:[%s1034 + $0x40] sm:$0xf]
      %v1047 = vld [vmem:[%s1034 + $0x48] sm:$0xf]
      %v1048 = vld [vmem:[%s1034 + $0x4c] sm:$0xf]
      %v1049 = vld [vmem:[%s1034 + $0x54] sm:$0xf]
      %v1050 = vld [vmem:[%s1034 + $0x58] sm:$0xf]
      %v1051 = vld [vmem:[%s1034 + $0x60] sm:$0xf]
      %v1052 = vld [vmem:[%s1034 + $0x64] sm:$0xf]
      %v1053 = vld [vmem:[%s1034 + $0x6c] sm:$0xf]
      %v1054 = vld [vmem:[%s1034 + $0x70] sm:$0xf]
      %v1055 = vld [vmem:[%s1034 + $0x78] sm:$0xf]
      %v1056 = vld [vmem:[%s1034 + $0x7c] sm:$0xf]
      %v1057 = vld [vmem:[%s1034 + $0x84] sm:$0xf]
      %v1058 = vld [vmem:[%s1034 + $0x88] sm:$0xf]
      %v1059 = vld [vmem:[%s1034 + $0x90] sm:$0xf]
      %v1060 = vld [vmem:[%s1034 + $0x94] sm:$0xf]
      %v1061 = vld [vmem:[%s1034 + $0x9c] sm:$0xf]
      %v1062 = vld [vmem:[%s1034 + $0xa0] sm:$0xf]
      %v1063 = vld [vmem:[%s1034 + $0xa8] sm:$0xf]
      %v1064 = vld [vmem:[%s1034 + $0xac] sm:$0xf]
      %v1065 = vld [vmem:[%s1034 + $0xb4] sm:$0xf]
      %v1066 = vld [vmem:[%s1034 + $0xb8] sm:$0xf]
      %v1067 = vld [vmem:[%s1034 + $0x8] sm:$0x1]
      %v1068 = vld [vmem:[%s1034 + $0x14] sm:$0x1]
      %v1069 = vld [vmem:[%s1034 + $0x20] sm:$0x1]
      %v1070 = vld [vmem:[%s1034 + $0x2c] sm:$0x1]
      %v1071 = vld [vmem:[%s1034 + $0x38] sm:$0x1]
      %v1072 = vld [vmem:[%s1034 + $0x44] sm:$0x1]
      %v1073 = vld [vmem:[%s1034 + $0x50] sm:$0x1]
      %v1074 = vld [vmem:[%s1034 + $0x5c] sm:$0x1]
      %v1075 = vld [vmem:[%s1034 + $0x68] sm:$0x1]
      %v1076 = vld [vmem:[%s1034 + $0x74] sm:$0x1]
      %v1077 = vld [vmem:[%s1034 + $0x80] sm:$0x1]
      %v1078 = vld [vmem:[%s1034 + $0x8c] sm:$0x1]
      %v1079 = vld [vmem:[%s1034 + $0x98] sm:$0x1]
      %v1080 = vld [vmem:[%s1034 + $0xa4] sm:$0x1]
      %v1081 = vld [vmem:[%s1034 + $0xb0] sm:$0x1]
      %v1082 = vld [vmem:[%s1034 + $0xbc] sm:$0x1]
      %v1083 = vld [vmem:[%s1034] sm:$0xe]
      %v1084 = vld [vmem:[%s1034 + $0xc] sm:$0xe]
      %v1085 = vld [vmem:[%s1034 + $0x18] sm:$0xe]
      %v1086 = vld [vmem:[%s1034 + $0x24] sm:$0xe]
      %v1087 = vld [vmem:[%s1034 + $0x30] sm:$0xe]
      %v1088 = vld [vmem:[%s1034 + $0x3c] sm:$0xe]
      %v1089 = vld [vmem:[%s1034 + $0x48] sm:$0xe]
      %v1090 = vld [vmem:[%s1034 + $0x54] sm:$0xe]
      %v1091 = vld [vmem:[%s1034 + $0x60] sm:$0xe]
      %v1092 = vld [vmem:[%s1034 + $0x6c] sm:$0xe]
      %v1093 = vld [vmem:[%s1034 + $0x78] sm:$0xe]
      %v1094 = vld [vmem:[%s1034 + $0x84] sm:$0xe]
      %v1095 = vld [vmem:[%s1034 + $0x90] sm:$0xe]
      %v1096 = vld [vmem:[%s1034 + $0x9c] sm:$0xe]
      %v1097 = vld [vmem:[%s1034 + $0xa8] sm:$0xe]
      %v1098 = vld [vmem:[%s1034 + $0xb4] sm:$0xe]
      %v1131 = vunpack.c.l.b16 %v906
      %v1132 = vunpack.c.l.b16 %v907
      %v1133 = vunpack.c.l.b16 %v908
      %v1134 = vunpack.c.l.b16 %v909
      %v1135 = vunpack.c.l.b16 %v910
      %v1136 = vunpack.c.l.b16 %v911
      %v1137 = vunpack.c.l.b16 %v912
      %v1138 = vunpack.c.l.b16 %v913
      %v1139 = vunpack.c.l.b16 %v914
      %v1140 = vunpack.c.l.b16 %v915
      %v1141 = vunpack.c.l.b16 %v916
      %v1142 = vunpack.c.l.b16 %v917
      %v1143 = vunpack.c.l.b16 %v918
      %v1144 = vunpack.c.l.b16 %v919
      %v1145 = vunpack.c.l.b16 %v920
      %v1146 = vunpack.c.l.b16 %v921
      %v1147 = vunpack.c.l.b16 %v922
      %v1148 = vunpack.c.l.b16 %v923
      %v1149 = vunpack.c.l.b16 %v924
      %v1150 = vunpack.c.l.b16 %v925
      %v1151 = vunpack.c.l.b16 %v926
      %v1152 = vunpack.c.l.b16 %v927
      %v1153 = vunpack.c.l.b16 %v928
      %v1154 = vunpack.c.l.b16 %v929
      %v1155 = vunpack.c.l.b16 %v930
      %v1156 = vunpack.c.l.b16 %v931
      %v1157 = vunpack.c.l.b16 %v932
      %v1158 = vunpack.c.l.b16 %v933
      %v1159 = vunpack.c.l.b16 %v934
      %v1160 = vunpack.c.l.b16 %v935
      %v1161 = vunpack.c.l.b16 %v936
      %v1162 = vunpack.c.l.b16 %v937
      %v1163 = vpack.c.b16 %v1132, %v1131
      %v1164 = vpack.c.b16 %v1134, %v1133
      %v1165 = vpack.c.b16 %v1136, %v1135
      %v1166 = vpack.c.b16 %v1138, %v1137
      %v1167 = vpack.c.b16 %v1140, %v1139
      %v1168 = vpack.c.b16 %v1142, %v1141
      %v1169 = vpack.c.b16 %v1144, %v1143
      %v1170 = vpack.c.b16 %v1146, %v1145
      %v1171 = vpack.c.b16 %v1148, %v1147
      %v1172 = vpack.c.b16 %v1150, %v1149
      %v1173 = vpack.c.b16 %v1152, %v1151
      %v1174 = vpack.c.b16 %v1154, %v1153
      %v1175 = vpack.c.b16 %v1156, %v1155
      %v1176 = vpack.c.b16 %v1158, %v1157
      %v1177 = vpack.c.b16 %v1160, %v1159
      %v1178 = vpack.c.b16 %v1162, %v1161
      %v1195 = vunpack.c.l.b16 %v938
      %v1196 = vunpack.c.l.b16 %v939
      %v1197 = vunpack.c.l.b16 %v940
      %v1198 = vunpack.c.l.b16 %v941
      %v1199 = vunpack.c.l.b16 %v942
      %v1200 = vunpack.c.l.b16 %v943
      %v1201 = vunpack.c.l.b16 %v944
      %v1202 = vunpack.c.l.b16 %v945
      %v1203 = vunpack.c.l.b16 %v946
      %v1204 = vunpack.c.l.b16 %v947
      %v1205 = vunpack.c.l.b16 %v948
      %v1206 = vunpack.c.l.b16 %v949
      %v1207 = vunpack.c.l.b16 %v950
      %v1208 = vunpack.c.l.b16 %v951
      %v1209 = vunpack.c.l.b16 %v952
      %v1210 = vunpack.c.l.b16 %v953
      %v1211 = vpack.c.b16 %v1195, %v1195
      %v1212 = vpack.c.b16 %v1196, %v1196
      %v1213 = vpack.c.b16 %v1197, %v1197
      %v1214 = vpack.c.b16 %v1198, %v1198
      %v1215 = vpack.c.b16 %v1199, %v1199
      %v1216 = vpack.c.b16 %v1200, %v1200
      %v1217 = vpack.c.b16 %v1201, %v1201
      %v1218 = vpack.c.b16 %v1202, %v1202
      %v1219 = vpack.c.b16 %v1203, %v1203
      %v1220 = vpack.c.b16 %v1204, %v1204
      %v1221 = vpack.c.b16 %v1205, %v1205
      %v1222 = vpack.c.b16 %v1206, %v1206
      %v1223 = vpack.c.b16 %v1207, %v1207
      %v1224 = vpack.c.b16 %v1208, %v1208
      %v1225 = vpack.c.b16 %v1209, %v1209
      %v1226 = vpack.c.b16 %v1210, %v1210
      %vm1227 = vsmask.f32 7424
      %v1229 = vshrl.u32 %v1163, 16
      %v1231 = vshll.u32 %v1163, 16
      %v1233 = vrot.slane %v1231, 1
      %v1234 = vor.u32 %v1229, %v1233
      %v1236 = vshll.u32 %v1211, 16
      %v1238 = vrot.slane %v1236, 1
      %v1239 = vsel %vm1227, %v1234, %v1238
      %v1241 = vshrl.u32 %v1164, 16
      %v1243 = vshll.u32 %v1164, 16
      %v1245 = vrot.slane %v1243, 1
      %v1246 = vor.u32 %v1241, %v1245
      %v1248 = vshll.u32 %v1212, 16
      %v1250 = vrot.slane %v1248, 1
      %v1251 = vsel %vm1227, %v1246, %v1250
      %v1253 = vshrl.u32 %v1165, 16
      %v1255 = vshll.u32 %v1165, 16
      %v1257 = vrot.slane %v1255, 1
      %v1258 = vor.u32 %v1253, %v1257
      %v1260 = vshll.u32 %v1213, 16
      %v1262 = vrot.slane %v1260, 1
      %v1263 = vsel %vm1227, %v1258, %v1262
      %v1265 = vshrl.u32 %v1166, 16
      %v1267 = vshll.u32 %v1166, 16
      %v1269 = vrot.slane %v1267, 1
      %v1270 = vor.u32 %v1265, %v1269
      %v1272 = vshll.u32 %v1214, 16
      %v1274 = vrot.slane %v1272, 1
      %v1275 = vsel %vm1227, %v1270, %v1274
      %v1277 = vshrl.u32 %v1167, 16
      %v1279 = vshll.u32 %v1167, 16
      %v1281 = vrot.slane %v1279, 1
      %v1282 = vor.u32 %v1277, %v1281
      %v1284 = vshll.u32 %v1215, 16
      %v1286 = vrot.slane %v1284, 1
      %v1287 = vsel %vm1227, %v1282, %v1286
      %v1289 = vshrl.u32 %v1168, 16
      %v1291 = vshll.u32 %v1168, 16
      %v1293 = vrot.slane %v1291, 1
      %v1294 = vor.u32 %v1289, %v1293
      %v1296 = vshll.u32 %v1216, 16
      %v1298 = vrot.slane %v1296, 1
      %v1299 = vsel %vm1227, %v1294, %v1298
      %v1301 = vshrl.u32 %v1169, 16
      %v1303 = vshll.u32 %v1169, 16
      %v1305 = vrot.slane %v1303, 1
      %v1306 = vor.u32 %v1301, %v1305
      %v1308 = vshll.u32 %v1217, 16
      %v1310 = vrot.slane %v1308, 1
      %v1311 = vsel %vm1227, %v1306, %v1310
      %v1313 = vshrl.u32 %v1170, 16
      %v1315 = vshll.u32 %v1170, 16
      %v1317 = vrot.slane %v1315, 1
      %v1318 = vor.u32 %v1313, %v1317
      %v1320 = vshll.u32 %v1218, 16
      %v1322 = vrot.slane %v1320, 1
      %v1323 = vsel %vm1227, %v1318, %v1322
      %v1325 = vshrl.u32 %v1171, 16
      %v1327 = vshll.u32 %v1171, 16
      %v1329 = vrot.slane %v1327, 1
      %v1330 = vor.u32 %v1325, %v1329
      %v1332 = vshll.u32 %v1219, 16
      %v1334 = vrot.slane %v1332, 1
      %v1335 = vsel %vm1227, %v1330, %v1334
      %v1337 = vshrl.u32 %v1172, 16
      %v1339 = vshll.u32 %v1172, 16
      %v1341 = vrot.slane %v1339, 1
      %v1342 = vor.u32 %v1337, %v1341
      %v1344 = vshll.u32 %v1220, 16
      %v1346 = vrot.slane %v1344, 1
      %v1347 = vsel %vm1227, %v1342, %v1346
      %v1349 = vshrl.u32 %v1173, 16
      %v1351 = vshll.u32 %v1173, 16
      %v1353 = vrot.slane %v1351, 1
      %v1354 = vor.u32 %v1349, %v1353
      %v1356 = vshll.u32 %v1221, 16
      %v1358 = vrot.slane %v1356, 1
      %v1359 = vsel %vm1227, %v1354, %v1358
      %v1361 = vshrl.u32 %v1174, 16
      %v1363 = vshll.u32 %v1174, 16
      %v1365 = vrot.slane %v1363, 1
      %v1366 = vor.u32 %v1361, %v1365
      %v1368 = vshll.u32 %v1222, 16
      %v1370 = vrot.slane %v1368, 1
      %v1371 = vsel %vm1227, %v1366, %v1370
      %v1373 = vshrl.u32 %v1175, 16
      %v1375 = vshll.u32 %v1175, 16
      %v1377 = vrot.slane %v1375, 1
      %v1378 = vor.u32 %v1373, %v1377
      %v1380 = vshll.u32 %v1223, 16
      %v1382 = vrot.slane %v1380, 1
      %v1383 = vsel %vm1227, %v1378, %v1382
      %v1385 = vshrl.u32 %v1176, 16
      %v1387 = vshll.u32 %v1176, 16
      %v1389 = vrot.slane %v1387, 1
      %v1390 = vor.u32 %v1385, %v1389
      %v1392 = vshll.u32 %v1224, 16
      %v1394 = vrot.slane %v1392, 1
      %v1395 = vsel %vm1227, %v1390, %v1394
      %v1397 = vshrl.u32 %v1177, 16
      %v1399 = vshll.u32 %v1177, 16
      %v1401 = vrot.slane %v1399, 1
      %v1402 = vor.u32 %v1397, %v1401
      %v1404 = vshll.u32 %v1225, 16
      %v1406 = vrot.slane %v1404, 1
      %v1407 = vsel %vm1227, %v1402, %v1406
      %v1409 = vshrl.u32 %v1178, 16
      %v1411 = vshll.u32 %v1178, 16
      %v1413 = vrot.slane %v1411, 1
      %v1414 = vor.u32 %v1409, %v1413
      %v1416 = vshll.u32 %v1226, 16
      %v1418 = vrot.slane %v1416, 1
      %v1419 = vsel %vm1227, %v1414, %v1418
      %1420 = vrot.lane.b32.xlu0 %v1239, 4
      %v1421 = vpop.permute.xlu0 %1420
      %1422 = vrot.lane.b32.xlu0 %v1251, 4
      %v1423 = vpop.permute.xlu0 %1422
      %1424 = vrot.lane.b32.xlu0 %v1263, 4
      %v1425 = vpop.permute.xlu0 %1424
      %1426 = vrot.lane.b32.xlu0 %v1275, 4
      %v1427 = vpop.permute.xlu0 %1426
      %1428 = vrot.lane.b32.xlu0 %v1287, 4
      %v1429 = vpop.permute.xlu0 %1428
      %1430 = vrot.lane.b32.xlu0 %v1299, 4
      %v1431 = vpop.permute.xlu0 %1430
      %1432 = vrot.lane.b32.xlu0 %v1311, 4
      %v1433 = vpop.permute.xlu0 %1432
      %1434 = vrot.lane.b32.xlu0 %v1323, 4
      %v1435 = vpop.permute.xlu0 %1434
      %1436 = vrot.lane.b32.xlu0 %v1335, 4
      %v1437 = vpop.permute.xlu0 %1436
      %1438 = vrot.lane.b32.xlu0 %v1347, 4
      %v1439 = vpop.permute.xlu0 %1438
      %1440 = vrot.lane.b32.xlu0 %v1359, 4
      %v1441 = vpop.permute.xlu0 %1440
      %1442 = vrot.lane.b32.xlu0 %v1371, 4
      %v1443 = vpop.permute.xlu0 %1442
      %1444 = vrot.lane.b32.xlu0 %v1383, 4
      %v1445 = vpop.permute.xlu0 %1444
      %1446 = vrot.lane.b32.xlu0 %v1395, 4
      %v1447 = vpop.permute.xlu0 %1446
      %1448 = vrot.lane.b32.xlu0 %v1407, 4
      %v1449 = vpop.permute.xlu0 %1448
      %1450 = vrot.lane.b32.xlu0 %v1419, 4
      %v1451 = vpop.permute.xlu0 %1450
      %v1468 = vunpack.c.l.b16 %v954
      %v1469 = vunpack.c.l.b16 %v955
      %v1470 = vunpack.c.l.b16 %v956
      %v1471 = vunpack.c.l.b16 %v957
      %v1472 = vunpack.c.l.b16 %v958
      %v1473 = vunpack.c.l.b16 %v959
      %v1474 = vunpack.c.l.b16 %v960
      %v1475 = vunpack.c.l.b16 %v961
      %v1476 = vunpack.c.l.b16 %v962
      %v1477 = vunpack.c.l.b16 %v963
      %v1478 = vunpack.c.l.b16 %v964
      %v1479 = vunpack.c.l.b16 %v965
      %v1480 = vunpack.c.l.b16 %v966
      %v1481 = vunpack.c.l.b16 %v967
      %v1482 = vunpack.c.l.b16 %v968
      %v1483 = vunpack.c.l.b16 %v969
      %v1484 = vpack.c.b16 %v1132, %v1468
      %v1485 = vpack.c.b16 %v1134, %v1469
      %v1486 = vpack.c.b16 %v1136, %v1470
      %v1487 = vpack.c.b16 %v1138, %v1471
      %v1488 = vpack.c.b16 %v1140, %v1472
      %v1489 = vpack.c.b16 %v1142, %v1473
      %v1490 = vpack.c.b16 %v1144, %v1474
      %v1491 = vpack.c.b16 %v1146, %v1475
      %v1492 = vpack.c.b16 %v1148, %v1476
      %v1493 = vpack.c.b16 %v1150, %v1477
      %v1494 = vpack.c.b16 %v1152, %v1478
      %v1495 = vpack.c.b16 %v1154, %v1479
      %v1496 = vpack.c.b16 %v1156, %v1480
      %v1497 = vpack.c.b16 %v1158, %v1481
      %v1498 = vpack.c.b16 %v1160, %v1482
      %v1499 = vpack.c.b16 %v1162, %v1483
      %vm1500 = vcmask 1046528
      %v1501 = vrot.slane %v1484, 1
      %v1502 = vrot.slane %v1211, 1
      %v1503 = vsel %vm1500, %v1501, %v1502
      %v1504 = vrot.slane %v1485, 1
      %v1505 = vrot.slane %v1212, 1
      %v1506 = vsel %vm1500, %v1504, %v1505
      %v1507 = vrot.slane %v1486, 1
      %v1508 = vrot.slane %v1213, 1
      %v1509 = vsel %vm1500, %v1507, %v1508
      %v1510 = vrot.slane %v1487, 1
      %v1511 = vrot.slane %v1214, 1
      %v1512 = vsel %vm1500, %v1510, %v1511
      %v1513 = vrot.slane %v1488, 1
      %v1514 = vrot.slane %v1215, 1
      %v1515 = vsel %vm1500, %v1513, %v1514
      %v1516 = vrot.slane %v1489, 1
      %v1517 = vrot.slane %v1216, 1
      %v1518 = vsel %vm1500, %v1516, %v1517
      %v1519 = vrot.slane %v1490, 1
      %v1520 = vrot.slane %v1217, 1
      %v1521 = vsel %vm1500, %v1519, %v1520
      %v1522 = vrot.slane %v1491, 1
      %v1523 = vrot.slane %v1218, 1
      %v1524 = vsel %vm1500, %v1522, %v1523
      %v1525 = vrot.slane %v1492, 1
      %v1526 = vrot.slane %v1219, 1
      %v1527 = vsel %vm1500, %v1525, %v1526
      %v1528 = vrot.slane %v1493, 1
      %v1529 = vrot.slane %v1220, 1
      %v1530 = vsel %vm1500, %v1528, %v1529
      %v1531 = vrot.slane %v1494, 1
      %v1532 = vrot.slane %v1221, 1
      %v1533 = vsel %vm1500, %v1531, %v1532
      %v1534 = vrot.slane %v1495, 1
      %v1535 = vrot.slane %v1222, 1
      %v1536 = vsel %vm1500, %v1534, %v1535
      %v1537 = vrot.slane %v1496, 1
      %v1538 = vrot.slane %v1223, 1
      %v1539 = vsel %vm1500, %v1537, %v1538
      %v1540 = vrot.slane %v1497, 1
      %v1541 = vrot.slane %v1224, 1
      %v1542 = vsel %vm1500, %v1540, %v1541
      %v1543 = vrot.slane %v1498, 1
      %v1544 = vrot.slane %v1225, 1
      %v1545 = vsel %vm1500, %v1543, %v1544
      %v1546 = vrot.slane %v1499, 1
      %v1547 = vrot.slane %v1226, 1
      %v1548 = vsel %vm1500, %v1546, %v1547
      %1549 = vrot.lane.b32.xlu0 %v1503, 8
      %v1550 = vpop.permute.xlu0 %1549
      %1551 = vrot.lane.b32.xlu0 %v1506, 8
      %v1552 = vpop.permute.xlu0 %1551
      %1553 = vrot.lane.b32.xlu0 %v1509, 8
      %v1554 = vpop.permute.xlu0 %1553
      %1555 = vrot.lane.b32.xlu0 %v1512, 8
      %v1556 = vpop.permute.xlu0 %1555
      %1557 = vrot.lane.b32.xlu0 %v1515, 8
      %v1558 = vpop.permute.xlu0 %1557
      %1559 = vrot.lane.b32.xlu0 %v1518, 8
      %v1560 = vpop.permute.xlu0 %1559
      %1561 = vrot.lane.b32.xlu0 %v1521, 8
      %v1562 = vpop.permute.xlu0 %1561
      %1563 = vrot.lane.b32.xlu0 %v1524, 8
      %v1564 = vpop.permute.xlu0 %1563
      %1565 = vrot.lane.b32.xlu0 %v1527, 8
      %v1566 = vpop.permute.xlu0 %1565
      %1567 = vrot.lane.b32.xlu0 %v1530, 8
      %v1568 = vpop.permute.xlu0 %1567
      %1569 = vrot.lane.b32.xlu0 %v1533, 8
      %v1570 = vpop.permute.xlu0 %1569
      %1571 = vrot.lane.b32.xlu0 %v1536, 8
      %v1572 = vpop.permute.xlu0 %1571
      %1573 = vrot.lane.b32.xlu0 %v1539, 8
      %v1574 = vpop.permute.xlu0 %1573
      %1575 = vrot.lane.b32.xlu0 %v1542, 8
      %v1576 = vpop.permute.xlu0 %1575
      %1577 = vrot.lane.b32.xlu0 %v1545, 8
      %v1578 = vpop.permute.xlu0 %1577
      %1579 = vrot.lane.b32.xlu0 %v1548, 8
      %v1580 = vpop.permute.xlu0 %1579
      %v1613 = vunpack.c.l.b16 %v970
      %v1614 = vunpack.c.l.b16 %v971
      %v1615 = vunpack.c.l.b16 %v972
      %v1616 = vunpack.c.l.b16 %v973
      %v1617 = vunpack.c.l.b16 %v974
      %v1618 = vunpack.c.l.b16 %v975
      %v1619 = vunpack.c.l.b16 %v976
      %v1620 = vunpack.c.l.b16 %v977
      %v1621 = vunpack.c.l.b16 %v978
      %v1622 = vunpack.c.l.b16 %v979
      %v1623 = vunpack.c.l.b16 %v980
      %v1624 = vunpack.c.l.b16 %v981
      %v1625 = vunpack.c.l.b16 %v982
      %v1626 = vunpack.c.l.b16 %v983
      %v1627 = vunpack.c.l.b16 %v984
      %v1628 = vunpack.c.l.b16 %v985
      %v1629 = vunpack.c.l.b16 %v986
      %v1630 = vunpack.c.l.b16 %v987
      %v1631 = vunpack.c.l.b16 %v988
      %v1632 = vunpack.c.l.b16 %v989
      %v1633 = vunpack.c.l.b16 %v990
      %v1634 = vunpack.c.l.b16 %v991
      %v1635 = vunpack.c.l.b16 %v992
      %v1636 = vunpack.c.l.b16 %v993
      %v1637 = vunpack.c.l.b16 %v994
      %v1638 = vunpack.c.l.b16 %v995
      %v1639 = vunpack.c.l.b16 %v996
      %v1640 = vunpack.c.l.b16 %v997
      %v1641 = vunpack.c.l.b16 %v998
      %v1642 = vunpack.c.l.b16 %v999
      %v1643 = vunpack.c.l.b16 %v1000
      %v1644 = vunpack.c.l.b16 %v1001
      %v1645 = vpack.c.b16 %v1614, %v1613
      %v1646 = vpack.c.b16 %v1616, %v1615
      %v1647 = vpack.c.b16 %v1618, %v1617
      %v1648 = vpack.c.b16 %v1620, %v1619
      %v1649 = vpack.c.b16 %v1622, %v1621
      %v1650 = vpack.c.b16 %v1624, %v1623
      %v1651 = vpack.c.b16 %v1626, %v1625
      %v1652 = vpack.c.b16 %v1628, %v1627
      %v1653 = vpack.c.b16 %v1630, %v1629
      %v1654 = vpack.c.b16 %v1632, %v1631
      %v1655 = vpack.c.b16 %v1634, %v1633
      %v1656 = vpack.c.b16 %v1636, %v1635
      %v1657 = vpack.c.b16 %v1638, %v1637
      %v1658 = vpack.c.b16 %v1640, %v1639
      %v1659 = vpack.c.b16 %v1642, %v1641
      %v1660 = vpack.c.b16 %v1644, %v1643
      %1661 = vrot.lane.b32.xlu0 %v1645, 12
      %v1662 = vpop.permute.xlu0 %1661
      %1663 = vrot.lane.b32.xlu0 %v1646, 12
      %v1664 = vpop.permute.xlu0 %1663
      %1665 = vrot.lane.b32.xlu0 %v1647, 12
      %v1666 = vpop.permute.xlu0 %1665
      %1667 = vrot.lane.b32.xlu0 %v1648, 12
      %v1668 = vpop.permute.xlu0 %1667
      %1669 = vrot.lane.b32.xlu0 %v1649, 12
      %v1670 = vpop.permute.xlu0 %1669
      %1671 = vrot.lane.b32.xlu0 %v1650, 12
      %v1672 = vpop.permute.xlu0 %1671
      %1673 = vrot.lane.b32.xlu0 %v1651, 12
      %v1674 = vpop.permute.xlu0 %1673
      %1675 = vrot.lane.b32.xlu0 %v1652, 12
      %v1676 = vpop.permute.xlu0 %1675
      %1677 = vrot.lane.b32.xlu0 %v1653, 12
      %v1678 = vpop.permute.xlu0 %1677
      %1679 = vrot.lane.b32.xlu0 %v1654, 12
      %v1680 = vpop.permute.xlu0 %1679
      %1681 = vrot.lane.b32.xlu0 %v1655, 12
      %v1682 = vpop.permute.xlu0 %1681
      %1683 = vrot.lane.b32.xlu0 %v1656, 12
      %v1684 = vpop.permute.xlu0 %1683
      %1685 = vrot.lane.b32.xlu0 %v1657, 12
      %v1686 = vpop.permute.xlu0 %1685
      %1687 = vrot.lane.b32.xlu0 %v1658, 12
      %v1688 = vpop.permute.xlu0 %1687
      %1689 = vrot.lane.b32.xlu0 %v1659, 12
      %v1690 = vpop.permute.xlu0 %1689
      %1691 = vrot.lane.b32.xlu0 %v1660, 12
      %v1692 = vpop.permute.xlu0 %1691
      %v1709 = vunpack.c.l.b16 %v1002
      %v1710 = vunpack.c.l.b16 %v1003
      %v1711 = vunpack.c.l.b16 %v1004
      %v1712 = vunpack.c.l.b16 %v1005
      %v1713 = vunpack.c.l.b16 %v1006
      %v1714 = vunpack.c.l.b16 %v1007
      %v1715 = vunpack.c.l.b16 %v1008
      %v1716 = vunpack.c.l.b16 %v1009
      %v1717 = vunpack.c.l.b16 %v1010
      %v1718 = vunpack.c.l.b16 %v1011
      %v1719 = vunpack.c.l.b16 %v1012
      %v1720 = vunpack.c.l.b16 %v1013
      %v1721 = vunpack.c.l.b16 %v1014
      %v1722 = vunpack.c.l.b16 %v1015
      %v1723 = vunpack.c.l.b16 %v1016
      %v1724 = vunpack.c.l.b16 %v1017
      %v1725 = vpack.c.b16 %v1709, %v1709
      %v1726 = vpack.c.b16 %v1710, %v1710
      %v1727 = vpack.c.b16 %v1711, %v1711
      %v1728 = vpack.c.b16 %v1712, %v1712
      %v1729 = vpack.c.b16 %v1713, %v1713
      %v1730 = vpack.c.b16 %v1714, %v1714
      %v1731 = vpack.c.b16 %v1715, %v1715
      %v1732 = vpack.c.b16 %v1716, %v1716
      %v1733 = vpack.c.b16 %v1717, %v1717
      %v1734 = vpack.c.b16 %v1718, %v1718
      %v1735 = vpack.c.b16 %v1719, %v1719
      %v1736 = vpack.c.b16 %v1720, %v1720
      %v1737 = vpack.c.b16 %v1721, %v1721
      %v1738 = vpack.c.b16 %v1722, %v1722
      %v1739 = vpack.c.b16 %v1723, %v1723
      %v1740 = vpack.c.b16 %v1724, %v1724
      %v1742 = vshrl.u32 %v1645, 16
      %v1744 = vshll.u32 %v1645, 16
      %v1746 = vrot.slane %v1744, 1
      %v1747 = vor.u32 %v1742, %v1746
      %v1749 = vshll.u32 %v1725, 16
      %v1751 = vrot.slane %v1749, 1
      %v1752 = vsel %vm1227, %v1747, %v1751
      %v1754 = vshrl.u32 %v1646, 16
      %v1756 = vshll.u32 %v1646, 16
      %v1758 = vrot.slane %v1756, 1
      %v1759 = vor.u32 %v1754, %v1758
      %v1761 = vshll.u32 %v1726, 16
      %v1763 = vrot.slane %v1761, 1
      %v1764 = vsel %vm1227, %v1759, %v1763
      %v1766 = vshrl.u32 %v1647, 16
      %v1768 = vshll.u32 %v1647, 16
      %v1770 = vrot.slane %v1768, 1
      %v1771 = vor.u32 %v1766, %v1770
      %v1773 = vshll.u32 %v1727, 16
      %v1775 = vrot.slane %v1773, 1
      %v1776 = vsel %vm1227, %v1771, %v1775
      %v1778 = vshrl.u32 %v1648, 16
      %v1780 = vshll.u32 %v1648, 16
      %v1782 = vrot.slane %v1780, 1
      %v1783 = vor.u32 %v1778, %v1782
      %v1785 = vshll.u32 %v1728, 16
      %v1787 = vrot.slane %v1785, 1
      %v1788 = vsel %vm1227, %v1783, %v1787
      %v1790 = vshrl.u32 %v1649, 16
      %v1792 = vshll.u32 %v1649, 16
      %v1794 = vrot.slane %v1792, 1
      %v1795 = vor.u32 %v1790, %v1794
      %v1797 = vshll.u32 %v1729, 16
      %v1799 = vrot.slane %v1797, 1
      %v1800 = vsel %vm1227, %v1795, %v1799
      %v1802 = vshrl.u32 %v1650, 16
      %v1804 = vshll.u32 %v1650, 16
      %v1806 = vrot.slane %v1804, 1
      %v1807 = vor.u32 %v1802, %v1806
      %v1809 = vshll.u32 %v1730, 16
      %v1811 = vrot.slane %v1809, 1
      %v1812 = vsel %vm1227, %v1807, %v1811
      %v1814 = vshrl.u32 %v1651, 16
      %v1816 = vshll.u32 %v1651, 16
      %v1818 = vrot.slane %v1816, 1
      %v1819 = vor.u32 %v1814, %v1818
      %v1821 = vshll.u32 %v1731, 16
      %v1823 = vrot.slane %v1821, 1
      %v1824 = vsel %vm1227, %v1819, %v1823
      %v1826 = vshrl.u32 %v1652, 16
      %v1828 = vshll.u32 %v1652, 16
      %v1830 = vrot.slane %v1828, 1
      %v1831 = vor.u32 %v1826, %v1830
      %v1833 = vshll.u32 %v1732, 16
      %v1835 = vrot.slane %v1833, 1
      %v1836 = vsel %vm1227, %v1831, %v1835
      %v1838 = vshrl.u32 %v1653, 16
      %v1840 = vshll.u32 %v1653, 16
      %v1842 = vrot.slane %v1840, 1
      %v1843 = vor.u32 %v1838, %v1842
      %v1845 = vshll.u32 %v1733, 16
      %v1847 = vrot.slane %v1845, 1
      %v1848 = vsel %vm1227, %v1843, %v1847
      %v1850 = vshrl.u32 %v1654, 16
      %v1852 = vshll.u32 %v1654, 16
      %v1854 = vrot.slane %v1852, 1
      %v1855 = vor.u32 %v1850, %v1854
      %v1857 = vshll.u32 %v1734, 16
      %v1859 = vrot.slane %v1857, 1
      %v1860 = vsel %vm1227, %v1855, %v1859
      %v1862 = vshrl.u32 %v1655, 16
      %v1864 = vshll.u32 %v1655, 16
      %v1866 = vrot.slane %v1864, 1
      %v1867 = vor.u32 %v1862, %v1866
      %v1869 = vshll.u32 %v1735, 16
      %v1871 = vrot.slane %v1869, 1
      %v1872 = vsel %vm1227, %v1867, %v1871
      %v1874 = vshrl.u32 %v1656, 16
      %v1876 = vshll.u32 %v1656, 16
      %v1878 = vrot.slane %v1876, 1
      %v1879 = vor.u32 %v1874, %v1878
      %v1881 = vshll.u32 %v1736, 16
      %v1883 = vrot.slane %v1881, 1
      %v1884 = vsel %vm1227, %v1879, %v1883
      %v1886 = vshrl.u32 %v1657, 16
      %v1888 = vshll.u32 %v1657, 16
      %v1890 = vrot.slane %v1888, 1
      %v1891 = vor.u32 %v1886, %v1890
      %v1893 = vshll.u32 %v1737, 16
      %v1895 = vrot.slane %v1893, 1
      %v1896 = vsel %vm1227, %v1891, %v1895
      %v1898 = vshrl.u32 %v1658, 16
      %v1900 = vshll.u32 %v1658, 16
      %v1902 = vrot.slane %v1900, 1
      %v1903 = vor.u32 %v1898, %v1902
      %v1905 = vshll.u32 %v1738, 16
      %v1907 = vrot.slane %v1905, 1
      %v1908 = vsel %vm1227, %v1903, %v1907
      %v1910 = vshrl.u32 %v1659, 16
      %v1912 = vshll.u32 %v1659, 16
      %v1914 = vrot.slane %v1912, 1
      %v1915 = vor.u32 %v1910, %v1914
      %v1917 = vshll.u32 %v1739, 16
      %v1919 = vrot.slane %v1917, 1
      %v1920 = vsel %vm1227, %v1915, %v1919
      %v1922 = vshrl.u32 %v1660, 16
      %v1924 = vshll.u32 %v1660, 16
      %v1926 = vrot.slane %v1924, 1
      %v1927 = vor.u32 %v1922, %v1926
      %v1929 = vshll.u32 %v1740, 16
      %v1931 = vrot.slane %v1929, 1
      %v1932 = vsel %vm1227, %v1927, %v1931
      %1933 = vrot.lane.b32.xlu0 %v1752, 16
      %v1934 = vpop.permute.xlu0 %1933
      %1935 = vrot.lane.b32.xlu0 %v1764, 16
      %v1936 = vpop.permute.xlu0 %1935
      %1937 = vrot.lane.b32.xlu0 %v1776, 16
      %v1938 = vpop.permute.xlu0 %1937
      %1939 = vrot.lane.b32.xlu0 %v1788, 16
      %v1940 = vpop.permute.xlu0 %1939
      %1941 = vrot.lane.b32.xlu0 %v1800, 16
      %v1942 = vpop.permute.xlu0 %1941
      %1943 = vrot.lane.b32.xlu0 %v1812, 16
      %v1944 = vpop.permute.xlu0 %1943
      %1945 = vrot.lane.b32.xlu0 %v1824, 16
      %v1946 = vpop.permute.xlu0 %1945
      %1947 = vrot.lane.b32.xlu0 %v1836, 16
      %v1948 = vpop.permute.xlu0 %1947
      %1949 = vrot.lane.b32.xlu0 %v1848, 16
      %v1950 = vpop.permute.xlu0 %1949
      %1951 = vrot.lane.b32.xlu0 %v1860, 16
      %v1952 = vpop.permute.xlu0 %1951
      %1953 = vrot.lane.b32.xlu0 %v1872, 16
      %v1954 = vpop.permute.xlu0 %1953
      %1955 = vrot.lane.b32.xlu0 %v1884, 16
      %v1956 = vpop.permute.xlu0 %1955
      %1957 = vrot.lane.b32.xlu0 %v1896, 16
      %v1958 = vpop.permute.xlu0 %1957
      %1959 = vrot.lane.b32.xlu0 %v1908, 16
      %v1960 = vpop.permute.xlu0 %1959
      %1961 = vrot.lane.b32.xlu0 %v1920, 16
      %v1962 = vpop.permute.xlu0 %1961
      %1963 = vrot.lane.b32.xlu0 %v1932, 16
      %v1964 = vpop.permute.xlu0 %1963
      %v1981 = vunpack.c.l.b16 %v1018
      %v1982 = vunpack.c.l.b16 %v1019
      %v1983 = vunpack.c.l.b16 %v1020
      %v1984 = vunpack.c.l.b16 %v1021
      %v1985 = vunpack.c.l.b16 %v1022
      %v1986 = vunpack.c.l.b16 %v1023
      %v1987 = vunpack.c.l.b16 %v1024
      %v1988 = vunpack.c.l.b16 %v1025
      %v1989 = vunpack.c.l.b16 %v1026
      %v1990 = vunpack.c.l.b16 %v1027
      %v1991 = vunpack.c.l.b16 %v1028
      %v1992 = vunpack.c.l.b16 %v1029
      %v1993 = vunpack.c.l.b16 %v1030
      %v1994 = vunpack.c.l.b16 %v1031
      %v1995 = vunpack.c.l.b16 %v1032
      %v1996 = vunpack.c.l.b16 %v1033
      %v1997 = vpack.c.b16 %v1614, %v1981
      %v1998 = vpack.c.b16 %v1616, %v1982
      %v1999 = vpack.c.b16 %v1618, %v1983
      %v2000 = vpack.c.b16 %v1620, %v1984
      %v2001 = vpack.c.b16 %v1622, %v1985
      %v2002 = vpack.c.b16 %v1624, %v1986
      %v2003 = vpack.c.b16 %v1626, %v1987
      %v2004 = vpack.c.b16 %v1628, %v1988
      %v2005 = vpack.c.b16 %v1630, %v1989
      %v2006 = vpack.c.b16 %v1632, %v1990
      %v2007 = vpack.c.b16 %v1634, %v1991
      %v2008 = vpack.c.b16 %v1636, %v1992
      %v2009 = vpack.c.b16 %v1638, %v1993
      %v2010 = vpack.c.b16 %v1640, %v1994
      %v2011 = vpack.c.b16 %v1642, %v1995
      %v2012 = vpack.c.b16 %v1644, %v1996
      %v2013 = vrot.slane %v1997, 1
      %v2014 = vrot.slane %v1725, 1
      %v2015 = vsel %vm1500, %v2013, %v2014
      %v2016 = vrot.slane %v1998, 1
      %v2017 = vrot.slane %v1726, 1
      %v2018 = vsel %vm1500, %v2016, %v2017
      %v2019 = vrot.slane %v1999, 1
      %v2020 = vrot.slane %v1727, 1
      %v2021 = vsel %vm1500, %v2019, %v2020
      %v2022 = vrot.slane %v2000, 1
      %v2023 = vrot.slane %v1728, 1
      %v2024 = vsel %vm1500, %v2022, %v2023
      %v2025 = vrot.slane %v2001, 1
      %v2026 = vrot.slane %v1729, 1
      %v2027 = vsel %vm1500, %v2025, %v2026
      %v2028 = vrot.slane %v2002, 1
      %v2029 = vrot.slane %v1730, 1
      %v2030 = vsel %vm1500, %v2028, %v2029
      %v2031 = vrot.slane %v2003, 1
      %v2032 = vrot.slane %v1731, 1
      %v2033 = vsel %vm1500, %v2031, %v2032
      %v2034 = vrot.slane %v2004, 1
      %v2035 = vrot.slane %v1732, 1
      %v2036 = vsel %vm1500, %v2034, %v2035
      %v2037 = vrot.slane %v2005, 1
      %v2038 = vrot.slane %v1733, 1
      %v2039 = vsel %vm1500, %v2037, %v2038
      %v2040 = vrot.slane %v2006, 1
      %v2041 = vrot.slane %v1734, 1
      %v2042 = vsel %vm1500, %v2040, %v2041
      %v2043 = vrot.slane %v2007, 1
      %v2044 = vrot.slane %v1735, 1
      %v2045 = vsel %vm1500, %v2043, %v2044
      %v2046 = vrot.slane %v2008, 1
      %v2047 = vrot.slane %v1736, 1
      %v2048 = vsel %vm1500, %v2046, %v2047
      %v2049 = vrot.slane %v2009, 1
      %v2050 = vrot.slane %v1737, 1
      %v2051 = vsel %vm1500, %v2049, %v2050
      %v2052 = vrot.slane %v2010, 1
      %v2053 = vrot.slane %v1738, 1
      %v2054 = vsel %vm1500, %v2052, %v2053
      %v2055 = vrot.slane %v2011, 1
      %v2056 = vrot.slane %v1739, 1
      %v2057 = vsel %vm1500, %v2055, %v2056
      %v2058 = vrot.slane %v2012, 1
      %v2059 = vrot.slane %v1740, 1
      %v2060 = vsel %vm1500, %v2058, %v2059
      %2061 = vrot.lane.b32.xlu0 %v2015, 20
      %v2062 = vpop.permute.xlu0 %2061
      %2063 = vrot.lane.b32.xlu0 %v2018, 20
      %v2064 = vpop.permute.xlu0 %2063
      %2065 = vrot.lane.b32.xlu0 %v2021, 20
      %v2066 = vpop.permute.xlu0 %2065
      %2067 = vrot.lane.b32.xlu0 %v2024, 20
      %v2068 = vpop.permute.xlu0 %2067
      %2069 = vrot.lane.b32.xlu0 %v2027, 20
      %v2070 = vpop.permute.xlu0 %2069
      %2071 = vrot.lane.b32.xlu0 %v2030, 20
      %v2072 = vpop.permute.xlu0 %2071
      %2073 = vrot.lane.b32.xlu0 %v2033, 20
      %v2074 = vpop.permute.xlu0 %2073
      %2075 = vrot.lane.b32.xlu0 %v2036, 20
      %v2076 = vpop.permute.xlu0 %2075
      %2077 = vrot.lane.b32.xlu0 %v2039, 20
      %v2078 = vpop.permute.xlu0 %2077
      %2079 = vrot.lane.b32.xlu0 %v2042, 20
      %v2080 = vpop.permute.xlu0 %2079
      %2081 = vrot.lane.b32.xlu0 %v2045, 20
      %v2082 = vpop.permute.xlu0 %2081
      %2083 = vrot.lane.b32.xlu0 %v2048, 20
      %v2084 = vpop.permute.xlu0 %2083
      %2085 = vrot.lane.b32.xlu0 %v2051, 20
      %v2086 = vpop.permute.xlu0 %2085
      %2087 = vrot.lane.b32.xlu0 %v2054, 20
      %v2088 = vpop.permute.xlu0 %2087
      %2089 = vrot.lane.b32.xlu0 %v2057, 20
      %v2090 = vpop.permute.xlu0 %2089
      %2091 = vrot.lane.b32.xlu0 %v2060, 20
      %v2092 = vpop.permute.xlu0 %2091
      %v2125 = vunpack.c.l.b16 %v1035
      %v2126 = vunpack.c.l.b16 %v1036
      %v2127 = vunpack.c.l.b16 %v1037
      %v2128 = vunpack.c.l.b16 %v1038
      %v2129 = vunpack.c.l.b16 %v1039
      %v2130 = vunpack.c.l.b16 %v1040
      %v2131 = vunpack.c.l.b16 %v1041
      %v2132 = vunpack.c.l.b16 %v1042
      %v2133 = vunpack.c.l.b16 %v1043
      %v2134 = vunpack.c.l.b16 %v1044
      %v2135 = vunpack.c.l.b16 %v1045
      %v2136 = vunpack.c.l.b16 %v1046
      %v2137 = vunpack.c.l.b16 %v1047
      %v2138 = vunpack.c.l.b16 %v1048
      %v2139 = vunpack.c.l.b16 %v1049
      %v2140 = vunpack.c.l.b16 %v1050
      %v2141 = vunpack.c.l.b16 %v1051
      %v2142 = vunpack.c.l.b16 %v1052
      %v2143 = vunpack.c.l.b16 %v1053
      %v2144 = vunpack.c.l.b16 %v1054
      %v2145 = vunpack.c.l.b16 %v1055
      %v2146 = vunpack.c.l.b16 %v1056
      %v2147 = vunpack.c.l.b16 %v1057
      %v2148 = vunpack.c.l.b16 %v1058
      %v2149 = vunpack.c.l.b16 %v1059
      %v2150 = vunpack.c.l.b16 %v1060
      %v2151 = vunpack.c.l.b16 %v1061
      %v2152 = vunpack.c.l.b16 %v1062
      %v2153 = vunpack.c.l.b16 %v1063
      %v2154 = vunpack.c.l.b16 %v1064
      %v2155 = vunpack.c.l.b16 %v1065
      %v2156 = vunpack.c.l.b16 %v1066
      %v2157 = vpack.c.b16 %v2126, %v2125
      %v2158 = vpack.c.b16 %v2128, %v2127
      %v2159 = vpack.c.b16 %v2130, %v2129
      %v2160 = vpack.c.b16 %v2132, %v2131
      %v2161 = vpack.c.b16 %v2134, %v2133
      %v2162 = vpack.c.b16 %v2136, %v2135
      %v2163 = vpack.c.b16 %v2138, %v2137
      %v2164 = vpack.c.b16 %v2140, %v2139
      %v2165 = vpack.c.b16 %v2142, %v2141
      %v2166 = vpack.c.b16 %v2144, %v2143
      %v2167 = vpack.c.b16 %v2146, %v2145
      %v2168 = vpack.c.b16 %v2148, %v2147
      %v2169 = vpack.c.b16 %v2150, %v2149
      %v2170 = vpack.c.b16 %v2152, %v2151
      %v2171 = vpack.c.b16 %v2154, %v2153
      %v2172 = vpack.c.b16 %v2156, %v2155
      %2173 = vrot.lane.b32.xlu0 %v2157, 24
      %v2174 = vpop.permute.xlu0 %2173
      %2175 = vrot.lane.b32.xlu0 %v2158, 24
      %v2176 = vpop.permute.xlu0 %2175
      %2177 = vrot.lane.b32.xlu0 %v2159, 24
      %v2178 = vpop.permute.xlu0 %2177
      %2179 = vrot.lane.b32.xlu0 %v2160, 24
      %v2180 = vpop.permute.xlu0 %2179
      %2181 = vrot.lane.b32.xlu0 %v2161, 24
      %v2182 = vpop.permute.xlu0 %2181
      %2183 = vrot.lane.b32.xlu0 %v2162, 24
      %v2184 = vpop.permute.xlu0 %2183
      %2185 = vrot.lane.b32.xlu0 %v2163, 24
      %v2186 = vpop.permute.xlu0 %2185
      %2187 = vrot.lane.b32.xlu0 %v2164, 24
      %v2188 = vpop.permute.xlu0 %2187
      %2189 = vrot.lane.b32.xlu0 %v2165, 24
      %v2190 = vpop.permute.xlu0 %2189
      %2191 = vrot.lane.b32.xlu0 %v2166, 24
      %v2192 = vpop.permute.xlu0 %2191
      %2193 = vrot.lane.b32.xlu0 %v2167, 24
      %v2194 = vpop.permute.xlu0 %2193
      %2195 = vrot.lane.b32.xlu0 %v2168, 24
      %v2196 = vpop.permute.xlu0 %2195
      %2197 = vrot.lane.b32.xlu0 %v2169, 24
      %v2198 = vpop.permute.xlu0 %2197
      %2199 = vrot.lane.b32.xlu0 %v2170, 24
      %v2200 = vpop.permute.xlu0 %2199
      %2201 = vrot.lane.b32.xlu0 %v2171, 24
      %v2202 = vpop.permute.xlu0 %2201
      %2203 = vrot.lane.b32.xlu0 %v2172, 24
      %v2204 = vpop.permute.xlu0 %2203
      %v2221 = vunpack.c.l.b16 %v1067
      %v2222 = vunpack.c.l.b16 %v1068
      %v2223 = vunpack.c.l.b16 %v1069
      %v2224 = vunpack.c.l.b16 %v1070
      %v2225 = vunpack.c.l.b16 %v1071
      %v2226 = vunpack.c.l.b16 %v1072
      %v2227 = vunpack.c.l.b16 %v1073
      %v2228 = vunpack.c.l.b16 %v1074
      %v2229 = vunpack.c.l.b16 %v1075
      %v2230 = vunpack.c.l.b16 %v1076
      %v2231 = vunpack.c.l.b16 %v1077
      %v2232 = vunpack.c.l.b16 %v1078
      %v2233 = vunpack.c.l.b16 %v1079
      %v2234 = vunpack.c.l.b16 %v1080
      %v2235 = vunpack.c.l.b16 %v1081
      %v2236 = vunpack.c.l.b16 %v1082
      %v2237 = vpack.c.b16 %v2221, %v2221
      %v2238 = vpack.c.b16 %v2222, %v2222
      %v2239 = vpack.c.b16 %v2223, %v2223
      %v2240 = vpack.c.b16 %v2224, %v2224
      %v2241 = vpack.c.b16 %v2225, %v2225
      %v2242 = vpack.c.b16 %v2226, %v2226
      %v2243 = vpack.c.b16 %v2227, %v2227
      %v2244 = vpack.c.b16 %v2228, %v2228
      %v2245 = vpack.c.b16 %v2229, %v2229
      %v2246 = vpack.c.b16 %v2230, %v2230
      %v2247 = vpack.c.b16 %v2231, %v2231
      %v2248 = vpack.c.b16 %v2232, %v2232
      %v2249 = vpack.c.b16 %v2233, %v2233
      %v2250 = vpack.c.b16 %v2234, %v2234
      %v2251 = vpack.c.b16 %v2235, %v2235
      %v2252 = vpack.c.b16 %v2236, %v2236
      %v2254 = vshrl.u32 %v2157, 16
      %v2256 = vshll.u32 %v2157, 16
      %v2258 = vrot.slane %v2256, 1
      %v2259 = vor.u32 %v2254, %v2258
      %v2261 = vshll.u32 %v2237, 16
      %v2263 = vrot.slane %v2261, 1
      %v2264 = vsel %vm1227, %v2259, %v2263
      %v2266 = vshrl.u32 %v2158, 16
      %v2268 = vshll.u32 %v2158, 16
      %v2270 = vrot.slane %v2268, 1
      %v2271 = vor.u32 %v2266, %v2270
      %v2273 = vshll.u32 %v2238, 16
      %v2275 = vrot.slane %v2273, 1
      %v2276 = vsel %vm1227, %v2271, %v2275
      %v2278 = vshrl.u32 %v2159, 16
      %v2280 = vshll.u32 %v2159, 16
      %v2282 = vrot.slane %v2280, 1
      %v2283 = vor.u32 %v2278, %v2282
      %v2285 = vshll.u32 %v2239, 16
      %v2287 = vrot.slane %v2285, 1
      %v2288 = vsel %vm1227, %v2283, %v2287
      %v2290 = vshrl.u32 %v2160, 16
      %v2292 = vshll.u32 %v2160, 16
      %v2294 = vrot.slane %v2292, 1
      %v2295 = vor.u32 %v2290, %v2294
      %v2297 = vshll.u32 %v2240, 16
      %v2299 = vrot.slane %v2297, 1
      %v2300 = vsel %vm1227, %v2295, %v2299
      %v2302 = vshrl.u32 %v2161, 16
      %v2304 = vshll.u32 %v2161, 16
      %v2306 = vrot.slane %v2304, 1
      %v2307 = vor.u32 %v2302, %v2306
      %v2309 = vshll.u32 %v2241, 16
      %v2311 = vrot.slane %v2309, 1
      %v2312 = vsel %vm1227, %v2307, %v2311
      %v2314 = vshrl.u32 %v2162, 16
      %v2316 = vshll.u32 %v2162, 16
      %v2318 = vrot.slane %v2316, 1
      %v2319 = vor.u32 %v2314, %v2318
      %v2321 = vshll.u32 %v2242, 16
      %v2323 = vrot.slane %v2321, 1
      %v2324 = vsel %vm1227, %v2319, %v2323
      %v2326 = vshrl.u32 %v2163, 16
      %v2328 = vshll.u32 %v2163, 16
      %v2330 = vrot.slane %v2328, 1
      %v2331 = vor.u32 %v2326, %v2330
      %v2333 = vshll.u32 %v2243, 16
      %v2335 = vrot.slane %v2333, 1
      %v2336 = vsel %vm1227, %v2331, %v2335
      %v2338 = vshrl.u32 %v2164, 16
      %v2340 = vshll.u32 %v2164, 16
      %v2342 = vrot.slane %v2340, 1
      %v2343 = vor.u32 %v2338, %v2342
      %v2345 = vshll.u32 %v2244, 16
      %v2347 = vrot.slane %v2345, 1
      %v2348 = vsel %vm1227, %v2343, %v2347
      %v2350 = vshrl.u32 %v2165, 16
      %v2352 = vshll.u32 %v2165, 16
      %v2354 = vrot.slane %v2352, 1
      %v2355 = vor.u32 %v2350, %v2354
      %v2357 = vshll.u32 %v2245, 16
      %v2359 = vrot.slane %v2357, 1
      %v2360 = vsel %vm1227, %v2355, %v2359
      %v2362 = vshrl.u32 %v2166, 16
      %v2364 = vshll.u32 %v2166, 16
      %v2366 = vrot.slane %v2364, 1
      %v2367 = vor.u32 %v2362, %v2366
      %v2369 = vshll.u32 %v2246, 16
      %v2371 = vrot.slane %v2369, 1
      %v2372 = vsel %vm1227, %v2367, %v2371
      %v2374 = vshrl.u32 %v2167, 16
      %v2376 = vshll.u32 %v2167, 16
      %v2378 = vrot.slane %v2376, 1
      %v2379 = vor.u32 %v2374, %v2378
      %v2381 = vshll.u32 %v2247, 16
      %v2383 = vrot.slane %v2381, 1
      %v2384 = vsel %vm1227, %v2379, %v2383
      %v2386 = vshrl.u32 %v2168, 16
      %v2388 = vshll.u32 %v2168, 16
      %v2390 = vrot.slane %v2388, 1
      %v2391 = vor.u32 %v2386, %v2390
      %v2393 = vshll.u32 %v2248, 16
      %v2395 = vrot.slane %v2393, 1
      %v2396 = vsel %vm1227, %v2391, %v2395
      %v2398 = vshrl.u32 %v2169, 16
      %v2400 = vshll.u32 %v2169, 16
      %v2402 = vrot.slane %v2400, 1
      %v2403 = vor.u32 %v2398, %v2402
      %v2405 = vshll.u32 %v2249, 16
      %v2407 = vrot.slane %v2405, 1
      %v2408 = vsel %vm1227, %v2403, %v2407
      %v2410 = vshrl.u32 %v2170, 16
      %v2412 = vshll.u32 %v2170, 16
      %v2414 = vrot.slane %v2412, 1
      %v2415 = vor.u32 %v2410, %v2414
      %v2417 = vshll.u32 %v2250, 16
      %v2419 = vrot.slane %v2417, 1
      %v2420 = vsel %vm1227, %v2415, %v2419
      %v2422 = vshrl.u32 %v2171, 16
      %v2424 = vshll.u32 %v2171, 16
      %v2426 = vrot.slane %v2424, 1
      %v2427 = vor.u32 %v2422, %v2426
      %v2429 = vshll.u32 %v2251, 16
      %v2431 = vrot.slane %v2429, 1
      %v2432 = vsel %vm1227, %v2427, %v2431
      %v2434 = vshrl.u32 %v2172, 16
      %v2436 = vshll.u32 %v2172, 16
      %v2438 = vrot.slane %v2436, 1
      %v2439 = vor.u32 %v2434, %v2438
      %v2441 = vshll.u32 %v2252, 16
      %v2443 = vrot.slane %v2441, 1
      %v2444 = vsel %vm1227, %v2439, %v2443
      %2445 = vrot.lane.b32.xlu0 %v2264, 28
      %v2446 = vpop.permute.xlu0 %2445
      %2447 = vrot.lane.b32.xlu0 %v2276, 28
      %v2448 = vpop.permute.xlu0 %2447
      %2449 = vrot.lane.b32.xlu0 %v2288, 28
      %v2450 = vpop.permute.xlu0 %2449
      %2451 = vrot.lane.b32.xlu0 %v2300, 28
      %v2452 = vpop.permute.xlu0 %2451
      %2453 = vrot.lane.b32.xlu0 %v2312, 28
      %v2454 = vpop.permute.xlu0 %2453
      %2455 = vrot.lane.b32.xlu0 %v2324, 28
      %v2456 = vpop.permute.xlu0 %2455
      %2457 = vrot.lane.b32.xlu0 %v2336, 28
      %v2458 = vpop.permute.xlu0 %2457
      %2459 = vrot.lane.b32.xlu0 %v2348, 28
      %v2460 = vpop.permute.xlu0 %2459
      %2461 = vrot.lane.b32.xlu0 %v2360, 28
      %v2462 = vpop.permute.xlu0 %2461
      %2463 = vrot.lane.b32.xlu0 %v2372, 28
      %v2464 = vpop.permute.xlu0 %2463
      %2465 = vrot.lane.b32.xlu0 %v2384, 28
      %v2466 = vpop.permute.xlu0 %2465
      %2467 = vrot.lane.b32.xlu0 %v2396, 28
      %v2468 = vpop.permute.xlu0 %2467
      %2469 = vrot.lane.b32.xlu0 %v2408, 28
      %v2470 = vpop.permute.xlu0 %2469
      %2471 = vrot.lane.b32.xlu0 %v2420, 28
      %v2472 = vpop.permute.xlu0 %2471
      %2473 = vrot.lane.b32.xlu0 %v2432, 28
      %v2474 = vpop.permute.xlu0 %2473
      %2475 = vrot.lane.b32.xlu0 %v2444, 28
      %v2476 = vpop.permute.xlu0 %2475
      %v2493 = vunpack.c.l.b16 %v1083
      %v2494 = vunpack.c.l.b16 %v1084
      %v2495 = vunpack.c.l.b16 %v1085
      %v2496 = vunpack.c.l.b16 %v1086
      %v2497 = vunpack.c.l.b16 %v1087
      %v2498 = vunpack.c.l.b16 %v1088
      %v2499 = vunpack.c.l.b16 %v1089
      %v2500 = vunpack.c.l.b16 %v1090
      %v2501 = vunpack.c.l.b16 %v1091
      %v2502 = vunpack.c.l.b16 %v1092
      %v2503 = vunpack.c.l.b16 %v1093
      %v2504 = vunpack.c.l.b16 %v1094
      %v2505 = vunpack.c.l.b16 %v1095
      %v2506 = vunpack.c.l.b16 %v1096
      %v2507 = vunpack.c.l.b16 %v1097
      %v2508 = vunpack.c.l.b16 %v1098
      %v2509 = vpack.c.b16 %v2126, %v2493
      %v2510 = vpack.c.b16 %v2128, %v2494
      %v2511 = vpack.c.b16 %v2130, %v2495
      %v2512 = vpack.c.b16 %v2132, %v2496
      %v2513 = vpack.c.b16 %v2134, %v2497
      %v2514 = vpack.c.b16 %v2136, %v2498
      %v2515 = vpack.c.b16 %v2138, %v2499
      %v2516 = vpack.c.b16 %v2140, %v2500
      %v2517 = vpack.c.b16 %v2142, %v2501
      %v2518 = vpack.c.b16 %v2144, %v2502
      %v2519 = vpack.c.b16 %v2146, %v2503
      %v2520 = vpack.c.b16 %v2148, %v2504
      %v2521 = vpack.c.b16 %v2150, %v2505
      %v2522 = vpack.c.b16 %v2152, %v2506
      %v2523 = vpack.c.b16 %v2154, %v2507
      %v2524 = vpack.c.b16 %v2156, %v2508
      %v2525 = vrot.slane %v2509, 1
      %v2526 = vrot.slane %v2237, 1
      %v2527 = vsel %vm1500, %v2525, %v2526
      %v2528 = vrot.slane %v2510, 1
      %v2529 = vrot.slane %v2238, 1
      %v2530 = vsel %vm1500, %v2528, %v2529
      %v2531 = vrot.slane %v2511, 1
      %v2532 = vrot.slane %v2239, 1
      %v2533 = vsel %vm1500, %v2531, %v2532
      %v2534 = vrot.slane %v2512, 1
      %v2535 = vrot.slane %v2240, 1
      %v2536 = vsel %vm1500, %v2534, %v2535
      %v2537 = vrot.slane %v2513, 1
      %v2538 = vrot.slane %v2241, 1
      %v2539 = vsel %vm1500, %v2537, %v2538
      %v2540 = vrot.slane %v2514, 1
      %v2541 = vrot.slane %v2242, 1
      %v2542 = vsel %vm1500, %v2540, %v2541
      %v2543 = vrot.slane %v2515, 1
      %v2544 = vrot.slane %v2243, 1
      %v2545 = vsel %vm1500, %v2543, %v2544
      %v2546 = vrot.slane %v2516, 1
      %v2547 = vrot.slane %v2244, 1
      %v2548 = vsel %vm1500, %v2546, %v2547
      %v2549 = vrot.slane %v2517, 1
      %v2550 = vrot.slane %v2245, 1
      %v2551 = vsel %vm1500, %v2549, %v2550
      %v2552 = vrot.slane %v2518, 1
      %v2553 = vrot.slane %v2246, 1
      %v2554 = vsel %vm1500, %v2552, %v2553
      %v2555 = vrot.slane %v2519, 1
      %v2556 = vrot.slane %v2247, 1
      %v2557 = vsel %vm1500, %v2555, %v2556
      %v2558 = vrot.slane %v2520, 1
      %v2559 = vrot.slane %v2248, 1
      %v2560 = vsel %vm1500, %v2558, %v2559
      %v2561 = vrot.slane %v2521, 1
      %v2562 = vrot.slane %v2249, 1
      %v2563 = vsel %vm1500, %v2561, %v2562
      %v2564 = vrot.slane %v2522, 1
      %v2565 = vrot.slane %v2250, 1
      %v2566 = vsel %vm1500, %v2564, %v2565
      %v2567 = vrot.slane %v2523, 1
      %v2568 = vrot.slane %v2251, 1
      %v2569 = vsel %vm1500, %v2567, %v2568
      %v2570 = vrot.slane %v2524, 1
      %v2571 = vrot.slane %v2252, 1
      %v2572 = vsel %vm1500, %v2570, %v2571
      %2573 = vrot.lane.b32.xlu0 %v2527, 32
      %v2574 = vpop.permute.xlu0 %2573
      %2575 = vrot.lane.b32.xlu0 %v2530, 32
      %v2576 = vpop.permute.xlu0 %2575
      %2577 = vrot.lane.b32.xlu0 %v2533, 32
      %v2578 = vpop.permute.xlu0 %2577
      %2579 = vrot.lane.b32.xlu0 %v2536, 32
      %v2580 = vpop.permute.xlu0 %2579
      %2581 = vrot.lane.b32.xlu0 %v2539, 32
      %v2582 = vpop.permute.xlu0 %2581
      %2583 = vrot.lane.b32.xlu0 %v2542, 32
      %v2584 = vpop.permute.xlu0 %2583
      %2585 = vrot.lane.b32.xlu0 %v2545, 32
      %v2586 = vpop.permute.xlu0 %2585
      %2587 = vrot.lane.b32.xlu0 %v2548, 32
      %v2588 = vpop.permute.xlu0 %2587
      %2589 = vrot.lane.b32.xlu0 %v2551, 32
      %v2590 = vpop.permute.xlu0 %2589
      %2591 = vrot.lane.b32.xlu0 %v2554, 32
      %v2592 = vpop.permute.xlu0 %2591
      %2593 = vrot.lane.b32.xlu0 %v2557, 32
      %v2594 = vpop.permute.xlu0 %2593
      %2595 = vrot.lane.b32.xlu0 %v2560, 32
      %v2596 = vpop.permute.xlu0 %2595
      %2597 = vrot.lane.b32.xlu0 %v2563, 32
      %v2598 = vpop.permute.xlu0 %2597
      %2599 = vrot.lane.b32.xlu0 %v2566, 32
      %v2600 = vpop.permute.xlu0 %2599
      %2601 = vrot.lane.b32.xlu0 %v2569, 32
      %v2602 = vpop.permute.xlu0 %2601
      %2603 = vrot.lane.b32.xlu0 %v2572, 32
      %v2604 = vpop.permute.xlu0 %2603
      %vm2605 = vcmask 31744
      %v2607 = vsel %vm2605, %v1163, %v1421
      %v2609 = vsel %vm2605, %v1164, %v1423
      %v2611 = vsel %vm2605, %v1165, %v1425
      %v2613 = vsel %vm2605, %v1166, %v1427
      %v2615 = vsel %vm2605, %v1167, %v1429
      %v2617 = vsel %vm2605, %v1168, %v1431
      %v2619 = vsel %vm2605, %v1169, %v1433
      %v2621 = vsel %vm2605, %v1170, %v1435
      %v2623 = vsel %vm2605, %v1171, %v1437
      %v2625 = vsel %vm2605, %v1172, %v1439
      %v2627 = vsel %vm2605, %v1173, %v1441
      %v2629 = vsel %vm2605, %v1174, %v1443
      %v2631 = vsel %vm2605, %v1175, %v1445
      %v2633 = vsel %vm2605, %v1176, %v1447
      %v2635 = vsel %vm2605, %v1177, %v1449
      %v2637 = vsel %vm2605, %v1178, %v1451
      %vm2638 = vcmask 64512
      %v2640 = vsel %vm2638, %v2607, %v1550
      %v2642 = vsel %vm2638, %v2609, %v1552
      %v2644 = vsel %vm2638, %v2611, %v1554
      %v2646 = vsel %vm2638, %v2613, %v1556
      %v2648 = vsel %vm2638, %v2615, %v1558
      %v2650 = vsel %vm2638, %v2617, %v1560
      %v2652 = vsel %vm2638, %v2619, %v1562
      %v2654 = vsel %vm2638, %v2621, %v1564
      %v2656 = vsel %vm2638, %v2623, %v1566
      %v2658 = vsel %vm2638, %v2625, %v1568
      %v2660 = vsel %vm2638, %v2627, %v1570
      %v2662 = vsel %vm2638, %v2629, %v1572
      %v2664 = vsel %vm2638, %v2631, %v1574
      %v2666 = vsel %vm2638, %v2633, %v1576
      %v2668 = vsel %vm2638, %v2635, %v1578
      %v2670 = vsel %vm2638, %v2637, %v1580
      %vm2671 = vcmask 97280
      %v2673 = vsel %vm2671, %v2640, %v1662
      %v2675 = vsel %vm2671, %v2642, %v1664
      %v2677 = vsel %vm2671, %v2644, %v1666
      %v2679 = vsel %vm2671, %v2646, %v1668
      %v2681 = vsel %vm2671, %v2648, %v1670
      %v2683 = vsel %vm2671, %v2650, %v1672
      %v2685 = vsel %vm2671, %v2652, %v1674
      %v2687 = vsel %vm2671, %v2654, %v1676
      %v2689 = vsel %vm2671, %v2656, %v1678
      %v2691 = vsel %vm2671, %v2658, %v1680
      %v2693 = vsel %vm2671, %v2660, %v1682
      %v2695 = vsel %vm2671, %v2662, %v1684
      %v2697 = vsel %vm2671, %v2664, %v1686
      %v2699 = vsel %vm2671, %v2666, %v1688
      %v2701 = vsel %vm2671, %v2668, %v1690
      %v2703 = vsel %vm2671, %v2670, %v1692
      %vm2704 = vcmask 130048
      %v2706 = vsel %vm2704, %v2673, %v1934
      %v2708 = vsel %vm2704, %v2675, %v1936
      %v2710 = vsel %vm2704, %v2677, %v1938
      %v2712 = vsel %vm2704, %v2679, %v1940
      %v2714 = vsel %vm2704, %v2681, %v1942
      %v2716 = vsel %vm2704, %v2683, %v1944
      %v2718 = vsel %vm2704, %v2685, %v1946
      %v2720 = vsel %vm2704, %v2687, %v1948
      %v2722 = vsel %vm2704, %v2689, %v1950
      %v2724 = vsel %vm2704, %v2691, %v1952
      %v2726 = vsel %vm2704, %v2693, %v1954
      %v2728 = vsel %vm2704, %v2695, %v1956
      %v2730 = vsel %vm2704, %v2697, %v1958
      %v2732 = vsel %vm2704, %v2699, %v1960
      %v2734 = vsel %vm2704, %v2701, %v1962
      %v2736 = vsel %vm2704, %v2703, %v1964
      %vm2737 = vcmask 162816
      %v2739 = vsel %vm2737, %v2706, %v2062
      %v2741 = vsel %vm2737, %v2708, %v2064
      %v2743 = vsel %vm2737, %v2710, %v2066
      %v2745 = vsel %vm2737, %v2712, %v2068
      %v2747 = vsel %vm2737, %v2714, %v2070
      %v2749 = vsel %vm2737, %v2716, %v2072
      %v2751 = vsel %vm2737, %v2718, %v2074
      %v2753 = vsel %vm2737, %v2720, %v2076
      %v2755 = vsel %vm2737, %v2722, %v2078
      %v2757 = vsel %vm2737, %v2724, %v2080
      %v2759 = vsel %vm2737, %v2726, %v2082
      %v2761 = vsel %vm2737, %v2728, %v2084
      %v2763 = vsel %vm2737, %v2730, %v2086
      %v2765 = vsel %vm2737, %v2732, %v2088
      %v2767 = vsel %vm2737, %v2734, %v2090
      %v2769 = vsel %vm2737, %v2736, %v2092
      %vm2770 = vcmask 195584
      %v2772 = vsel %vm2770, %v2739, %v2174
      %v2774 = vsel %vm2770, %v2741, %v2176
      %v2776 = vsel %vm2770, %v2743, %v2178
      %v2778 = vsel %vm2770, %v2745, %v2180
      %v2780 = vsel %vm2770, %v2747, %v2182
      %v2782 = vsel %vm2770, %v2749, %v2184
      %v2784 = vsel %vm2770, %v2751, %v2186
      %v2786 = vsel %vm2770, %v2753, %v2188
      %v2788 = vsel %vm2770, %v2755, %v2190
      %v2790 = vsel %vm2770, %v2757, %v2192
      %v2792 = vsel %vm2770, %v2759, %v2194
      %v2794 = vsel %vm2770, %v2761, %v2196
      %v2796 = vsel %vm2770, %v2763, %v2198
      %v2798 = vsel %vm2770, %v2765, %v2200
      %v2800 = vsel %vm2770, %v2767, %v2202
      %v2802 = vsel %vm2770, %v2769, %v2204
      %vm2803 = vcmask 228352
      %v2805 = vsel %vm2803, %v2772, %v2446
      %v2807 = vsel %vm2803, %v2774, %v2448
      %v2809 = vsel %vm2803, %v2776, %v2450
      %v2811 = vsel %vm2803, %v2778, %v2452
      %v2813 = vsel %vm2803, %v2780, %v2454
      %v2815 = vsel %vm2803, %v2782, %v2456
      %v2817 = vsel %vm2803, %v2784, %v2458
      %v2819 = vsel %vm2803, %v2786, %v2460
      %v2821 = vsel %vm2803, %v2788, %v2462
      %v2823 = vsel %vm2803, %v2790, %v2464
      %v2825 = vsel %vm2803, %v2792, %v2466
      %v2827 = vsel %vm2803, %v2794, %v2468
      %v2829 = vsel %vm2803, %v2796, %v2470
      %v2831 = vsel %vm2803, %v2798, %v2472
      %v2833 = vsel %vm2803, %v2800, %v2474
      %v2835 = vsel %vm2803, %v2802, %v2476
      %vm2836 = vcmask 261120
      %v2838 = vsel %vm2836, %v2805, %v2574
      %v2840 = vsel %vm2836, %v2807, %v2576
      %v2842 = vsel %vm2836, %v2809, %v2578
      %v2844 = vsel %vm2836, %v2811, %v2580
      %v2846 = vsel %vm2836, %v2813, %v2582
      %v2848 = vsel %vm2836, %v2815, %v2584
      %v2850 = vsel %vm2836, %v2817, %v2586
      %v2852 = vsel %vm2836, %v2819, %v2588
      %v2854 = vsel %vm2836, %v2821, %v2590
      %v2856 = vsel %vm2836, %v2823, %v2592
      %v2858 = vsel %vm2836, %v2825, %v2594
      %v2860 = vsel %vm2836, %v2827, %v2596
      %v2862 = vsel %vm2836, %v2829, %v2598
      %v2864 = vsel %vm2836, %v2831, %v2600
      %v2866 = vsel %vm2836, %v2833, %v2602
      %v2868 = vsel %vm2836, %v2835, %v2604
      %v2869 = vld [vmem:[%s1] sm:$0xf]
      %v2870 = vld [vmem:[%s1 + $0x4] sm:$0xf]
      %v2871 = vld [vmem:[%s1 + $0x8] sm:$0xf]
      %v2872 = vld [vmem:[%s1 + $0xc] sm:$0xf]
      %v2873 = vld [vmem:[%s1 + $0x10] sm:$0x3]
      %v2879 = vunpack.c.l.b16 %v2869
      %v2880 = vunpack.c.l.b16 %v2870
      %v2881 = vunpack.c.l.b16 %v2871
      %v2882 = vunpack.c.l.b16 %v2872
      %v2883 = vunpack.c.l.b16 %v2873
      %v2884 = vpack.c.b16 %v2880, %v2879
      %v2885 = vpack.c.b16 %v2882, %v2881
      %v2886 = vpack.c.b16 %v2883, %v2883
      %vm2889 = vcmask 293888
      %v2890 = vsel %vm2889, %v2838, 0
      %v2892 = vsel %vm2889, %v2840, 0
      %v2894 = vsel %vm2889, %v2842, 0
      %v2896 = vsel %vm2889, %v2844, 0
      %v2898 = vsel %vm2889, %v2846, 0
      %v2900 = vsel %vm2889, %v2848, 0
      %v2902 = vsel %vm2889, %v2850, 0
      %v2904 = vsel %vm2889, %v2852, 0
      %v2906 = vsel %vm2889, %v2854, 0
      %v2908 = vsel %vm2889, %v2856, 0
      %v2910 = vsel %vm2889, %v2858, 0
      %v2912 = vsel %vm2889, %v2860, 0
      %v2914 = vsel %vm2889, %v2862, 0
      %v2916 = vsel %vm2889, %v2864, 0
      %v2918 = vsel %vm2889, %v2866, 0
      %v2920 = vsel %vm2889, %v2868, 0
      %vm2922 = vcmask 1041408
      %v2924 = vsel %vm2922, %v2886, 0
      %2926 = vmatprep.subr.bf16.mxu0 0
      %2927 = vmatpush1.bf16.msra.mxu0 %v2884
      %2928 = vmatprep.subr.bf16.mxu0 0
      %2929 = vmatpush1.bf16.msra.mxu0 %v2885
      %2930 = vmatprep.subr.bf16.mxu0 0
      %2931 = vmatpush1.bf16.msra.mxu0 %v2924
      %2932 = vmatprep.subr.bf16.mxu0 0
      %2933 = vmatpush1.bf16.msra.mxu0 0
      %2934 = vmatprep.subr.bf16.mxu0 0
      %2935 = vmatpush1.bf16.msra.mxu0 0
      %2936 = vmatprep.subr.bf16.mxu0 0
      %2937 = vmatpush1.bf16.msra.mxu0 0
      %2938 = vmatprep.subr.bf16.mxu0 0
      %2939 = vmatpush1.bf16.msra.mxu0 0
      %2940 = vmatprep.subr.bf16.mxu0 0
      %2941 = vmatpush1.bf16.msra.mxu0 0
      %2942 = vmatprep.subr.bf16.mxu0 0
      %2943 = vmatpush1.bf16.msra.mxu0 0
      %2944 = vmatprep.subr.bf16.mxu0 0
      %2945 = vmatpush1.bf16.msra.mxu0 0
      %2946 = vmatprep.subr.bf16.mxu0 0
      %2947 = vmatpush1.bf16.msra.mxu0 0
      %2948 = vmatprep.subr.bf16.mxu0 0
      %2949 = vmatpush1.bf16.msra.mxu0 0
      %2950 = vmatprep.subr.bf16.mxu0 0
      %2951 = vmatpush1.bf16.msra.mxu0 0
      %2952 = vmatprep.subr.bf16.mxu0 0
      %2953 = vmatpush1.bf16.msra.mxu0 0
      %2954 = vmatprep.subr.bf16.mxu0 0
      %2955 = vmatpush1.bf16.msra.mxu0 0
      %2956 = vmatprep.subr.bf16.mxu0 0
      %2957 = vmatpush1.bf16.msra.mxu0 0
      %2958 = vmatprep.mubr.bf16.mxu0 0
      %2959 = vmatmul.mubr.bf16.gmra.mrb[0].mxu0 %v2890
      %v2960 = vpop.f32.mrb[0].mxu0
      %v2961 = vadd.f32 0.0, %v2960
      %v2962 = vpop.f32.mrb[0].mxu0
      %v2963 = vpop.f32.mrb[0].mxu0
      %v2964 = vadd.f32 0.0, %v2963
      %v2965 = vpop.f32.mrb[0].mxu0
      %2966 = vmatprep.mubr.bf16.mxu0 0
      %2967 = vmatmul.mubr.bf16.gmra.mrb[0].mxu0 %v2892
      %v2968 = vpop.f32.mrb[0].mxu0
      %v2969 = vadd.f32 0.0, %v2968
      %v2970 = vpop.f32.mrb[0].mxu0
      %v2971 = vpop.f32.mrb[0].mxu0
      %v2972 = vadd.f32 0.0, %v2971
      %v2973 = vpop.f32.mrb[0].mxu0
      %2974 = vmatprep.mubr.bf16.mxu0 0
      %2975 = vmatmul.mubr.bf16.gmra.mrb[0].mxu0 %v2894
      %v2976 = vpop.f32.mrb[0].mxu0
      %v2977 = vadd.f32 0.0, %v2976
      %v2978 = vpop.f32.mrb[0].mxu0
      %v2979 = vpop.f32.mrb[0].mxu0
      %v2980 = vadd.f32 0.0, %v2979
      %v2981 = vpop.f32.mrb[0].mxu0
      %2982 = vmatprep.mubr.bf16.mxu0 0
      %2983 = vmatmul.mubr.bf16.gmra.mrb[0].mxu0 %v2896
      %v2984 = vpop.f32.mrb[0].mxu0
      %v2985 = vadd.f32 0.0, %v2984
      %v2986 = vpop.f32.mrb[0].mxu0
      %v2987 = vpop.f32.mrb[0].mxu0
      %v2988 = vadd.f32 0.0, %v2987
      %v2989 = vpop.f32.mrb[0].mxu0
      %2990 = vmatprep.mubr.bf16.mxu0 0
      %2991 = vmatmul.mubr.bf16.gmra.mrb[0].mxu0 %v2898
      %v2992 = vpop.f32.mrb[0].mxu0
      %v2993 = vadd.f32 0.0, %v2992
      %v2994 = vpop.f32.mrb[0].mxu0
      %v2995 = vpop.f32.mrb[0].mxu0
      %v2996 = vadd.f32 0.0, %v2995
      %v2997 = vpop.f32.mrb[0].mxu0
      %2998 = vmatprep.mubr.bf16.mxu0 0
      %2999 = vmatmul.mubr.bf16.gmra.mrb[0].mxu0 %v2900
      %v3000 = vpop.f32.mrb[0].mxu0
      %v3001 = vadd.f32 0.0, %v3000
      %v3002 = vpop.f32.mrb[0].mxu0
      %v3003 = vpop.f32.mrb[0].mxu0
      %v3004 = vadd.f32 0.0, %v3003
      %v3005 = vpop.f32.mrb[0].mxu0
      %3006 = vmatprep.mubr.bf16.mxu0 0
      %3007 = vmatmul.mubr.bf16.gmra.mrb[0].mxu0 %v2902
      %v3008 = vpop.f32.mrb[0].mxu0
      %v3009 = vadd.f32 0.0, %v3008
      %v3010 = vpop.f32.mrb[0].mxu0
      %v3011 = vpop.f32.mrb[0].mxu0
      %v3012 = vadd.f32 0.0, %v3011
      %v3013 = vpop.f32.mrb[0].mxu0
      %3014 = vmatprep.mubr.bf16.mxu0 0
      %3015 = vmatmul.mubr.bf16.gmra.mrb[0].mxu0 %v2904
      %v3016 = vpop.f32.mrb[0].mxu0
      %v3017 = vadd.f32 0.0, %v3016
      %v3018 = vpop.f32.mrb[0].mxu0
      %v3019 = vpop.f32.mrb[0].mxu0
      %v3020 = vadd.f32 0.0, %v3019
      %v3021 = vpop.f32.mrb[0].mxu0
      %3022 = vmatprep.mubr.bf16.mxu0 0
      %3023 = vmatmul.mubr.bf16.gmra.mrb[0].mxu0 %v2906
      %v3024 = vpop.f32.mrb[0].mxu0
      %v3025 = vadd.f32 0.0, %v3024
      %v3026 = vpop.f32.mrb[0].mxu0
      %v3027 = vpop.f32.mrb[0].mxu0
      %v3028 = vadd.f32 0.0, %v3027
      %v3029 = vpop.f32.mrb[0].mxu0
      %3030 = vmatprep.mubr.bf16.mxu0 0
      %3031 = vmatmul.mubr.bf16.gmra.mrb[0].mxu0 %v2908
      %v3032 = vpop.f32.mrb[0].mxu0
      %v3033 = vadd.f32 0.0, %v3032
      %v3034 = vpop.f32.mrb[0].mxu0
      %v3035 = vpop.f32.mrb[0].mxu0
      %v3036 = vadd.f32 0.0, %v3035
      %v3037 = vpop.f32.mrb[0].mxu0
      %3038 = vmatprep.mubr.bf16.mxu0 0
      %3039 = vmatmul.mubr.bf16.gmra.mrb[0].mxu0 %v2910
      %v3040 = vpop.f32.mrb[0].mxu0
      %v3041 = vadd.f32 0.0, %v3040
      %v3042 = vpop.f32.mrb[0].mxu0
      %v3043 = vpop.f32.mrb[0].mxu0
      %v3044 = vadd.f32 0.0, %v3043
      %v3045 = vpop.f32.mrb[0].mxu0
      %3046 = vmatprep.mubr.bf16.mxu0 0
      %3047 = vmatmul.mubr.bf16.gmra.mrb[0].mxu0 %v2912
      %v3048 = vpop.f32.mrb[0].mxu0
      %v3049 = vadd.f32 0.0, %v3048
      %v3050 = vpop.f32.mrb[0].mxu0
      %v3051 = vpop.f32.mrb[0].mxu0
      %v3052 = vadd.f32 0.0, %v3051
      %v3053 = vpop.f32.mrb[0].mxu0
      %3054 = vmatprep.mubr.bf16.mxu0 0
      %3055 = vmatmul.mubr.bf16.gmra.mrb[0].mxu0 %v2914
      %v3056 = vpop.f32.mrb[0].mxu0
      %v3057 = vadd.f32 0.0, %v3056
      %v3058 = vpop.f32.mrb[0].mxu0
      %v3059 = vpop.f32.mrb[0].mxu0
      %v3060 = vadd.f32 0.0, %v3059
      %v3061 = vpop.f32.mrb[0].mxu0
      %3062 = vmatprep.mubr.bf16.mxu0 0
      %3063 = vmatmul.mubr.bf16.gmra.mrb[0].mxu0 %v2916
      %v3064 = vpop.f32.mrb[0].mxu0
      %v3065 = vadd.f32 0.0, %v3064
      %v3066 = vpop.f32.mrb[0].mxu0
      %v3067 = vpop.f32.mrb[0].mxu0
      %v3068 = vadd.f32 0.0, %v3067
      %v3069 = vpop.f32.mrb[0].mxu0
      %3070 = vmatprep.mubr.bf16.mxu0 0
      %3071 = vmatmul.mubr.bf16.gmra.mrb[0].mxu0 %v2918
      %v3072 = vpop.f32.mrb[0].mxu0
      %v3073 = vadd.f32 0.0, %v3072
      %v3074 = vpop.f32.mrb[0].mxu0
      %v3075 = vpop.f32.mrb[0].mxu0
      %v3076 = vadd.f32 0.0, %v3075
      %v3077 = vpop.f32.mrb[0].mxu0
      %3078 = vmatprep.mubr.bf16.mxu0 0
      %3079 = vmatmul.mubr.bf16.gmra.mrb[0].mxu0 %v2920
      %v3080 = vpop.f32.mrb[0].mxu0
      %v3081 = vadd.f32 0.0, %v3080
      %v3082 = vpop.f32.mrb[0].mxu0
      %v3083 = vpop.f32.mrb[0].mxu0
      %v3084 = vadd.f32 0.0, %v3083
      %v3085 = vpop.f32.mrb[0].mxu0
      %3086 = vdwg.mxu0
      %v3087 = vsel %vm2605, %v2961, 0.0
      %v3088 = vsel %vm2605, %v2964, 0.0
      %v3089 = vadd.f32 %v3087, %v3088
      %v3090 = vsel %vm2605, %v2969, 0.0
      %v3091 = vadd.f32 %v3089, %v3090
      %v3092 = vsel %vm2605, %v2972, 0.0
      %v3093 = vadd.f32 %v3091, %v3092
      %v3094 = vsel %vm2605, %v2977, 0.0
      %v3095 = vadd.f32 %v3093, %v3094
      %v3096 = vsel %vm2605, %v2980, 0.0
      %v3097 = vadd.f32 %v3095, %v3096
      %v3098 = vsel %vm2605, %v2985, 0.0
      %v3099 = vadd.f32 %v3097, %v3098
      %v3100 = vsel %vm2605, %v2988, 0.0
      %v3101 = vadd.f32 %v3099, %v3100
      %v3102 = vsel %vm2605, %v2993, 0.0
      %v3103 = vadd.f32 %v3101, %v3102
      %v3104 = vsel %vm2605, %v2996, 0.0
      %v3105 = vadd.f32 %v3103, %v3104
      %v3106 = vsel %vm2605, %v3001, 0.0
      %v3107 = vadd.f32 %v3105, %v3106
      %v3108 = vsel %vm2605, %v3004, 0.0
      %v3109 = vadd.f32 %v3107, %v3108
      %v3110 = vsel %vm2605, %v3009, 0.0
      %v3111 = vadd.f32 %v3109, %v3110
      %v3112 = vsel %vm2605, %v3012, 0.0
      %v3113 = vadd.f32 %v3111, %v3112
      %v3114 = vsel %vm2605, %v3017, 0.0
      %v3115 = vadd.f32 %v3113, %v3114
      %v3116 = vsel %vm2605, %v3020, 0.0
      %v3117 = vadd.f32 %v3115, %v3116
      %v3118 = vsel %vm2605, %v3025, 0.0
      %v3119 = vadd.f32 %v3117, %v3118
      %v3120 = vsel %vm2605, %v3028, 0.0
      %v3121 = vadd.f32 %v3119, %v3120
      %v3122 = vsel %vm2605, %v3033, 0.0
      %v3123 = vadd.f32 %v3121, %v3122
      %v3124 = vsel %vm2605, %v3036, 0.0
      %v3125 = vadd.f32 %v3123, %v3124
      %v3126 = vsel %vm2605, %v3041, 0.0
      %v3127 = vadd.f32 %v3125, %v3126
      %v3128 = vsel %vm2605, %v3044, 0.0
      %v3129 = vadd.f32 %v3127, %v3128
      %v3130 = vsel %vm2605, %v3049, 0.0
      %v3131 = vadd.f32 %v3129, %v3130
      %v3132 = vsel %vm2605, %v3052, 0.0
      %v3133 = vadd.f32 %v3131, %v3132
      %v3134 = vsel %vm2605, %v3057, 0.0
      %v3135 = vadd.f32 %v3133, %v3134
      %v3136 = vsel %vm2605, %v3060, 0.0
      %v3137 = vadd.f32 %v3135, %v3136
      %v3138 = vsel %vm2605, %v3065, 0.0
      %v3139 = vadd.f32 %v3137, %v3138
      %v3140 = vsel %vm2605, %v3068, 0.0
      %v3141 = vadd.f32 %v3139, %v3140
      %v3142 = vsel %vm2605, %v3073, 0.0
      %v3143 = vadd.f32 %v3141, %v3142
      %v3144 = vsel %vm2605, %v3076, 0.0
      %v3145 = vadd.f32 %v3143, %v3144
      %v3146 = vsel %vm2605, %v3081, 0.0
      %v3147 = vadd.f32 %v3145, %v3146
      %v3148 = vsel %vm2605, %v3084, 0.0
      %v3149 = vadd.f32 %v3147, %v3148
      %v3150 = vrot.slane %v3149, 4
      %v3151 = vadd.f32 %v3149, %v3150
      %v3152 = vrot.slane %v3151, 2
      %v3153 = vadd.f32 %v3151, %v3152
      %v3154 = vrot.slane %v3153, 1
      %v3155 = vadd.f32 %v3153, %v3154
      %v3156 = vmul.f32 %v2961, %v2961
      %v3157 = vmul.f32 %v2964, %v2964
      %v3158 = vmul.f32 %v2969, %v2969
      %v3159 = vmul.f32 %v2972, %v2972
      %v3160 = vmul.f32 %v2977, %v2977
      %v3161 = vmul.f32 %v2980, %v2980
      %v3162 = vmul.f32 %v2985, %v2985
      %v3163 = vmul.f32 %v2988, %v2988
      %v3164 = vmul.f32 %v2993, %v2993
      %v3165 = vmul.f32 %v2996, %v2996
      %v3166 = vmul.f32 %v3001, %v3001
      %v3167 = vmul.f32 %v3004, %v3004
      %v3168 = vmul.f32 %v3009, %v3009
      %v3169 = vmul.f32 %v3012, %v3012
      %v3170 = vmul.f32 %v3017, %v3017
      %v3171 = vmul.f32 %v3020, %v3020
      %v3172 = vmul.f32 %v3025, %v3025
      %v3173 = vmul.f32 %v3028, %v3028
      %v3174 = vmul.f32 %v3033, %v3033
      %v3175 = vmul.f32 %v3036, %v3036
      %v3176 = vmul.f32 %v3041, %v3041
      %v3177 = vmul.f32 %v3044, %v3044
      %v3178 = vmul.f32 %v3049, %v3049
      %v3179 = vmul.f32 %v3052, %v3052
      %v3180 = vmul.f32 %v3057, %v3057
      %v3181 = vmul.f32 %v3060, %v3060
      %v3182 = vmul.f32 %v3065, %v3065
      %v3183 = vmul.f32 %v3068, %v3068
      %v3184 = vmul.f32 %v3073, %v3073
      %v3185 = vmul.f32 %v3076, %v3076
      %v3186 = vmul.f32 %v3081, %v3081
      %v3187 = vmul.f32 %v3084, %v3084
      %v3188 = vsel %vm2605, %v3156, 0.0
      %v3189 = vsel %vm2605, %v3157, 0.0
      %v3190 = vadd.f32 %v3188, %v3189
      %v3191 = vsel %vm2605, %v3158, 0.0
      %v3192 = vadd.f32 %v3190, %v3191
      %v3193 = vsel %vm2605, %v3159, 0.0
      %v3194 = vadd.f32 %v3192, %v3193
      %v3195 = vsel %vm2605, %v3160, 0.0
      %v3196 = vadd.f32 %v3194, %v3195
      %v3197 = vsel %vm2605, %v3161, 0.0
      %v3198 = vadd.f32 %v3196, %v3197
      %v3199 = vsel %vm2605, %v3162, 0.0
      %v3200 = vadd.f32 %v3198, %v3199
      %v3201 = vsel %vm2605, %v3163, 0.0
      %v3202 = vadd.f32 %v3200, %v3201
      %v3203 = vsel %vm2605, %v3164, 0.0
      %v3204 = vadd.f32 %v3202, %v3203
      %v3205 = vsel %vm2605, %v3165, 0.0
      %v3206 = vadd.f32 %v3204, %v3205
      %v3207 = vsel %vm2605, %v3166, 0.0
      %v3208 = vadd.f32 %v3206, %v3207
      %v3209 = vsel %vm2605, %v3167, 0.0
      %v3210 = vadd.f32 %v3208, %v3209
      %v3211 = vsel %vm2605, %v3168, 0.0
      %v3212 = vadd.f32 %v3210, %v3211
      %v3213 = vsel %vm2605, %v3169, 0.0
      %v3214 = vadd.f32 %v3212, %v3213
      %v3215 = vsel %vm2605, %v3170, 0.0
      %v3216 = vadd.f32 %v3214, %v3215
      %v3217 = vsel %vm2605, %v3171, 0.0
      %v3218 = vadd.f32 %v3216, %v3217
      %v3219 = vsel %vm2605, %v3172, 0.0
      %v3220 = vadd.f32 %v3218, %v3219
      %v3221 = vsel %vm2605, %v3173, 0.0
      %v3222 = vadd.f32 %v3220, %v3221
      %v3223 = vsel %vm2605, %v3174, 0.0
      %v3224 = vadd.f32 %v3222, %v3223
      %v3225 = vsel %vm2605, %v3175, 0.0
      %v3226 = vadd.f32 %v3224, %v3225
      %v3227 = vsel %vm2605, %v3176, 0.0
      %v3228 = vadd.f32 %v3226, %v3227
      %v3229 = vsel %vm2605, %v3177, 0.0
      %v3230 = vadd.f32 %v3228, %v3229
      %v3231 = vsel %vm2605, %v3178, 0.0
      %v3232 = vadd.f32 %v3230, %v3231
      %v3233 = vsel %vm2605, %v3179, 0.0
      %v3234 = vadd.f32 %v3232, %v3233
      %v3235 = vsel %vm2605, %v3180, 0.0
      %v3236 = vadd.f32 %v3234, %v3235
      %v3237 = vsel %vm2605, %v3181, 0.0
      %v3238 = vadd.f32 %v3236, %v3237
      %v3239 = vsel %vm2605, %v3182, 0.0
      %v3240 = vadd.f32 %v3238, %v3239
      %v3241 = vsel %vm2605, %v3183, 0.0
      %v3242 = vadd.f32 %v3240, %v3241
      %v3243 = vsel %vm2605, %v3184, 0.0
      %v3244 = vadd.f32 %v3242, %v3243
      %v3245 = vsel %vm2605, %v3185, 0.0
      %v3246 = vadd.f32 %v3244, %v3245
      %v3247 = vsel %vm2605, %v3186, 0.0
      %v3248 = vadd.f32 %v3246, %v3247
      %v3249 = vsel %vm2605, %v3187, 0.0
      %v3250 = vadd.f32 %v3248, %v3249
      %v3251 = vrot.slane %v3250, 4
      %v3252 = vadd.f32 %v3250, %v3251
      %v3253 = vrot.slane %v3252, 2
      %v3254 = vadd.f32 %v3252, %v3253
      %v3255 = vrot.slane %v3254, 1
      %v3256 = vadd.f32 %v3254, %v3255
      %vm3257 = vcmask 1040384
      %v3258 = vsel %vm3257, %v3155, %v3256
      %vm3259 = vcmask 25600
      %3260 = vst.msk [vmem:[%s181] sm:$0x3] %vm3259, %v3258
      %3261 = vxpose.xlu0.b32.start [1/16] %v2961, 128
      %3262 = vxpose.xlu0.b32.cont [2/16] %v2964, 128
      %3263 = vxpose.xlu0.b32.cont [3/16] %v2969, 128
      %3264 = vxpose.xlu0.b32.cont [4/16] %v2972, 128
      %3265 = vxpose.xlu0.b32.cont [5/16] %v2977, 128
      %3266 = vxpose.xlu0.b32.cont [6/16] %v2980, 128
      %3267 = vxpose.xlu0.b32.cont [7/16] %v2985, 128
      %3268 = vxpose.xlu0.b32.cont [8/16] %v2988, 128
      %3269 = vxpose.xlu0.b32.cont [9/16] %v2993, 128
      %3270 = vxpose.xlu0.b32.cont [10/16] %v2996, 128
      %3271 = vxpose.xlu0.b32.cont [11/16] %v3001, 128
      %3272 = vxpose.xlu0.b32.cont [12/16] %v3004, 128
      %3273 = vxpose.xlu0.b32.cont [13/16] %v3009, 128
      %3274 = vxpose.xlu0.b32.cont [14/16] %v3012, 128
      %3275 = vxpose.xlu0.b32.cont [15/16] %v3017, 128
      %3276 = vxpose.xlu0.b32.end [16/16] %v3020, 128
      %v3277 = vpop.trf.xlu0
      %v3278 = vpop.trf.xlu0
      %v3279 = vpop.trf.xlu0
      %v3280 = vpop.trf.xlu0
      %v3281 = vpop.trf.xlu0
      %v3282 = vpop.trf.xlu0
      %v3283 = vpop.trf.xlu0
      %v3284 = vpop.trf.xlu0
      %v3285 = vpop.trf.xlu0
      %v3286 = vpop.trf.xlu0
      %v3287 = vpop.trf.xlu0
      %v3288 = vpop.trf.xlu0
      %v3289 = vpop.trf.xlu0
      %v3290 = vpop.trf.xlu0
      %v3291 = vpop.trf.xlu0
      %v3292 = vpop.trf.xlu0
      %3293 = vxpose.xlu0.b32.start [1/16] %v3025, 128
      %3294 = vxpose.xlu0.b32.cont [2/16] %v3028, 128
      %3295 = vxpose.xlu0.b32.cont [3/16] %v3033, 128
      %3296 = vxpose.xlu0.b32.cont [4/16] %v3036, 128
      %3297 = vxpose.xlu0.b32.cont [5/16] %v3041, 128
      %3298 = vxpose.xlu0.b32.cont [6/16] %v3044, 128
      %3299 = vxpose.xlu0.b32.cont [7/16] %v3049, 128
      %3300 = vxpose.xlu0.b32.cont [8/16] %v3052, 128
      %3301 = vxpose.xlu0.b32.cont [9/16] %v3057, 128
      %3302 = vxpose.xlu0.b32.cont [10/16] %v3060, 128
      %3303 = vxpose.xlu0.b32.cont [11/16] %v3065, 128
      %3304 = vxpose.xlu0.b32.cont [12/16] %v3068, 128
      %3305 = vxpose.xlu0.b32.cont [13/16] %v3073, 128
      %3306 = vxpose.xlu0.b32.cont [14/16] %v3076, 128
      %3307 = vxpose.xlu0.b32.cont [15/16] %v3081, 128
      %3308 = vxpose.xlu0.b32.end [16/16] %v3084, 128
      %v3309 = vpop.trf.xlu0
      %v3310 = vpop.trf.xlu0
      %v3311 = vpop.trf.xlu0
      %v3312 = vpop.trf.xlu0
      %v3313 = vpop.trf.xlu0
      %v3314 = vpop.trf.xlu0
      %v3315 = vpop.trf.xlu0
      %v3316 = vpop.trf.xlu0
      %v3317 = vpop.trf.xlu0
      %v3318 = vpop.trf.xlu0
      %v3319 = vpop.trf.xlu0
      %v3320 = vpop.trf.xlu0
      %v3321 = vpop.trf.xlu0
      %v3322 = vpop.trf.xlu0
      %v3323 = vpop.trf.xlu0
      %v3324 = vpop.trf.xlu0
      %v3325 = vpack.c.bf16 %v3277, %v3277
      %v3326 = vpack.c.bf16 %v3309, %v3309
      %v3329 = vcombine.low %v3325, %v3326
      %v3331 = vunpack.c.l.s4 1983009808
      %v3332 = vunpack.c.0.s8 %v3331
      %v3333 = vlaneseq
      %v3334 = vshrl.u32 %v3333, 7
      %v3335 = vsub.s32 %v3332, %v3334
      %v3336 = vrot.slane %v3329, %v3335
      %3338 = vst [vmem:[%s177] sm:$0xf] %v3336
      %p3339 = scmp.lt.s32.totalorder %s15, 1
      %s3340 = scalar_select %p3339, %s15, 1
      %s3341 = smul.addr %s3340, 2
      %s3342 = smul.addr %s3341, 2
      %s3343 = scalar_lea.vmem %s2, %s3342
      %p3344 = scmp.lt.s32.totalorder %s15, 1
      %s3345 = scalar_select %p3344, %s15, 1
      %s3346 = smul.addr %s3345, 2
      %s3347 = scalar_lea.vmem %s3, %s3346
      // Predicated region
      $region29: #{basic_block_forward.3} parent=27 // pred_check
        %p3348 = pneg %p80
      $region30: #{basic_block_forward.3} parent=27 // pred_check_branch
        %3350 = sbr.rel (%p3348) target = $region32
      $region31: #{basic_block_forward.3} parent=27 // pred_region
        _
      $region32: #{basic_block_forward.3} parent=27 // pred_fallthru
        _
      // Predicated region
      $region33: #{basic_block_forward.3} parent=27 // pred_check
        %p3351 = pneg %p106
      $region34: #{basic_block_forward.3} parent=27 // pred_check_branch
        %3353 = sbr.rel (%p3351) target = $region36
      $region35: #{basic_block_forward.3} parent=27 // pred_region
        _
      $region36: #{basic_block_forward.3} parent=27 // pred_fallthru
        _
    $region28: #{basic_block_forward.3} parent=5 // pred_fallthru
      _
    %p3354 = scmp.le.s32.totalorder 2, %s10
    // Predicated region
    $region37: #{basic_block_forward.3} parent=5 // pred_check
      %p3355 = pneg %p3354
    $region38: #{basic_block_forward.3} parent=5 // pred_check_branch
      %3357 = sbr.rel (%p3355) target = $region40
    $region39: #{basic_block_forward.3} parent=5 // pred_region
      %s3358 = ssub.s32 %s10, 2
      // Predicated region
      $region41: #{basic_block_forward.3} parent=39 // pred_check
        %p3359 = pneg %p86
      $region42: #{basic_block_forward.3} parent=39 // pred_check_branch
        %3361 = sbr.rel (%p3359) target = $region44
      $region43: #{basic_block_forward.3} parent=39 // pred_region
        %p3362 = scmp.lt.s32.totalorder %s16, 1
        %s3363 = scalar_select %p3362, %s16, 1
        %s3364 = smul.addr %s3363, 2
        %s3365 = smul.addr %s3364, 2
        %s3366 = scalar_lea.vmem %s2, %s3365
      $region44: #{basic_block_forward.3} parent=39 // pred_fallthru
        _
      // Predicated region
      $region45: #{basic_block_forward.3} parent=39 // pred_check
        %p3367 = pneg %p112
      $region46: #{basic_block_forward.3} parent=39 // pred_check_branch
        %3369 = sbr.rel (%p3367) target = $region48
      $region47: #{basic_block_forward.3} parent=39 // pred_region
        %p3370 = scmp.lt.s32.totalorder %s16, 1
        %s3371 = scalar_select %p3370, %s16, 1
        %s3372 = smul.addr %s3371, 2
        %s3373 = scalar_lea.vmem %s3, %s3372
      $region48: #{basic_block_forward.3} parent=39 // pred_fallthru
        _
    $region40: #{basic_block_forward.3} parent=5 // pred_fallthru
      _
  $region6: #{basic_block_forward.3} parent=0 // loop_footer
    %s14 = sadd.s32 1, %s10
  $region7: #{basic_block_forward.3} parent=0 // loop_footer_branch
    %9 = sbr.rel target = $region3
  $region8: #{basic_block_forward.3} parent=0 // loop_exit
    _

// kernel: basic_block_forward.4
$region0: #{basic_block_forward.4}
  #allocation0 [shape = 'u32[]', space=smem, size = 0x4, offset = 0x4, fixed_abs, tag = 'smem constant byte address 0x4 - core index']
  #allocation1 [shape = 'u32[144,128]{1,0:T(1,128)}', space=vmem, size = 0x12000, scoped, tag = 'internal scratch']
  #allocation2 [shape = 'bf16[1,18,18,4]{3,2,1,0:T(8,128)(2,1)}', space=vmem, size = 0x1b000, scoped, tag = 'scratch operand']
  %s0 = inlined_call_operand.vmem [shape: bf16[2,4,256], index: 0, kind: input, shape index: {}]
  %s1 = inlined_call_operand.vmem [shape: f32[2,2,4], index: 1, kind: input, shape index: {}]
  %s2 = inlined_call_operand.vmem [shape: f32[1,4], index: 2, kind: input, shape index: {}]
  %s3 = inlined_call_operand.vmem [shape: f32[1,4], index: 3, kind: input, shape index: {}]
  %s4 = inlined_call_operand.vmem [shape: bf16[36,4], index: 4, kind: input, shape index: {}]
  %s5 = inlined_call_operand.vmem [shape: bf16[2,4,256], index: 5, kind: output, shape index: {0}]
  %s6 = inlined_call_operand.vmem [shape: f32[2,2,4], index: 6, kind: output, shape index: {1}]
  %7 = xla_tuple %s5, %s6
  %s8 = sld [smem:[#allocation0]]
  $region61: #{basic_block_forward.4} parent=0
    _
  %s10 = ssub.s32 1, %s8
  %s11 = scalar_select 0, %s10, %s8
  loop: start=0, step=1, limit=4
  $region2: #{basic_block_forward.4} parent=0 // loop_pre_header
    _
  $region3: #{basic_block_forward.4} parent=0 // loop_header
    %s13 = sphi 0, %s17
    %p14 = scmp.ge.s32.totalorder %s13, 4
    %s23 = sphi 0, %s25
    %s26 = sphi 0, %s23
    %s27 = sphi 0, %s26
    %s43 = sphi 0, %s27
    %s47 = sphi 0, %s47
    %s49 = sphi 0, %s47
    %s50 = sphi 0, %s49
    %s64 = sphi 0, %s50
    %s68 = sphi 0, %s68
    %s70 = sphi 0, %s68
    %s71 = sphi 0, %s70
    %s85 = sphi 0, %s71
    %s89 = sphi 0, %s89
    %s91 = sphi 0, %s89
    %s92 = sphi 0, %s91
    %s106 = sphi 0, %s92
    %s110 = sphi 0, %s110
    %s112 = sphi 0, %s110
    %s113 = sphi 0, %s112
    %s127 = sphi 0, %s113
    %s133 = sphi 0, %s135
    %s136 = sphi 0, %s133
    %s137 = sphi 0, %s136
    %s153 = sphi 0, %s137
    %s159 = sphi 0, %s161
    %s162 = sphi 0, %s159
    %s163 = sphi 0, %s162
    %s179 = sphi 0, %s163
  $region4: #{basic_block_forward.4} parent=0 // loop_header_branch
    %16 = sbr.rel (%p14) target = $region8
  $region5: #{basic_block_forward.4} parent=0 // loop_body
    %s18 = ssub.s32 %s13, 1
    %s19 = ssub.s32 %s13, 2
    %s20 = sadd.s32 %s13, 1
    %s21 = ssub.s32 %s13, %s20
    %p22 = scmp.eq.s32.totalorder %s21, 0
    %s24 = sadd.s32 %s23, 1
    %s25 = scalar_select %p22, %s23, %s24
    %p28 = pneg %p22
    %p29 = scmp.eq.s32.totalorder %s13, 1
    %p30 = por %p28, %p29
    %p31 = scmp.ne.s32.totalorder %s23, %s26
    %p32 = scmp.eq.s32.totalorder %s13, 0
    %p33 = por %p31, %p32
    %p34 = scmp.ne.s32.totalorder %s23, %s26
    %p35 = scmp.eq.s32.totalorder %s18, 1
    %p36 = por %p34, %p35
    %p37 = scmp.ne.s32.totalorder %s26, %s27
    %p38 = scmp.eq.s32.totalorder %s18, 0
    %p39 = por %p37, %p38
    %p40 = scmp.ne.s32.totalorder %s26, %s27
    %p41 = scmp.eq.s32.totalorder %s19, 1
    %p42 = por %p40, %p41
    %p44 = scmp.ne.s32.totalorder %s27, %s43
    %p45 = scmp.eq.s32.totalorder %s19, 0
    %p46 = por %p44, %p45
    %s48 = sadd.s32 %s47, 1
    %p51 = scmp.eq.s32.totalorder %s13, 1
    %p52 = scmp.ne.s32.totalorder %s47, %s49
    %p53 = scmp.eq.s32.totalorder %s13, 0
    %p54 = por %p52, %p53
    %p55 = scmp.ne.s32.totalorder %s47, %s49
    %p56 = scmp.eq.s32.totalorder %s18, 1
    %p57 = por %p55, %p56
    %p58 = scmp.ne.s32.totalorder %s49, %s50
    %p59 = scmp.eq.s32.totalorder %s18, 0
    %p60 = por %p58, %p59
    %p61 = scmp.ne.s32.totalorder %s49, %s50
    %p62 = scmp.eq.s32.totalorder %s19, 1
    %p63 = por %p61, %p62
    %p65 = scmp.ne.s32.totalorder %s50, %s64
    %p66 = scmp.eq.s32.totalorder %s19, 0
    %p67 = por %p65, %p66
    %s69 = sadd.s32 %s68, 1
    %p72 = scmp.eq.s32.totalorder %s13, 1
    %p73 = scmp.ne.s32.totalorder %s68, %s70
    %p74 = scmp.eq.s32.totalorder %s13, 0
    %p75 = por %p73, %p74
    %p76 = scmp.ne.s32.totalorder %s68, %s70
    %p77 = scmp.eq.s32.totalorder %s18, 1
    %p78 = por %p76, %p77
    %p79 = scmp.ne.s32.totalorder %s70, %s71
    %p80 = scmp.eq.s32.totalorder %s18, 0
    %p81 = por %p79, %p80
    %p82 = scmp.ne.s32.totalorder %s70, %s71
    %p83 = scmp.eq.s32.totalorder %s19, 1
    %p84 = por %p82, %p83
    %p86 = scmp.ne.s32.totalorder %s71, %s85
    %p87 = scmp.eq.s32.totalorder %s19, 0
    %p88 = por %p86, %p87
    %s90 = sadd.s32 %s89, 1
    %p93 = scmp.eq.s32.totalorder %s13, 1
    %p94 = scmp.ne.s32.totalorder %s89, %s91
    %p95 = scmp.eq.s32.totalorder %s13, 0
    %p96 = por %p94, %p95
    %p97 = scmp.ne.s32.totalorder %s89, %s91
    %p98 = scmp.eq.s32.totalorder %s18, 1
    %p99 = por %p97, %p98
    %p100 = scmp.ne.s32.totalorder %s91, %s92
    %p101 = scmp.eq.s32.totalorder %s18, 0
    %p102 = por %p100, %p101
    %p103 = scmp.ne.s32.totalorder %s91, %s92
    %p104 = scmp.eq.s32.totalorder %s19, 1
    %p105 = por %p103, %p104
    %p107 = scmp.ne.s32.totalorder %s92, %s106
    %p108 = scmp.eq.s32.totalorder %s19, 0
    %p109 = por %p107, %p108
    %s111 = sadd.s32 %s110, 1
    %p114 = scmp.eq.s32.totalorder %s13, 1
    %p115 = scmp.ne.s32.totalorder %s110, %s112
    %p116 = scmp.eq.s32.totalorder %s13, 0
    %p117 = por %p115, %p116
    %p118 = scmp.ne.s32.totalorder %s110, %s112
    %p119 = scmp.eq.s32.totalorder %s18, 1
    %p120 = por %p118, %p119
    %p121 = scmp.ne.s32.totalorder %s112, %s113
    %p122 = scmp.eq.s32.totalorder %s18, 0
    %p123 = por %p121, %p122
    %p124 = scmp.ne.s32.totalorder %s112, %s113
    %p125 = scmp.eq.s32.totalorder %s19, 1
    %p126 = por %p124, %p125
    %p128 = scmp.ne.s32.totalorder %s113, %s127
    %p129 = scmp.eq.s32.totalorder %s19, 0
    %p130 = por %p128, %p129
    %s131 = ssub.s32 %s13, %s20
    %p132 = scmp.eq.s32.totalorder %s131, 0
    %s134 = sadd.s32 %s133, 1
    %s135 = scalar_select %p132, %s133, %s134
    %p138 = pneg %p132
    %p139 = scmp.eq.s32.totalorder %s13, 1
    %p140 = por %p138, %p139
    %p141 = scmp.ne.s32.totalorder %s133, %s136
    %p142 = scmp.eq.s32.totalorder %s13, 0
    %p143 = por %p141, %p142
    %p144 = scmp.ne.s32.totalorder %s133, %s136
    %p145 = scmp.eq.s32.totalorder %s18, 1
    %p146 = por %p144, %p145
    %p147 = scmp.ne.s32.totalorder %s136, %s137
    %p148 = scmp.eq.s32.totalorder %s18, 0
    %p149 = por %p147, %p148
    %p150 = scmp.ne.s32.totalorder %s136, %s137
    %p151 = scmp.eq.s32.totalorder %s19, 1
    %p152 = por %p150, %p151
    %p154 = scmp.ne.s32.totalorder %s137, %s153
    %p155 = scmp.eq.s32.totalorder %s19, 0
    %p156 = por %p154, %p155
    %s157 = ssub.s32 %s13, %s20
    %p158 = scmp.eq.s32.totalorder %s157, 0
    %s160 = sadd.s32 %s159, 1
    %s161 = scalar_select %p158, %s159, %s160
    %p164 = pneg %p158
    %p165 = scmp.eq.s32.totalorder %s13, 1
    %p166 = por %p164, %p165
    %p167 = scmp.ne.s32.totalorder %s159, %s162
    %p168 = scmp.eq.s32.totalorder %s13, 0
    %p169 = por %p167, %p168
    %p170 = scmp.ne.s32.totalorder %s159, %s162
    %p171 = scmp.eq.s32.totalorder %s18, 1
    %p172 = por %p170, %p171
    %p173 = scmp.ne.s32.totalorder %s162, %s163
    %p174 = scmp.eq.s32.totalorder %s18, 0
    %p175 = por %p173, %p174
    %p176 = scmp.ne.s32.totalorder %s162, %s163
    %p177 = scmp.eq.s32.totalorder %s19, 1
    %p178 = por %p176, %p177
    %p180 = scmp.ne.s32.totalorder %s163, %s179
    %p181 = scmp.eq.s32.totalorder %s19, 0
    %p182 = por %p180, %p181
    %p183 = scmp.le.s32.totalorder 1, %s13
    %p184 = scmp.lt.s32.totalorder %s13, 3
    %p185 = pnand %p183, %p184
    %p186 = pneg %p185
    // Predicated region
    $region9: #{basic_block_forward.4} parent=5 // pred_check
      _
    $region10: #{basic_block_forward.4} parent=5 // pred_check_branch
      %188 = sbr.rel (%p185) target = $region12
    $region11: #{basic_block_forward.4} parent=5 // pred_region
      %s189 = ssub.s32 %s13, 1
      // Predicated region
      $region13: #{basic_block_forward.4} parent=11 // pred_check
        %p190 = pneg %p60
      $region14: #{basic_block_forward.4} parent=11 // pred_check_branch
        %192 = sbr.rel (%p190) target = $region16
      $region15: #{basic_block_forward.4} parent=11 // pred_region
        _
      $region16: #{basic_block_forward.4} parent=11 // pred_fallthru
        _
      // Predicated region
      $region17: #{basic_block_forward.4} parent=11 // pred_check
        %p193 = pneg %p81
      $region18: #{basic_block_forward.4} parent=11 // pred_check_branch
        %195 = sbr.rel (%p193) target = $region20
      $region19: #{basic_block_forward.4} parent=11 // pred_region
        _
      $region20: #{basic_block_forward.4} parent=11 // pred_fallthru
        _
      // Predicated region
      $region21: #{basic_block_forward.4} parent=11 // pred_check
        %p196 = pneg %p102
      $region22: #{basic_block_forward.4} parent=11 // pred_check_branch
        %198 = sbr.rel (%p196) target = $region24
      $region23: #{basic_block_forward.4} parent=11 // pred_region
        _
      $region24: #{basic_block_forward.4} parent=11 // pred_fallthru
        _
      // Predicated region
      $region25: #{basic_block_forward.4} parent=11 // pred_check
        %p199 = pneg %p123
      $region26: #{basic_block_forward.4} parent=11 // pred_check_branch
        %201 = sbr.rel (%p199) target = $region28
      $region27: #{basic_block_forward.4} parent=11 // pred_region
        _
      $region28: #{basic_block_forward.4} parent=11 // pred_fallthru
        _
    $region12: #{basic_block_forward.4} parent=5 // pred_fallthru
      _
    %p202 = scmp.lt.s32.totalorder %s13, 2
    // Predicated region
    $region29: #{basic_block_forward.4} parent=5 // pred_check
      %p203 = pneg %p202
    $region30: #{basic_block_forward.4} parent=5 // pred_check_branch
      %205 = sbr.rel (%p203) target = $region32
    $region31: #{basic_block_forward.4} parent=5 // pred_region
      // Predicated region
      $region33: #{basic_block_forward.4} parent=31 // pred_check
        %p206 = pneg %p33
      $region34: #{basic_block_forward.4} parent=31 // pred_check_branch
        %208 = sbr.rel (%p206) target = $region36
      $region35: #{basic_block_forward.4} parent=31 // pred_region
        %p209 = scmp.lt.s32.totalorder %s13, 1
        %s210 = scalar_select %p209, %s13, 1
        %s211 = smul.addr %s210, 2
        %s212 = smul.addr %s211, 2
        %s213 = scalar_lea.vmem %s0, %s212
      $region36: #{basic_block_forward.4} parent=31 // pred_fallthru
        _
    $region32: #{basic_block_forward.4} parent=5 // pred_fallthru
      _
    %p214 = scmp.le.s32.totalorder 1, %s13
    %p215 = scmp.lt.s32.totalorder %s13, 3
    %p216 = pnand %p214, %p215
    %p217 = pneg %p216
    // Predicated region
    $region37: #{basic_block_forward.4} parent=5 // pred_check
      _
    $region38: #{basic_block_forward.4} parent=5 // pred_check_branch
      %219 = sbr.rel (%p216) target = $region40
    $region39: #{basic_block_forward.4} parent=5 // pred_region
      %s220 = ssub.s32 %s13, 1
      %p221 = scmp.lt.s32.totalorder %s18, 1
      %s222 = scalar_select %p221, %s18, 1
      %s223 = smul.addr %s222, 2
      %s224 = smul.addr %s223, 2
      %s225 = scalar_lea.vmem %s0, %s224
      %p226 = pneg %p39
      %p227 = pneg %p36
      %p228 = pneg %p60
      %p229 = pneg %p57
      %p230 = pneg %p81
      %p231 = pneg %p78
      %p232 = pneg %p102
      %p233 = pneg %p99
      %p234 = pneg %p123
      %p235 = pneg %p120
      %p236 = pneg %p149
      %p237 = pneg %p146
      %p238 = scmp.lt.s32.totalorder %s18, 1
      %s239 = scalar_select %p238, %s18, 1
      %s240 = smul.addr %s239, 2
      %s241 = smul.addr %s240, 2
      %s242 = scalar_lea.vmem %s5, %s241
      %p243 = pneg %p175
      %p244 = pneg %p172
      %p245 = scmp.lt.s32.totalorder %s18, 1
      %s246 = scalar_select %p245, %s18, 1
      %s247 = smul.addr %s246, 2
      %s248 = scalar_lea.vmem %s6, %s247
      %p249 = scmp.lt.s32.totalorder %s18, 1
      %s250 = scalar_select %p249, %s18, 1
      %s251 = smul.addr %s250, 2
      %s252 = smul.addr %s251, 2
      %s253 = scalar_lea.vmem %s0, %s252
      %p254 = scmp.lt.s32.totalorder %s18, 1
      %s255 = scalar_select %p254, %s18, 1
      %s256 = smul.addr %s255, 2
      %s257 = smul.addr %s256, 2
      %s258 = scalar_lea.vmem %s5, %s257
      %p259 = scmp.lt.s32.totalorder %s18, 1
      %s260 = scalar_select %p259, %s18, 1
      %s261 = smul.addr %s260, 2
      %s262 = scalar_lea.vmem %s6, %s261
      %v264 = vld [vmem:[%s1] sm:$0x3]
      %v265 = vld [vmem:[%s1 + $0x2] sm:$0x3]
      %vm266 = vcmask 25600
      %v267 = vsel %vm266, %v264, 0.0
      %v268 = vsel %vm266, %v265, 0.0
      %v269 = vadd.f32 %v267, %v268
      %v270 = vmul.f32 %v269, 0.001953125
      %v271 = vmul.f32 %v270, %v270
      %v273 = vrot.slane %v271, 7
      %v275 = vsub.f32 %v270, %v273
      %v276 = vmax.f32 %v275, 0.0
      %v277 = vld [vmem:[%s2] sm:$0x1]
      %v278 = vadd.f32 %v276, 1e-05
      %v279 = vrsqrt.pop %v278
      %v282 = vunpack.c.l.s4 1966171168
      %v283 = vunpack.c.0.s8 %v282
      %v284 = vlaneseq
      %v285 = vshrl.u32 %v284, 7
      %v286 = vsub.s32 %v283, %v285
      %v287 = vrot.slane %v279, %v286
      %v288 = vcombine.high %v287, %v287
      %v290 = vunpack.c.l.s4 1966171168
      %v291 = vunpack.c.0.s8 %v290
      %v292 = vlaneseq
      %v293 = vshrl.u32 %v292, 7
      %v294 = vsub.s32 %v291, %v293
      %v295 = vrot.slane %v288, %v294
      %v297 = vmul.f32 %v277, %v295
      %v298 = vld [vmem:[%s3] sm:$0x1]
      %v299 = vmul.f32 %v270, %v297
      %v300 = vsub.f32 %v298, %v299
      %vm301 = vcmask 27648
      %302 = vst.msk [vmem:[#allocation2] sm:$0xf] %vm301, 0
      %303 = vst.msk [vmem:[#allocation2 + $0x4] sm:$0xf] %vm301, 0
      %vm304 = vcmask 24576
      %305 = vst.msk [vmem:[#allocation2 + $0x8] sm:$0x1] %vm304, 0
      %s306 = scalar_lea.vmem [#allocation2], 204
      %307 = vst.msk [vmem:[%s306] sm:$0xf] %vm301, 0
      %308 = vst.msk [vmem:[%s306 + $0x4] sm:$0xf] %vm301, 0
      %309 = vst.msk [vmem:[%s306 + $0x8] sm:$0x1] %vm304, 0
      %vm310 = vcmask 24576
      %vm311 = vsmask.f32 256
      %vm312 = vmand %vm310, %vm311
      %v313 = vld [vmem:[#allocation2] sm:$0x1]
      %v314 = vsel %vm312, 0, %v313
      %315 = vst [vmem:[#allocation2] sm:$0x1] %v314
      %v316 = vld [vmem:[#allocation2 + $0xc] sm:$0x1]
      %v317 = vsel %vm312, 0, %v316
      %318 = vst [vmem:[#allocation2 + $0xc] sm:$0x1] %v317
      %v319 = vld [vmem:[#allocation2 + $0x18] sm:$0x1]
      %v320 = vsel %vm312, 0, %v319
      %321 = vst [vmem:[#allocation2 + $0x18] sm:$0x1] %v320
      %v322 = vld [vmem:[#allocation2 + $0x24] sm:$0x1]
      %v323 = vsel %vm312, 0, %v322
      %324 = vst [vmem:[#allocation2 + $0x24] sm:$0x1] %v323
      %v325 = vld [vmem:[#allocation2 + $0x30] sm:$0x1]
      %v326 = vsel %vm312, 0, %v325
      %327 = vst [vmem:[#allocation2 + $0x30] sm:$0x1] %v326
      %v328 = vld [vmem:[#allocation2 + $0x3c] sm:$0x1]
      %v329 = vsel %vm312, 0, %v328
      %330 = vst [vmem:[#allocation2 + $0x3c] sm:$0x1] %v329
      %v331 = vld [vmem:[#allocation2 + $0x48] sm:$0x1]
      %v332 = vsel %vm312, 0, %v331
      %333 = vst [vmem:[#allocation2 + $0x48] sm:$0x1] %v332
      %v334 = vld [vmem:[#allocation2 + $0x54] sm:$0x1]
      %v335 = vsel %vm312, 0, %v334
      %336 = vst [vmem:[#allocation2 + $0x54] sm:$0x1] %v335
      %v337 = vld [vmem:[#allocation2 + $0x60] sm:$0x1]
      %v338 = vsel %vm312, 0, %v337
      %339 = vst [vmem:[#allocation2 + $0x60] sm:$0x1] %v338
      %v340 = vld [vmem:[#allocation2 + $0x6c] sm:$0x1]
      %v341 = vsel %vm312, 0, %v340
      %342 = vst [vmem:[#allocation2 + $0x6c] sm:$0x1] %v341
      %v343 = vld [vmem:[#allocation2 + $0x78] sm:$0x1]
      %v344 = vsel %vm312, 0, %v343
      %345 = vst [vmem:[#allocation2 + $0x78] sm:$0x1] %v344
      %v346 = vld [vmem:[#allocation2 + $0x84] sm:$0x1]
      %v347 = vsel %vm312, 0, %v346
      %348 = vst [vmem:[#allocation2 + $0x84] sm:$0x1] %v347
      %v349 = vld [vmem:[#allocation2 + $0x90] sm:$0x1]
      %v350 = vsel %vm312, 0, %v349
      %351 = vst [vmem:[#allocation2 + $0x90] sm:$0x1] %v350
      %v352 = vld [vmem:[#allocation2 + $0x9c] sm:$0x1]
      %v353 = vsel %vm312, 0, %v352
      %354 = vst [vmem:[#allocation2 + $0x9c] sm:$0x1] %v353
      %v355 = vld [vmem:[#allocation2 + $0xa8] sm:$0x1]
      %v356 = vsel %vm312, 0, %v355
      %357 = vst [vmem:[#allocation2 + $0xa8] sm:$0x1] %v356
      %v358 = vld [vmem:[#allocation2 + $0xb4] sm:$0x1]
      %v359 = vsel %vm312, 0, %v358
      %360 = vst [vmem:[#allocation2 + $0xb4] sm:$0x1] %v359
      %v361 = vld [vmem:[#allocation2 + $0xc0] sm:$0x1]
      %v362 = vsel %vm312, 0, %v361
      %363 = vst [vmem:[#allocation2 + $0xc0] sm:$0x1] %v362
      %v364 = vld [vmem:[#allocation2 + $0xcc] sm:$0x1]
      %v365 = vsel %vm312, 0, %v364
      %366 = vst [vmem:[#allocation2 + $0xcc] sm:$0x1] %v365
      %vm367 = vsmask.f32 7938
      %vm368 = vmand %vm310, %vm367
      %v369 = vld [vmem:[#allocation2 + $0x8] sm:$0x1]
      %v370 = vsel %vm368, 0, %v369
      %371 = vst [vmem:[#allocation2 + $0x8] sm:$0x1] %v370
      %v372 = vld [vmem:[#allocation2 + $0x14] sm:$0x1]
      %v373 = vsel %vm368, 0, %v372
      %374 = vst [vmem:[#allocation2 + $0x14] sm:$0x1] %v373
      %v375 = vld [vmem:[#allocation2 + $0x20] sm:$0x1]
      %v376 = vsel %vm368, 0, %v375
      %377 = vst [vmem:[#allocation2 + $0x20] sm:$0x1] %v376
      %v378 = vld [vmem:[#allocation2 + $0x2c] sm:$0x1]
      %v379 = vsel %vm368, 0, %v378
      %380 = vst [vmem:[#allocation2 + $0x2c] sm:$0x1] %v379
      %v381 = vld [vmem:[#allocation2 + $0x38] sm:$0x1]
      %v382 = vsel %vm368, 0, %v381
      %383 = vst [vmem:[#allocation2 + $0x38] sm:$0x1] %v382
      %v384 = vld [vmem:[#allocation2 + $0x44] sm:$0x1]
      %v385 = vsel %vm368, 0, %v384
      %386 = vst [vmem:[#allocation2 + $0x44] sm:$0x1] %v385
      %v387 = vld [vmem:[#allocation2 + $0x50] sm:$0x1]
      %v388 = vsel %vm368, 0, %v387
      %389 = vst [vmem:[#allocation2 + $0x50] sm:$0x1] %v388
      %v390 = vld [vmem:[#allocation2 + $0x5c] sm:$0x1]
      %v391 = vsel %vm368, 0, %v390
      %392 = vst [vmem:[#allocation2 + $0x5c] sm:$0x1] %v391
      %v393 = vld [vmem:[#allocation2 + $0x68] sm:$0x1]
      %v394 = vsel %vm368, 0, %v393
      %395 = vst [vmem:[#allocation2 + $0x68] sm:$0x1] %v394
      %v396 = vld [vmem:[#allocation2 + $0x74] sm:$0x1]
      %v397 = vsel %vm368, 0, %v396
      %398 = vst [vmem:[#allocation2 + $0x74] sm:$0x1] %v397
      %v399 = vld [vmem:[#allocation2 + $0x80] sm:$0x1]
      %v400 = vsel %vm368, 0, %v399
      %401 = vst [vmem:[#allocation2 + $0x80] sm:$0x1] %v400
      %v402 = vld [vmem:[#allocation2 + $0x8c] sm:$0x1]
      %v403 = vsel %vm368, 0, %v402
      %404 = vst [vmem:[#allocation2 + $0x8c] sm:$0x1] %v403
      %v405 = vld [vmem:[#allocation2 + $0x98] sm:$0x1]
      %v406 = vsel %vm368, 0, %v405
      %407 = vst [vmem:[#allocation2 + $0x98] sm:$0x1] %v406
      %v408 = vld [vmem:[#allocation2 + $0xa4] sm:$0x1]
      %v409 = vsel %vm368, 0, %v408
      %410 = vst [vmem:[#allocation2 + $0xa4] sm:$0x1] %v409
      %v411 = vld [vmem:[#allocation2 + $0xb0] sm:$0x1]
      %v412 = vsel %vm368, 0, %v411
      %413 = vst [vmem:[#allocation2 + $0xb0] sm:$0x1] %v412
      %v414 = vld [vmem:[#allocation2 + $0xbc] sm:$0x1]
      %v415 = vsel %vm368, 0, %v414
      %416 = vst [vmem:[#allocation2 + $0xbc] sm:$0x1] %v415
      %v417 = vld [vmem:[#allocation2 + $0xc8] sm:$0x1]
      %v418 = vsel %vm368, 0, %v417
      %419 = vst [vmem:[#allocation2 + $0xc8] sm:$0x1] %v418
      %v420 = vld [vmem:[#allocation2 + $0xd4] sm:$0x1]
      %v421 = vsel %vm368, 0, %v420
      %422 = vst [vmem:[#allocation2 + $0xd4] sm:$0x1] %v421
      %v423 = vld [vmem:[%s253] sm:$0xf]
      %v424 = vunpack.c.l.bf16 %v423
      %v426 = vcombine.high %v424, %v424
      %428 = vxpose.xlu0.b32.start [1/16] %v424, 128
      %429 = vxpose.xlu0.b32.cont [2/16] 0.0, 128
      %430 = vxpose.xlu0.b32.cont [3/16] 0.0, 128
      %431 = vxpose.xlu0.b32.cont [4/16] 0.0, 128
      %432 = vxpose.xlu0.b32.cont [5/16] 0.0, 128
      %433 = vxpose.xlu0.b32.cont [6/16] 0.0, 128
      %434 = vxpose.xlu0.b32.cont [7/16] 0.0, 128
      %435 = vxpose.xlu0.b32.cont [8/16] 0.0, 128
      %436 = vxpose.xlu0.b32.cont [9/16] 0.0, 128
      %437 = vxpose.xlu0.b32.cont [10/16] 0.0, 128
      %438 = vxpose.xlu0.b32.cont [11/16] 0.0, 128
      %439 = vxpose.xlu0.b32.cont [12/16] 0.0, 128
      %440 = vxpose.xlu0.b32.cont [13/16] 0.0, 128
      %441 = vxpose.xlu0.b32.cont [14/16] 0.0, 128
      %442 = vxpose.xlu0.b32.cont [15/16] 0.0, 128
      %443 = vxpose.xlu0.b32.end [16/16] 0.0, 128
      %v444 = vpop.trf.xlu0
      %v445 = vpop.trf.xlu0
      %v446 = vpop.trf.xlu0
      %v447 = vpop.trf.xlu0
      %v448 = vpop.trf.xlu0
      %v449 = vpop.trf.xlu0
      %v450 = vpop.trf.xlu0
      %v451 = vpop.trf.xlu0
      %v452 = vpop.trf.xlu0
      %v453 = vpop.trf.xlu0
      %v454 = vpop.trf.xlu0
      %v455 = vpop.trf.xlu0
      %v456 = vpop.trf.xlu0
      %v457 = vpop.trf.xlu0
      %v458 = vpop.trf.xlu0
      %v459 = vpop.trf.xlu0
      %460 = vxpose.xlu0.b32.start [1/16] %v426, 128
      %461 = vxpose.xlu0.b32.cont [2/16] 0.0, 128
      %462 = vxpose.xlu0.b32.cont [3/16] 0.0, 128
      %463 = vxpose.xlu0.b32.cont [4/16] 0.0, 128
      %464 = vxpose.xlu0.b32.cont [5/16] 0.0, 128
      %465 = vxpose.xlu0.b32.cont [6/16] 0.0, 128
      %466 = vxpose.xlu0.b32.cont [7/16] 0.0, 128
      %467 = vxpose.xlu0.b32.cont [8/16] 0.0, 128
      %468 = vxpose.xlu0.b32.cont [9/16] 0.0, 128
      %469 = vxpose.xlu0.b32.cont [10/16] 0.0, 128
      %470 = vxpose.xlu0.b32.cont [11/16] 0.0, 128
      %471 = vxpose.xlu0.b32.cont [12/16] 0.0, 128
      %472 = vxpose.xlu0.b32.cont [13/16] 0.0, 128
      %473 = vxpose.xlu0.b32.cont [14/16] 0.0, 128
      %474 = vxpose.xlu0.b32.cont [15/16] 0.0, 128
      %475 = vxpose.xlu0.b32.end [16/16] 0.0, 128
      %v476 = vpop.trf.xlu0
      %v477 = vpop.trf.xlu0
      %v478 = vpop.trf.xlu0
      %v479 = vpop.trf.xlu0
      %v480 = vpop.trf.xlu0
      %v481 = vpop.trf.xlu0
      %v482 = vpop.trf.xlu0
      %v483 = vpop.trf.xlu0
      %v484 = vpop.trf.xlu0
      %v485 = vpop.trf.xlu0
      %v486 = vpop.trf.xlu0
      %v487 = vpop.trf.xlu0
      %v488 = vpop.trf.xlu0
      %v489 = vpop.trf.xlu0
      %v490 = vpop.trf.xlu0
      %v491 = vpop.trf.xlu0
      %v493 = vlaneseq
      %v494 = vshrl.u32 %v493, 7
      %v495 = vsub.s32 0, %v494
      %v496 = vrot.slane %v297, %v495
      %v498 = vmul.f32 %v444, %v496
      %v499 = vmul.f32 %v445, %v496
      %v500 = vmul.f32 %v446, %v496
      %v501 = vmul.f32 %v447, %v496
      %v502 = vmul.f32 %v448, %v496
      %v503 = vmul.f32 %v449, %v496
      %v504 = vmul.f32 %v450, %v496
      %v505 = vmul.f32 %v451, %v496
      %v506 = vmul.f32 %v452, %v496
      %v507 = vmul.f32 %v453, %v496
      %v508 = vmul.f32 %v454, %v496
      %v509 = vmul.f32 %v455, %v496
      %v510 = vmul.f32 %v456, %v496
      %v511 = vmul.f32 %v457, %v496
      %v512 = vmul.f32 %v458, %v496
      %v513 = vmul.f32 %v459, %v496
      %v514 = vmul.f32 %v476, %v496
      %v515 = vmul.f32 %v477, %v496
      %v516 = vmul.f32 %v478, %v496
      %v517 = vmul.f32 %v479, %v496
      %v518 = vmul.f32 %v480, %v496
      %v519 = vmul.f32 %v481, %v496
      %v520 = vmul.f32 %v482, %v496
      %v521 = vmul.f32 %v483, %v496
      %v522 = vmul.f32 %v484, %v496
      %v523 = vmul.f32 %v485, %v496
      %v524 = vmul.f32 %v486, %v496
      %v525 = vmul.f32 %v487, %v496
      %v526 = vmul.f32 %v488, %v496
      %v527 = vmul.f32 %v489, %v496
      %v528 = vmul.f32 %v490, %v496
      %v529 = vmul.f32 %v491, %v496
      %v531 = vlaneseq
      %v532 = vshrl.u32 %v531, 7
      %v533 = vsub.s32 0, %v532
      %v534 = vrot.slane %v300, %v533
      %v536 = vadd.f32 %v498, %v534
      %v537 = vadd.f32 %v499, %v534
      %v538 = vadd.f32 %v500, %v534
      %v539 = vadd.f32 %v501, %v534
      %v540 = vadd.f32 %v502, %v534
      %v541 = vadd.f32 %v503, %v534
      %v542 = vadd.f32 %v504, %v534
      %v543 = vadd.f32 %v505, %v534
      %v544 = vadd.f32 %v506, %v534
      %v545 = vadd.f32 %v507, %v534
      %v546 = vadd.f32 %v508, %v534
      %v547 = vadd.f32 %v509, %v534
      %v548 = vadd.f32 %v510, %v534
      %v549 = vadd.f32 %v511, %v534
      %v550 = vadd.f32 %v512, %v534
      %v551 = vadd.f32 %v513, %v534
      %v552 = vadd.f32 %v514, %v534
      %v553 = vadd.f32 %v515, %v534
      %v554 = vadd.f32 %v516, %v534
      %v555 = vadd.f32 %v517, %v534
      %v556 = vadd.f32 %v518, %v534
      %v557 = vadd.f32 %v519, %v534
      %v558 = vadd.f32 %v520, %v534
      %v559 = vadd.f32 %v521, %v534
      %v560 = vadd.f32 %v522, %v534
      %v561 = vadd.f32 %v523, %v534
      %v562 = vadd.f32 %v524, %v534
      %v563 = vadd.f32 %v525, %v534
      %v564 = vadd.f32 %v526, %v534
      %v565 = vadd.f32 %v527, %v534
      %v566 = vadd.f32 %v528, %v534
      %v567 = vadd.f32 %v529, %v534
      %vm568 = vcmp.ge.f32.partialorder %v536, 0.0
      %vm569 = vcmp.ge.f32.partialorder %v537, 0.0
      %vm570 = vcmp.ge.f32.partialorder %v538, 0.0
      %vm571 = vcmp.ge.f32.partialorder %v539, 0.0
      %vm572 = vcmp.ge.f32.partialorder %v540, 0.0
      %vm573 = vcmp.ge.f32.partialorder %v541, 0.0
      %vm574 = vcmp.ge.f32.partialorder %v542, 0.0
      %vm575 = vcmp.ge.f32.partialorder %v543, 0.0
      %vm576 = vcmp.ge.f32.partialorder %v544, 0.0
      %vm577 = vcmp.ge.f32.partialorder %v545, 0.0
      %vm578 = vcmp.ge.f32.partialorder %v546, 0.0
      %vm579 = vcmp.ge.f32.partialorder %v547, 0.0
      %vm580 = vcmp.ge.f32.partialorder %v548, 0.0
      %vm581 = vcmp.ge.f32.partialorder %v549, 0.0
      %vm582 = vcmp.ge.f32.partialorder %v550, 0.0
      %vm583 = vcmp.ge.f32.partialorder %v551, 0.0
      %vm584 = vcmp.ge.f32.partialorder %v552, 0.0
      %vm585 = vcmp.ge.f32.partialorder %v553, 0.0
      %vm586 = vcmp.ge.f32.partialorder %v554, 0.0
      %vm587 = vcmp.ge.f32.partialorder %v555, 0.0
      %vm588 = vcmp.ge.f32.partialorder %v556, 0.0
      %vm589 = vcmp.ge.f32.partialorder %v557, 0.0
      %vm590 = vcmp.ge.f32.partialorder %v558, 0.0
      %vm591 = vcmp.ge.f32.partialorder %v559, 0.0
      %vm592 = vcmp.ge.f32.partialorder %v560, 0.0
      %vm593 = vcmp.ge.f32.partialorder %v561, 0.0
      %vm594 = vcmp.ge.f32.partialorder %v562, 0.0
      %vm595 = vcmp.ge.f32.partialorder %v563, 0.0
      %vm596 = vcmp.ge.f32.partialorder %v564, 0.0
      %vm597 = vcmp.ge.f32.partialorder %v565, 0.0
      %vm598 = vcmp.ge.f32.partialorder %v566, 0.0
      %vm599 = vcmp.ge.f32.partialorder %v567, 0.0
      %v600 = vmul.f32 %v536, 0.01
      %v601 = vmul.f32 %v537, 0.01
      %v602 = vmul.f32 %v538, 0.01
      %v603 = vmul.f32 %v539, 0.01
      %v604 = vmul.f32 %v540, 0.01
      %v605 = vmul.f32 %v541, 0.01
      %v606 = vmul.f32 %v542, 0.01
      %v607 = vmul.f32 %v543, 0.01
      %v608 = vmul.f32 %v544, 0.01
      %v609 = vmul.f32 %v545, 0.01
      %v610 = vmul.f32 %v546, 0.01
      %v611 = vmul.f32 %v547, 0.01
      %v612 = vmul.f32 %v548, 0.01
      %v613 = vmul.f32 %v549, 0.01
      %v614 = vmul.f32 %v550, 0.01
      %v615 = vmul.f32 %v551, 0.01
      %v616 = vmul.f32 %v552, 0.01
      %v617 = vmul.f32 %v553, 0.01
      %v618 = vmul.f32 %v554, 0.01
      %v619 = vmul.f32 %v555, 0.01
      %v620 = vmul.f32 %v556, 0.01
      %v621 = vmul.f32 %v557, 0.01
      %v622 = vmul.f32 %v558, 0.01
      %v623 = vmul.f32 %v559, 0.01
      %v624 = vmul.f32 %v560, 0.01
      %v625 = vmul.f32 %v561, 0.01
      %v626 = vmul.f32 %v562, 0.01
      %v627 = vmul.f32 %v563, 0.01
      %v628 = vmul.f32 %v564, 0.01
      %v629 = vmul.f32 %v565, 0.01
      %v630 = vmul.f32 %v566, 0.01
      %v631 = vmul.f32 %v567, 0.01
      %v632 = vsel %vm568, %v536, %v600
      %v633 = vsel %vm569, %v537, %v601
      %v634 = vsel %vm570, %v538, %v602
      %v635 = vsel %vm571, %v539, %v603
      %v636 = vsel %vm572, %v540, %v604
      %v637 = vsel %vm573, %v541, %v605
      %v638 = vsel %vm574, %v542, %v606
      %v639 = vsel %vm575, %v543, %v607
      %v640 = vsel %vm576, %v544, %v608
      %v641 = vsel %vm577, %v545, %v609
      %v642 = vsel %vm578, %v546, %v610
      %v643 = vsel %vm579, %v547, %v611
      %v644 = vsel %vm580, %v548, %v612
      %v645 = vsel %vm581, %v549, %v613
      %v646 = vsel %vm582, %v550, %v614
      %v647 = vsel %vm583, %v551, %v615
      %v648 = vsel %vm584, %v552, %v616
      %v649 = vsel %vm585, %v553, %v617
      %v650 = vsel %vm586, %v554, %v618
      %v651 = vsel %vm587, %v555, %v619
      %v652 = vsel %vm588, %v556, %v620
      %v653 = vsel %vm589, %v557, %v621
      %v654 = vsel %vm590, %v558, %v622
      %v655 = vsel %vm591, %v559, %v623
      %v656 = vsel %vm592, %v560, %v624
      %v657 = vsel %vm593, %v561, %v625
      %v658 = vsel %vm594, %v562, %v626
      %v659 = vsel %vm595, %v563, %v627
      %v660 = vsel %vm596, %v564, %v628
      %v661 = vsel %vm597, %v565, %v629
      %v662 = vsel %vm598, %v566, %v630
      %v663 = vsel %vm599, %v567, %v631
      %v664 = vpack.c.bf16 %v633, %v632
      %v665 = vpack.c.bf16 %v635, %v634
      %v666 = vpack.c.bf16 %v637, %v636
      %v667 = vpack.c.bf16 %v639, %v638
      %v668 = vpack.c.bf16 %v641, %v640
      %v669 = vpack.c.bf16 %v643, %v642
      %v670 = vpack.c.bf16 %v645, %v644
      %v671 = vpack.c.bf16 %v647, %v646
      %v672 = vpack.c.bf16 %v649, %v648
      %v673 = vpack.c.bf16 %v651, %v650
      %v674 = vpack.c.bf16 %v653, %v652
      %v675 = vpack.c.bf16 %v655, %v654
      %v676 = vpack.c.bf16 %v657, %v656
      %v677 = vpack.c.bf16 %v659, %v658
      %v678 = vpack.c.bf16 %v661, %v660
      %v679 = vpack.c.bf16 %v663, %v662
      %v696 = vunpack.c.l.b16 %v664
      %v697 = vunpack.c.h.b16 %v664
      %v698 = vunpack.c.l.b16 %v665
      %v699 = vunpack.c.h.b16 %v665
      %v700 = vunpack.c.l.b16 %v666
      %v701 = vunpack.c.h.b16 %v666
      %v702 = vunpack.c.l.b16 %v667
      %v703 = vunpack.c.h.b16 %v667
      %v704 = vunpack.c.l.b16 %v668
      %v705 = vunpack.c.h.b16 %v668
      %v706 = vunpack.c.l.b16 %v669
      %v707 = vunpack.c.h.b16 %v669
      %v708 = vunpack.c.l.b16 %v670
      %v709 = vunpack.c.h.b16 %v670
      %v710 = vunpack.c.l.b16 %v671
      %v711 = vunpack.c.h.b16 %v671
      %v712 = vunpack.c.l.b16 %v672
      %v713 = vunpack.c.h.b16 %v672
      %v714 = vunpack.c.l.b16 %v673
      %v715 = vunpack.c.h.b16 %v673
      %v716 = vunpack.c.l.b16 %v674
      %v717 = vunpack.c.h.b16 %v674
      %v718 = vunpack.c.l.b16 %v675
      %v719 = vunpack.c.h.b16 %v675
      %v720 = vunpack.c.l.b16 %v676
      %v721 = vunpack.c.h.b16 %v676
      %v722 = vunpack.c.l.b16 %v677
      %v723 = vunpack.c.h.b16 %v677
      %v724 = vunpack.c.l.b16 %v678
      %v725 = vunpack.c.h.b16 %v678
      %v726 = vunpack.c.l.b16 %v679
      %v727 = vunpack.c.h.b16 %v679
      %v728 = vpack.c.b16 %v696, %v696
      %v729 = vpack.c.b16 %v697, %v697
      %v730 = vpack.c.b16 %v698, %v698
      %v731 = vpack.c.b16 %v699, %v699
      %v732 = vpack.c.b16 %v700, %v700
      %v733 = vpack.c.b16 %v701, %v701
      %v734 = vpack.c.b16 %v702, %v702
      %v735 = vpack.c.b16 %v703, %v703
      %v736 = vpack.c.b16 %v704, %v704
      %v737 = vpack.c.b16 %v705, %v705
      %v738 = vpack.c.b16 %v706, %v706
      %v739 = vpack.c.b16 %v707, %v707
      %v740 = vpack.c.b16 %v708, %v708
      %v741 = vpack.c.b16 %v709, %v709
      %v742 = vpack.c.b16 %v710, %v710
      %v743 = vpack.c.b16 %v711, %v711
      %v744 = vpack.c.b16 %v712, %v712
      %v745 = vpack.c.b16 %v713, %v713
      %v746 = vpack.c.b16 %v714, %v714
      %v747 = vpack.c.b16 %v715, %v715
      %v748 = vpack.c.b16 %v716, %v716
      %v749 = vpack.c.b16 %v717, %v717
      %v750 = vpack.c.b16 %v718, %v718
      %v751 = vpack.c.b16 %v719, %v719
      %v752 = vpack.c.b16 %v720, %v720
      %v753 = vpack.c.b16 %v721, %v721
      %v754 = vpack.c.b16 %v722, %v722
      %v755 = vpack.c.b16 %v723, %v723
      %v756 = vpack.c.b16 %v724, %v724
      %v757 = vpack.c.b16 %v725, %v725
      %v758 = vpack.c.b16 %v726, %v726
      %v759 = vpack.c.b16 %v727, %v727
      %vm760 = vsmask.f32 4368
      %vm761 = vmor %vm311, %vm760
      %v763 = vshrl.u32 %v728, 16
      %v765 = vrot.slane %v763, 7
      %v766 = vshll.u32 %v728, 16
      %v768 = vor.u32 %v765, %v766
      %v769 = vrot.slane %v765, 4
      %v771 = vshrl.u32 %v729, 16
      %v773 = vrot.slane %v771, 7
      %v774 = vshll.u32 %v729, 16
      %v776 = vor.u32 %v773, %v774
      %v777 = vsel %vm761, %v769, %v776
      %v778 = vrot.slane %v773, 4
      %v780 = vshrl.u32 %v730, 16
      %v782 = vrot.slane %v780, 7
      %v783 = vshll.u32 %v730, 16
      %v785 = vor.u32 %v782, %v783
      %v786 = vrot.slane %v782, 4
      %v788 = vshrl.u32 %v731, 16
      %v790 = vrot.slane %v788, 7
      %v791 = vshll.u32 %v731, 16
      %v793 = vor.u32 %v790, %v791
      %v794 = vsel %vm761, %v786, %v793
      %v795 = vrot.slane %v790, 4
      %v797 = vshrl.u32 %v732, 16
      %v799 = vrot.slane %v797, 7
      %v800 = vshll.u32 %v732, 16
      %v802 = vor.u32 %v799, %v800
      %v803 = vrot.slane %v799, 4
      %v805 = vshrl.u32 %v733, 16
      %v807 = vrot.slane %v805, 7
      %v808 = vshll.u32 %v733, 16
      %v810 = vor.u32 %v807, %v808
      %v811 = vsel %vm761, %v803, %v810
      %v812 = vrot.slane %v807, 4
      %v814 = vshrl.u32 %v734, 16
      %v816 = vrot.slane %v814, 7
      %v817 = vshll.u32 %v734, 16
      %v819 = vor.u32 %v816, %v817
      %v820 = vrot.slane %v816, 4
      %v822 = vshrl.u32 %v735, 16
      %v824 = vrot.slane %v822, 7
      %v825 = vshll.u32 %v735, 16
      %v827 = vor.u32 %v824, %v825
      %v828 = vsel %vm761, %v820, %v827
      %v829 = vrot.slane %v824, 4
      %v831 = vshrl.u32 %v736, 16
      %v833 = vrot.slane %v831, 7
      %v834 = vshll.u32 %v736, 16
      %v836 = vor.u32 %v833, %v834
      %v837 = vrot.slane %v833, 4
      %v839 = vshrl.u32 %v737, 16
      %v841 = vrot.slane %v839, 7
      %v842 = vshll.u32 %v737, 16
      %v844 = vor.u32 %v841, %v842
      %v845 = vsel %vm761, %v837, %v844
      %v846 = vrot.slane %v841, 4
      %v848 = vshrl.u32 %v738, 16
      %v850 = vrot.slane %v848, 7
      %v851 = vshll.u32 %v738, 16
      %v853 = vor.u32 %v850, %v851
      %v854 = vrot.slane %v850, 4
      %v856 = vshrl.u32 %v739, 16
      %v858 = vrot.slane %v856, 7
      %v859 = vshll.u32 %v739, 16
      %v861 = vor.u32 %v858, %v859
      %v862 = vsel %vm761, %v854, %v861
      %v863 = vrot.slane %v858, 4
      %v865 = vshrl.u32 %v740, 16
      %v867 = vrot.slane %v865, 7
      %v868 = vshll.u32 %v740, 16
      %v870 = vor.u32 %v867, %v868
      %v871 = vrot.slane %v867, 4
      %v873 = vshrl.u32 %v741, 16
      %v875 = vrot.slane %v873, 7
      %v876 = vshll.u32 %v741, 16
      %v878 = vor.u32 %v875, %v876
      %v879 = vsel %vm761, %v871, %v878
      %v880 = vrot.slane %v875, 4
      %v882 = vshrl.u32 %v742, 16
      %v884 = vrot.slane %v882, 7
      %v885 = vshll.u32 %v742, 16
      %v887 = vor.u32 %v884, %v885
      %v888 = vrot.slane %v884, 4
      %v890 = vshrl.u32 %v743, 16
      %v892 = vrot.slane %v890, 7
      %v893 = vshll.u32 %v743, 16
      %v895 = vor.u32 %v892, %v893
      %v896 = vsel %vm761, %v888, %v895
      %v897 = vrot.slane %v892, 4
      %v899 = vshrl.u32 %v744, 16
      %v901 = vrot.slane %v899, 7
      %v902 = vshll.u32 %v744, 16
      %v904 = vor.u32 %v901, %v902
      %v905 = vrot.slane %v901, 4
      %v907 = vshrl.u32 %v745, 16
      %v909 = vrot.slane %v907, 7
      %v910 = vshll.u32 %v745, 16
      %v912 = vor.u32 %v909, %v910
      %v913 = vsel %vm761, %v905, %v912
      %v914 = vrot.slane %v909, 4
      %v916 = vshrl.u32 %v746, 16
      %v918 = vrot.slane %v916, 7
      %v919 = vshll.u32 %v746, 16
      %v921 = vor.u32 %v918, %v919
      %v922 = vrot.slane %v918, 4
      %v924 = vshrl.u32 %v747, 16
      %v926 = vrot.slane %v924, 7
      %v927 = vshll.u32 %v747, 16
      %v929 = vor.u32 %v926, %v927
      %v930 = vsel %vm761, %v922, %v929
      %v931 = vrot.slane %v926, 4
      %v933 = vshrl.u32 %v748, 16
      %v935 = vrot.slane %v933, 7
      %v936 = vshll.u32 %v748, 16
      %v938 = vor.u32 %v935, %v936
      %v939 = vrot.slane %v935, 4
      %v941 = vshrl.u32 %v749, 16
      %v943 = vrot.slane %v941, 7
      %v944 = vshll.u32 %v749, 16
      %v946 = vor.u32 %v943, %v944
      %v947 = vsel %vm761, %v939, %v946
      %v948 = vrot.slane %v943, 4
      %v950 = vshrl.u32 %v750, 16
      %v952 = vrot.slane %v950, 7
      %v953 = vshll.u32 %v750, 16
      %v955 = vor.u32 %v952, %v953
      %v956 = vrot.slane %v952, 4
      %v958 = vshrl.u32 %v751, 16
      %v960 = vrot.slane %v958, 7
      %v961 = vshll.u32 %v751, 16
      %v963 = vor.u32 %v960, %v961
      %v964 = vsel %vm761, %v956, %v963
      %v965 = vrot.slane %v960, 4
      %v967 = vshrl.u32 %v752, 16
      %v969 = vrot.slane %v967, 7
      %v970 = vshll.u32 %v752, 16
      %v972 = vor.u32 %v969, %v970
      %v973 = vrot.slane %v969, 4
      %v975 = vshrl.u32 %v753, 16
      %v977 = vrot.slane %v975, 7
      %v978 = vshll.u32 %v753, 16
      %v980 = vor.u32 %v977, %v978
      %v981 = vsel %vm761, %v973, %v980
      %v982 = vrot.slane %v977, 4
      %v984 = vshrl.u32 %v754, 16
      %v986 = vrot.slane %v984, 7
      %v987 = vshll.u32 %v754, 16
      %v989 = vor.u32 %v986, %v987
      %v990 = vrot.slane %v986, 4
      %v992 = vshrl.u32 %v755, 16
      %v994 = vrot.slane %v992, 7
      %v995 = vshll.u32 %v755, 16
      %v997 = vor.u32 %v994, %v995
      %v998 = vsel %vm761, %v990, %v997
      %v999 = vrot.slane %v994, 4
      %v1001 = vshrl.u32 %v756, 16
      %v1003 = vrot.slane %v1001, 7
      %v1004 = vshll.u32 %v756, 16
      %v1006 = vor.u32 %v1003, %v1004
      %v1007 = vrot.slane %v1003, 4
      %v1009 = vshrl.u32 %v757, 16
      %v1011 = vrot.slane %v1009, 7
      %v1012 = vshll.u32 %v757, 16
      %v1014 = vor.u32 %v1011, %v1012
      %v1015 = vsel %vm761, %v1007, %v1014
      %v1016 = vrot.slane %v1011, 4
      %v1018 = vshrl.u32 %v758, 16
      %v1020 = vrot.slane %v1018, 7
      %v1021 = vshll.u32 %v758, 16
      %v1023 = vor.u32 %v1020, %v1021
      %v1024 = vrot.slane %v1020, 4
      %v1026 = vshrl.u32 %v759, 16
      %v1028 = vrot.slane %v1026, 7
      %v1029 = vshll.u32 %v759, 16
      %v1031 = vor.u32 %v1028, %v1029
      %v1032 = vsel %vm761, %v1024, %v1031
      %v1033 = vrot.slane %v1028, 4
      %s1082 = scalar_lea.vmem [#allocation2], 12
      %vm1083 = vcmask 27648
      %vm1084 = vmand %vm1083, %vm367
      %v1085 = vld [vmem:[%s1082] sm:$0xf]
      %v1086 = vsel %vm1084, %v768, %v1085
      %1087 = vst [vmem:[%s1082] sm:$0xf] %v1086
      %1088 = vst.msk [vmem:[%s1082 + $0x4] sm:$0xf] %vm301, %v777
      %v1089 = vld [vmem:[%s1082 + $0x8] sm:$0x1]
      %v1090 = vsel %vm312, %v778, %v1089
      %1091 = vst [vmem:[%s1082 + $0x8] sm:$0x1] %v1090
      %v1092 = vld [vmem:[%s1082 + $0xc] sm:$0xf]
      %v1093 = vsel %vm1084, %v785, %v1092
      %1094 = vst [vmem:[%s1082 + $0xc] sm:$0xf] %v1093
      %1095 = vst.msk [vmem:[%s1082 + $0x10] sm:$0xf] %vm301, %v794
      %v1096 = vld [vmem:[%s1082 + $0x14] sm:$0x1]
      %v1097 = vsel %vm312, %v795, %v1096
      %1098 = vst [vmem:[%s1082 + $0x14] sm:$0x1] %v1097
      %v1099 = vld [vmem:[%s1082 + $0x18] sm:$0xf]
      %v1100 = vsel %vm1084, %v802, %v1099
      %1101 = vst [vmem:[%s1082 + $0x18] sm:$0xf] %v1100
      %1102 = vst.msk [vmem:[%s1082 + $0x1c] sm:$0xf] %vm301, %v811
      %v1103 = vld [vmem:[%s1082 + $0x20] sm:$0x1]
      %v1104 = vsel %vm312, %v812, %v1103
      %1105 = vst [vmem:[%s1082 + $0x20] sm:$0x1] %v1104
      %v1106 = vld [vmem:[%s1082 + $0x24] sm:$0xf]
      %v1107 = vsel %vm1084, %v819, %v1106
      %1108 = vst [vmem:[%s1082 + $0x24] sm:$0xf] %v1107
      %1109 = vst.msk [vmem:[%s1082 + $0x28] sm:$0xf] %vm301, %v828
      %v1110 = vld [vmem:[%s1082 + $0x2c] sm:$0x1]
      %v1111 = vsel %vm312, %v829, %v1110
      %1112 = vst [vmem:[%s1082 + $0x2c] sm:$0x1] %v1111
      %v1113 = vld [vmem:[%s1082 + $0x30] sm:$0xf]
      %v1114 = vsel %vm1084, %v836, %v1113
      %1115 = vst [vmem:[%s1082 + $0x30] sm:$0xf] %v1114
      %1116 = vst.msk [vmem:[%s1082 + $0x34] sm:$0xf] %vm301, %v845
      %v1117 = vld [vmem:[%s1082 + $0x38] sm:$0x1]
      %v1118 = vsel %vm312, %v846, %v1117
      %1119 = vst [vmem:[%s1082 + $0x38] sm:$0x1] %v1118
      %v1120 = vld [vmem:[%s1082 + $0x3c] sm:$0xf]
      %v1121 = vsel %vm1084, %v853, %v1120
      %1122 = vst [vmem:[%s1082 + $0x3c] sm:$0xf] %v1121
      %1123 = vst.msk [vmem:[%s1082 + $0x40] sm:$0xf] %vm301, %v862
      %v1124 = vld [vmem:[%s1082 + $0x44] sm:$0x1]
      %v1125 = vsel %vm312, %v863, %v1124
      %1126 = vst [vmem:[%s1082 + $0x44] sm:$0x1] %v1125
      %v1127 = vld [vmem:[%s1082 + $0x48] sm:$0xf]
      %v1128 = vsel %vm1084, %v870, %v1127
      %1129 = vst [vmem:[%s1082 + $0x48] sm:$0xf] %v1128
      %1130 = vst.msk [vmem:[%s1082 + $0x4c] sm:$0xf] %vm301, %v879
      %v1131 = vld [vmem:[%s1082 + $0x50] sm:$0x1]
      %v1132 = vsel %vm312, %v880, %v1131
      %1133 = vst [vmem:[%s1082 + $0x50] sm:$0x1] %v1132
      %v1134 = vld [vmem:[%s1082 + $0x54] sm:$0xf]
      %v1135 = vsel %vm1084, %v887, %v1134
      %1136 = vst [vmem:[%s1082 + $0x54] sm:$0xf] %v1135
      %1137 = vst.msk [vmem:[%s1082 + $0x58] sm:$0xf] %vm301, %v896
      %v1138 = vld [vmem:[%s1082 + $0x5c] sm:$0x1]
      %v1139 = vsel %vm312, %v897, %v1138
      %1140 = vst [vmem:[%s1082 + $0x5c] sm:$0x1] %v1139
      %v1141 = vld [vmem:[%s1082 + $0x60] sm:$0xf]
      %v1142 = vsel %vm1084, %v904, %v1141
      %1143 = vst [vmem:[%s1082 + $0x60] sm:$0xf] %v1142
      %1144 = vst.msk [vmem:[%s1082 + $0x64] sm:$0xf] %vm301, %v913
      %v1145 = vld [vmem:[%s1082 + $0x68] sm:$0x1]
      %v1146 = vsel %vm312, %v914, %v1145
      %1147 = vst [vmem:[%s1082 + $0x68] sm:$0x1] %v1146
      %v1148 = vld [vmem:[%s1082 + $0x6c] sm:$0xf]
      %v1149 = vsel %vm1084, %v921, %v1148
      %1150 = vst [vmem:[%s1082 + $0x6c] sm:$0xf] %v1149
      %1151 = vst.msk [vmem:[%s1082 + $0x70] sm:$0xf] %vm301, %v930
      %v1152 = vld [vmem:[%s1082 + $0x74] sm:$0x1]
      %v1153 = vsel %vm312, %v931, %v1152
      %1154 = vst [vmem:[%s1082 + $0x74] sm:$0x1] %v1153
      %v1155 = vld [vmem:[%s1082 + $0x78] sm:$0xf]
      %v1156 = vsel %vm1084, %v938, %v1155
      %1157 = vst [vmem:[%s1082 + $0x78] sm:$0xf] %v1156
      %1158 = vst.msk [vmem:[%s1082 + $0x7c] sm:$0xf] %vm301, %v947
      %v1159 = vld [vmem:[%s1082 + $0x80] sm:$0x1]
      %v1160 = vsel %vm312, %v948, %v1159
      %1161 = vst [vmem:[%s1082 + $0x80] sm:$0x1] %v1160
      %v1162 = vld [vmem:[%s1082 + $0x84] sm:$0xf]
      %v1163 = vsel %vm1084, %v955, %v1162
      %1164 = vst [vmem:[%s1082 + $0x84] sm:$0xf] %v1163
      %1165 = vst.msk [vmem:[%s1082 + $0x88] sm:$0xf] %vm301, %v964
      %v1166 = vld [vmem:[%s1082 + $0x8c] sm:$0x1]
      %v1167 = vsel %vm312, %v965, %v1166
      %1168 = vst [vmem:[%s1082 + $0x8c] sm:$0x1] %v1167
      %v1169 = vld [vmem:[%s1082 + $0x90] sm:$0xf]
      %v1170 = vsel %vm1084, %v972, %v1169
      %1171 = vst [vmem:[%s1082 + $0x90] sm:$0xf] %v1170
      %1172 = vst.msk [vmem:[%s1082 + $0x94] sm:$0xf] %vm301, %v981
      %v1173 = vld [vmem:[%s1082 + $0x98] sm:$0x1]
      %v1174 = vsel %vm312, %v982, %v1173
      %1175 = vst [vmem:[%s1082 + $0x98] sm:$0x1] %v1174
      %v1176 = vld [vmem:[%s1082 + $0x9c] sm:$0xf]
      %v1177 = vsel %vm1084, %v989, %v1176
      %1178 = vst [vmem:[%s1082 + $0x9c] sm:$0xf] %v1177
      %1179 = vst.msk [vmem:[%s1082 + $0xa0] sm:$0xf] %vm301, %v998
      %v1180 = vld [vmem:[%s1082 + $0xa4] sm:$0x1]
      %v1181 = vsel %vm312, %v999, %v1180
      %1182 = vst [vmem:[%s1082 + $0xa4] sm:$0x1] %v1181
      %v1183 = vld [vmem:[%s1082 + $0xa8] sm:$0xf]
      %v1184 = vsel %vm1084, %v1006, %v1183
      %1185 = vst [vmem:[%s1082 + $0xa8] sm:$0xf] %v1184
      %1186 = vst.msk [vmem:[%s1082 + $0xac] sm:$0xf] %vm301, %v1015
      %v1187 = vld [vmem:[%s1082 + $0xb0] sm:$0x1]
      %v1188 = vsel %vm312, %v1016, %v1187
      %1189 = vst [vmem:[%s1082 + $0xb0] sm:$0x1] %v1188
      %v1190 = vld [vmem:[%s1082 + $0xb4] sm:$0xf]
      %v1191 = vsel %vm1084, %v1023, %v1190
      %1192 = vst [vmem:[%s1082 + $0xb4] sm:$0xf] %v1191
      %1193 = vst.msk [vmem:[%s1082 + $0xb8] sm:$0xf] %vm301, %v1032
      %v1194 = vld [vmem:[%s1082 + $0xbc] sm:$0x1]
      %v1195 = vsel %vm312, %v1033, %v1194
      %1196 = vst [vmem:[%s1082 + $0xbc] sm:$0x1] %v1195
      %v1197 = vld [vmem:[#allocation2] sm:$0xf]
      %v1198 = vld [vmem:[#allocation2 + $0x4] sm:$0xf]
      %v1199 = vld [vmem:[#allocation2 + $0xc] sm:$0xf]
      %v1200 = vld [vmem:[#allocation2 + $0x10] sm:$0xf]
      %v1201 = vld [vmem:[#allocation2 + $0x18] sm:$0xf]
      %v1202 = vld [vmem:[#allocation2 + $0x1c] sm:$0xf]
      %v1203 = vld [vmem:[#allocation2 + $0x24] sm:$0xf]
      %v1204 = vld [vmem:[#allocation2 + $0x28] sm:$0xf]
      %v1205 = vld [vmem:[#allocation2 + $0x30] sm:$0xf]
      %v1206 = vld [vmem:[#allocation2 + $0x34] sm:$0xf]
      %v1207 = vld [vmem:[#allocation2 + $0x3c] sm:$0xf]
      %v1208 = vld [vmem:[#allocation2 + $0x40] sm:$0xf]
      %v1209 = vld [vmem:[#allocation2 + $0x48] sm:$0xf]
      %v1210 = vld [vmem:[#allocation2 + $0x4c] sm:$0xf]
      %v1211 = vld [vmem:[#allocation2 + $0x54] sm:$0xf]
      %v1212 = vld [vmem:[#allocation2 + $0x58] sm:$0xf]
      %v1213 = vld [vmem:[#allocation2 + $0x60] sm:$0xf]
      %v1214 = vld [vmem:[#allocation2 + $0x64] sm:$0xf]
      %v1215 = vld [vmem:[#allocation2 + $0x6c] sm:$0xf]
      %v1216 = vld [vmem:[#allocation2 + $0x70] sm:$0xf]
      %v1217 = vld [vmem:[#allocation2 + $0x78] sm:$0xf]
      %v1218 = vld [vmem:[#allocation2 + $0x7c] sm:$0xf]
      %v1219 = vld [vmem:[#allocation2 + $0x84] sm:$0xf]
      %v1220 = vld [vmem:[#allocation2 + $0x88] sm:$0xf]
      %v1221 = vld [vmem:[#allocation2 + $0x90] sm:$0xf]
      %v1222 = vld [vmem:[#allocation2 + $0x94] sm:$0xf]
      %v1223 = vld [vmem:[#allocation2 + $0x9c] sm:$0xf]
      %v1224 = vld [vmem:[#allocation2 + $0xa0] sm:$0xf]
      %v1225 = vld [vmem:[#allocation2 + $0xa8] sm:$0xf]
      %v1226 = vld [vmem:[#allocation2 + $0xac] sm:$0xf]
      %v1227 = vld [vmem:[#allocation2 + $0xb4] sm:$0xf]
      %v1228 = vld [vmem:[#allocation2 + $0xb8] sm:$0xf]
      %v1229 = vld [vmem:[#allocation2 + $0x8] sm:$0x1]
      %v1230 = vld [vmem:[#allocation2 + $0x14] sm:$0x1]
      %v1231 = vld [vmem:[#allocation2 + $0x20] sm:$0x1]
      %v1232 = vld [vmem:[#allocation2 + $0x2c] sm:$0x1]
      %v1233 = vld [vmem:[#allocation2 + $0x38] sm:$0x1]
      %v1234 = vld [vmem:[#allocation2 + $0x44] sm:$0x1]
      %v1235 = vld [vmem:[#allocation2 + $0x50] sm:$0x1]
      %v1236 = vld [vmem:[#allocation2 + $0x5c] sm:$0x1]
      %v1237 = vld [vmem:[#allocation2 + $0x68] sm:$0x1]
      %v1238 = vld [vmem:[#allocation2 + $0x74] sm:$0x1]
      %v1239 = vld [vmem:[#allocation2 + $0x80] sm:$0x1]
      %v1240 = vld [vmem:[#allocation2 + $0x8c] sm:$0x1]
      %v1241 = vld [vmem:[#allocation2 + $0x98] sm:$0x1]
      %v1242 = vld [vmem:[#allocation2 + $0xa4] sm:$0x1]
      %v1243 = vld [vmem:[#allocation2 + $0xb0] sm:$0x1]
      %v1244 = vld [vmem:[#allocation2 + $0xbc] sm:$0x1]
      %v1245 = vld [vmem:[#allocation2] sm:$0xe]
      %v1246 = vld [vmem:[#allocation2 + $0xc] sm:$0xe]
      %v1247 = vld [vmem:[#allocation2 + $0x18] sm:$0xe]
      %v1248 = vld [vmem:[#allocation2 + $0x24] sm:$0xe]
      %v1249 = vld [vmem:[#allocation2 + $0x30] sm:$0xe]
      %v1250 = vld [vmem:[#allocation2 + $0x3c] sm:$0xe]
      %v1251 = vld [vmem:[#allocation2 + $0x48] sm:$0xe]
      %v1252 = vld [vmem:[#allocation2 + $0x54] sm:$0xe]
      %v1253 = vld [vmem:[#allocation2 + $0x60] sm:$0xe]
      %v1254 = vld [vmem:[#allocation2 + $0x6c] sm:$0xe]
      %v1255 = vld [vmem:[#allocation2 + $0x78] sm:$0xe]
      %v1256 = vld [vmem:[#allocation2 + $0x84] sm:$0xe]
      %v1257 = vld [vmem:[#allocation2 + $0x90] sm:$0xe]
      %v1258 = vld [vmem:[#allocation2 + $0x9c] sm:$0xe]
      %v1259 = vld [vmem:[#allocation2 + $0xa8] sm:$0xe]
      %v1260 = vld [vmem:[#allocation2 + $0xb4] sm:$0xe]
      %v1261 = vld [vmem:[%s1082] sm:$0xf]
      %v1262 = vld [vmem:[%s1082 + $0x4] sm:$0xf]
      %v1263 = vld [vmem:[%s1082 + $0xc] sm:$0xf]
      %v1264 = vld [vmem:[%s1082 + $0x10] sm:$0xf]
      %v1265 = vld [vmem:[%s1082 + $0x18] sm:$0xf]
      %v1266 = vld [vmem:[%s1082 + $0x1c] sm:$0xf]
      %v1267 = vld [vmem:[%s1082 + $0x24] sm:$0xf]
      %v1268 = vld [vmem:[%s1082 + $0x28] sm:$0xf]
      %v1269 = vld [vmem:[%s1082 + $0x30] sm:$0xf]
      %v1270 = vld [vmem:[%s1082 + $0x34] sm:$0xf]
      %v1271 = vld [vmem:[%s1082 + $0x3c] sm:$0xf]
      %v1272 = vld [vmem:[%s1082 + $0x40] sm:$0xf]
      %v1273 = vld [vmem:[%s1082 + $0x48] sm:$0xf]
      %v1274 = vld [vmem:[%s1082 + $0x4c] sm:$0xf]
      %v1275 = vld [vmem:[%s1082 + $0x54] sm:$0xf]
      %v1276 = vld [vmem:[%s1082 + $0x58] sm:$0xf]
      %v1277 = vld [vmem:[%s1082 + $0x60] sm:$0xf]
      %v1278 = vld [vmem:[%s1082 + $0x64] sm:$0xf]
      %v1279 = vld [vmem:[%s1082 + $0x6c] sm:$0xf]
      %v1280 = vld [vmem:[%s1082 + $0x70] sm:$0xf]
      %v1281 = vld [vmem:[%s1082 + $0x78] sm:$0xf]
      %v1282 = vld [vmem:[%s1082 + $0x7c] sm:$0xf]
      %v1283 = vld [vmem:[%s1082 + $0x84] sm:$0xf]
      %v1284 = vld [vmem:[%s1082 + $0x88] sm:$0xf]
      %v1285 = vld [vmem:[%s1082 + $0x90] sm:$0xf]
      %v1286 = vld [vmem:[%s1082 + $0x94] sm:$0xf]
      %v1287 = vld [vmem:[%s1082 + $0x9c] sm:$0xf]
      %v1288 = vld [vmem:[%s1082 + $0xa0] sm:$0xf]
      %v1289 = vld [vmem:[%s1082 + $0xa8] sm:$0xf]
      %v1290 = vld [vmem:[%s1082 + $0xac] sm:$0xf]
      %v1291 = vld [vmem:[%s1082 + $0xb4] sm:$0xf]
      %v1292 = vld [vmem:[%s1082 + $0xb8] sm:$0xf]
      %v1293 = vld [vmem:[%s1082 + $0x8] sm:$0x1]
      %v1294 = vld [vmem:[%s1082 + $0x14] sm:$0x1]
      %v1295 = vld [vmem:[%s1082 + $0x20] sm:$0x1]
      %v1296 = vld [vmem:[%s1082 + $0x2c] sm:$0x1]
      %v1297 = vld [vmem:[%s1082 + $0x38] sm:$0x1]
      %v1298 = vld [vmem:[%s1082 + $0x44] sm:$0x1]
      %v1299 = vld [vmem:[%s1082 + $0x50] sm:$0x1]
      %v1300 = vld [vmem:[%s1082 + $0x5c] sm:$0x1]
      %v1301 = vld [vmem:[%s1082 + $0x68] sm:$0x1]
      %v1302 = vld [vmem:[%s1082 + $0x74] sm:$0x1]
      %v1303 = vld [vmem:[%s1082 + $0x80] sm:$0x1]
      %v1304 = vld [vmem:[%s1082 + $0x8c] sm:$0x1]
      %v1305 = vld [vmem:[%s1082 + $0x98] sm:$0x1]
      %v1306 = vld [vmem:[%s1082 + $0xa4] sm:$0x1]
      %v1307 = vld [vmem:[%s1082 + $0xb0] sm:$0x1]
      %v1308 = vld [vmem:[%s1082 + $0xbc] sm:$0x1]
      %v1309 = vld [vmem:[%s1082] sm:$0xe]
      %v1310 = vld [vmem:[%s1082 + $0xc] sm:$0xe]
      %v1311 = vld [vmem:[%s1082 + $0x18] sm:$0xe]
      %v1312 = vld [vmem:[%s1082 + $0x24] sm:$0xe]
      %v1313 = vld [vmem:[%s1082 + $0x30] sm:$0xe]
      %v1314 = vld [vmem:[%s1082 + $0x3c] sm:$0xe]
      %v1315 = vld [vmem:[%s1082 + $0x48] sm:$0xe]
      %v1316 = vld [vmem:[%s1082 + $0x54] sm:$0xe]
      %v1317 = vld [vmem:[%s1082 + $0x60] sm:$0xe]
      %v1318 = vld [vmem:[%s1082 + $0x6c] sm:$0xe]
      %v1319 = vld [vmem:[%s1082 + $0x78] sm:$0xe]
      %v1320 = vld [vmem:[%s1082 + $0x84] sm:$0xe]
      %v1321 = vld [vmem:[%s1082 + $0x90] sm:$0xe]
      %v1322 = vld [vmem:[%s1082 + $0x9c] sm:$0xe]
      %v1323 = vld [vmem:[%s1082 + $0xa8] sm:$0xe]
      %v1324 = vld [vmem:[%s1082 + $0xb4] sm:$0xe]
      %s1325 = scalar_lea.vmem [#allocation2], 24
      %v1326 = vld [vmem:[%s1325] sm:$0xf]
      %v1327 = vld [vmem:[%s1325 + $0x4] sm:$0xf]
      %v1328 = vld [vmem:[%s1325 + $0xc] sm:$0xf]
      %v1329 = vld [vmem:[%s1325 + $0x10] sm:$0xf]
      %v1330 = vld [vmem:[%s1325 + $0x18] sm:$0xf]
      %v1331 = vld [vmem:[%s1325 + $0x1c] sm:$0xf]
      %v1332 = vld [vmem:[%s1325 + $0x24] sm:$0xf]
      %v1333 = vld [vmem:[%s1325 + $0x28] sm:$0xf]
      %v1334 = vld [vmem:[%s1325 + $0x30] sm:$0xf]
      %v1335 = vld [vmem:[%s1325 + $0x34] sm:$0xf]
      %v1336 = vld [vmem:[%s1325 + $0x3c] sm:$0xf]
      %v1337 = vld [vmem:[%s1325 + $0x40] sm:$0xf]
      %v1338 = vld [vmem:[%s1325 + $0x48] sm:$0xf]
      %v1339 = vld [vmem:[%s1325 + $0x4c] sm:$0xf]
      %v1340 = vld [vmem:[%s1325 + $0x54] sm:$0xf]
      %v1341 = vld [vmem:[%s1325 + $0x58] sm:$0xf]
      %v1342 = vld [vmem:[%s1325 + $0x60] sm:$0xf]
      %v1343 = vld [vmem:[%s1325 + $0x64] sm:$0xf]
      %v1344 = vld [vmem:[%s1325 + $0x6c] sm:$0xf]
      %v1345 = vld [vmem:[%s1325 + $0x70] sm:$0xf]
      %v1346 = vld [vmem:[%s1325 + $0x78] sm:$0xf]
      %v1347 = vld [vmem:[%s1325 + $0x7c] sm:$0xf]
      %v1348 = vld [vmem:[%s1325 + $0x84] sm:$0xf]
      %v1349 = vld [vmem:[%s1325 + $0x88] sm:$0xf]
      %v1350 = vld [vmem:[%s1325 + $0x90] sm:$0xf]
      %v1351 = vld [vmem:[%s1325 + $0x94] sm:$0xf]
      %v1352 = vld [vmem:[%s1325 + $0x9c] sm:$0xf]
      %v1353 = vld [vmem:[%s1325 + $0xa0] sm:$0xf]
      %v1354 = vld [vmem:[%s1325 + $0xa8] sm:$0xf]
      %v1355 = vld [vmem:[%s1325 + $0xac] sm:$0xf]
      %v1356 = vld [vmem:[%s1325 + $0xb4] sm:$0xf]
      %v1357 = vld [vmem:[%s1325 + $0xb8] sm:$0xf]
      %v1358 = vld [vmem:[%s1325 + $0x8] sm:$0x1]
      %v1359 = vld [vmem:[%s1325 + $0x14] sm:$0x1]
      %v1360 = vld [vmem:[%s1325 + $0x20] sm:$0x1]
      %v1361 = vld [vmem:[%s1325 + $0x2c] sm:$0x1]
      %v1362 = vld [vmem:[%s1325 + $0x38] sm:$0x1]
      %v1363 = vld [vmem:[%s1325 + $0x44] sm:$0x1]
      %v1364 = vld [vmem:[%s1325 + $0x50] sm:$0x1]
      %v1365 = vld [vmem:[%s1325 + $0x5c] sm:$0x1]
      %v1366 = vld [vmem:[%s1325 + $0x68] sm:$0x1]
      %v1367 = vld [vmem:[%s1325 + $0x74] sm:$0x1]
      %v1368 = vld [vmem:[%s1325 + $0x80] sm:$0x1]
      %v1369 = vld [vmem:[%s1325 + $0x8c] sm:$0x1]
      %v1370 = vld [vmem:[%s1325 + $0x98] sm:$0x1]
      %v1371 = vld [vmem:[%s1325 + $0xa4] sm:$0x1]
      %v1372 = vld [vmem:[%s1325 + $0xb0] sm:$0x1]
      %v1373 = vld [vmem:[%s1325 + $0xbc] sm:$0x1]
      %v1374 = vld [vmem:[%s1325] sm:$0xe]
      %v1375 = vld [vmem:[%s1325 + $0xc] sm:$0xe]
      %v1376 = vld [vmem:[%s1325 + $0x18] sm:$0xe]
      %v1377 = vld [vmem:[%s1325 + $0x24] sm:$0xe]
      %v1378 = vld [vmem:[%s1325 + $0x30] sm:$0xe]
      %v1379 = vld [vmem:[%s1325 + $0x3c] sm:$0xe]
      %v1380 = vld [vmem:[%s1325 + $0x48] sm:$0xe]
      %v1381 = vld [vmem:[%s1325 + $0x54] sm:$0xe]
      %v1382 = vld [vmem:[%s1325 + $0x60] sm:$0xe]
      %v1383 = vld [vmem:[%s1325 + $0x6c] sm:$0xe]
      %v1384 = vld [vmem:[%s1325 + $0x78] sm:$0xe]
      %v1385 = vld [vmem:[%s1325 + $0x84] sm:$0xe]
      %v1386 = vld [vmem:[%s1325 + $0x90] sm:$0xe]
      %v1387 = vld [vmem:[%s1325 + $0x9c] sm:$0xe]
      %v1388 = vld [vmem:[%s1325 + $0xa8] sm:$0xe]
      %v1389 = vld [vmem:[%s1325 + $0xb4] sm:$0xe]
      %v1422 = vunpack.c.l.b16 %v1197
      %v1423 = vunpack.c.l.b16 %v1198
      %v1424 = vunpack.c.l.b16 %v1199
      %v1425 = vunpack.c.l.b16 %v1200
      %v1426 = vunpack.c.l.b16 %v1201
      %v1427 = vunpack.c.l.b16 %v1202
      %v1428 = vunpack.c.l.b16 %v1203
      %v1429 = vunpack.c.l.b16 %v1204
      %v1430 = vunpack.c.l.b16 %v1205
      %v1431 = vunpack.c.l.b16 %v1206
      %v1432 = vunpack.c.l.b16 %v1207
      %v1433 = vunpack.c.l.b16 %v1208
      %v1434 = vunpack.c.l.b16 %v1209
      %v1435 = vunpack.c.l.b16 %v1210
      %v1436 = vunpack.c.l.b16 %v1211
      %v1437 = vunpack.c.l.b16 %v1212
      %v1438 = vunpack.c.l.b16 %v1213
      %v1439 = vunpack.c.l.b16 %v1214
      %v1440 = vunpack.c.l.b16 %v1215
      %v1441 = vunpack.c.l.b16 %v1216
      %v1442 = vunpack.c.l.b16 %v1217
      %v1443 = vunpack.c.l.b16 %v1218
      %v1444 = vunpack.c.l.b16 %v1219
      %v1445 = vunpack.c.l.b16 %v1220
      %v1446 = vunpack.c.l.b16 %v1221
      %v1447 = vunpack.c.l.b16 %v1222
      %v1448 = vunpack.c.l.b16 %v1223
      %v1449 = vunpack.c.l.b16 %v1224
      %v1450 = vunpack.c.l.b16 %v1225
      %v1451 = vunpack.c.l.b16 %v1226
      %v1452 = vunpack.c.l.b16 %v1227
      %v1453 = vunpack.c.l.b16 %v1228
      %v1454 = vpack.c.b16 %v1423, %v1422
      %v1455 = vpack.c.b16 %v1425, %v1424
      %v1456 = vpack.c.b16 %v1427, %v1426
      %v1457 = vpack.c.b16 %v1429, %v1428
      %v1458 = vpack.c.b16 %v1431, %v1430
      %v1459 = vpack.c.b16 %v1433, %v1432
      %v1460 = vpack.c.b16 %v1435, %v1434
      %v1461 = vpack.c.b16 %v1437, %v1436
      %v1462 = vpack.c.b16 %v1439, %v1438
      %v1463 = vpack.c.b16 %v1441, %v1440
      %v1464 = vpack.c.b16 %v1443, %v1442
      %v1465 = vpack.c.b16 %v1445, %v1444
      %v1466 = vpack.c.b16 %v1447, %v1446
      %v1467 = vpack.c.b16 %v1449, %v1448
      %v1468 = vpack.c.b16 %v1451, %v1450
      %v1469 = vpack.c.b16 %v1453, %v1452
      %v1486 = vunpack.c.l.b16 %v1229
      %v1487 = vunpack.c.l.b16 %v1230
      %v1488 = vunpack.c.l.b16 %v1231
      %v1489 = vunpack.c.l.b16 %v1232
      %v1490 = vunpack.c.l.b16 %v1233
      %v1491 = vunpack.c.l.b16 %v1234
      %v1492 = vunpack.c.l.b16 %v1235
      %v1493 = vunpack.c.l.b16 %v1236
      %v1494 = vunpack.c.l.b16 %v1237
      %v1495 = vunpack.c.l.b16 %v1238
      %v1496 = vunpack.c.l.b16 %v1239
      %v1497 = vunpack.c.l.b16 %v1240
      %v1498 = vunpack.c.l.b16 %v1241
      %v1499 = vunpack.c.l.b16 %v1242
      %v1500 = vunpack.c.l.b16 %v1243
      %v1501 = vunpack.c.l.b16 %v1244
      %v1502 = vpack.c.b16 %v1486, %v1486
      %v1503 = vpack.c.b16 %v1487, %v1487
      %v1504 = vpack.c.b16 %v1488, %v1488
      %v1505 = vpack.c.b16 %v1489, %v1489
      %v1506 = vpack.c.b16 %v1490, %v1490
      %v1507 = vpack.c.b16 %v1491, %v1491
      %v1508 = vpack.c.b16 %v1492, %v1492
      %v1509 = vpack.c.b16 %v1493, %v1493
      %v1510 = vpack.c.b16 %v1494, %v1494
      %v1511 = vpack.c.b16 %v1495, %v1495
      %v1512 = vpack.c.b16 %v1496, %v1496
      %v1513 = vpack.c.b16 %v1497, %v1497
      %v1514 = vpack.c.b16 %v1498, %v1498
      %v1515 = vpack.c.b16 %v1499, %v1499
      %v1516 = vpack.c.b16 %v1500, %v1500
      %v1517 = vpack.c.b16 %v1501, %v1501
      %vm1518 = vsmask.f32 7424
      %v1520 = vshrl.u32 %v1454, 16
      %v1522 = vshll.u32 %v1454, 16
      %v1524 = vrot.slane %v1522, 1
      %v1525 = vor.u32 %v1520, %v1524
      %v1527 = vshll.u32 %v1502, 16
      %v1529 = vrot.slane %v1527, 1
      %v1530 = vsel %vm1518, %v1525, %v1529
      %v1532 = vshrl.u32 %v1455, 16
      %v1534 = vshll.u32 %v1455, 16
      %v1536 = vrot.slane %v1534, 1
      %v1537 = vor.u32 %v1532, %v1536
      %v1539 = vshll.u32 %v1503, 16
      %v1541 = vrot.slane %v1539, 1
      %v1542 = vsel %vm1518, %v1537, %v1541
      %v1544 = vshrl.u32 %v1456, 16
      %v1546 = vshll.u32 %v1456, 16
      %v1548 = vrot.slane %v1546, 1
      %v1549 = vor.u32 %v1544, %v1548
      %v1551 = vshll.u32 %v1504, 16
      %v1553 = vrot.slane %v1551, 1
      %v1554 = vsel %vm1518, %v1549, %v1553
      %v1556 = vshrl.u32 %v1457, 16
      %v1558 = vshll.u32 %v1457, 16
      %v1560 = vrot.slane %v1558, 1
      %v1561 = vor.u32 %v1556, %v1560
      %v1563 = vshll.u32 %v1505, 16
      %v1565 = vrot.slane %v1563, 1
      %v1566 = vsel %vm1518, %v1561, %v1565
      %v1568 = vshrl.u32 %v1458, 16
      %v1570 = vshll.u32 %v1458, 16
      %v1572 = vrot.slane %v1570, 1
      %v1573 = vor.u32 %v1568, %v1572
      %v1575 = vshll.u32 %v1506, 16
      %v1577 = vrot.slane %v1575, 1
      %v1578 = vsel %vm1518, %v1573, %v1577
      %v1580 = vshrl.u32 %v1459, 16
      %v1582 = vshll.u32 %v1459, 16
      %v1584 = vrot.slane %v1582, 1
      %v1585 = vor.u32 %v1580, %v1584
      %v1587 = vshll.u32 %v1507, 16
      %v1589 = vrot.slane %v1587, 1
      %v1590 = vsel %vm1518, %v1585, %v1589
      %v1592 = vshrl.u32 %v1460, 16
      %v1594 = vshll.u32 %v1460, 16
      %v1596 = vrot.slane %v1594, 1
      %v1597 = vor.u32 %v1592, %v1596
      %v1599 = vshll.u32 %v1508, 16
      %v1601 = vrot.slane %v1599, 1
      %v1602 = vsel %vm1518, %v1597, %v1601
      %v1604 = vshrl.u32 %v1461, 16
      %v1606 = vshll.u32 %v1461, 16
      %v1608 = vrot.slane %v1606, 1
      %v1609 = vor.u32 %v1604, %v1608
      %v1611 = vshll.u32 %v1509, 16
      %v1613 = vrot.slane %v1611, 1
      %v1614 = vsel %vm1518, %v1609, %v1613
      %v1616 = vshrl.u32 %v1462, 16
      %v1618 = vshll.u32 %v1462, 16
      %v1620 = vrot.slane %v1618, 1
      %v1621 = vor.u32 %v1616, %v1620
      %v1623 = vshll.u32 %v1510, 16
      %v1625 = vrot.slane %v1623, 1
      %v1626 = vsel %vm1518, %v1621, %v1625
      %v1628 = vshrl.u32 %v1463, 16
      %v1630 = vshll.u32 %v1463, 16
      %v1632 = vrot.slane %v1630, 1
      %v1633 = vor.u32 %v1628, %v1632
      %v1635 = vshll.u32 %v1511, 16
      %v1637 = vrot.slane %v1635, 1
      %v1638 = vsel %vm1518, %v1633, %v1637
      %v1640 = vshrl.u32 %v1464, 16
      %v1642 = vshll.u32 %v1464, 16
      %v1644 = vrot.slane %v1642, 1
      %v1645 = vor.u32 %v1640, %v1644
      %v1647 = vshll.u32 %v1512, 16
      %v1649 = vrot.slane %v1647, 1
      %v1650 = vsel %vm1518, %v1645, %v1649
      %v1652 = vshrl.u32 %v1465, 16
      %v1654 = vshll.u32 %v1465, 16
      %v1656 = vrot.slane %v1654, 1
      %v1657 = vor.u32 %v1652, %v1656
      %v1659 = vshll.u32 %v1513, 16
      %v1661 = vrot.slane %v1659, 1
      %v1662 = vsel %vm1518, %v1657, %v1661
      %v1664 = vshrl.u32 %v1466, 16
      %v1666 = vshll.u32 %v1466, 16
      %v1668 = vrot.slane %v1666, 1
      %v1669 = vor.u32 %v1664, %v1668
      %v1671 = vshll.u32 %v1514, 16
      %v1673 = vrot.slane %v1671, 1
      %v1674 = vsel %vm1518, %v1669, %v1673
      %v1676 = vshrl.u32 %v1467, 16
      %v1678 = vshll.u32 %v1467, 16
      %v1680 = vrot.slane %v1678, 1
      %v1681 = vor.u32 %v1676, %v1680
      %v1683 = vshll.u32 %v1515, 16
      %v1685 = vrot.slane %v1683, 1
      %v1686 = vsel %vm1518, %v1681, %v1685
      %v1688 = vshrl.u32 %v1468, 16
      %v1690 = vshll.u32 %v1468, 16
      %v1692 = vrot.slane %v1690, 1
      %v1693 = vor.u32 %v1688, %v1692
      %v1695 = vshll.u32 %v1516, 16
      %v1697 = vrot.slane %v1695, 1
      %v1698 = vsel %vm1518, %v1693, %v1697
      %v1700 = vshrl.u32 %v1469, 16
      %v1702 = vshll.u32 %v1469, 16
      %v1704 = vrot.slane %v1702, 1
      %v1705 = vor.u32 %v1700, %v1704
      %v1707 = vshll.u32 %v1517, 16
      %v1709 = vrot.slane %v1707, 1
      %v1710 = vsel %vm1518, %v1705, %v1709
      %1711 = vrot.lane.b32.xlu0 %v1530, 4
      %v1712 = vpop.permute.xlu0 %1711
      %1713 = vrot.lane.b32.xlu0 %v1542, 4
      %v1714 = vpop.permute.xlu0 %1713
      %1715 = vrot.lane.b32.xlu0 %v1554, 4
      %v1716 = vpop.permute.xlu0 %1715
      %1717 = vrot.lane.b32.xlu0 %v1566, 4
      %v1718 = vpop.permute.xlu0 %1717
      %1719 = vrot.lane.b32.xlu0 %v1578, 4
      %v1720 = vpop.permute.xlu0 %1719
      %1721 = vrot.lane.b32.xlu0 %v1590, 4
      %v1722 = vpop.permute.xlu0 %1721
      %1723 = vrot.lane.b32.xlu0 %v1602, 4
      %v1724 = vpop.permute.xlu0 %1723
      %1725 = vrot.lane.b32.xlu0 %v1614, 4
      %v1726 = vpop.permute.xlu0 %1725
      %1727 = vrot.lane.b32.xlu0 %v1626, 4
      %v1728 = vpop.permute.xlu0 %1727
      %1729 = vrot.lane.b32.xlu0 %v1638, 4
      %v1730 = vpop.permute.xlu0 %1729
      %1731 = vrot.lane.b32.xlu0 %v1650, 4
      %v1732 = vpop.permute.xlu0 %1731
      %1733 = vrot.lane.b32.xlu0 %v1662, 4
      %v1734 = vpop.permute.xlu0 %1733
      %1735 = vrot.lane.b32.xlu0 %v1674, 4
      %v1736 = vpop.permute.xlu0 %1735
      %1737 = vrot.lane.b32.xlu0 %v1686, 4
      %v1738 = vpop.permute.xlu0 %1737
      %1739 = vrot.lane.b32.xlu0 %v1698, 4
      %v1740 = vpop.permute.xlu0 %1739
      %1741 = vrot.lane.b32.xlu0 %v1710, 4
      %v1742 = vpop.permute.xlu0 %1741
      %v1759 = vunpack.c.l.b16 %v1245
      %v1760 = vunpack.c.l.b16 %v1246
      %v1761 = vunpack.c.l.b16 %v1247
      %v1762 = vunpack.c.l.b16 %v1248
      %v1763 = vunpack.c.l.b16 %v1249
      %v1764 = vunpack.c.l.b16 %v1250
      %v1765 = vunpack.c.l.b16 %v1251
      %v1766 = vunpack.c.l.b16 %v1252
      %v1767 = vunpack.c.l.b16 %v1253
      %v1768 = vunpack.c.l.b16 %v1254
      %v1769 = vunpack.c.l.b16 %v1255
      %v1770 = vunpack.c.l.b16 %v1256
      %v1771 = vunpack.c.l.b16 %v1257
      %v1772 = vunpack.c.l.b16 %v1258
      %v1773 = vunpack.c.l.b16 %v1259
      %v1774 = vunpack.c.l.b16 %v1260
      %v1775 = vpack.c.b16 %v1423, %v1759
      %v1776 = vpack.c.b16 %v1425, %v1760
      %v1777 = vpack.c.b16 %v1427, %v1761
      %v1778 = vpack.c.b16 %v1429, %v1762
      %v1779 = vpack.c.b16 %v1431, %v1763
      %v1780 = vpack.c.b16 %v1433, %v1764
      %v1781 = vpack.c.b16 %v1435, %v1765
      %v1782 = vpack.c.b16 %v1437, %v1766
      %v1783 = vpack.c.b16 %v1439, %v1767
      %v1784 = vpack.c.b16 %v1441, %v1768
      %v1785 = vpack.c.b16 %v1443, %v1769
      %v1786 = vpack.c.b16 %v1445, %v1770
      %v1787 = vpack.c.b16 %v1447, %v1771
      %v1788 = vpack.c.b16 %v1449, %v1772
      %v1789 = vpack.c.b16 %v1451, %v1773
      %v1790 = vpack.c.b16 %v1453, %v1774
      %vm1791 = vcmask 1046528
      %v1792 = vrot.slane %v1775, 1
      %v1793 = vrot.slane %v1502, 1
      %v1794 = vsel %vm1791, %v1792, %v1793
      %v1795 = vrot.slane %v1776, 1
      %v1796 = vrot.slane %v1503, 1
      %v1797 = vsel %vm1791, %v1795, %v1796
      %v1798 = vrot.slane %v1777, 1
      %v1799 = vrot.slane %v1504, 1
      %v1800 = vsel %vm1791, %v1798, %v1799
      %v1801 = vrot.slane %v1778, 1
      %v1802 = vrot.slane %v1505, 1
      %v1803 = vsel %vm1791, %v1801, %v1802
      %v1804 = vrot.slane %v1779, 1
      %v1805 = vrot.slane %v1506, 1
      %v1806 = vsel %vm1791, %v1804, %v1805
      %v1807 = vrot.slane %v1780, 1
      %v1808 = vrot.slane %v1507, 1
      %v1809 = vsel %vm1791, %v1807, %v1808
      %v1810 = vrot.slane %v1781, 1
      %v1811 = vrot.slane %v1508, 1
      %v1812 = vsel %vm1791, %v1810, %v1811
      %v1813 = vrot.slane %v1782, 1
      %v1814 = vrot.slane %v1509, 1
      %v1815 = vsel %vm1791, %v1813, %v1814
      %v1816 = vrot.slane %v1783, 1
      %v1817 = vrot.slane %v1510, 1
      %v1818 = vsel %vm1791, %v1816, %v1817
      %v1819 = vrot.slane %v1784, 1
      %v1820 = vrot.slane %v1511, 1
      %v1821 = vsel %vm1791, %v1819, %v1820
      %v1822 = vrot.slane %v1785, 1
      %v1823 = vrot.slane %v1512, 1
      %v1824 = vsel %vm1791, %v1822, %v1823
      %v1825 = vrot.slane %v1786, 1
      %v1826 = vrot.slane %v1513, 1
      %v1827 = vsel %vm1791, %v1825, %v1826
      %v1828 = vrot.slane %v1787, 1
      %v1829 = vrot.slane %v1514, 1
      %v1830 = vsel %vm1791, %v1828, %v1829
      %v1831 = vrot.slane %v1788, 1
      %v1832 = vrot.slane %v1515, 1
      %v1833 = vsel %vm1791, %v1831, %v1832
      %v1834 = vrot.slane %v1789, 1
      %v1835 = vrot.slane %v1516, 1
      %v1836 = vsel %vm1791, %v1834, %v1835
      %v1837 = vrot.slane %v1790, 1
      %v1838 = vrot.slane %v1517, 1
      %v1839 = vsel %vm1791, %v1837, %v1838
      %1840 = vrot.lane.b32.xlu0 %v1794, 8
      %v1841 = vpop.permute.xlu0 %1840
      %1842 = vrot.lane.b32.xlu0 %v1797, 8
      %v1843 = vpop.permute.xlu0 %1842
      %1844 = vrot.lane.b32.xlu0 %v1800, 8
      %v1845 = vpop.permute.xlu0 %1844
      %1846 = vrot.lane.b32.xlu0 %v1803, 8
      %v1847 = vpop.permute.xlu0 %1846
      %1848 = vrot.lane.b32.xlu0 %v1806, 8
      %v1849 = vpop.permute.xlu0 %1848
      %1850 = vrot.lane.b32.xlu0 %v1809, 8
      %v1851 = vpop.permute.xlu0 %1850
      %1852 = vrot.lane.b32.xlu0 %v1812, 8
      %v1853 = vpop.permute.xlu0 %1852
      %1854 = vrot.lane.b32.xlu0 %v1815, 8
      %v1855 = vpop.permute.xlu0 %1854
      %1856 = vrot.lane.b32.xlu0 %v1818, 8
      %v1857 = vpop.permute.xlu0 %1856
      %1858 = vrot.lane.b32.xlu0 %v1821, 8
      %v1859 = vpop.permute.xlu0 %1858
      %1860 = vrot.lane.b32.xlu0 %v1824, 8
      %v1861 = vpop.permute.xlu0 %1860
      %1862 = vrot.lane.b32.xlu0 %v1827, 8
      %v1863 = vpop.permute.xlu0 %1862
      %1864 = vrot.lane.b32.xlu0 %v1830, 8
      %v1865 = vpop.permute.xlu0 %1864
      %1866 = vrot.lane.b32.xlu0 %v1833, 8
      %v1867 = vpop.permute.xlu0 %1866
      %1868 = vrot.lane.b32.xlu0 %v1836, 8
      %v1869 = vpop.permute.xlu0 %1868
      %1870 = vrot.lane.b32.xlu0 %v1839, 8
      %v1871 = vpop.permute.xlu0 %1870
      %v1904 = vunpack.c.l.b16 %v1261
      %v1905 = vunpack.c.l.b16 %v1262
      %v1906 = vunpack.c.l.b16 %v1263
      %v1907 = vunpack.c.l.b16 %v1264
      %v1908 = vunpack.c.l.b16 %v1265
      %v1909 = vunpack.c.l.b16 %v1266
      %v1910 = vunpack.c.l.b16 %v1267
      %v1911 = vunpack.c.l.b16 %v1268
      %v1912 = vunpack.c.l.b16 %v1269
      %v1913 = vunpack.c.l.b16 %v1270
      %v1914 = vunpack.c.l.b16 %v1271
      %v1915 = vunpack.c.l.b16 %v1272
      %v1916 = vunpack.c.l.b16 %v1273
      %v1917 = vunpack.c.l.b16 %v1274
      %v1918 = vunpack.c.l.b16 %v1275
      %v1919 = vunpack.c.l.b16 %v1276
      %v1920 = vunpack.c.l.b16 %v1277
      %v1921 = vunpack.c.l.b16 %v1278
      %v1922 = vunpack.c.l.b16 %v1279
      %v1923 = vunpack.c.l.b16 %v1280
      %v1924 = vunpack.c.l.b16 %v1281
      %v1925 = vunpack.c.l.b16 %v1282
      %v1926 = vunpack.c.l.b16 %v1283
      %v1927 = vunpack.c.l.b16 %v1284
      %v1928 = vunpack.c.l.b16 %v1285
      %v1929 = vunpack.c.l.b16 %v1286
      %v1930 = vunpack.c.l.b16 %v1287
      %v1931 = vunpack.c.l.b16 %v1288
      %v1932 = vunpack.c.l.b16 %v1289
      %v1933 = vunpack.c.l.b16 %v1290
      %v1934 = vunpack.c.l.b16 %v1291
      %v1935 = vunpack.c.l.b16 %v1292
      %v1936 = vpack.c.b16 %v1905, %v1904
      %v1937 = vpack.c.b16 %v1907, %v1906
      %v1938 = vpack.c.b16 %v1909, %v1908
      %v1939 = vpack.c.b16 %v1911, %v1910
      %v1940 = vpack.c.b16 %v1913, %v1912
      %v1941 = vpack.c.b16 %v1915, %v1914
      %v1942 = vpack.c.b16 %v1917, %v1916
      %v1943 = vpack.c.b16 %v1919, %v1918
      %v1944 = vpack.c.b16 %v1921, %v1920
      %v1945 = vpack.c.b16 %v1923, %v1922
      %v1946 = vpack.c.b16 %v1925, %v1924
      %v1947 = vpack.c.b16 %v1927, %v1926
      %v1948 = vpack.c.b16 %v1929, %v1928
      %v1949 = vpack.c.b16 %v1931, %v1930
      %v1950 = vpack.c.b16 %v1933, %v1932
      %v1951 = vpack.c.b16 %v1935, %v1934
      %1952 = vrot.lane.b32.xlu0 %v1936, 12
      %v1953 = vpop.permute.xlu0 %1952
      %1954 = vrot.lane.b32.xlu0 %v1937, 12
      %v1955 = vpop.permute.xlu0 %1954
      %1956 = vrot.lane.b32.xlu0 %v1938, 12
      %v1957 = vpop.permute.xlu0 %1956
      %1958 = vrot.lane.b32.xlu0 %v1939, 12
      %v1959 = vpop.permute.xlu0 %1958
      %1960 = vrot.lane.b32.xlu0 %v1940, 12
      %v1961 = vpop.permute.xlu0 %1960
      %1962 = vrot.lane.b32.xlu0 %v1941, 12
      %v1963 = vpop.permute.xlu0 %1962
      %1964 = vrot.lane.b32.xlu0 %v1942, 12
      %v1965 = vpop.permute.xlu0 %1964
      %1966 = vrot.lane.b32.xlu0 %v1943, 12
      %v1967 = vpop.permute.xlu0 %1966
      %1968 = vrot.lane.b32.xlu0 %v1944, 12
      %v1969 = vpop.permute.xlu0 %1968
      %1970 = vrot.lane.b32.xlu0 %v1945, 12
      %v1971 = vpop.permute.xlu0 %1970
      %1972 = vrot.lane.b32.xlu0 %v1946, 12
      %v1973 = vpop.permute.xlu0 %1972
      %1974 = vrot.lane.b32.xlu0 %v1947, 12
      %v1975 = vpop.permute.xlu0 %1974
      %1976 = vrot.lane.b32.xlu0 %v1948, 12
      %v1977 = vpop.permute.xlu0 %1976
      %1978 = vrot.lane.b32.xlu0 %v1949, 12
      %v1979 = vpop.permute.xlu0 %1978
      %1980 = vrot.lane.b32.xlu0 %v1950, 12
      %v1981 = vpop.permute.xlu0 %1980
      %1982 = vrot.lane.b32.xlu0 %v1951, 12
      %v1983 = vpop.permute.xlu0 %1982
      %v2000 = vunpack.c.l.b16 %v1293
      %v2001 = vunpack.c.l.b16 %v1294
      %v2002 = vunpack.c.l.b16 %v1295
      %v2003 = vunpack.c.l.b16 %v1296
      %v2004 = vunpack.c.l.b16 %v1297
      %v2005 = vunpack.c.l.b16 %v1298
      %v2006 = vunpack.c.l.b16 %v1299
      %v2007 = vunpack.c.l.b16 %v1300
      %v2008 = vunpack.c.l.b16 %v1301
      %v2009 = vunpack.c.l.b16 %v1302
      %v2010 = vunpack.c.l.b16 %v1303
      %v2011 = vunpack.c.l.b16 %v1304
      %v2012 = vunpack.c.l.b16 %v1305
      %v2013 = vunpack.c.l.b16 %v1306
      %v2014 = vunpack.c.l.b16 %v1307
      %v2015 = vunpack.c.l.b16 %v1308
      %v2016 = vpack.c.b16 %v2000, %v2000
      %v2017 = vpack.c.b16 %v2001, %v2001
      %v2018 = vpack.c.b16 %v2002, %v2002
      %v2019 = vpack.c.b16 %v2003, %v2003
      %v2020 = vpack.c.b16 %v2004, %v2004
      %v2021 = vpack.c.b16 %v2005, %v2005
      %v2022 = vpack.c.b16 %v2006, %v2006
      %v2023 = vpack.c.b16 %v2007, %v2007
      %v2024 = vpack.c.b16 %v2008, %v2008
      %v2025 = vpack.c.b16 %v2009, %v2009
      %v2026 = vpack.c.b16 %v2010, %v2010
      %v2027 = vpack.c.b16 %v2011, %v2011
      %v2028 = vpack.c.b16 %v2012, %v2012
      %v2029 = vpack.c.b16 %v2013, %v2013
      %v2030 = vpack.c.b16 %v2014, %v2014
      %v2031 = vpack.c.b16 %v2015, %v2015
      %v2033 = vshrl.u32 %v1936, 16
      %v2035 = vshll.u32 %v1936, 16
      %v2037 = vrot.slane %v2035, 1
      %v2038 = vor.u32 %v2033, %v2037
      %v2040 = vshll.u32 %v2016, 16
      %v2042 = vrot.slane %v2040, 1
      %v2043 = vsel %vm1518, %v2038, %v2042
      %v2045 = vshrl.u32 %v1937, 16
      %v2047 = vshll.u32 %v1937, 16
      %v2049 = vrot.slane %v2047, 1
      %v2050 = vor.u32 %v2045, %v2049
      %v2052 = vshll.u32 %v2017, 16
      %v2054 = vrot.slane %v2052, 1
      %v2055 = vsel %vm1518, %v2050, %v2054
      %v2057 = vshrl.u32 %v1938, 16
      %v2059 = vshll.u32 %v1938, 16
      %v2061 = vrot.slane %v2059, 1
      %v2062 = vor.u32 %v2057, %v2061
      %v2064 = vshll.u32 %v2018, 16
      %v2066 = vrot.slane %v2064, 1
      %v2067 = vsel %vm1518, %v2062, %v2066
      %v2069 = vshrl.u32 %v1939, 16
      %v2071 = vshll.u32 %v1939, 16
      %v2073 = vrot.slane %v2071, 1
      %v2074 = vor.u32 %v2069, %v2073
      %v2076 = vshll.u32 %v2019, 16
      %v2078 = vrot.slane %v2076, 1
      %v2079 = vsel %vm1518, %v2074, %v2078
      %v2081 = vshrl.u32 %v1940, 16
      %v2083 = vshll.u32 %v1940, 16
      %v2085 = vrot.slane %v2083, 1
      %v2086 = vor.u32 %v2081, %v2085
      %v2088 = vshll.u32 %v2020, 16
      %v2090 = vrot.slane %v2088, 1
      %v2091 = vsel %vm1518, %v2086, %v2090
      %v2093 = vshrl.u32 %v1941, 16
      %v2095 = vshll.u32 %v1941, 16
      %v2097 = vrot.slane %v2095, 1
      %v2098 = vor.u32 %v2093, %v2097
      %v2100 = vshll.u32 %v2021, 16
      %v2102 = vrot.slane %v2100, 1
      %v2103 = vsel %vm1518, %v2098, %v2102
      %v2105 = vshrl.u32 %v1942, 16
      %v2107 = vshll.u32 %v1942, 16
      %v2109 = vrot.slane %v2107, 1
      %v2110 = vor.u32 %v2105, %v2109
      %v2112 = vshll.u32 %v2022, 16
      %v2114 = vrot.slane %v2112, 1
      %v2115 = vsel %vm1518, %v2110, %v2114
      %v2117 = vshrl.u32 %v1943, 16
      %v2119 = vshll.u32 %v1943, 16
      %v2121 = vrot.slane %v2119, 1
      %v2122 = vor.u32 %v2117, %v2121
      %v2124 = vshll.u32 %v2023, 16
      %v2126 = vrot.slane %v2124, 1
      %v2127 = vsel %vm1518, %v2122, %v2126
      %v2129 = vshrl.u32 %v1944, 16
      %v2131 = vshll.u32 %v1944, 16
      %v2133 = vrot.slane %v2131, 1
      %v2134 = vor.u32 %v2129, %v2133
      %v2136 = vshll.u32 %v2024, 16
      %v2138 = vrot.slane %v2136, 1
      %v2139 = vsel %vm1518, %v2134, %v2138
      %v2141 = vshrl.u32 %v1945, 16
      %v2143 = vshll.u32 %v1945, 16
      %v2145 = vrot.slane %v2143, 1
      %v2146 = vor.u32 %v2141, %v2145
      %v2148 = vshll.u32 %v2025, 16
      %v2150 = vrot.slane %v2148, 1
      %v2151 = vsel %vm1518, %v2146, %v2150
      %v2153 = vshrl.u32 %v1946, 16
      %v2155 = vshll.u32 %v1946, 16
      %v2157 = vrot.slane %v2155, 1
      %v2158 = vor.u32 %v2153, %v2157
      %v2160 = vshll.u32 %v2026, 16
      %v2162 = vrot.slane %v2160, 1
      %v2163 = vsel %vm1518, %v2158, %v2162
      %v2165 = vshrl.u32 %v1947, 16
      %v2167 = vshll.u32 %v1947, 16
      %v2169 = vrot.slane %v2167, 1
      %v2170 = vor.u32 %v2165, %v2169
      %v2172 = vshll.u32 %v2027, 16
      %v2174 = vrot.slane %v2172, 1
      %v2175 = vsel %vm1518, %v2170, %v2174
      %v2177 = vshrl.u32 %v1948, 16
      %v2179 = vshll.u32 %v1948, 16
      %v2181 = vrot.slane %v2179, 1
      %v2182 = vor.u32 %v2177, %v2181
      %v2184 = vshll.u32 %v2028, 16
      %v2186 = vrot.slane %v2184, 1
      %v2187 = vsel %vm1518, %v2182, %v2186
      %v2189 = vshrl.u32 %v1949, 16
      %v2191 = vshll.u32 %v1949, 16
      %v2193 = vrot.slane %v2191, 1
      %v2194 = vor.u32 %v2189, %v2193
      %v2196 = vshll.u32 %v2029, 16
      %v2198 = vrot.slane %v2196, 1
      %v2199 = vsel %vm1518, %v2194, %v2198
      %v2201 = vshrl.u32 %v1950, 16
      %v2203 = vshll.u32 %v1950, 16
      %v2205 = vrot.slane %v2203, 1
      %v2206 = vor.u32 %v2201, %v2205
      %v2208 = vshll.u32 %v2030, 16
      %v2210 = vrot.slane %v2208, 1
      %v2211 = vsel %vm1518, %v2206, %v2210
      %v2213 = vshrl.u32 %v1951, 16
      %v2215 = vshll.u32 %v1951, 16
      %v2217 = vrot.slane %v2215, 1
      %v2218 = vor.u32 %v2213, %v2217
      %v2220 = vshll.u32 %v2031, 16
      %v2222 = vrot.slane %v2220, 1
      %v2223 = vsel %vm1518, %v2218, %v2222
      %2224 = vrot.lane.b32.xlu0 %v2043, 16
      %v2225 = vpop.permute.xlu0 %2224
      %2226 = vrot.lane.b32.xlu0 %v2055, 16
      %v2227 = vpop.permute.xlu0 %2226
      %2228 = vrot.lane.b32.xlu0 %v2067, 16
      %v2229 = vpop.permute.xlu0 %2228
      %2230 = vrot.lane.b32.xlu0 %v2079, 16
      %v2231 = vpop.permute.xlu0 %2230
      %2232 = vrot.lane.b32.xlu0 %v2091, 16
      %v2233 = vpop.permute.xlu0 %2232
      %2234 = vrot.lane.b32.xlu0 %v2103, 16
      %v2235 = vpop.permute.xlu0 %2234
      %2236 = vrot.lane.b32.xlu0 %v2115, 16
      %v2237 = vpop.permute.xlu0 %2236
      %2238 = vrot.lane.b32.xlu0 %v2127, 16
      %v2239 = vpop.permute.xlu0 %2238
      %2240 = vrot.lane.b32.xlu0 %v2139, 16
      %v2241 = vpop.permute.xlu0 %2240
      %2242 = vrot.lane.b32.xlu0 %v2151, 16
      %v2243 = vpop.permute.xlu0 %2242
      %2244 = vrot.lane.b32.xlu0 %v2163, 16
      %v2245 = vpop.permute.xlu0 %2244
      %2246 = vrot.lane.b32.xlu0 %v2175, 16
      %v2247 = vpop.permute.xlu0 %2246
      %2248 = vrot.lane.b32.xlu0 %v2187, 16
      %v2249 = vpop.permute.xlu0 %2248
      %2250 = vrot.lane.b32.xlu0 %v2199, 16
      %v2251 = vpop.permute.xlu0 %2250
      %2252 = vrot.lane.b32.xlu0 %v2211, 16
      %v2253 = vpop.permute.xlu0 %2252
      %2254 = vrot.lane.b32.xlu0 %v2223, 16
      %v2255 = vpop.permute.xlu0 %2254
      %v2272 = vunpack.c.l.b16 %v1309
      %v2273 = vunpack.c.l.b16 %v1310
      %v2274 = vunpack.c.l.b16 %v1311
      %v2275 = vunpack.c.l.b16 %v1312
      %v2276 = vunpack.c.l.b16 %v1313
      %v2277 = vunpack.c.l.b16 %v1314
      %v2278 = vunpack.c.l.b16 %v1315
      %v2279 = vunpack.c.l.b16 %v1316
      %v2280 = vunpack.c.l.b16 %v1317
      %v2281 = vunpack.c.l.b16 %v1318
      %v2282 = vunpack.c.l.b16 %v1319
      %v2283 = vunpack.c.l.b16 %v1320
      %v2284 = vunpack.c.l.b16 %v1321
      %v2285 = vunpack.c.l.b16 %v1322
      %v2286 = vunpack.c.l.b16 %v1323
      %v2287 = vunpack.c.l.b16 %v1324
      %v2288 = vpack.c.b16 %v1905, %v2272
      %v2289 = vpack.c.b16 %v1907, %v2273
      %v2290 = vpack.c.b16 %v1909, %v2274
      %v2291 = vpack.c.b16 %v1911, %v2275
      %v2292 = vpack.c.b16 %v1913, %v2276
      %v2293 = vpack.c.b16 %v1915, %v2277
      %v2294 = vpack.c.b16 %v1917, %v2278
      %v2295 = vpack.c.b16 %v1919, %v2279
      %v2296 = vpack.c.b16 %v1921, %v2280
      %v2297 = vpack.c.b16 %v1923, %v2281
      %v2298 = vpack.c.b16 %v1925, %v2282
      %v2299 = vpack.c.b16 %v1927, %v2283
      %v2300 = vpack.c.b16 %v1929, %v2284
      %v2301 = vpack.c.b16 %v1931, %v2285
      %v2302 = vpack.c.b16 %v1933, %v2286
      %v2303 = vpack.c.b16 %v1935, %v2287
      %v2304 = vrot.slane %v2288, 1
      %v2305 = vrot.slane %v2016, 1
      %v2306 = vsel %vm1791, %v2304, %v2305
      %v2307 = vrot.slane %v2289, 1
      %v2308 = vrot.slane %v2017, 1
      %v2309 = vsel %vm1791, %v2307, %v2308
      %v2310 = vrot.slane %v2290, 1
      %v2311 = vrot.slane %v2018, 1
      %v2312 = vsel %vm1791, %v2310, %v2311
      %v2313 = vrot.slane %v2291, 1
      %v2314 = vrot.slane %v2019, 1
      %v2315 = vsel %vm1791, %v2313, %v2314
      %v2316 = vrot.slane %v2292, 1
      %v2317 = vrot.slane %v2020, 1
      %v2318 = vsel %vm1791, %v2316, %v2317
      %v2319 = vrot.slane %v2293, 1
      %v2320 = vrot.slane %v2021, 1
      %v2321 = vsel %vm1791, %v2319, %v2320
      %v2322 = vrot.slane %v2294, 1
      %v2323 = vrot.slane %v2022, 1
      %v2324 = vsel %vm1791, %v2322, %v2323
      %v2325 = vrot.slane %v2295, 1
      %v2326 = vrot.slane %v2023, 1
      %v2327 = vsel %vm1791, %v2325, %v2326
      %v2328 = vrot.slane %v2296, 1
      %v2329 = vrot.slane %v2024, 1
      %v2330 = vsel %vm1791, %v2328, %v2329
      %v2331 = vrot.slane %v2297, 1
      %v2332 = vrot.slane %v2025, 1
      %v2333 = vsel %vm1791, %v2331, %v2332
      %v2334 = vrot.slane %v2298, 1
      %v2335 = vrot.slane %v2026, 1
      %v2336 = vsel %vm1791, %v2334, %v2335
      %v2337 = vrot.slane %v2299, 1
      %v2338 = vrot.slane %v2027, 1
      %v2339 = vsel %vm1791, %v2337, %v2338
      %v2340 = vrot.slane %v2300, 1
      %v2341 = vrot.slane %v2028, 1
      %v2342 = vsel %vm1791, %v2340, %v2341
      %v2343 = vrot.slane %v2301, 1
      %v2344 = vrot.slane %v2029, 1
      %v2345 = vsel %vm1791, %v2343, %v2344
      %v2346 = vrot.slane %v2302, 1
      %v2347 = vrot.slane %v2030, 1
      %v2348 = vsel %vm1791, %v2346, %v2347
      %v2349 = vrot.slane %v2303, 1
      %v2350 = vrot.slane %v2031, 1
      %v2351 = vsel %vm1791, %v2349, %v2350
      %2352 = vrot.lane.b32.xlu0 %v2306, 20
      %v2353 = vpop.permute.xlu0 %2352
      %2354 = vrot.lane.b32.xlu0 %v2309, 20
      %v2355 = vpop.permute.xlu0 %2354
      %2356 = vrot.lane.b32.xlu0 %v2312, 20
      %v2357 = vpop.permute.xlu0 %2356
      %2358 = vrot.lane.b32.xlu0 %v2315, 20
      %v2359 = vpop.permute.xlu0 %2358
      %2360 = vrot.lane.b32.xlu0 %v2318, 20
      %v2361 = vpop.permute.xlu0 %2360
      %2362 = vrot.lane.b32.xlu0 %v2321, 20
      %v2363 = vpop.permute.xlu0 %2362
      %2364 = vrot.lane.b32.xlu0 %v2324, 20
      %v2365 = vpop.permute.xlu0 %2364
      %2366 = vrot.lane.b32.xlu0 %v2327, 20
      %v2367 = vpop.permute.xlu0 %2366
      %2368 = vrot.lane.b32.xlu0 %v2330, 20
      %v2369 = vpop.permute.xlu0 %2368
      %2370 = vrot.lane.b32.xlu0 %v2333, 20
      %v2371 = vpop.permute.xlu0 %2370
      %2372 = vrot.lane.b32.xlu0 %v2336, 20
      %v2373 = vpop.permute.xlu0 %2372
      %2374 = vrot.lane.b32.xlu0 %v2339, 20
      %v2375 = vpop.permute.xlu0 %2374
      %2376 = vrot.lane.b32.xlu0 %v2342, 20
      %v2377 = vpop.permute.xlu0 %2376
      %2378 = vrot.lane.b32.xlu0 %v2345, 20
      %v2379 = vpop.permute.xlu0 %2378
      %2380 = vrot.lane.b32.xlu0 %v2348, 20
      %v2381 = vpop.permute.xlu0 %2380
      %2382 = vrot.lane.b32.xlu0 %v2351, 20
      %v2383 = vpop.permute.xlu0 %2382
      %v2416 = vunpack.c.l.b16 %v1326
      %v2417 = vunpack.c.l.b16 %v1327
      %v2418 = vunpack.c.l.b16 %v1328
      %v2419 = vunpack.c.l.b16 %v1329
      %v2420 = vunpack.c.l.b16 %v1330
      %v2421 = vunpack.c.l.b16 %v1331
      %v2422 = vunpack.c.l.b16 %v1332
      %v2423 = vunpack.c.l.b16 %v1333
      %v2424 = vunpack.c.l.b16 %v1334
      %v2425 = vunpack.c.l.b16 %v1335
      %v2426 = vunpack.c.l.b16 %v1336
      %v2427 = vunpack.c.l.b16 %v1337
      %v2428 = vunpack.c.l.b16 %v1338
      %v2429 = vunpack.c.l.b16 %v1339
      %v2430 = vunpack.c.l.b16 %v1340
      %v2431 = vunpack.c.l.b16 %v1341
      %v2432 = vunpack.c.l.b16 %v1342
      %v2433 = vunpack.c.l.b16 %v1343
      %v2434 = vunpack.c.l.b16 %v1344
      %v2435 = vunpack.c.l.b16 %v1345
      %v2436 = vunpack.c.l.b16 %v1346
      %v2437 = vunpack.c.l.b16 %v1347
      %v2438 = vunpack.c.l.b16 %v1348
      %v2439 = vunpack.c.l.b16 %v1349
      %v2440 = vunpack.c.l.b16 %v1350
      %v2441 = vunpack.c.l.b16 %v1351
      %v2442 = vunpack.c.l.b16 %v1352
      %v2443 = vunpack.c.l.b16 %v1353
      %v2444 = vunpack.c.l.b16 %v1354
      %v2445 = vunpack.c.l.b16 %v1355
      %v2446 = vunpack.c.l.b16 %v1356
      %v2447 = vunpack.c.l.b16 %v1357
      %v2448 = vpack.c.b16 %v2417, %v2416
      %v2449 = vpack.c.b16 %v2419, %v2418
      %v2450 = vpack.c.b16 %v2421, %v2420
      %v2451 = vpack.c.b16 %v2423, %v2422
      %v2452 = vpack.c.b16 %v2425, %v2424
      %v2453 = vpack.c.b16 %v2427, %v2426
      %v2454 = vpack.c.b16 %v2429, %v2428
      %v2455 = vpack.c.b16 %v2431, %v2430
      %v2456 = vpack.c.b16 %v2433, %v2432
      %v2457 = vpack.c.b16 %v2435, %v2434
      %v2458 = vpack.c.b16 %v2437, %v2436
      %v2459 = vpack.c.b16 %v2439, %v2438
      %v2460 = vpack.c.b16 %v2441, %v2440
      %v2461 = vpack.c.b16 %v2443, %v2442
      %v2462 = vpack.c.b16 %v2445, %v2444
      %v2463 = vpack.c.b16 %v2447, %v2446
      %2464 = vrot.lane.b32.xlu0 %v2448, 24
      %v2465 = vpop.permute.xlu0 %2464
      %2466 = vrot.lane.b32.xlu0 %v2449, 24
      %v2467 = vpop.permute.xlu0 %2466
      %2468 = vrot.lane.b32.xlu0 %v2450, 24
      %v2469 = vpop.permute.xlu0 %2468
      %2470 = vrot.lane.b32.xlu0 %v2451, 24
      %v2471 = vpop.permute.xlu0 %2470
      %2472 = vrot.lane.b32.xlu0 %v2452, 24
      %v2473 = vpop.permute.xlu0 %2472
      %2474 = vrot.lane.b32.xlu0 %v2453, 24
      %v2475 = vpop.permute.xlu0 %2474
      %2476 = vrot.lane.b32.xlu0 %v2454, 24
      %v2477 = vpop.permute.xlu0 %2476
      %2478 = vrot.lane.b32.xlu0 %v2455, 24
      %v2479 = vpop.permute.xlu0 %2478
      %2480 = vrot.lane.b32.xlu0 %v2456, 24
      %v2481 = vpop.permute.xlu0 %2480
      %2482 = vrot.lane.b32.xlu0 %v2457, 24
      %v2483 = vpop.permute.xlu0 %2482
      %2484 = vrot.lane.b32.xlu0 %v2458, 24
      %v2485 = vpop.permute.xlu0 %2484
      %2486 = vrot.lane.b32.xlu0 %v2459, 24
      %v2487 = vpop.permute.xlu0 %2486
      %2488 = vrot.lane.b32.xlu0 %v2460, 24
      %v2489 = vpop.permute.xlu0 %2488
      %2490 = vrot.lane.b32.xlu0 %v2461, 24
      %v2491 = vpop.permute.xlu0 %2490
      %2492 = vrot.lane.b32.xlu0 %v2462, 24
      %v2493 = vpop.permute.xlu0 %2492
      %2494 = vrot.lane.b32.xlu0 %v2463, 24
      %v2495 = vpop.permute.xlu0 %2494
      %v2512 = vunpack.c.l.b16 %v1358
      %v2513 = vunpack.c.l.b16 %v1359
      %v2514 = vunpack.c.l.b16 %v1360
      %v2515 = vunpack.c.l.b16 %v1361
      %v2516 = vunpack.c.l.b16 %v1362
      %v2517 = vunpack.c.l.b16 %v1363
      %v2518 = vunpack.c.l.b16 %v1364
      %v2519 = vunpack.c.l.b16 %v1365
      %v2520 = vunpack.c.l.b16 %v1366
      %v2521 = vunpack.c.l.b16 %v1367
      %v2522 = vunpack.c.l.b16 %v1368
      %v2523 = vunpack.c.l.b16 %v1369
      %v2524 = vunpack.c.l.b16 %v1370
      %v2525 = vunpack.c.l.b16 %v1371
      %v2526 = vunpack.c.l.b16 %v1372
      %v2527 = vunpack.c.l.b16 %v1373
      %v2528 = vpack.c.b16 %v2512, %v2512
      %v2529 = vpack.c.b16 %v2513, %v2513
      %v2530 = vpack.c.b16 %v2514, %v2514
      %v2531 = vpack.c.b16 %v2515, %v2515
      %v2532 = vpack.c.b16 %v2516, %v2516
      %v2533 = vpack.c.b16 %v2517, %v2517
      %v2534 = vpack.c.b16 %v2518, %v2518
      %v2535 = vpack.c.b16 %v2519, %v2519
      %v2536 = vpack.c.b16 %v2520, %v2520
      %v2537 = vpack.c.b16 %v2521, %v2521
      %v2538 = vpack.c.b16 %v2522, %v2522
      %v2539 = vpack.c.b16 %v2523, %v2523
      %v2540 = vpack.c.b16 %v2524, %v2524
      %v2541 = vpack.c.b16 %v2525, %v2525
      %v2542 = vpack.c.b16 %v2526, %v2526
      %v2543 = vpack.c.b16 %v2527, %v2527
      %v2545 = vshrl.u32 %v2448, 16
      %v2547 = vshll.u32 %v2448, 16
      %v2549 = vrot.slane %v2547, 1
      %v2550 = vor.u32 %v2545, %v2549
      %v2552 = vshll.u32 %v2528, 16
      %v2554 = vrot.slane %v2552, 1
      %v2555 = vsel %vm1518, %v2550, %v2554
      %v2557 = vshrl.u32 %v2449, 16
      %v2559 = vshll.u32 %v2449, 16
      %v2561 = vrot.slane %v2559, 1
      %v2562 = vor.u32 %v2557, %v2561
      %v2564 = vshll.u32 %v2529, 16
      %v2566 = vrot.slane %v2564, 1
      %v2567 = vsel %vm1518, %v2562, %v2566
      %v2569 = vshrl.u32 %v2450, 16
      %v2571 = vshll.u32 %v2450, 16
      %v2573 = vrot.slane %v2571, 1
      %v2574 = vor.u32 %v2569, %v2573
      %v2576 = vshll.u32 %v2530, 16
      %v2578 = vrot.slane %v2576, 1
      %v2579 = vsel %vm1518, %v2574, %v2578
      %v2581 = vshrl.u32 %v2451, 16
      %v2583 = vshll.u32 %v2451, 16
      %v2585 = vrot.slane %v2583, 1
      %v2586 = vor.u32 %v2581, %v2585
      %v2588 = vshll.u32 %v2531, 16
      %v2590 = vrot.slane %v2588, 1
      %v2591 = vsel %vm1518, %v2586, %v2590
      %v2593 = vshrl.u32 %v2452, 16
      %v2595 = vshll.u32 %v2452, 16
      %v2597 = vrot.slane %v2595, 1
      %v2598 = vor.u32 %v2593, %v2597
      %v2600 = vshll.u32 %v2532, 16
      %v2602 = vrot.slane %v2600, 1
      %v2603 = vsel %vm1518, %v2598, %v2602
      %v2605 = vshrl.u32 %v2453, 16
      %v2607 = vshll.u32 %v2453, 16
      %v2609 = vrot.slane %v2607, 1
      %v2610 = vor.u32 %v2605, %v2609
      %v2612 = vshll.u32 %v2533, 16
      %v2614 = vrot.slane %v2612, 1
      %v2615 = vsel %vm1518, %v2610, %v2614
      %v2617 = vshrl.u32 %v2454, 16
      %v2619 = vshll.u32 %v2454, 16
      %v2621 = vrot.slane %v2619, 1
      %v2622 = vor.u32 %v2617, %v2621
      %v2624 = vshll.u32 %v2534, 16
      %v2626 = vrot.slane %v2624, 1
      %v2627 = vsel %vm1518, %v2622, %v2626
      %v2629 = vshrl.u32 %v2455, 16
      %v2631 = vshll.u32 %v2455, 16
      %v2633 = vrot.slane %v2631, 1
      %v2634 = vor.u32 %v2629, %v2633
      %v2636 = vshll.u32 %v2535, 16
      %v2638 = vrot.slane %v2636, 1
      %v2639 = vsel %vm1518, %v2634, %v2638
      %v2641 = vshrl.u32 %v2456, 16
      %v2643 = vshll.u32 %v2456, 16
      %v2645 = vrot.slane %v2643, 1
      %v2646 = vor.u32 %v2641, %v2645
      %v2648 = vshll.u32 %v2536, 16
      %v2650 = vrot.slane %v2648, 1
      %v2651 = vsel %vm1518, %v2646, %v2650
      %v2653 = vshrl.u32 %v2457, 16
      %v2655 = vshll.u32 %v2457, 16
      %v2657 = vrot.slane %v2655, 1
      %v2658 = vor.u32 %v2653, %v2657
      %v2660 = vshll.u32 %v2537, 16
      %v2662 = vrot.slane %v2660, 1
      %v2663 = vsel %vm1518, %v2658, %v2662
      %v2665 = vshrl.u32 %v2458, 16
      %v2667 = vshll.u32 %v2458, 16
      %v2669 = vrot.slane %v2667, 1
      %v2670 = vor.u32 %v2665, %v2669
      %v2672 = vshll.u32 %v2538, 16
      %v2674 = vrot.slane %v2672, 1
      %v2675 = vsel %vm1518, %v2670, %v2674
      %v2677 = vshrl.u32 %v2459, 16
      %v2679 = vshll.u32 %v2459, 16
      %v2681 = vrot.slane %v2679, 1
      %v2682 = vor.u32 %v2677, %v2681
      %v2684 = vshll.u32 %v2539, 16
      %v2686 = vrot.slane %v2684, 1
      %v2687 = vsel %vm1518, %v2682, %v2686
      %v2689 = vshrl.u32 %v2460, 16
      %v2691 = vshll.u32 %v2460, 16
      %v2693 = vrot.slane %v2691, 1
      %v2694 = vor.u32 %v2689, %v2693
      %v2696 = vshll.u32 %v2540, 16
      %v2698 = vrot.slane %v2696, 1
      %v2699 = vsel %vm1518, %v2694, %v2698
      %v2701 = vshrl.u32 %v2461, 16
      %v2703 = vshll.u32 %v2461, 16
      %v2705 = vrot.slane %v2703, 1
      %v2706 = vor.u32 %v2701, %v2705
      %v2708 = vshll.u32 %v2541, 16
      %v2710 = vrot.slane %v2708, 1
      %v2711 = vsel %vm1518, %v2706, %v2710
      %v2713 = vshrl.u32 %v2462, 16
      %v2715 = vshll.u32 %v2462, 16
      %v2717 = vrot.slane %v2715, 1
      %v2718 = vor.u32 %v2713, %v2717
      %v2720 = vshll.u32 %v2542, 16
      %v2722 = vrot.slane %v2720, 1
      %v2723 = vsel %vm1518, %v2718, %v2722
      %v2725 = vshrl.u32 %v2463, 16
      %v2727 = vshll.u32 %v2463, 16
      %v2729 = vrot.slane %v2727, 1
      %v2730 = vor.u32 %v2725, %v2729
      %v2732 = vshll.u32 %v2543, 16
      %v2734 = vrot.slane %v2732, 1
      %v2735 = vsel %vm1518, %v2730, %v2734
      %2736 = vrot.lane.b32.xlu0 %v2555, 28
      %v2737 = vpop.permute.xlu0 %2736
      %2738 = vrot.lane.b32.xlu0 %v2567, 28
      %v2739 = vpop.permute.xlu0 %2738
      %2740 = vrot.lane.b32.xlu0 %v2579, 28
      %v2741 = vpop.permute.xlu0 %2740
      %2742 = vrot.lane.b32.xlu0 %v2591, 28
      %v2743 = vpop.permute.xlu0 %2742
      %2744 = vrot.lane.b32.xlu0 %v2603, 28
      %v2745 = vpop.permute.xlu0 %2744
      %2746 = vrot.lane.b32.xlu0 %v2615, 28
      %v2747 = vpop.permute.xlu0 %2746
      %2748 = vrot.lane.b32.xlu0 %v2627, 28
      %v2749 = vpop.permute.xlu0 %2748
      %2750 = vrot.lane.b32.xlu0 %v2639, 28
      %v2751 = vpop.permute.xlu0 %2750
      %2752 = vrot.lane.b32.xlu0 %v2651, 28
      %v2753 = vpop.permute.xlu0 %2752
      %2754 = vrot.lane.b32.xlu0 %v2663, 28
      %v2755 = vpop.permute.xlu0 %2754
      %2756 = vrot.lane.b32.xlu0 %v2675, 28
      %v2757 = vpop.permute.xlu0 %2756
      %2758 = vrot.lane.b32.xlu0 %v2687, 28
      %v2759 = vpop.permute.xlu0 %2758
      %2760 = vrot.lane.b32.xlu0 %v2699, 28
      %v2761 = vpop.permute.xlu0 %2760
      %2762 = vrot.lane.b32.xlu0 %v2711, 28
      %v2763 = vpop.permute.xlu0 %2762
      %2764 = vrot.lane.b32.xlu0 %v2723, 28
      %v2765 = vpop.permute.xlu0 %2764
      %2766 = vrot.lane.b32.xlu0 %v2735, 28
      %v2767 = vpop.permute.xlu0 %2766
      %v2784 = vunpack.c.l.b16 %v1374
      %v2785 = vunpack.c.l.b16 %v1375
      %v2786 = vunpack.c.l.b16 %v1376
      %v2787 = vunpack.c.l.b16 %v1377
      %v2788 = vunpack.c.l.b16 %v1378
      %v2789 = vunpack.c.l.b16 %v1379
      %v2790 = vunpack.c.l.b16 %v1380
      %v2791 = vunpack.c.l.b16 %v1381
      %v2792 = vunpack.c.l.b16 %v1382
      %v2793 = vunpack.c.l.b16 %v1383
      %v2794 = vunpack.c.l.b16 %v1384
      %v2795 = vunpack.c.l.b16 %v1385
      %v2796 = vunpack.c.l.b16 %v1386
      %v2797 = vunpack.c.l.b16 %v1387
      %v2798 = vunpack.c.l.b16 %v1388
      %v2799 = vunpack.c.l.b16 %v1389
      %v2800 = vpack.c.b16 %v2417, %v2784
      %v2801 = vpack.c.b16 %v2419, %v2785
      %v2802 = vpack.c.b16 %v2421, %v2786
      %v2803 = vpack.c.b16 %v2423, %v2787
      %v2804 = vpack.c.b16 %v2425, %v2788
      %v2805 = vpack.c.b16 %v2427, %v2789
      %v2806 = vpack.c.b16 %v2429, %v2790
      %v2807 = vpack.c.b16 %v2431, %v2791
      %v2808 = vpack.c.b16 %v2433, %v2792
      %v2809 = vpack.c.b16 %v2435, %v2793
      %v2810 = vpack.c.b16 %v2437, %v2794
      %v2811 = vpack.c.b16 %v2439, %v2795
      %v2812 = vpack.c.b16 %v2441, %v2796
      %v2813 = vpack.c.b16 %v2443, %v2797
      %v2814 = vpack.c.b16 %v2445, %v2798
      %v2815 = vpack.c.b16 %v2447, %v2799
      %v2816 = vrot.slane %v2800, 1
      %v2817 = vrot.slane %v2528, 1
      %v2818 = vsel %vm1791, %v2816, %v2817
      %v2819 = vrot.slane %v2801, 1
      %v2820 = vrot.slane %v2529, 1
      %v2821 = vsel %vm1791, %v2819, %v2820
      %v2822 = vrot.slane %v2802, 1
      %v2823 = vrot.slane %v2530, 1
      %v2824 = vsel %vm1791, %v2822, %v2823
      %v2825 = vrot.slane %v2803, 1
      %v2826 = vrot.slane %v2531, 1
      %v2827 = vsel %vm1791, %v2825, %v2826
      %v2828 = vrot.slane %v2804, 1
      %v2829 = vrot.slane %v2532, 1
      %v2830 = vsel %vm1791, %v2828, %v2829
      %v2831 = vrot.slane %v2805, 1
      %v2832 = vrot.slane %v2533, 1
      %v2833 = vsel %vm1791, %v2831, %v2832
      %v2834 = vrot.slane %v2806, 1
      %v2835 = vrot.slane %v2534, 1
      %v2836 = vsel %vm1791, %v2834, %v2835
      %v2837 = vrot.slane %v2807, 1
      %v2838 = vrot.slane %v2535, 1
      %v2839 = vsel %vm1791, %v2837, %v2838
      %v2840 = vrot.slane %v2808, 1
      %v2841 = vrot.slane %v2536, 1
      %v2842 = vsel %vm1791, %v2840, %v2841
      %v2843 = vrot.slane %v2809, 1
      %v2844 = vrot.slane %v2537, 1
      %v2845 = vsel %vm1791, %v2843, %v2844
      %v2846 = vrot.slane %v2810, 1
      %v2847 = vrot.slane %v2538, 1
      %v2848 = vsel %vm1791, %v2846, %v2847
      %v2849 = vrot.slane %v2811, 1
      %v2850 = vrot.slane %v2539, 1
      %v2851 = vsel %vm1791, %v2849, %v2850
      %v2852 = vrot.slane %v2812, 1
      %v2853 = vrot.slane %v2540, 1
      %v2854 = vsel %vm1791, %v2852, %v2853
      %v2855 = vrot.slane %v2813, 1
      %v2856 = vrot.slane %v2541, 1
      %v2857 = vsel %vm1791, %v2855, %v2856
      %v2858 = vrot.slane %v2814, 1
      %v2859 = vrot.slane %v2542, 1
      %v2860 = vsel %vm1791, %v2858, %v2859
      %v2861 = vrot.slane %v2815, 1
      %v2862 = vrot.slane %v2543, 1
      %v2863 = vsel %vm1791, %v2861, %v2862
      %2864 = vrot.lane.b32.xlu0 %v2818, 32
      %v2865 = vpop.permute.xlu0 %2864
      %2866 = vrot.lane.b32.xlu0 %v2821, 32
      %v2867 = vpop.permute.xlu0 %2866
      %2868 = vrot.lane.b32.xlu0 %v2824, 32
      %v2869 = vpop.permute.xlu0 %2868
      %2870 = vrot.lane.b32.xlu0 %v2827, 32
      %v2871 = vpop.permute.xlu0 %2870
      %2872 = vrot.lane.b32.xlu0 %v2830, 32
      %v2873 = vpop.permute.xlu0 %2872
      %2874 = vrot.lane.b32.xlu0 %v2833, 32
      %v2875 = vpop.permute.xlu0 %2874
      %2876 = vrot.lane.b32.xlu0 %v2836, 32
      %v2877 = vpop.permute.xlu0 %2876
      %2878 = vrot.lane.b32.xlu0 %v2839, 32
      %v2879 = vpop.permute.xlu0 %2878
      %2880 = vrot.lane.b32.xlu0 %v2842, 32
      %v2881 = vpop.permute.xlu0 %2880
      %2882 = vrot.lane.b32.xlu0 %v2845, 32
      %v2883 = vpop.permute.xlu0 %2882
      %2884 = vrot.lane.b32.xlu0 %v2848, 32
      %v2885 = vpop.permute.xlu0 %2884
      %2886 = vrot.lane.b32.xlu0 %v2851, 32
      %v2887 = vpop.permute.xlu0 %2886
      %2888 = vrot.lane.b32.xlu0 %v2854, 32
      %v2889 = vpop.permute.xlu0 %2888
      %2890 = vrot.lane.b32.xlu0 %v2857, 32
      %v2891 = vpop.permute.xlu0 %2890
      %2892 = vrot.lane.b32.xlu0 %v2860, 32
      %v2893 = vpop.permute.xlu0 %2892
      %2894 = vrot.lane.b32.xlu0 %v2863, 32
      %v2895 = vpop.permute.xlu0 %2894
      %vm2896 = vcmask 31744
      %v2898 = vsel %vm2896, %v1454, %v1712
      %v2900 = vsel %vm2896, %v1455, %v1714
      %v2902 = vsel %vm2896, %v1456, %v1716
      %v2904 = vsel %vm2896, %v1457, %v1718
      %v2906 = vsel %vm2896, %v1458, %v1720
      %v2908 = vsel %vm2896, %v1459, %v1722
      %v2910 = vsel %vm2896, %v1460, %v1724
      %v2912 = vsel %vm2896, %v1461, %v1726
      %v2914 = vsel %vm2896, %v1462, %v1728
      %v2916 = vsel %vm2896, %v1463, %v1730
      %v2918 = vsel %vm2896, %v1464, %v1732
      %v2920 = vsel %vm2896, %v1465, %v1734
      %v2922 = vsel %vm2896, %v1466, %v1736
      %v2924 = vsel %vm2896, %v1467, %v1738
      %v2926 = vsel %vm2896, %v1468, %v1740
      %v2928 = vsel %vm2896, %v1469, %v1742
      %vm2929 = vcmask 64512
      %v2931 = vsel %vm2929, %v2898, %v1841
      %v2933 = vsel %vm2929, %v2900, %v1843
      %v2935 = vsel %vm2929, %v2902, %v1845
      %v2937 = vsel %vm2929, %v2904, %v1847
      %v2939 = vsel %vm2929, %v2906, %v1849
      %v2941 = vsel %vm2929, %v2908, %v1851
      %v2943 = vsel %vm2929, %v2910, %v1853
      %v2945 = vsel %vm2929, %v2912, %v1855
      %v2947 = vsel %vm2929, %v2914, %v1857
      %v2949 = vsel %vm2929, %v2916, %v1859
      %v2951 = vsel %vm2929, %v2918, %v1861
      %v2953 = vsel %vm2929, %v2920, %v1863
      %v2955 = vsel %vm2929, %v2922, %v1865
      %v2957 = vsel %vm2929, %v2924, %v1867
      %v2959 = vsel %vm2929, %v2926, %v1869
      %v2961 = vsel %vm2929, %v2928, %v1871
      %vm2962 = vcmask 97280
      %v2964 = vsel %vm2962, %v2931, %v1953
      %v2966 = vsel %vm2962, %v2933, %v1955
      %v2968 = vsel %vm2962, %v2935, %v1957
      %v2970 = vsel %vm2962, %v2937, %v1959
      %v2972 = vsel %vm2962, %v2939, %v1961
      %v2974 = vsel %vm2962, %v2941, %v1963
      %v2976 = vsel %vm2962, %v2943, %v1965
      %v2978 = vsel %vm2962, %v2945, %v1967
      %v2980 = vsel %vm2962, %v2947, %v1969
      %v2982 = vsel %vm2962, %v2949, %v1971
      %v2984 = vsel %vm2962, %v2951, %v1973
      %v2986 = vsel %vm2962, %v2953, %v1975
      %v2988 = vsel %vm2962, %v2955, %v1977
      %v2990 = vsel %vm2962, %v2957, %v1979
      %v2992 = vsel %vm2962, %v2959, %v1981
      %v2994 = vsel %vm2962, %v2961, %v1983
      %vm2995 = vcmask 130048
      %v2997 = vsel %vm2995, %v2964, %v2225
      %v2999 = vsel %vm2995, %v2966, %v2227
      %v3001 = vsel %vm2995, %v2968, %v2229
      %v3003 = vsel %vm2995, %v2970, %v2231
      %v3005 = vsel %vm2995, %v2972, %v2233
      %v3007 = vsel %vm2995, %v2974, %v2235
      %v3009 = vsel %vm2995, %v2976, %v2237
      %v3011 = vsel %vm2995, %v2978, %v2239
      %v3013 = vsel %vm2995, %v2980, %v2241
      %v3015 = vsel %vm2995, %v2982, %v2243
      %v3017 = vsel %vm2995, %v2984, %v2245
      %v3019 = vsel %vm2995, %v2986, %v2247
      %v3021 = vsel %vm2995, %v2988, %v2249
      %v3023 = vsel %vm2995, %v2990, %v2251
      %v3025 = vsel %vm2995, %v2992, %v2253
      %v3027 = vsel %vm2995, %v2994, %v2255
      %vm3028 = vcmask 162816
      %v3030 = vsel %vm3028, %v2997, %v2353
      %v3032 = vsel %vm3028, %v2999, %v2355
      %v3034 = vsel %vm3028, %v3001, %v2357
      %v3036 = vsel %vm3028, %v3003, %v2359
      %v3038 = vsel %vm3028, %v3005, %v2361
      %v3040 = vsel %vm3028, %v3007, %v2363
      %v3042 = vsel %vm3028, %v3009, %v2365
      %v3044 = vsel %vm3028, %v3011, %v2367
      %v3046 = vsel %vm3028, %v3013, %v2369
      %v3048 = vsel %vm3028, %v3015, %v2371
      %v3050 = vsel %vm3028, %v3017, %v2373
      %v3052 = vsel %vm3028, %v3019, %v2375
      %v3054 = vsel %vm3028, %v3021, %v2377
      %v3056 = vsel %vm3028, %v3023, %v2379
      %v3058 = vsel %vm3028, %v3025, %v2381
      %v3060 = vsel %vm3028, %v3027, %v2383
      %vm3061 = vcmask 195584
      %v3063 = vsel %vm3061, %v3030, %v2465
      %v3065 = vsel %vm3061, %v3032, %v2467
      %v3067 = vsel %vm3061, %v3034, %v2469
      %v3069 = vsel %vm3061, %v3036, %v2471
      %v3071 = vsel %vm3061, %v3038, %v2473
      %v3073 = vsel %vm3061, %v3040, %v2475
      %v3075 = vsel %vm3061, %v3042, %v2477
      %v3077 = vsel %vm3061, %v3044, %v2479
      %v3079 = vsel %vm3061, %v3046, %v2481
      %v3081 = vsel %vm3061, %v3048, %v2483
      %v3083 = vsel %vm3061, %v3050, %v2485
      %v3085 = vsel %vm3061, %v3052, %v2487
      %v3087 = vsel %vm3061, %v3054, %v2489
      %v3089 = vsel %vm3061, %v3056, %v2491
      %v3091 = vsel %vm3061, %v3058, %v2493
      %v3093 = vsel %vm3061, %v3060, %v2495
      %vm3094 = vcmask 228352
      %v3096 = vsel %vm3094, %v3063, %v2737
      %v3098 = vsel %vm3094, %v3065, %v2739
      %v3100 = vsel %vm3094, %v3067, %v2741
      %v3102 = vsel %vm3094, %v3069, %v2743
      %v3104 = vsel %vm3094, %v3071, %v2745
      %v3106 = vsel %vm3094, %v3073, %v2747
      %v3108 = vsel %vm3094, %v3075, %v2749
      %v3110 = vsel %vm3094, %v3077, %v2751
      %v3112 = vsel %vm3094, %v3079, %v2753
      %v3114 = vsel %vm3094, %v3081, %v2755
      %v3116 = vsel %vm3094, %v3083, %v2757
      %v3118 = vsel %vm3094, %v3085, %v2759
      %v3120 = vsel %vm3094, %v3087, %v2761
      %v3122 = vsel %vm3094, %v3089, %v2763
      %v3124 = vsel %vm3094, %v3091, %v2765
      %v3126 = vsel %vm3094, %v3093, %v2767
      %vm3127 = vcmask 261120
      %v3129 = vsel %vm3127, %v3096, %v2865
      %v3131 = vsel %vm3127, %v3098, %v2867
      %v3133 = vsel %vm3127, %v3100, %v2869
      %v3135 = vsel %vm3127, %v3102, %v2871
      %v3137 = vsel %vm3127, %v3104, %v2873
      %v3139 = vsel %vm3127, %v3106, %v2875
      %v3141 = vsel %vm3127, %v3108, %v2877
      %v3143 = vsel %vm3127, %v3110, %v2879
      %v3145 = vsel %vm3127, %v3112, %v2881
      %v3147 = vsel %vm3127, %v3114, %v2883
      %v3149 = vsel %vm3127, %v3116, %v2885
      %v3151 = vsel %vm3127, %v3118, %v2887
      %v3153 = vsel %vm3127, %v3120, %v2889
      %v3155 = vsel %vm3127, %v3122, %v2891
      %v3157 = vsel %vm3127, %v3124, %v2893
      %v3159 = vsel %vm3127, %v3126, %v2895
      %v3160 = vld [vmem:[%s4] sm:$0xf]
      %v3161 = vld [vmem:[%s4 + $0x4] sm:$0xf]
      %v3162 = vld [vmem:[%s4 + $0x8] sm:$0xf]
      %v3163 = vld [vmem:[%s4 + $0xc] sm:$0xf]
      %v3164 = vld [vmem:[%s4 + $0x10] sm:$0x3]
      %v3170 = vunpack.c.l.b16 %v3160
      %v3171 = vunpack.c.l.b16 %v3161
      %v3172 = vunpack.c.l.b16 %v3162
      %v3173 = vunpack.c.l.b16 %v3163
      %v3174 = vunpack.c.l.b16 %v3164
      %v3175 = vpack.c.b16 %v3171, %v3170
      %v3176 = vpack.c.b16 %v3173, %v3172
      %v3177 = vpack.c.b16 %v3174, %v3174
      %vm3180 = vcmask 293888
      %v3181 = vsel %vm3180, %v3129, 0
      %v3183 = vsel %vm3180, %v3131, 0
      %v3185 = vsel %vm3180, %v3133, 0
      %v3187 = vsel %vm3180, %v3135, 0
      %v3189 = vsel %vm3180, %v3137, 0
      %v3191 = vsel %vm3180, %v3139, 0
      %v3193 = vsel %vm3180, %v3141, 0
      %v3195 = vsel %vm3180, %v3143, 0
      %v3197 = vsel %vm3180, %v3145, 0
      %v3199 = vsel %vm3180, %v3147, 0
      %v3201 = vsel %vm3180, %v3149, 0
      %v3203 = vsel %vm3180, %v3151, 0
      %v3205 = vsel %vm3180, %v3153, 0
      %v3207 = vsel %vm3180, %v3155, 0
      %v3209 = vsel %vm3180, %v3157, 0
      %v3211 = vsel %vm3180, %v3159, 0
      %vm3213 = vcmask 1041408
      %v3215 = vsel %vm3213, %v3177, 0
      %3217 = vmatprep.subr.bf16.mxu0 0
      %3218 = vmatpush1.bf16.msra.mxu0 %v3175
      %3219 = vmatprep.subr.bf16.mxu0 0
      %3220 = vmatpush1.bf16.msra.mxu0 %v3176
      %3221 = vmatprep.subr.bf16.mxu0 0
      %3222 = vmatpush1.bf16.msra.mxu0 %v3215
      %3223 = vmatprep.subr.bf16.mxu0 0
      %3224 = vmatpush1.bf16.msra.mxu0 0
      %3225 = vmatprep.subr.bf16.mxu0 0
      %3226 = vmatpush1.bf16.msra.mxu0 0
      %3227 = vmatprep.subr.bf16.mxu0 0
      %3228 = vmatpush1.bf16.msra.mxu0 0
      %3229 = vmatprep.subr.bf16.mxu0 0
      %3230 = vmatpush1.bf16.msra.mxu0 0
      %3231 = vmatprep.subr.bf16.mxu0 0
      %3232 = vmatpush1.bf16.msra.mxu0 0
      %3233 = vmatprep.subr.bf16.mxu0 0
      %3234 = vmatpush1.bf16.msra.mxu0 0
      %3235 = vmatprep.subr.bf16.mxu0 0
      %3236 = vmatpush1.bf16.msra.mxu0 0
      %3237 = vmatprep.subr.bf16.mxu0 0
      %3238 = vmatpush1.bf16.msra.mxu0 0
      %3239 = vmatprep.subr.bf16.mxu0 0
      %3240 = vmatpush1.bf16.msra.mxu0 0
      %3241 = vmatprep.subr.bf16.mxu0 0
      %3242 = vmatpush1.bf16.msra.mxu0 0
      %3243 = vmatprep.subr.bf16.mxu0 0
      %3244 = vmatpush1.bf16.msra.mxu0 0
      %3245 = vmatprep.subr.bf16.mxu0 0
      %3246 = vmatpush1.bf16.msra.mxu0 0
      %3247 = vmatprep.subr.bf16.mxu0 0
      %3248 = vmatpush1.bf16.msra.mxu0 0
      %3249 = vmatprep.mubr.bf16.mxu0 0
      %3250 = vmatmul.mubr.bf16.gmra.mrb[0].mxu0 %v3181
      %v3251 = vpop.f32.mrb[0].mxu0
      %v3252 = vadd.f32 0.0, %v3251
      %v3253 = vpop.f32.mrb[0].mxu0
      %v3254 = vpop.f32.mrb[0].mxu0
      %v3255 = vadd.f32 0.0, %v3254
      %v3256 = vpop.f32.mrb[0].mxu0
      %3257 = vmatprep.mubr.bf16.mxu0 0
      %3258 = vmatmul.mubr.bf16.gmra.mrb[0].mxu0 %v3183
      %v3259 = vpop.f32.mrb[0].mxu0
      %v3260 = vadd.f32 0.0, %v3259
      %v3261 = vpop.f32.mrb[0].mxu0
      %v3262 = vpop.f32.mrb[0].mxu0
      %v3263 = vadd.f32 0.0, %v3262
      %v3264 = vpop.f32.mrb[0].mxu0
      %3265 = vmatprep.mubr.bf16.mxu0 0
      %3266 = vmatmul.mubr.bf16.gmra.mrb[0].mxu0 %v3185
      %v3267 = vpop.f32.mrb[0].mxu0
      %v3268 = vadd.f32 0.0, %v3267
      %v3269 = vpop.f32.mrb[0].mxu0
      %v3270 = vpop.f32.mrb[0].mxu0
      %v3271 = vadd.f32 0.0, %v3270
      %v3272 = vpop.f32.mrb[0].mxu0
      %3273 = vmatprep.mubr.bf16.mxu0 0
      %3274 = vmatmul.mubr.bf16.gmra.mrb[0].mxu0 %v3187
      %v3275 = vpop.f32.mrb[0].mxu0
      %v3276 = vadd.f32 0.0, %v3275
      %v3277 = vpop.f32.mrb[0].mxu0
      %v3278 = vpop.f32.mrb[0].mxu0
      %v3279 = vadd.f32 0.0, %v3278
      %v3280 = vpop.f32.mrb[0].mxu0
      %3281 = vmatprep.mubr.bf16.mxu0 0
      %3282 = vmatmul.mubr.bf16.gmra.mrb[0].mxu0 %v3189
      %v3283 = vpop.f32.mrb[0].mxu0
      %v3284 = vadd.f32 0.0, %v3283
      %v3285 = vpop.f32.mrb[0].mxu0
      %v3286 = vpop.f32.mrb[0].mxu0
      %v3287 = vadd.f32 0.0, %v3286
      %v3288 = vpop.f32.mrb[0].mxu0
      %3289 = vmatprep.mubr.bf16.mxu0 0
      %3290 = vmatmul.mubr.bf16.gmra.mrb[0].mxu0 %v3191
      %v3291 = vpop.f32.mrb[0].mxu0
      %v3292 = vadd.f32 0.0, %v3291
      %v3293 = vpop.f32.mrb[0].mxu0
      %v3294 = vpop.f32.mrb[0].mxu0
      %v3295 = vadd.f32 0.0, %v3294
      %v3296 = vpop.f32.mrb[0].mxu0
      %3297 = vmatprep.mubr.bf16.mxu0 0
      %3298 = vmatmul.mubr.bf16.gmra.mrb[0].mxu0 %v3193
      %v3299 = vpop.f32.mrb[0].mxu0
      %v3300 = vadd.f32 0.0, %v3299
      %v3301 = vpop.f32.mrb[0].mxu0
      %v3302 = vpop.f32.mrb[0].mxu0
      %v3303 = vadd.f32 0.0, %v3302
      %v3304 = vpop.f32.mrb[0].mxu0
      %3305 = vmatprep.mubr.bf16.mxu0 0
      %3306 = vmatmul.mubr.bf16.gmra.mrb[0].mxu0 %v3195
      %v3307 = vpop.f32.mrb[0].mxu0
      %v3308 = vadd.f32 0.0, %v3307
      %v3309 = vpop.f32.mrb[0].mxu0
      %v3310 = vpop.f32.mrb[0].mxu0
      %v3311 = vadd.f32 0.0, %v3310
      %v3312 = vpop.f32.mrb[0].mxu0
      %3313 = vmatprep.mubr.bf16.mxu0 0
      %3314 = vmatmul.mubr.bf16.gmra.mrb[0].mxu0 %v3197
      %v3315 = vpop.f32.mrb[0].mxu0
      %v3316 = vadd.f32 0.0, %v3315
      %v3317 = vpop.f32.mrb[0].mxu0
      %v3318 = vpop.f32.mrb[0].mxu0
      %v3319 = vadd.f32 0.0, %v3318
      %v3320 = vpop.f32.mrb[0].mxu0
      %3321 = vmatprep.mubr.bf16.mxu0 0
      %3322 = vmatmul.mubr.bf16.gmra.mrb[0].mxu0 %v3199
      %v3323 = vpop.f32.mrb[0].mxu0
      %v3324 = vadd.f32 0.0, %v3323
      %v3325 = vpop.f32.mrb[0].mxu0
      %v3326 = vpop.f32.mrb[0].mxu0
      %v3327 = vadd.f32 0.0, %v3326
      %v3328 = vpop.f32.mrb[0].mxu0
      %3329 = vmatprep.mubr.bf16.mxu0 0
      %3330 = vmatmul.mubr.bf16.gmra.mrb[0].mxu0 %v3201
      %v3331 = vpop.f32.mrb[0].mxu0
      %v3332 = vadd.f32 0.0, %v3331
      %v3333 = vpop.f32.mrb[0].mxu0
      %v3334 = vpop.f32.mrb[0].mxu0
      %v3335 = vadd.f32 0.0, %v3334
      %v3336 = vpop.f32.mrb[0].mxu0
      %3337 = vmatprep.mubr.bf16.mxu0 0
      %3338 = vmatmul.mubr.bf16.gmra.mrb[0].mxu0 %v3203
      %v3339 = vpop.f32.mrb[0].mxu0
      %v3340 = vadd.f32 0.0, %v3339
      %v3341 = vpop.f32.mrb[0].mxu0
      %v3342 = vpop.f32.mrb[0].mxu0
      %v3343 = vadd.f32 0.0, %v3342
      %v3344 = vpop.f32.mrb[0].mxu0
      %3345 = vmatprep.mubr.bf16.mxu0 0
      %3346 = vmatmul.mubr.bf16.gmra.mrb[0].mxu0 %v3205
      %v3347 = vpop.f32.mrb[0].mxu0
      %v3348 = vadd.f32 0.0, %v3347
      %v3349 = vpop.f32.mrb[0].mxu0
      %v3350 = vpop.f32.mrb[0].mxu0
      %v3351 = vadd.f32 0.0, %v3350
      %v3352 = vpop.f32.mrb[0].mxu0
      %3353 = vmatprep.mubr.bf16.mxu0 0
      %3354 = vmatmul.mubr.bf16.gmra.mrb[0].mxu0 %v3207
      %v3355 = vpop.f32.mrb[0].mxu0
      %v3356 = vadd.f32 0.0, %v3355
      %v3357 = vpop.f32.mrb[0].mxu0
      %v3358 = vpop.f32.mrb[0].mxu0
      %v3359 = vadd.f32 0.0, %v3358
      %v3360 = vpop.f32.mrb[0].mxu0
      %3361 = vmatprep.mubr.bf16.mxu0 0
      %3362 = vmatmul.mubr.bf16.gmra.mrb[0].mxu0 %v3209
      %v3363 = vpop.f32.mrb[0].mxu0
      %v3364 = vadd.f32 0.0, %v3363
      %v3365 = vpop.f32.mrb[0].mxu0
      %v3366 = vpop.f32.mrb[0].mxu0
      %v3367 = vadd.f32 0.0, %v3366
      %v3368 = vpop.f32.mrb[0].mxu0
      %3369 = vmatprep.mubr.bf16.mxu0 0
      %3370 = vmatmul.mubr.bf16.gmra.mrb[0].mxu0 %v3211
      %v3371 = vpop.f32.mrb[0].mxu0
      %v3372 = vadd.f32 0.0, %v3371
      %v3373 = vpop.f32.mrb[0].mxu0
      %v3374 = vpop.f32.mrb[0].mxu0
      %v3375 = vadd.f32 0.0, %v3374
      %v3376 = vpop.f32.mrb[0].mxu0
      %3377 = vdwg.mxu0
      %v3378 = vsel %vm2896, %v3252, 0.0
      %v3379 = vsel %vm2896, %v3255, 0.0
      %v3380 = vadd.f32 %v3378, %v3379
      %v3381 = vsel %vm2896, %v3260, 0.0
      %v3382 = vadd.f32 %v3380, %v3381
      %v3383 = vsel %vm2896, %v3263, 0.0
      %v3384 = vadd.f32 %v3382, %v3383
      %v3385 = vsel %vm2896, %v3268, 0.0
      %v3386 = vadd.f32 %v3384, %v3385
      %v3387 = vsel %vm2896, %v3271, 0.0
      %v3388 = vadd.f32 %v3386, %v3387
      %v3389 = vsel %vm2896, %v3276, 0.0
      %v3390 = vadd.f32 %v3388, %v3389
      %v3391 = vsel %vm2896, %v3279, 0.0
      %v3392 = vadd.f32 %v3390, %v3391
      %v3393 = vsel %vm2896, %v3284, 0.0
      %v3394 = vadd.f32 %v3392, %v3393
      %v3395 = vsel %vm2896, %v3287, 0.0
      %v3396 = vadd.f32 %v3394, %v3395
      %v3397 = vsel %vm2896, %v3292, 0.0
      %v3398 = vadd.f32 %v3396, %v3397
      %v3399 = vsel %vm2896, %v3295, 0.0
      %v3400 = vadd.f32 %v3398, %v3399
      %v3401 = vsel %vm2896, %v3300, 0.0
      %v3402 = vadd.f32 %v3400, %v3401
      %v3403 = vsel %vm2896, %v3303, 0.0
      %v3404 = vadd.f32 %v3402, %v3403
      %v3405 = vsel %vm2896, %v3308, 0.0
      %v3406 = vadd.f32 %v3404, %v3405
      %v3407 = vsel %vm2896, %v3311, 0.0
      %v3408 = vadd.f32 %v3406, %v3407
      %v3409 = vsel %vm2896, %v3316, 0.0
      %v3410 = vadd.f32 %v3408, %v3409
      %v3411 = vsel %vm2896, %v3319, 0.0
      %v3412 = vadd.f32 %v3410, %v3411
      %v3413 = vsel %vm2896, %v3324, 0.0
      %v3414 = vadd.f32 %v3412, %v3413
      %v3415 = vsel %vm2896, %v3327, 0.0
      %v3416 = vadd.f32 %v3414, %v3415
      %v3417 = vsel %vm2896, %v3332, 0.0
      %v3418 = vadd.f32 %v3416, %v3417
      %v3419 = vsel %vm2896, %v3335, 0.0
      %v3420 = vadd.f32 %v3418, %v3419
      %v3421 = vsel %vm2896, %v3340, 0.0
      %v3422 = vadd.f32 %v3420, %v3421
      %v3423 = vsel %vm2896, %v3343, 0.0
      %v3424 = vadd.f32 %v3422, %v3423
      %v3425 = vsel %vm2896, %v3348, 0.0
      %v3426 = vadd.f32 %v3424, %v3425
      %v3427 = vsel %vm2896, %v3351, 0.0
      %v3428 = vadd.f32 %v3426, %v3427
      %v3429 = vsel %vm2896, %v3356, 0.0
      %v3430 = vadd.f32 %v3428, %v3429
      %v3431 = vsel %vm2896, %v3359, 0.0
      %v3432 = vadd.f32 %v3430, %v3431
      %v3433 = vsel %vm2896, %v3364, 0.0
      %v3434 = vadd.f32 %v3432, %v3433
      %v3435 = vsel %vm2896, %v3367, 0.0
      %v3436 = vadd.f32 %v3434, %v3435
      %v3437 = vsel %vm2896, %v3372, 0.0
      %v3438 = vadd.f32 %v3436, %v3437
      %v3439 = vsel %vm2896, %v3375, 0.0
      %v3440 = vadd.f32 %v3438, %v3439
      %v3441 = vrot.slane %v3440, 4
      %v3442 = vadd.f32 %v3440, %v3441
      %v3443 = vrot.slane %v3442, 2
      %v3444 = vadd.f32 %v3442, %v3443
      %v3445 = vrot.slane %v3444, 1
      %v3446 = vadd.f32 %v3444, %v3445
      %v3447 = vmul.f32 %v3252, %v3252
      %v3448 = vmul.f32 %v3255, %v3255
      %v3449 = vmul.f32 %v3260, %v3260
      %v3450 = vmul.f32 %v3263, %v3263
      %v3451 = vmul.f32 %v3268, %v3268
      %v3452 = vmul.f32 %v3271, %v3271
      %v3453 = vmul.f32 %v3276, %v3276
      %v3454 = vmul.f32 %v3279, %v3279
      %v3455 = vmul.f32 %v3284, %v3284
      %v3456 = vmul.f32 %v3287, %v3287
      %v3457 = vmul.f32 %v3292, %v3292
      %v3458 = vmul.f32 %v3295, %v3295
      %v3459 = vmul.f32 %v3300, %v3300
      %v3460 = vmul.f32 %v3303, %v3303
      %v3461 = vmul.f32 %v3308, %v3308
      %v3462 = vmul.f32 %v3311, %v3311
      %v3463 = vmul.f32 %v3316, %v3316
      %v3464 = vmul.f32 %v3319, %v3319
      %v3465 = vmul.f32 %v3324, %v3324
      %v3466 = vmul.f32 %v3327, %v3327
      %v3467 = vmul.f32 %v3332, %v3332
      %v3468 = vmul.f32 %v3335, %v3335
      %v3469 = vmul.f32 %v3340, %v3340
      %v3470 = vmul.f32 %v3343, %v3343
      %v3471 = vmul.f32 %v3348, %v3348
      %v3472 = vmul.f32 %v3351, %v3351
      %v3473 = vmul.f32 %v3356, %v3356
      %v3474 = vmul.f32 %v3359, %v3359
      %v3475 = vmul.f32 %v3364, %v3364
      %v3476 = vmul.f32 %v3367, %v3367
      %v3477 = vmul.f32 %v3372, %v3372
      %v3478 = vmul.f32 %v3375, %v3375
      %v3479 = vsel %vm2896, %v3447, 0.0
      %v3480 = vsel %vm2896, %v3448, 0.0
      %v3481 = vadd.f32 %v3479, %v3480
      %v3482 = vsel %vm2896, %v3449, 0.0
      %v3483 = vadd.f32 %v3481, %v3482
      %v3484 = vsel %vm2896, %v3450, 0.0
      %v3485 = vadd.f32 %v3483, %v3484
      %v3486 = vsel %vm2896, %v3451, 0.0
      %v3487 = vadd.f32 %v3485, %v3486
      %v3488 = vsel %vm2896, %v3452, 0.0
      %v3489 = vadd.f32 %v3487, %v3488
      %v3490 = vsel %vm2896, %v3453, 0.0
      %v3491 = vadd.f32 %v3489, %v3490
      %v3492 = vsel %vm2896, %v3454, 0.0
      %v3493 = vadd.f32 %v3491, %v3492
      %v3494 = vsel %vm2896, %v3455, 0.0
      %v3495 = vadd.f32 %v3493, %v3494
      %v3496 = vsel %vm2896, %v3456, 0.0
      %v3497 = vadd.f32 %v3495, %v3496
      %v3498 = vsel %vm2896, %v3457, 0.0
      %v3499 = vadd.f32 %v3497, %v3498
      %v3500 = vsel %vm2896, %v3458, 0.0
      %v3501 = vadd.f32 %v3499, %v3500
      %v3502 = vsel %vm2896, %v3459, 0.0
      %v3503 = vadd.f32 %v3501, %v3502
      %v3504 = vsel %vm2896, %v3460, 0.0
      %v3505 = vadd.f32 %v3503, %v3504
      %v3506 = vsel %vm2896, %v3461, 0.0
      %v3507 = vadd.f32 %v3505, %v3506
      %v3508 = vsel %vm2896, %v3462, 0.0
      %v3509 = vadd.f32 %v3507, %v3508
      %v3510 = vsel %vm2896, %v3463, 0.0
      %v3511 = vadd.f32 %v3509, %v3510
      %v3512 = vsel %vm2896, %v3464, 0.0
      %v3513 = vadd.f32 %v3511, %v3512
      %v3514 = vsel %vm2896, %v3465, 0.0
      %v3515 = vadd.f32 %v3513, %v3514
      %v3516 = vsel %vm2896, %v3466, 0.0
      %v3517 = vadd.f32 %v3515, %v3516
      %v3518 = vsel %vm2896, %v3467, 0.0
      %v3519 = vadd.f32 %v3517, %v3518
      %v3520 = vsel %vm2896, %v3468, 0.0
      %v3521 = vadd.f32 %v3519, %v3520
      %v3522 = vsel %vm2896, %v3469, 0.0
      %v3523 = vadd.f32 %v3521, %v3522
      %v3524 = vsel %vm2896, %v3470, 0.0
      %v3525 = vadd.f32 %v3523, %v3524
      %v3526 = vsel %vm2896, %v3471, 0.0
      %v3527 = vadd.f32 %v3525, %v3526
      %v3528 = vsel %vm2896, %v3472, 0.0
      %v3529 = vadd.f32 %v3527, %v3528
      %v3530 = vsel %vm2896, %v3473, 0.0
      %v3531 = vadd.f32 %v3529, %v3530
      %v3532 = vsel %vm2896, %v3474, 0.0
      %v3533 = vadd.f32 %v3531, %v3532
      %v3534 = vsel %vm2896, %v3475, 0.0
      %v3535 = vadd.f32 %v3533, %v3534
      %v3536 = vsel %vm2896, %v3476, 0.0
      %v3537 = vadd.f32 %v3535, %v3536
      %v3538 = vsel %vm2896, %v3477, 0.0
      %v3539 = vadd.f32 %v3537, %v3538
      %v3540 = vsel %vm2896, %v3478, 0.0
      %v3541 = vadd.f32 %v3539, %v3540
      %v3542 = vrot.slane %v3541, 4
      %v3543 = vadd.f32 %v3541, %v3542
      %v3544 = vrot.slane %v3543, 2
      %v3545 = vadd.f32 %v3543, %v3544
      %v3546 = vrot.slane %v3545, 1
      %v3547 = vadd.f32 %v3545, %v3546
      %vm3548 = vcmask 1040384
      %v3549 = vsel %vm3548, %v3446, %v3547
      %3550 = vst.msk [vmem:[%s262] sm:$0x3] %vm266, %v3549
      %3551 = vxpose.xlu0.b32.start [1/16] %v3252, 128
      %3552 = vxpose.xlu0.b32.cont [2/16] %v3255, 128
      %3553 = vxpose.xlu0.b32.cont [3/16] %v3260, 128
      %3554 = vxpose.xlu0.b32.cont [4/16] %v3263, 128
      %3555 = vxpose.xlu0.b32.cont [5/16] %v3268, 128
      %3556 = vxpose.xlu0.b32.cont [6/16] %v3271, 128
      %3557 = vxpose.xlu0.b32.cont [7/16] %v3276, 128
      %3558 = vxpose.xlu0.b32.cont [8/16] %v3279, 128
      %3559 = vxpose.xlu0.b32.cont [9/16] %v3284, 128
      %3560 = vxpose.xlu0.b32.cont [10/16] %v3287, 128
      %3561 = vxpose.xlu0.b32.cont [11/16] %v3292, 128
      %3562 = vxpose.xlu0.b32.cont [12/16] %v3295, 128
      %3563 = vxpose.xlu0.b32.cont [13/16] %v3300, 128
      %3564 = vxpose.xlu0.b32.cont [14/16] %v3303, 128
      %3565 = vxpose.xlu0.b32.cont [15/16] %v3308, 128
      %3566 = vxpose.xlu0.b32.end [16/16] %v3311, 128
      %v3567 = vpop.trf.xlu0
      %v3568 = vpop.trf.xlu0
      %v3569 = vpop.trf.xlu0
      %v3570 = vpop.trf.xlu0
      %v3571 = vpop.trf.xlu0
      %v3572 = vpop.trf.xlu0
      %v3573 = vpop.trf.xlu0
      %v3574 = vpop.trf.xlu0
      %v3575 = vpop.trf.xlu0
      %v3576 = vpop.trf.xlu0
      %v3577 = vpop.trf.xlu0
      %v3578 = vpop.trf.xlu0
      %v3579 = vpop.trf.xlu0
      %v3580 = vpop.trf.xlu0
      %v3581 = vpop.trf.xlu0
      %v3582 = vpop.trf.xlu0
      %3583 = vxpose.xlu0.b32.start [1/16] %v3316, 128
      %3584 = vxpose.xlu0.b32.cont [2/16] %v3319, 128
      %3585 = vxpose.xlu0.b32.cont [3/16] %v3324, 128
      %3586 = vxpose.xlu0.b32.cont [4/16] %v3327, 128
      %3587 = vxpose.xlu0.b32.cont [5/16] %v3332, 128
      %3588 = vxpose.xlu0.b32.cont [6/16] %v3335, 128
      %3589 = vxpose.xlu0.b32.cont [7/16] %v3340, 128
      %3590 = vxpose.xlu0.b32.cont [8/16] %v3343, 128
      %3591 = vxpose.xlu0.b32.cont [9/16] %v3348, 128
      %3592 = vxpose.xlu0.b32.cont [10/16] %v3351, 128
      %3593 = vxpose.xlu0.b32.cont [11/16] %v3356, 128
      %3594 = vxpose.xlu0.b32.cont [12/16] %v3359, 128
      %3595 = vxpose.xlu0.b32.cont [13/16] %v3364, 128
      %3596 = vxpose.xlu0.b32.cont [14/16] %v3367, 128
      %3597 = vxpose.xlu0.b32.cont [15/16] %v3372, 128
      %3598 = vxpose.xlu0.b32.end [16/16] %v3375, 128
      %v3599 = vpop.trf.xlu0
      %v3600 = vpop.trf.xlu0
      %v3601 = vpop.trf.xlu0
      %v3602 = vpop.trf.xlu0
      %v3603 = vpop.trf.xlu0
      %v3604 = vpop.trf.xlu0
      %v3605 = vpop.trf.xlu0
      %v3606 = vpop.trf.xlu0
      %v3607 = vpop.trf.xlu0
      %v3608 = vpop.trf.xlu0
      %v3609 = vpop.trf.xlu0
      %v3610 = vpop.trf.xlu0
      %v3611 = vpop.trf.xlu0
      %v3612 = vpop.trf.xlu0
      %v3613 = vpop.trf.xlu0
      %v3614 = vpop.trf.xlu0
      %v3615 = vpack.c.bf16 %v3567, %v3567
      %v3616 = vpack.c.bf16 %v3599, %v3599
      %v3619 = vcombine.low %v3615, %v3616
      %v3621 = vunpack.c.l.s4 1983009808
      %v3622 = vunpack.c.0.s8 %v3621
      %v3623 = vlaneseq
      %v3624 = vshrl.u32 %v3623, 7
      %v3625 = vsub.s32 %v3622, %v3624
      %v3626 = vrot.slane %v3619, %v3625
      %3628 = vst [vmem:[%s258] sm:$0xf] %v3626
      %p3629 = scmp.lt.s32.totalorder %s18, 1
      %s3630 = scalar_select %p3629, %s18, 1
      %s3631 = smul.addr %s3630, 2
      %s3632 = smul.addr %s3631, 2
      %s3633 = scalar_lea.vmem %s5, %s3632
      %p3634 = scmp.lt.s32.totalorder %s18, 1
      %s3635 = scalar_select %p3634, %s18, 1
      %s3636 = smul.addr %s3635, 2
      %s3637 = scalar_lea.vmem %s6, %s3636
      // Predicated region
      $region41: #{basic_block_forward.4} parent=39 // pred_check
        %p3638 = pneg %p146
      $region42: #{basic_block_forward.4} parent=39 // pred_check_branch
        %3640 = sbr.rel (%p3638) target = $region44
      $region43: #{basic_block_forward.4} parent=39 // pred_region
        _
      $region44: #{basic_block_forward.4} parent=39 // pred_fallthru
        _
      // Predicated region
      $region45: #{basic_block_forward.4} parent=39 // pred_check
        %p3641 = pneg %p172
      $region46: #{basic_block_forward.4} parent=39 // pred_check_branch
        %3643 = sbr.rel (%p3641) target = $region48
      $region47: #{basic_block_forward.4} parent=39 // pred_region
        _
      $region48: #{basic_block_forward.4} parent=39 // pred_fallthru
        _
    $region40: #{basic_block_forward.4} parent=5 // pred_fallthru
      _
    %p3644 = scmp.le.s32.totalorder 2, %s13
    // Predicated region
    $region49: #{basic_block_forward.4} parent=5 // pred_check
      %p3645 = pneg %p3644
    $region50: #{basic_block_forward.4} parent=5 // pred_check_branch
      %3647 = sbr.rel (%p3645) target = $region52
    $region51: #{basic_block_forward.4} parent=5 // pred_region
      %s3648 = ssub.s32 %s13, 2
      // Predicated region
      $region53: #{basic_block_forward.4} parent=51 // pred_check
        %p3649 = pneg %p152
      $region54: #{basic_block_forward.4} parent=51 // pred_check_branch
        %3651 = sbr.rel (%p3649) target = $region56
      $region55: #{basic_block_forward.4} parent=51 // pred_region
        %p3652 = scmp.lt.s32.totalorder %s19, 1
        %s3653 = scalar_select %p3652, %s19, 1
        %s3654 = smul.addr %s3653, 2
        %s3655 = smul.addr %s3654, 2
        %s3656 = scalar_lea.vmem %s5, %s3655
      $region56: #{basic_block_forward.4} parent=51 // pred_fallthru
        _
      // Predicated region
      $region57: #{basic_block_forward.4} parent=51 // pred_check
        %p3657 = pneg %p178
      $region58: #{basic_block_forward.4} parent=51 // pred_check_branch
        %3659 = sbr.rel (%p3657) target = $region60
      $region59: #{basic_block_forward.4} parent=51 // pred_region
        %p3660 = scmp.lt.s32.totalorder %s19, 1
        %s3661 = scalar_select %p3660, %s19, 1
        %s3662 = smul.addr %s3661, 2
        %s3663 = scalar_lea.vmem %s6, %s3662
      $region60: #{basic_block_forward.4} parent=51 // pred_fallthru
        _
    $region52: #{basic_block_forward.4} parent=5 // pred_fallthru
      _
  $region6: #{basic_block_forward.4} parent=0 // loop_footer
    %s17 = sadd.s32 1, %s13
  $region7: #{basic_block_forward.4} parent=0 // loop_footer_branch
    %12 = sbr.rel target = $region3
  $region8: #{basic_block_forward.4} parent=0 // loop_exit
    _

</llo_original>
